<compile_context>
chip_gen: v7x
topology: tpu7x:2x2x1
jax: 0.10.0
libtpu: 0.0.40
codegen_flags: <defaults>
</compile_context>

<pallas_src>
import jax
import jax.numpy as jnp
from jax.experimental import pallas as pl
from jax.experimental.pallas import tpu as pltpu


# ----------------------------- fused Pallas kernel -----------------------------

def _hetero_gnn_kernel(
    edge_c_ref,   # (E, 2) int32  [:,0]=ligand src idx, [:,1]=target dst idx
    edge_r_ref,   # (2, E) int32  row 0 = ligand src, row 1 = target dst
    x_lig_ref,    # (n_lig, F_lig) bf16
    x_tgt_ref,    # (n_tgt, F_tgt) bf16
    w_lig1_ref,   # (F_lig, 2H) bf16 : [:, :H] = conv1 l2t lin_l, [:, H:] = conv1 t2l lin_r
    w_tgt1_ref,   # (F_tgt, 2H) bf16 : [:, :H] = conv1 t2l lin_l, [:, H:] = conv1 l2t lin_r
    w_lig2_ref,   # (H, 2H) bf16     : conv2, same packing
    w_tgt2_ref,   # (H, 2H) bf16
    ep_w1l_ref,   # (H, H) bf16  edge-predictor W1, ligand half
    ep_w1t_ref,   # (H, H) bf16  edge-predictor W1, target half
    small_ref,    # (11, H) f32  packed biases / BN params / final linear
    out_ref,      # (E, 1) f32
):
    f32 = jnp.float32
    bf16 = jnp.bfloat16

    E = edge_c_ref.shape[0]
    n_lig = x_lig_ref.shape[0]
    n_tgt = x_tgt_ref.shape[0]
    H = ep_w1l_ref.shape[1]

    # ---- packed small params (static row slices, zero-cost views) ----
    b_c1_l2t = small_ref[0:1, :]
    b_c1_t2l = small_ref[1:2, :]
    bn1_g = small_ref[2:3, :]
    bn1_b = small_ref[3:4, :]
    b_c2_l2t = small_ref[4:5, :]
    b_c2_t2l = small_ref[5:6, :]
    bn2_g = small_ref[6:7, :]
    bn2_b = small_ref[7:8, :]
    ep_b1 = small_ref[8:9, :]
    ep_w2 = small_ref[9:10, :]
    ep_b2 = small_ref[10:11, 0:1]

    # ---- one-hot edge-endpoint matrices, built in-kernel in bf16 (exact 0/1) ----
    src_c = edge_c_ref[:, 0:1]     # (E, 1)
    dst_c = edge_c_ref[:, 1:2]     # (E, 1)
    src_r = edge_r_ref[0:1, :]     # (1, E)
    dst_r = edge_r_ref[1:2, :]     # (1, E)

    S_et = (jax.lax.broadcasted_iota(jnp.int32, (E, n_lig), 1) == src_c).astype(bf16)
    D_et = (jax.lax.broadcasted_iota(jnp.int32, (E, n_tgt), 1) == dst_c).astype(bf16)
    S_te = (jax.lax.broadcasted_iota(jnp.int32, (n_lig, E), 0) == src_r).astype(bf16)
    D_te = (jax.lax.broadcasted_iota(jnp.int32, (n_tgt, E), 0) == dst_r).astype(bf16)

    # ---- edge-count matrices (exact small integers, f32 accumulation) ----
    # mean aggregation = (counts @ messages) / degree; the 1/deg scaling is applied on
    # the VPU after the bf16 MXU matmul instead of pre-scaling a dense f32 A matrix.
    cnt_l2t = jnp.dot(D_te, S_et, preferred_element_type=f32)   # (n_tgt, n_lig)
    cnt_t2l = jnp.dot(S_te, D_et, preferred_element_type=f32)   # (n_lig, n_tgt)
    inv_deg_tgt = 1.0 / jnp.maximum(jnp.sum(cnt_l2t, axis=1, keepdims=True), 1.0)
    inv_deg_lig = 1.0 / jnp.maximum(jnp.sum(cnt_t2l, axis=1, keepdims=True), 1.0)
    cnt_l2t_b = cnt_l2t.astype(bf16)
    cnt_t2l_b = cnt_t2l.astype(bf16)

    def relu_bn(x, g, b):
        # dropout(identity) -> relu -> BatchNorm1d with batch statistics (eps=1e-5)
        r = jnp.maximum(x, 0.0)
        mean = jnp.mean(r, axis=0, keepdims=True)
        var = jnp.mean((r - mean) * (r - mean), axis=0, keepdims=True)
        return (r - mean) * jax.lax.rsqrt(var + 1e-5) * g + b

    def conv(xl_b, xt_b, w_lig_ref, w_tgt_ref, b_l2t, b_t2l):
        # Fused per-source projection: [message | root] in ONE matmul per source type.
        proj_lig = jnp.dot(xl_b, w_lig_ref[...], preferred_element_type=f32)   # (n_lig, 2H)
        proj_tgt = jnp.dot(xt_b, w_tgt_ref[...], preferred_element_type=f32)   # (n_tgt, 2H)
        msg_l2t, root_lig = proj_lig[:, :H], proj_lig[:, H:]
        msg_t2l, root_tgt = proj_tgt[:, :H], proj_tgt[:, H:]
        # Mean aggregation: bf16 counts @ bf16 messages -> f32, then per-row 1/deg.
        agg_tgt = jnp.dot(cnt_l2t_b, msg_l2t.astype(bf16),
                          preferred_element_type=f32) * inv_deg_tgt
        agg_lig = jnp.dot(cnt_t2l_b, msg_t2l.astype(bf16),
                          preferred_element_type=f32) * inv_deg_lig
        h_tgt = agg_tgt + b_l2t + root_tgt
        h_lig = agg_lig + b_t2l + root_lig
        return h_lig, h_tgt

    # ---- conv1 (HeteroConv of two SAGEConvs) -> relu -> bn1 ----
    h_lig, h_tgt = conv(x_lig_ref[...], x_tgt_ref[...],
                        w_lig1_ref, w_tgt1_ref, b_c1_l2t, b_c1_t2l)
    h_lig = relu_bn(h_lig, bn1_g, bn1_b)
    h_tgt = relu_bn(h_tgt, bn1_g, bn1_b)

    # ---- conv2 -> relu -> bn2 ----
    h_lig2, h_tgt2 = conv(h_lig.astype(bf16), h_tgt.astype(bf16),
                          w_lig2_ref, w_tgt2_ref, b_c2_l2t, b_c2_t2l)
    h_lig2 = relu_bn(h_lig2, bn2_g, bn2_b)
    h_tgt2 = relu_bn(h_tgt2, bn2_g, bn2_b)

    # ---- edge predictor, re-associated: project per NODE, then gather per edge ----
    p_lig = jnp.dot(h_lig2.astype(bf16), ep_w1l_ref[...], preferred_element_type=f32)
    p_tgt = jnp.dot(h_tgt2.astype(bf16), ep_w1t_ref[...], preferred_element_type=f32)
    h_e = (jnp.dot(S_et, p_lig.astype(bf16), preferred_element_type=f32)
           + jnp.dot(D_et, p_tgt.astype(bf16), preferred_element_type=f32)
           + ep_b1)
    h_e = jnp.maximum(h_e, 0.0)
    # final Linear(H, 1) as elementwise multiply + lane reduction (no N=1 MXU matmul)
    out_ref[...] = jnp.sum(h_e * ep_w2, axis=-1, keepdims=True) + ep_b2


# ----------------------------- wrapper -----------------------------

def hetero_gnn_forward(params, x_lig, x_tgt, edge_index):
    """Batched forward over B independent graphs.

    x_lig:      (B, n_lig, F_lig) bf16
    x_tgt:      (B, n_tgt, F_tgt) bf16
    edge_index: (B, 2, E) int32, row 0 = ligand index, row 1 = target index
    returns:    (B, E) f32 edge scores
    """
    p = params
    B, _, E = edge_index.shape
    n_lig, f_lig = x_lig.shape[1], x_lig.shape[2]
    n_tgt, f_tgt = x_tgt.shape[1], x_tgt.shape[2]

    edge_r = edge_index                        # (B, 2, E)
    edge_c = jnp.swapaxes(edge_index, 1, 2)    # (B, E, 2) — tiny int reorder only

    # per-graph blocks (leading batch dim squeezed out of the kernel refs)
    def graph3(shape):
        return pl.BlockSpec((None,) + shape, lambda b: (b, 0, 0))

    # weights / packed params: constant index_map => fetched once, revisited every step
    def shared2(shape):
        return pl.BlockSpec(shape, lambda b: (0, 0))

    out = pl.pallas_call(
        _hetero_gnn_kernel,
        grid=(B,),
        out_shape=jax.ShapeDtypeStruct((B, E, 1), jnp.float32),
        in_specs=[
            graph3((E, 2)),
            graph3((2, E)),
            graph3((n_lig, f_lig)),
            graph3((n_tgt, f_tgt)),
            shared2(p["w_lig1"].shape),
            shared2(p["w_tgt1"].shape),
            shared2(p["w_lig2"].shape),
            shared2(p["w_tgt2"].shape),
            shared2(p["ep_w1_lig"].shape),
            shared2(p["ep_w1_tgt"].shape),
            shared2(p["small"].shape),
        ],
        out_specs=graph3((E, 1)),
        compiler_params=pltpu.CompilerParams(dimension_semantics=("parallel",)),
    )(
        edge_c, edge_r, x_lig, x_tgt,
        p["w_lig1"], p["w_tgt1"], p["w_lig2"], p["w_tgt2"],
        p["ep_w1_lig"], p["ep_w1_tgt"], p["small"],
    )
    return out[..., 0]   # squeeze(-1)


# ----------------------------- parameter init -----------------------------

def init_params(key, ligand_in, target_in, hidden):
    keys = jax.random.split(key, 12)
    f32 = jnp.float32
    bf16 = jnp.bfloat16
    H = hidden

    def lin(k, fan_in, fan_out, fan_in_scale=None):
        scale = 1.0 / jnp.sqrt(jnp.float32(fan_in_scale if fan_in_scale else fan_in))
        return jax.random.uniform(k, (fan_in, fan_out), f32, -scale, scale)

    # conv1 SAGEConv weights
    c1_l2t_wl = lin(keys[0], ligand_in, H)   # message proj: ligand -> target
    c1_l2t_wr = lin(keys[1], target_in, H)   # root proj on target
    c1_t2l_wl = lin(keys[2], target_in, H)   # message proj: target -> ligand
    c1_t2l_wr = lin(keys[3], ligand_in, H)   # root proj on ligand
    # conv2 SAGEConv weights (hidden -> hidden both ways)
    c2_l2t_wl = lin(keys[4], H, H)
    c2_l2t_wr = lin(keys[5], H, H)
    c2_t2l_wl = lin(keys[6], H, H)
    c2_t2l_wr = lin(keys[7], H, H)
    # edge predictor Linear(2H, H) split into ligand / target halves, then Linear(H, 1)
    ep_w1_lig = lin(keys[8], H, H, fan_in_scale=2 * H)
    ep_w1_tgt = lin(keys[9], H, H, fan_in_scale=2 * H)
    ep_w2 = lin(keys[10], H, 1)[:, 0]        # (H,)

    zeros = jnp.zeros((H,), f32)
    ones = jnp.ones((H,), f32)
    small = jnp.stack([
        zeros,   # 0: conv1 l2t bias (added to target output)
        zeros,   # 1: conv1 t2l bias (added to ligand output)
        ones,    # 2: bn1 gamma
        zeros,   # 3: bn1 beta
        zeros,   # 4: conv2 l2t bias
        zeros,   # 5: conv2 t2l bias
        ones,    # 6: bn2 gamma
        zeros,   # 7: bn2 beta
        zeros,   # 8: edge predictor b1
        ep_w2,   # 9: edge predictor final weight (H,)
        zeros,   # 10: edge predictor final bias (scalar at lane 0)
    ], axis=0)   # (11, H) f32

    return {
        # per-source-type packed projections: [W_message | W_root]
        "w_lig1": jnp.concatenate([c1_l2t_wl, c1_t2l_wr], axis=1).astype(bf16),  # (F_lig, 2H)
        "w_tgt1": jnp.concatenate([c1_t2l_wl, c1_l2t_wr], axis=1).astype(bf16),  # (F_tgt, 2H)
        "w_lig2": jnp.concatenate([c2_l2t_wl, c2_t2l_wr], axis=1).astype(bf16),  # (H, 2H)
        "w_tgt2": jnp.concatenate([c2_t2l_wl, c2_l2t_wr], axis=1).astype(bf16),  # (H, 2H)
        "ep_w1_lig": ep_w1_lig.astype(bf16),
        "ep_w1_tgt": ep_w1_tgt.astype(bf16),
        "small": small,
    }


# ----------------------------- main -----------------------------

if __name__ == "__main__":
    LIGAND_IN = 1024
    TARGET_IN = 1280
    HIDDEN = 256
    BATCH = 4
    N_LIG = 16
    N_TGT = 16
    N_EDGES = 32

    key = jax.random.PRNGKey(0)
    k_xl, k_xt, k_es, k_ed, k_p = jax.random.split(key, 5)

    # pre-cast node features to bf16 ONCE (off the per-call path)
    x_lig = jax.random.normal(k_xl, (BATCH, N_LIG, LIGAND_IN), jnp.float32).astype(jnp.bfloat16)
    x_tgt = jax.random.normal(k_xt, (BATCH, N_TGT, TARGET_IN), jnp.float32).astype(jnp.bfloat16)
    edge_index = jnp.stack(
        [
            jax.random.randint(k_es, (BATCH, N_EDGES), 0, N_LIG),
            jax.random.randint(k_ed, (BATCH, N_EDGES), 0, N_TGT),
        ],
        axis=1,
    ).astype(jnp.int32)   # (B, 2, E)

    params = init_params(k_p, LIGAND_IN, TARGET_IN, HIDDEN)

    fwd = jax.jit(hetero_gnn_forward)
    out = fwd(params, x_lig, x_tgt, edge_index)
    jax.block_until_ready(out)
    assert out.shape == (BATCH, N_EDGES)
    assert bool(jnp.all(jnp.isfinite(out)))
    print("KERNEL_OK")
</pallas_src>

<mosaic_0001>
module attributes {stable_mosaic.version = 11 : i64} {
  func.func @_hetero_gnn_kernel(%arg0: i32, %arg1: memref<1x32x2xi32, #tpu.memory_space<vmem>>, %arg2: memref<1x2x32xi32, #tpu.memory_space<vmem>>, %arg3: memref<1x16x1024xbf16, #tpu.memory_space<vmem>>, %arg4: memref<1x16x1280xbf16, #tpu.memory_space<vmem>>, %arg5: memref<1024x512xbf16, #tpu.memory_space<vmem>>, %arg6: memref<1280x512xbf16, #tpu.memory_space<vmem>>, %arg7: memref<256x512xbf16, #tpu.memory_space<vmem>>, %arg8: memref<256x512xbf16, #tpu.memory_space<vmem>>, %arg9: memref<256x256xbf16, #tpu.memory_space<vmem>>, %arg10: memref<256x256xbf16, #tpu.memory_space<vmem>>, %arg11: memref<11x256xf32, #tpu.memory_space<vmem>>, %arg12: memref<1x32x1xf32, #tpu.memory_space<vmem>>) attributes {dimension_semantics = [#tpu.dimension_semantics<parallel>], iteration_bounds = array<i64: 4>, scalar_prefetch = 0 : i64, scratch_operands = 0 : i64, tpu.core_type = #tpu.core_type<tc>, window_params = [{transform_indices = @transform_0, window_bounds = array<i64: 1, 32, 2>}, {transform_indices = @transform_1, window_bounds = array<i64: 1, 2, 32>}, {transform_indices = @transform_2, window_bounds = array<i64: 1, 16, 1024>}, {transform_indices = @transform_3, window_bounds = array<i64: 1, 16, 1280>}, {pipeline_mode = #tpu.pipeline_mode<synchronous>, transform_indices = @transform_4, window_bounds = array<i64: 1024, 512>}, {pipeline_mode = #tpu.pipeline_mode<synchronous>, transform_indices = @transform_5, window_bounds = array<i64: 1280, 512>}, {pipeline_mode = #tpu.pipeline_mode<synchronous>, transform_indices = @transform_6, window_bounds = array<i64: 256, 512>}, {pipeline_mode = #tpu.pipeline_mode<synchronous>, transform_indices = @transform_7, window_bounds = array<i64: 256, 512>}, {pipeline_mode = #tpu.pipeline_mode<synchronous>, transform_indices = @transform_8, window_bounds = array<i64: 256, 256>}, {pipeline_mode = #tpu.pipeline_mode<synchronous>, transform_indices = @transform_9, window_bounds = array<i64: 256, 256>}, {pipeline_mode = #tpu.pipeline_mode<synchronous>, transform_indices = @transform_10, window_bounds = array<i64: 11, 256>}, {transform_indices = @transform_11, window_bounds = array<i64: 1, 32, 1>}]} {
    %c0 = arith.constant 0 : index
    %c0_0 = arith.constant 0 : index
    %0 = vector.load %arg11[%c0, %c0_0] : memref<11x256xf32, #tpu.memory_space<vmem>>, vector<1x256xf32>
    %c1 = arith.constant 1 : index
    %c0_1 = arith.constant 0 : index
    %1 = vector.load %arg11[%c1, %c0_1] : memref<11x256xf32, #tpu.memory_space<vmem>>, vector<1x256xf32>
    %c2 = arith.constant 2 : index
    %c0_2 = arith.constant 0 : index
    %2 = vector.load %arg11[%c2, %c0_2] : memref<11x256xf32, #tpu.memory_space<vmem>>, vector<1x256xf32>
    %c3 = arith.constant 3 : index
    %c0_3 = arith.constant 0 : index
    %3 = vector.load %arg11[%c3, %c0_3] : memref<11x256xf32, #tpu.memory_space<vmem>>, vector<1x256xf32>
    %c4 = arith.constant 4 : index
    %c0_4 = arith.constant 0 : index
    %4 = vector.load %arg11[%c4, %c0_4] : memref<11x256xf32, #tpu.memory_space<vmem>>, vector<1x256xf32>
    %c5 = arith.constant 5 : index
    %c0_5 = arith.constant 0 : index
    %5 = vector.load %arg11[%c5, %c0_5] : memref<11x256xf32, #tpu.memory_space<vmem>>, vector<1x256xf32>
    %c6 = arith.constant 6 : index
    %c0_6 = arith.constant 0 : index
    %6 = vector.load %arg11[%c6, %c0_6] : memref<11x256xf32, #tpu.memory_space<vmem>>, vector<1x256xf32>
    %c7 = arith.constant 7 : index
    %c0_7 = arith.constant 0 : index
    %7 = vector.load %arg11[%c7, %c0_7] : memref<11x256xf32, #tpu.memory_space<vmem>>, vector<1x256xf32>
    %c8 = arith.constant 8 : index
    %c0_8 = arith.constant 0 : index
    %8 = vector.load %arg11[%c8, %c0_8] : memref<11x256xf32, #tpu.memory_space<vmem>>, vector<1x256xf32>
    %c9 = arith.constant 9 : index
    %c0_9 = arith.constant 0 : index
    %9 = vector.load %arg11[%c9, %c0_9] : memref<11x256xf32, #tpu.memory_space<vmem>>, vector<1x256xf32>
    %c10 = arith.constant 10 : index
    %c0_10 = arith.constant 0 : index
    %10 = vector.load %arg11[%c10, %c0_10] : memref<11x256xf32, #tpu.memory_space<vmem>>, vector<1x1xf32>
    %c0_11 = arith.constant 0 : index
    %c0_12 = arith.constant 0 : index
    %c0_13 = arith.constant 0 : index
    %11 = vector.load %arg1[%c0_11, %c0_12, %c0_13] : memref<1x32x2xi32, #tpu.memory_space<vmem>>, vector<1x32x1xi32>
    %12 = vector.shape_cast %11 : vector<1x32x1xi32> to vector<32x1xi32>
    %c0_14 = arith.constant 0 : index
    %c0_15 = arith.constant 0 : index
    %c1_16 = arith.constant 1 : index
    %13 = vector.load %arg1[%c0_14, %c0_15, %c1_16] : memref<1x32x2xi32, #tpu.memory_space<vmem>>, vector<1x32x1xi32>
    %14 = vector.shape_cast %13 : vector<1x32x1xi32> to vector<32x1xi32>
    %c0_17 = arith.constant 0 : index
    %c0_18 = arith.constant 0 : index
    %c0_19 = arith.constant 0 : index
    %15 = vector.load %arg2[%c0_17, %c0_18, %c0_19] : memref<1x2x32xi32, #tpu.memory_space<vmem>>, vector<1x1x32xi32>
    %16 = vector.shape_cast %15 : vector<1x1x32xi32> to vector<1x32xi32>
    %c0_20 = arith.constant 0 : index
    %c1_21 = arith.constant 1 : index
    %c0_22 = arith.constant 0 : index
    %17 = vector.load %arg2[%c0_20, %c1_21, %c0_22] : memref<1x2x32xi32, #tpu.memory_space<vmem>>, vector<1x1x32xi32>
    %18 = vector.shape_cast %17 : vector<1x1x32xi32> to vector<1x32xi32>
    %19 = tpu.iota {dimensions = array<i32: 1>} : vector<32x16xi32>
    %20 = vector.broadcast %12 : vector<32x1xi32> to vector<32x16xi32>
    %21 = arith.cmpi eq, %19, %20 : vector<32x16xi32>
    %22 = arith.extui %21 : vector<32x16xi1> to vector<32x16xi32>
    %23 = arith.sitofp %22 : vector<32x16xi32> to vector<32x16xf32>
    %24 = arith.truncf %23 : vector<32x16xf32> to vector<32x16xbf16>
    %25 = tpu.iota {dimensions = array<i32: 1>} : vector<32x16xi32>
    %26 = vector.broadcast %14 : vector<32x1xi32> to vector<32x16xi32>
    %27 = arith.cmpi eq, %25, %26 : vector<32x16xi32>
    %28 = arith.extui %27 : vector<32x16xi1> to vector<32x16xi32>
    %29 = arith.sitofp %28 : vector<32x16xi32> to vector<32x16xf32>
    %30 = arith.truncf %29 : vector<32x16xf32> to vector<32x16xbf16>
    %31 = tpu.iota {dimensions = array<i32: 0>} : vector<16x32xi32>
    %32 = vector.broadcast %16 : vector<1x32xi32> to vector<16x32xi32>
    %33 = arith.cmpi eq, %31, %32 : vector<16x32xi32>
    %34 = arith.extui %33 : vector<16x32xi1> to vector<16x32xi32>
    %35 = arith.sitofp %34 : vector<16x32xi32> to vector<16x32xf32>
    %36 = arith.truncf %35 : vector<16x32xf32> to vector<16x32xbf16>
    %37 = tpu.iota {dimensions = array<i32: 0>} : vector<16x32xi32>
    %38 = vector.broadcast %18 : vector<1x32xi32> to vector<16x32xi32>
    %39 = arith.cmpi eq, %37, %38 : vector<16x32xi32>
    %40 = arith.extui %39 : vector<16x32xi1> to vector<16x32xi32>
    %41 = arith.sitofp %40 : vector<16x32xi32> to vector<16x32xf32>
    %42 = arith.truncf %41 : vector<16x32xf32> to vector<16x32xbf16>
    %cst = arith.constant dense<0.000000e+00> : vector<16x16xf32>
    %43 = tpu.matmul %42, %24, %cst {dimension_numbers = #tpu.dot_dimension_numbers<[1], [0], [0], [1], [0, 0, 1, 1], [], []>} : vector<16x32xbf16>, vector<32x16xbf16>, vector<16x16xf32> -> vector<16x16xf32>
    %cst_23 = arith.constant dense<0.000000e+00> : vector<16x16xf32>
    %44 = tpu.matmul %36, %30, %cst_23 {dimension_numbers = #tpu.dot_dimension_numbers<[1], [0], [0], [1], [0, 0, 1, 1], [], []>} : vector<16x32xbf16>, vector<32x16xbf16>, vector<16x16xf32> -> vector<16x16xf32>
    %cst_24 = arith.constant dense<0.000000e+00> : vector<16xf32>
    %45 = vector.multi_reduction <add>, %43, %cst_24 [1] : vector<16x16xf32> to vector<16xf32>
    %46 = vector.shape_cast %45 : vector<16xf32> to vector<16x1xf32>
    %cst_25 = arith.constant 1.000000e+00 : f32
    %47 = vector.broadcast %cst_25 : f32 to vector<16x1xf32>
    %48 = arith.maximumf %46, %47 : vector<16x1xf32>
    %cst_26 = arith.constant 1.000000e+00 : f32
    %49 = vector.broadcast %cst_26 : f32 to vector<16x1xf32>
    %50 = arith.divf %49, %48 : vector<16x1xf32>
    %cst_27 = arith.constant dense<0.000000e+00> : vector<16xf32>
    %51 = vector.multi_reduction <add>, %44, %cst_27 [1] : vector<16x16xf32> to vector<16xf32>
    %52 = vector.shape_cast %51 : vector<16xf32> to vector<16x1xf32>
    %cst_28 = arith.constant 1.000000e+00 : f32
    %53 = vector.broadcast %cst_28 : f32 to vector<16x1xf32>
    %54 = arith.maximumf %52, %53 : vector<16x1xf32>
    %cst_29 = arith.constant 1.000000e+00 : f32
    %55 = vector.broadcast %cst_29 : f32 to vector<16x1xf32>
    %56 = arith.divf %55, %54 : vector<16x1xf32>
    %57 = arith.truncf %43 : vector<16x16xf32> to vector<16x16xbf16>
    %58 = arith.truncf %44 : vector<16x16xf32> to vector<16x16xbf16>
    %c0_30 = arith.constant 0 : index
    %c0_31 = arith.constant 0 : index
    %c0_32 = arith.constant 0 : index
    %59 = vector.load %arg3[%c0_30, %c0_31, %c0_32] : memref<1x16x1024xbf16, #tpu.memory_space<vmem>>, vector<1x16x1024xbf16>
    %60 = vector.shape_cast %59 : vector<1x16x1024xbf16> to vector<16x1024xbf16>
    %c0_33 = arith.constant 0 : index
    %c0_34 = arith.constant 0 : index
    %c0_35 = arith.constant 0 : index
    %61 = vector.load %arg4[%c0_33, %c0_34, %c0_35] : memref<1x16x1280xbf16, #tpu.memory_space<vmem>>, vector<1x16x1280xbf16>
    %62 = vector.shape_cast %61 : vector<1x16x1280xbf16> to vector<16x1280xbf16>
    %c0_36 = arith.constant 0 : index
    %c0_37 = arith.constant 0 : index
    %63 = vector.load %arg5[%c0_36, %c0_37] : memref<1024x512xbf16, #tpu.memory_space<vmem>>, vector<1024x512xbf16>
    %cst_38 = arith.constant dense<0.000000e+00> : vector<16x512xf32>
    %64 = tpu.matmul %60, %63, %cst_38 {dimension_numbers = #tpu.dot_dimension_numbers<[1], [0], [0], [1], [0, 0, 1, 1], [], []>} : vector<16x1024xbf16>, vector<1024x512xbf16>, vector<16x512xf32> -> vector<16x512xf32>
    %c0_39 = arith.constant 0 : index
    %c0_40 = arith.constant 0 : index
    %65 = vector.load %arg6[%c0_39, %c0_40] : memref<1280x512xbf16, #tpu.memory_space<vmem>>, vector<1280x512xbf16>
    %cst_41 = arith.constant dense<0.000000e+00> : vector<16x512xf32>
    %66 = tpu.matmul %62, %65, %cst_41 {dimension_numbers = #tpu.dot_dimension_numbers<[1], [0], [0], [1], [0, 0, 1, 1], [], []>} : vector<16x1280xbf16>, vector<1280x512xbf16>, vector<16x512xf32> -> vector<16x512xf32>
    %67 = vector.extract_strided_slice %64 {offsets = [0, 0], sizes = [16, 256], strides = [1, 1]} : vector<16x512xf32> to vector<16x256xf32>
    %68 = vector.extract_strided_slice %64 {offsets = [0, 256], sizes = [16, 256], strides = [1, 1]} : vector<16x512xf32> to vector<16x256xf32>
    %69 = vector.extract_strided_slice %66 {offsets = [0, 0], sizes = [16, 256], strides = [1, 1]} : vector<16x512xf32> to vector<16x256xf32>
    %70 = vector.extract_strided_slice %66 {offsets = [0, 256], sizes = [16, 256], strides = [1, 1]} : vector<16x512xf32> to vector<16x256xf32>
    %71 = arith.truncf %67 : vector<16x256xf32> to vector<16x256xbf16>
    %cst_42 = arith.constant dense<0.000000e+00> : vector<16x256xf32>
    %72 = tpu.matmul %57, %71, %cst_42 {dimension_numbers = #tpu.dot_dimension_numbers<[1], [0], [0], [1], [0, 0, 1, 1], [], []>} : vector<16x16xbf16>, vector<16x256xbf16>, vector<16x256xf32> -> vector<16x256xf32>
    %73 = vector.broadcast %50 : vector<16x1xf32> to vector<16x256xf32>
    %74 = arith.mulf %72, %73 : vector<16x256xf32>
    %75 = arith.truncf %69 : vector<16x256xf32> to vector<16x256xbf16>
    %cst_43 = arith.constant dense<0.000000e+00> : vector<16x256xf32>
    %76 = tpu.matmul %58, %75, %cst_43 {dimension_numbers = #tpu.dot_dimension_numbers<[1], [0], [0], [1], [0, 0, 1, 1], [], []>} : vector<16x16xbf16>, vector<16x256xbf16>, vector<16x256xf32> -> vector<16x256xf32>
    %77 = vector.broadcast %56 : vector<16x1xf32> to vector<16x256xf32>
    %78 = arith.mulf %76, %77 : vector<16x256xf32>
    %79 = vector.broadcast %0 : vector<1x256xf32> to vector<16x256xf32>
    %80 = arith.addf %74, %79 : vector<16x256xf32>
    %81 = arith.addf %80, %70 : vector<16x256xf32>
    %82 = vector.broadcast %1 : vector<1x256xf32> to vector<16x256xf32>
    %83 = arith.addf %78, %82 : vector<16x256xf32>
    %84 = arith.addf %83, %68 : vector<16x256xf32>
    %cst_44 = arith.constant 0.000000e+00 : f32
    %85 = vector.broadcast %cst_44 : f32 to vector<16x256xf32>
    %86 = arith.maximumf %84, %85 : vector<16x256xf32>
    %cst_45 = arith.constant dense<0.000000e+00> : vector<256xf32>
    %87 = vector.multi_reduction <add>, %86, %cst_45 [0] : vector<16x256xf32> to vector<256xf32>
    %88 = vector.shape_cast %87 : vector<256xf32> to vector<1x256xf32>
    %cst_46 = arith.constant 1.600000e+01 : f32
    %89 = vector.broadcast %cst_46 : f32 to vector<1x256xf32>
    %90 = arith.divf %88, %89 : vector<1x256xf32>
    %91 = vector.broadcast %90 : vector<1x256xf32> to vector<16x256xf32>
    %92 = arith.subf %86, %91 : vector<16x256xf32>
    %93 = vector.broadcast %90 : vector<1x256xf32> to vector<16x256xf32>
    %94 = arith.subf %86, %93 : vector<16x256xf32>
    %95 = arith.mulf %92, %94 : vector<16x256xf32>
    %cst_47 = arith.constant dense<0.000000e+00> : vector<256xf32>
    %96 = vector.multi_reduction <add>, %95, %cst_47 [0] : vector<16x256xf32> to vector<256xf32>
    %97 = vector.shape_cast %96 : vector<256xf32> to vector<1x256xf32>
    %cst_48 = arith.constant 1.600000e+01 : f32
    %98 = vector.broadcast %cst_48 : f32 to vector<1x256xf32>
    %99 = arith.divf %97, %98 : vector<1x256xf32>
    %100 = vector.broadcast %90 : vector<1x256xf32> to vector<16x256xf32>
    %101 = arith.subf %86, %100 : vector<16x256xf32>
    %cst_49 = arith.constant 9.99999974E-6 : f32
    %102 = vector.broadcast %cst_49 : f32 to vector<1x256xf32>
    %103 = arith.addf %99, %102 : vector<1x256xf32>
    %104 = math.rsqrt %103 : vector<1x256xf32>
    %105 = vector.broadcast %104 : vector<1x256xf32> to vector<16x256xf32>
    %106 = arith.mulf %101, %105 : vector<16x256xf32>
    %107 = vector.broadcast %2 : vector<1x256xf32> to vector<16x256xf32>
    %108 = arith.mulf %106, %107 : vector<16x256xf32>
    %109 = vector.broadcast %3 : vector<1x256xf32> to vector<16x256xf32>
    %110 = arith.addf %108, %109 : vector<16x256xf32>
    %cst_50 = arith.constant 0.000000e+00 : f32
    %111 = vector.broadcast %cst_50 : f32 to vector<16x256xf32>
    %112 = arith.maximumf %81, %111 : vector<16x256xf32>
    %cst_51 = arith.constant dense<0.000000e+00> : vector<256xf32>
    %113 = vector.multi_reduction <add>, %112, %cst_51 [0] : vector<16x256xf32> to vector<256xf32>
    %114 = vector.shape_cast %113 : vector<256xf32> to vector<1x256xf32>
    %cst_52 = arith.constant 1.600000e+01 : f32
    %115 = vector.broadcast %cst_52 : f32 to vector<1x256xf32>
    %116 = arith.divf %114, %115 : vector<1x256xf32>
    %117 = vector.broadcast %116 : vector<1x256xf32> to vector<16x256xf32>
    %118 = arith.subf %112, %117 : vector<16x256xf32>
    %119 = vector.broadcast %116 : vector<1x256xf32> to vector<16x256xf32>
    %120 = arith.subf %112, %119 : vector<16x256xf32>
    %121 = arith.mulf %118, %120 : vector<16x256xf32>
    %cst_53 = arith.constant dense<0.000000e+00> : vector<256xf32>
    %122 = vector.multi_reduction <add>, %121, %cst_53 [0] : vector<16x256xf32> to vector<256xf32>
    %123 = vector.shape_cast %122 : vector<256xf32> to vector<1x256xf32>
    %cst_54 = arith.constant 1.600000e+01 : f32
    %124 = vector.broadcast %cst_54 : f32 to vector<1x256xf32>
    %125 = arith.divf %123, %124 : vector<1x256xf32>
    %126 = vector.broadcast %116 : vector<1x256xf32> to vector<16x256xf32>
    %127 = arith.subf %112, %126 : vector<16x256xf32>
    %cst_55 = arith.constant 9.99999974E-6 : f32
    %128 = vector.broadcast %cst_55 : f32 to vector<1x256xf32>
    %129 = arith.addf %125, %128 : vector<1x256xf32>
    %130 = math.rsqrt %129 : vector<1x256xf32>
    %131 = vector.broadcast %130 : vector<1x256xf32> to vector<16x256xf32>
    %132 = arith.mulf %127, %131 : vector<16x256xf32>
    %133 = vector.broadcast %2 : vector<1x256xf32> to vector<16x256xf32>
    %134 = arith.mulf %132, %133 : vector<16x256xf32>
    %135 = vector.broadcast %3 : vector<1x256xf32> to vector<16x256xf32>
    %136 = arith.addf %134, %135 : vector<16x256xf32>
    %137 = arith.truncf %110 : vector<16x256xf32> to vector<16x256xbf16>
    %138 = arith.truncf %136 : vector<16x256xf32> to vector<16x256xbf16>
    %c0_56 = arith.constant 0 : index
    %c0_57 = arith.constant 0 : index
    %139 = vector.load %arg7[%c0_56, %c0_57] : memref<256x512xbf16, #tpu.memory_space<vmem>>, vector<256x512xbf16>
    %cst_58 = arith.constant dense<0.000000e+00> : vector<16x512xf32>
    %140 = tpu.matmul %137, %139, %cst_58 {dimension_numbers = #tpu.dot_dimension_numbers<[1], [0], [0], [1], [0, 0, 1, 1], [], []>} : vector<16x256xbf16>, vector<256x512xbf16>, vector<16x512xf32> -> vector<16x512xf32>
    %c0_59 = arith.constant 0 : index
    %c0_60 = arith.constant 0 : index
    %141 = vector.load %arg8[%c0_59, %c0_60] : memref<256x512xbf16, #tpu.memory_space<vmem>>, vector<256x512xbf16>
    %cst_61 = arith.constant dense<0.000000e+00> : vector<16x512xf32>
    %142 = tpu.matmul %138, %141, %cst_61 {dimension_numbers = #tpu.dot_dimension_numbers<[1], [0], [0], [1], [0, 0, 1, 1], [], []>} : vector<16x256xbf16>, vector<256x512xbf16>, vector<16x512xf32> -> vector<16x512xf32>
    %143 = vector.extract_strided_slice %140 {offsets = [0, 0], sizes = [16, 256], strides = [1, 1]} : vector<16x512xf32> to vector<16x256xf32>
    %144 = vector.extract_strided_slice %140 {offsets = [0, 256], sizes = [16, 256], strides = [1, 1]} : vector<16x512xf32> to vector<16x256xf32>
    %145 = vector.extract_strided_slice %142 {offsets = [0, 0], sizes = [16, 256], strides = [1, 1]} : vector<16x512xf32> to vector<16x256xf32>
    %146 = vector.extract_strided_slice %142 {offsets = [0, 256], sizes = [16, 256], strides = [1, 1]} : vector<16x512xf32> to vector<16x256xf32>
    %147 = arith.truncf %143 : vector<16x256xf32> to vector<16x256xbf16>
    %cst_62 = arith.constant dense<0.000000e+00> : vector<16x256xf32>
    %148 = tpu.matmul %57, %147, %cst_62 {dimension_numbers = #tpu.dot_dimension_numbers<[1], [0], [0], [1], [0, 0, 1, 1], [], []>} : vector<16x16xbf16>, vector<16x256xbf16>, vector<16x256xf32> -> vector<16x256xf32>
    %149 = vector.broadcast %50 : vector<16x1xf32> to vector<16x256xf32>
    %150 = arith.mulf %148, %149 : vector<16x256xf32>
    %151 = arith.truncf %145 : vector<16x256xf32> to vector<16x256xbf16>
    %cst_63 = arith.constant dense<0.000000e+00> : vector<16x256xf32>
    %152 = tpu.matmul %58, %151, %cst_63 {dimension_numbers = #tpu.dot_dimension_numbers<[1], [0], [0], [1], [0, 0, 1, 1], [], []>} : vector<16x16xbf16>, vector<16x256xbf16>, vector<16x256xf32> -> vector<16x256xf32>
    %153 = vector.broadcast %56 : vector<16x1xf32> to vector<16x256xf32>
    %154 = arith.mulf %152, %153 : vector<16x256xf32>
    %155 = vector.broadcast %4 : vector<1x256xf32> to vector<16x256xf32>
    %156 = arith.addf %150, %155 : vector<16x256xf32>
    %157 = arith.addf %156, %146 : vector<16x256xf32>
    %158 = vector.broadcast %5 : vector<1x256xf32> to vector<16x256xf32>
    %159 = arith.addf %154, %158 : vector<16x256xf32>
    %160 = arith.addf %159, %144 : vector<16x256xf32>
    %cst_64 = arith.constant 0.000000e+00 : f32
    %161 = vector.broadcast %cst_64 : f32 to vector<16x256xf32>
    %162 = arith.maximumf %160, %161 : vector<16x256xf32>
    %cst_65 = arith.constant dense<0.000000e+00> : vector<256xf32>
    %163 = vector.multi_reduction <add>, %162, %cst_65 [0] : vector<16x256xf32> to vector<256xf32>
    %164 = vector.shape_cast %163 : vector<256xf32> to vector<1x256xf32>
    %cst_66 = arith.constant 1.600000e+01 : f32
    %165 = vector.broadcast %cst_66 : f32 to vector<1x256xf32>
    %166 = arith.divf %164, %165 : vector<1x256xf32>
    %167 = vector.broadcast %166 : vector<1x256xf32> to vector<16x256xf32>
    %168 = arith.subf %162, %167 : vector<16x256xf32>
    %169 = vector.broadcast %166 : vector<1x256xf32> to vector<16x256xf32>
    %170 = arith.subf %162, %169 : vector<16x256xf32>
    %171 = arith.mulf %168, %170 : vector<16x256xf32>
    %cst_67 = arith.constant dense<0.000000e+00> : vector<256xf32>
    %172 = vector.multi_reduction <add>, %171, %cst_67 [0] : vector<16x256xf32> to vector<256xf32>
    %173 = vector.shape_cast %172 : vector<256xf32> to vector<1x256xf32>
    %cst_68 = arith.constant 1.600000e+01 : f32
    %174 = vector.broadcast %cst_68 : f32 to vector<1x256xf32>
    %175 = arith.divf %173, %174 : vector<1x256xf32>
    %176 = vector.broadcast %166 : vector<1x256xf32> to vector<16x256xf32>
    %177 = arith.subf %162, %176 : vector<16x256xf32>
    %cst_69 = arith.constant 9.99999974E-6 : f32
    %178 = vector.broadcast %cst_69 : f32 to vector<1x256xf32>
    %179 = arith.addf %175, %178 : vector<1x256xf32>
    %180 = math.rsqrt %179 : vector<1x256xf32>
    %181 = vector.broadcast %180 : vector<1x256xf32> to vector<16x256xf32>
    %182 = arith.mulf %177, %181 : vector<16x256xf32>
    %183 = vector.broadcast %6 : vector<1x256xf32> to vector<16x256xf32>
    %184 = arith.mulf %182, %183 : vector<16x256xf32>
    %185 = vector.broadcast %7 : vector<1x256xf32> to vector<16x256xf32>
    %186 = arith.addf %184, %185 : vector<16x256xf32>
    %cst_70 = arith.constant 0.000000e+00 : f32
    %187 = vector.broadcast %cst_70 : f32 to vector<16x256xf32>
    %188 = arith.maximumf %157, %187 : vector<16x256xf32>
    %cst_71 = arith.constant dense<0.000000e+00> : vector<256xf32>
    %189 = vector.multi_reduction <add>, %188, %cst_71 [0] : vector<16x256xf32> to vector<256xf32>
    %190 = vector.shape_cast %189 : vector<256xf32> to vector<1x256xf32>
    %cst_72 = arith.constant 1.600000e+01 : f32
    %191 = vector.broadcast %cst_72 : f32 to vector<1x256xf32>
    %192 = arith.divf %190, %191 : vector<1x256xf32>
    %193 = vector.broadcast %192 : vector<1x256xf32> to vector<16x256xf32>
    %194 = arith.subf %188, %193 : vector<16x256xf32>
    %195 = vector.broadcast %192 : vector<1x256xf32> to vector<16x256xf32>
    %196 = arith.subf %188, %195 : vector<16x256xf32>
    %197 = arith.mulf %194, %196 : vector<16x256xf32>
    %cst_73 = arith.constant dense<0.000000e+00> : vector<256xf32>
    %198 = vector.multi_reduction <add>, %197, %cst_73 [0] : vector<16x256xf32> to vector<256xf32>
    %199 = vector.shape_cast %198 : vector<256xf32> to vector<1x256xf32>
    %cst_74 = arith.constant 1.600000e+01 : f32
    %200 = vector.broadcast %cst_74 : f32 to vector<1x256xf32>
    %201 = arith.divf %199, %200 : vector<1x256xf32>
    %202 = vector.broadcast %192 : vector<1x256xf32> to vector<16x256xf32>
    %203 = arith.subf %188, %202 : vector<16x256xf32>
    %cst_75 = arith.constant 9.99999974E-6 : f32
    %204 = vector.broadcast %cst_75 : f32 to vector<1x256xf32>
    %205 = arith.addf %201, %204 : vector<1x256xf32>
    %206 = math.rsqrt %205 : vector<1x256xf32>
    %207 = vector.broadcast %206 : vector<1x256xf32> to vector<16x256xf32>
    %208 = arith.mulf %203, %207 : vector<16x256xf32>
    %209 = vector.broadcast %6 : vector<1x256xf32> to vector<16x256xf32>
    %210 = arith.mulf %208, %209 : vector<16x256xf32>
    %211 = vector.broadcast %7 : vector<1x256xf32> to vector<16x256xf32>
    %212 = arith.addf %210, %211 : vector<16x256xf32>
    %213 = arith.truncf %186 : vector<16x256xf32> to vector<16x256xbf16>
    %c0_76 = arith.constant 0 : index
    %c0_77 = arith.constant 0 : index
    %214 = vector.load %arg9[%c0_76, %c0_77] : memref<256x256xbf16, #tpu.memory_space<vmem>>, vector<256x256xbf16>
    %cst_78 = arith.constant dense<0.000000e+00> : vector<16x256xf32>
    %215 = tpu.matmul %213, %214, %cst_78 {dimension_numbers = #tpu.dot_dimension_numbers<[1], [0], [0], [1], [0, 0, 1, 1], [], []>} : vector<16x256xbf16>, vector<256x256xbf16>, vector<16x256xf32> -> vector<16x256xf32>
    %216 = arith.truncf %212 : vector<16x256xf32> to vector<16x256xbf16>
    %c0_79 = arith.constant 0 : index
    %c0_80 = arith.constant 0 : index
    %217 = vector.load %arg10[%c0_79, %c0_80] : memref<256x256xbf16, #tpu.memory_space<vmem>>, vector<256x256xbf16>
    %cst_81 = arith.constant dense<0.000000e+00> : vector<16x256xf32>
    %218 = tpu.matmul %216, %217, %cst_81 {dimension_numbers = #tpu.dot_dimension_numbers<[1], [0], [0], [1], [0, 0, 1, 1], [], []>} : vector<16x256xbf16>, vector<256x256xbf16>, vector<16x256xf32> -> vector<16x256xf32>
    %219 = arith.truncf %215 : vector<16x256xf32> to vector<16x256xbf16>
    %cst_82 = arith.constant dense<0.000000e+00> : vector<32x256xf32>
    %220 = tpu.matmul %24, %219, %cst_82 {dimension_numbers = #tpu.dot_dimension_numbers<[1], [0], [0], [1], [0, 0, 1, 1], [], []>} : vector<32x16xbf16>, vector<16x256xbf16>, vector<32x256xf32> -> vector<32x256xf32>
    %221 = arith.truncf %218 : vector<16x256xf32> to vector<16x256xbf16>
    %cst_83 = arith.constant dense<0.000000e+00> : vector<32x256xf32>
    %222 = tpu.matmul %30, %221, %cst_83 {dimension_numbers = #tpu.dot_dimension_numbers<[1], [0], [0], [1], [0, 0, 1, 1], [], []>} : vector<32x16xbf16>, vector<16x256xbf16>, vector<32x256xf32> -> vector<32x256xf32>
    %223 = arith.addf %220, %222 : vector<32x256xf32>
    %224 = vector.broadcast %8 : vector<1x256xf32> to vector<32x256xf32>
    %225 = arith.addf %223, %224 : vector<32x256xf32>
    %cst_84 = arith.constant 0.000000e+00 : f32
    %226 = vector.broadcast %cst_84 : f32 to vector<32x256xf32>
    %227 = arith.maximumf %225, %226 : vector<32x256xf32>
    %228 = vector.broadcast %9 : vector<1x256xf32> to vector<32x256xf32>
    %229 = arith.mulf %227, %228 : vector<32x256xf32>
    %cst_85 = arith.constant dense<0.000000e+00> : vector<32xf32>
    %230 = vector.multi_reduction <add>, %229, %cst_85 [1] : vector<32x256xf32> to vector<32xf32>
    %231 = vector.shape_cast %230 : vector<32xf32> to vector<32x1xf32>
    %232 = vector.broadcast %10 : vector<1x1xf32> to vector<32x1xf32>
    %233 = arith.addf %231, %232 : vector<32x1xf32>
    %c0_86 = arith.constant 0 : index
    %c0_87 = arith.constant 0 : index
    %c0_88 = arith.constant 0 : index
    %234 = vector.load %arg12[%c0_86, %c0_87, %c0_88] : memref<1x32x1xf32, #tpu.memory_space<vmem>>, vector<1x32x1xf32>
    %235 = vector.shape_cast %234 : vector<1x32x1xf32> to vector<32x1xf32>
    %236 = vector.shape_cast %233 : vector<32x1xf32> to vector<1x32x1xf32>
    tpu.vector_store %arg12[%c0_86, %c0_87, %c0_88], %236 {strides = array<i32>} : memref<1x32x1xf32, #tpu.memory_space<vmem>>, vector<1x32x1xf32>,
    return
  }
  func.func @transform_0(%arg0: i32) -> (i32, i32, i32) {
    %c0_i32 = arith.constant 0 : i32
    %c0_i32_0 = arith.constant 0 : i32
    %c0_i32_1 = arith.constant 0 : i32
    return %arg0, %c0_i32, %c0_i32_0 : i32, i32, i32
  }
  func.func @transform_1(%arg0: i32) -> (i32, i32, i32) {
    %c0_i32 = arith.constant 0 : i32
    %c0_i32_0 = arith.constant 0 : i32
    %c0_i32_1 = arith.constant 0 : i32
    return %arg0, %c0_i32, %c0_i32_0 : i32, i32, i32
  }
  func.func @transform_2(%arg0: i32) -> (i32, i32, i32) {
    %c0_i32 = arith.constant 0 : i32
    %c0_i32_0 = arith.constant 0 : i32
    %c0_i32_1 = arith.constant 0 : i32
    return %arg0, %c0_i32, %c0_i32_0 : i32, i32, i32
  }
  func.func @transform_3(%arg0: i32) -> (i32, i32, i32) {
    %c0_i32 = arith.constant 0 : i32
    %c0_i32_0 = arith.constant 0 : i32
    %c0_i32_1 = arith.constant 0 : i32
    return %arg0, %c0_i32, %c0_i32_0 : i32, i32, i32
  }
  func.func @transform_4(%arg0: i32) -> (i32, i32) {
    %c0_i32 = arith.constant 0 : i32
    %c0_i32_0 = arith.constant 0 : i32
    %c0_i32_1 = arith.constant 0 : i32
    return %c0_i32, %c0_i32_0 : i32, i32
  }
  func.func @transform_5(%arg0: i32) -> (i32, i32) {
    %c0_i32 = arith.constant 0 : i32
    %c0_i32_0 = arith.constant 0 : i32
    %c0_i32_1 = arith.constant 0 : i32
    return %c0_i32, %c0_i32_0 : i32, i32
  }
  func.func @transform_6(%arg0: i32) -> (i32, i32) {
    %c0_i32 = arith.constant 0 : i32
    %c0_i32_0 = arith.constant 0 : i32
    %c0_i32_1 = arith.constant 0 : i32
    return %c0_i32, %c0_i32_0 : i32, i32
  }
  func.func @transform_7(%arg0: i32) -> (i32, i32) {
    %c0_i32 = arith.constant 0 : i32
    %c0_i32_0 = arith.constant 0 : i32
    %c0_i32_1 = arith.constant 0 : i32
    return %c0_i32, %c0_i32_0 : i32, i32
  }
  func.func @transform_8(%arg0: i32) -> (i32, i32) {
    %c0_i32 = arith.constant 0 : i32
    %c0_i32_0 = arith.constant 0 : i32
    %c0_i32_1 = arith.constant 0 : i32
    return %c0_i32, %c0_i32_0 : i32, i32
  }
  func.func @transform_9(%arg0: i32) -> (i32, i32) {
    %c0_i32 = arith.constant 0 : i32
    %c0_i32_0 = arith.constant 0 : i32
    %c0_i32_1 = arith.constant 0 : i32
    return %c0_i32, %c0_i32_0 : i32, i32
  }
  func.func @transform_10(%arg0: i32) -> (i32, i32) {
    %c0_i32 = arith.constant 0 : i32
    %c0_i32_0 = arith.constant 0 : i32
    %c0_i32_1 = arith.constant 0 : i32
    return %c0_i32, %c0_i32_0 : i32, i32
  }
  func.func @transform_11(%arg0: i32) -> (i32, i32, i32) {
    %c0_i32 = arith.constant 0 : i32
    %c0_i32_0 = arith.constant 0 : i32
    %c0_i32_1 = arith.constant 0 : i32
    return %arg0, %c0_i32, %c0_i32_0 : i32, i32, i32
  }
}

</mosaic_0001>

<llo_original>
// kernel: hetero_gnn_forward.1
$region0: #{hetero_gnn_forward.1}
  #allocation0 [shape = 'u32[]', space=smem, size = 0x4, offset = 0x4, fixed_abs, tag = 'smem constant byte address 0x4 - core index']
  #allocation1 [shape = 'u32[144,128]{1,0:T(1,128)}', space=vmem, size = 0x12000, scoped, tag = 'internal scratch']
  %s0 = inlined_call_operand.vmem [shape: s32[4,32,2], index: 0, kind: input, shape index: {}]
  %s1 = inlined_call_operand.hbm [shape: s32[4,2,32], index: 1, kind: input, shape index: {}]
  %s2 = inlined_call_operand.hbm [shape: bf16[4,16,1024], index: 2, kind: input, shape index: {}]
  %s3 = inlined_call_operand.hbm [shape: bf16[4,16,1280], index: 3, kind: input, shape index: {}]
  %s4 = inlined_call_operand.hbm [shape: bf16[1024,512], index: 4, kind: input, shape index: {}]
  %s5 = inlined_call_operand.hbm [shape: bf16[1280,512], index: 5, kind: input, shape index: {}]
  %s6 = inlined_call_operand.hbm [shape: bf16[256,512], index: 6, kind: input, shape index: {}]
  %s7 = inlined_call_operand.hbm [shape: bf16[256,512], index: 7, kind: input, shape index: {}]
  %s8 = inlined_call_operand.hbm [shape: bf16[256,256], index: 8, kind: input, shape index: {}]
  %s9 = inlined_call_operand.hbm [shape: bf16[256,256], index: 9, kind: input, shape index: {}]
  %s10 = inlined_call_operand.hbm [shape: f32[11,256], index: 10, kind: input, shape index: {}]
  %s11 = inlined_call_operand.vmem [shape: f32[4,32,1], index: 11, kind: output, shape index: {}]
  %s12 = sld [smem:[#allocation0]]
  $region117: #{hetero_gnn_forward.1} parent=0
    _
  %s14 = ssub.s32 1, %s12
  %s15 = scalar_select 0, %s14, %s12
  $region1: #{hetero_gnn_forward.1} parent=0
    #allocation2 [shape = 'u8[2048]{0}', space=vmem, size = 0x800, scoped, tag = 'input window, operand 1']
    #allocation3 [shape = 's32[2]{0}', space=sflag, size = 0x8, scoped, tag = 'scoped memory for hetero_gnn_forward.1']
    #allocation4 [shape = 'u8[65536]{0}', space=vmem, size = 0x10000, scoped, tag = 'input window, operand 2']
    #allocation5 [shape = 's32[2]{0}', space=sflag, size = 0x8, scoped, tag = 'scoped memory for hetero_gnn_forward.1']
    #allocation6 [shape = 'u8[81920]{0}', space=vmem, size = 0x14000, scoped, tag = 'input window, operand 3']
    #allocation7 [shape = 'u8[1048576]{0}', space=vmem, size = 0x100000, scoped, tag = 'input window, operand 4, single buffered']
    #allocation8 [shape = 's32[1]{0}', space=sflag, size = 0x4, scoped, tag = 'scoped memory for hetero_gnn_forward.1']
    #allocation9 [shape = 'u8[1310720]{0}', space=vmem, size = 0x140000, scoped, tag = 'input window, operand 5, single buffered']
    #allocation10 [shape = 'u8[262144]{0}', space=vmem, size = 0x40000, scoped, tag = 'input window, operand 6, single buffered']
    #allocation11 [shape = 's32[1]{0}', space=sflag, size = 0x4, scoped, tag = 'scoped memory for hetero_gnn_forward.1']
    #allocation12 [shape = 'u8[262144]{0}', space=vmem, size = 0x40000, scoped, tag = 'input window, operand 7, single buffered']
    #allocation13 [shape = 'u8[131072]{0}', space=vmem, size = 0x20000, scoped, tag = 'input window, operand 8, single buffered']
    #allocation14 [shape = 's32[1]{0}', space=sflag, size = 0x4, scoped, tag = 'scoped memory for hetero_gnn_forward.1']
    #allocation15 [shape = 'u8[131072]{0}', space=vmem, size = 0x20000, scoped, tag = 'input window, operand 9, single buffered']
    #allocation16 [shape = 'u8[16384]{0}', space=vmem, size = 0x4000, scoped, tag = 'input window, operand 10, single buffered']
    #allocation17 [shape = 's32[1]{0}', space=sflag, size = 0x4, scoped, tag = 'scoped memory for hetero_gnn_forward.1']
    %16 = vsyncpa [#allocation3], 0
    %s17 = scalar_lea.sflag [#allocation3], 1
    %18 = vsyncpa %s17, 0
    %19 = vsyncpa [#allocation5], 0
    %s20 = scalar_lea.sflag [#allocation5], 1
    %21 = vsyncpa %s20, 0
    %22 = vsyncpa [#allocation8], 0
    %23 = vsyncpa [#allocation11], 0
    %24 = vsyncpa [#allocation14], 0
    %25 = vsyncpa [#allocation17], 0
    loop: start=0, step=1, limit=6
    $region2: #{hetero_gnn_forward.1} parent=1 // loop_pre_header
      _
    $region3: #{hetero_gnn_forward.1} parent=1 // loop_header
      %s27 = sphi 0, %s31
      %p28 = scmp.ge.s32.totalorder %s27, 6
      %s37 = sphi 0, %s39
      %s40 = sphi 0, %s37
      %s41 = sphi 0, %s40
      %s57 = sphi 0, %s41
      %s63 = sphi 0, %s65
      %s66 = sphi 0, %s63
      %s67 = sphi 0, %s66
      %s83 = sphi 0, %s67
      %s89 = sphi 0, %s91
      %s92 = sphi 0, %s89
      %s93 = sphi 0, %s92
      %s109 = sphi 0, %s93
      %s115 = sphi 0, %s117
      %s118 = sphi 0, %s115
      %s119 = sphi 0, %s118
      %s135 = sphi 0, %s119
      %s139 = sphi 0, %s139
      %s141 = sphi 0, %s139
      %s142 = sphi 0, %s141
      %s156 = sphi 0, %s142
      %s160 = sphi 0, %s160
      %s162 = sphi 0, %s160
      %s163 = sphi 0, %s162
      %s177 = sphi 0, %s163
      %s181 = sphi 0, %s181
      %s183 = sphi 0, %s181
      %s184 = sphi 0, %s183
      %s198 = sphi 0, %s184
      %s202 = sphi 0, %s202
      %s204 = sphi 0, %s202
      %s205 = sphi 0, %s204
      %s219 = sphi 0, %s205
      %s223 = sphi 0, %s223
      %s225 = sphi 0, %s223
      %s226 = sphi 0, %s225
      %s240 = sphi 0, %s226
      %s244 = sphi 0, %s244
      %s246 = sphi 0, %s244
      %s247 = sphi 0, %s246
      %s261 = sphi 0, %s247
      %s265 = sphi 0, %s265
      %s267 = sphi 0, %s265
      %s268 = sphi 0, %s267
      %s282 = sphi 0, %s268
      %s288 = sphi 0, %s290
      %s291 = sphi 0, %s288
      %s292 = sphi 0, %s291
      %s308 = sphi 0, %s292
    $region4: #{hetero_gnn_forward.1} parent=1 // loop_header_branch
      %30 = sbr.rel (%p28) target = $region8
    $region5: #{hetero_gnn_forward.1} parent=1 // loop_body
      %s32 = ssub.s32 %s27, 1
      %s33 = ssub.s32 %s27, 2
      %s34 = sadd.s32 %s27, 1
      %s35 = ssub.s32 %s27, %s34
      %p36 = scmp.eq.s32.totalorder %s35, 0
      %s38 = sadd.s32 %s37, 1
      %s39 = scalar_select %p36, %s37, %s38
      %p42 = pneg %p36
      %p43 = scmp.eq.s32.totalorder %s27, 3
      %p44 = por %p42, %p43
      %p45 = scmp.ne.s32.totalorder %s37, %s40
      %p46 = scmp.eq.s32.totalorder %s27, 0
      %p47 = por %p45, %p46
      %p48 = scmp.ne.s32.totalorder %s37, %s40
      %p49 = scmp.eq.s32.totalorder %s32, 3
      %p50 = por %p48, %p49
      %p51 = scmp.ne.s32.totalorder %s40, %s41
      %p52 = scmp.eq.s32.totalorder %s32, 0
      %p53 = por %p51, %p52
      %p54 = scmp.ne.s32.totalorder %s40, %s41
      %p55 = scmp.eq.s32.totalorder %s33, 3
      %p56 = por %p54, %p55
      %p58 = scmp.ne.s32.totalorder %s41, %s57
      %p59 = scmp.eq.s32.totalorder %s33, 0
      %p60 = por %p58, %p59
      %s61 = ssub.s32 %s27, %s34
      %p62 = scmp.eq.s32.totalorder %s61, 0
      %s64 = sadd.s32 %s63, 1
      %s65 = scalar_select %p62, %s63, %s64
      %p68 = pneg %p62
      %p69 = scmp.eq.s32.totalorder %s27, 3
      %p70 = por %p68, %p69
      %p71 = scmp.ne.s32.totalorder %s63, %s66
      %p72 = scmp.eq.s32.totalorder %s27, 0
      %p73 = por %p71, %p72
      %p74 = scmp.ne.s32.totalorder %s63, %s66
      %p75 = scmp.eq.s32.totalorder %s32, 3
      %p76 = por %p74, %p75
      %p77 = scmp.ne.s32.totalorder %s66, %s67
      %p78 = scmp.eq.s32.totalorder %s32, 0
      %p79 = por %p77, %p78
      %p80 = scmp.ne.s32.totalorder %s66, %s67
      %p81 = scmp.eq.s32.totalorder %s33, 3
      %p82 = por %p80, %p81
      %p84 = scmp.ne.s32.totalorder %s67, %s83
      %p85 = scmp.eq.s32.totalorder %s33, 0
      %p86 = por %p84, %p85
      %s87 = ssub.s32 %s27, %s34
      %p88 = scmp.eq.s32.totalorder %s87, 0
      %s90 = sadd.s32 %s89, 1
      %s91 = scalar_select %p88, %s89, %s90
      %p94 = pneg %p88
      %p95 = scmp.eq.s32.totalorder %s27, 3
      %p96 = por %p94, %p95
      %p97 = scmp.ne.s32.totalorder %s89, %s92
      %p98 = scmp.eq.s32.totalorder %s27, 0
      %p99 = por %p97, %p98
      %p100 = scmp.ne.s32.totalorder %s89, %s92
      %p101 = scmp.eq.s32.totalorder %s32, 3
      %p102 = por %p100, %p101
      %p103 = scmp.ne.s32.totalorder %s92, %s93
      %p104 = scmp.eq.s32.totalorder %s32, 0
      %p105 = por %p103, %p104
      %p106 = scmp.ne.s32.totalorder %s92, %s93
      %p107 = scmp.eq.s32.totalorder %s33, 3
      %p108 = por %p106, %p107
      %p110 = scmp.ne.s32.totalorder %s93, %s109
      %p111 = scmp.eq.s32.totalorder %s33, 0
      %p112 = por %p110, %p111
      %s113 = ssub.s32 %s27, %s34
      %p114 = scmp.eq.s32.totalorder %s113, 0
      %s116 = sadd.s32 %s115, 1
      %s117 = scalar_select %p114, %s115, %s116
      %p120 = pneg %p114
      %p121 = scmp.eq.s32.totalorder %s27, 3
      %p122 = por %p120, %p121
      %p123 = scmp.ne.s32.totalorder %s115, %s118
      %p124 = scmp.eq.s32.totalorder %s27, 0
      %p125 = por %p123, %p124
      %p126 = scmp.ne.s32.totalorder %s115, %s118
      %p127 = scmp.eq.s32.totalorder %s32, 3
      %p128 = por %p126, %p127
      %p129 = scmp.ne.s32.totalorder %s118, %s119
      %p130 = scmp.eq.s32.totalorder %s32, 0
      %p131 = por %p129, %p130
      %p132 = scmp.ne.s32.totalorder %s118, %s119
      %p133 = scmp.eq.s32.totalorder %s33, 3
      %p134 = por %p132, %p133
      %p136 = scmp.ne.s32.totalorder %s119, %s135
      %p137 = scmp.eq.s32.totalorder %s33, 0
      %p138 = por %p136, %p137
      %s140 = sadd.s32 %s139, 1
      %p143 = scmp.eq.s32.totalorder %s27, 3
      %p144 = scmp.ne.s32.totalorder %s139, %s141
      %p145 = scmp.eq.s32.totalorder %s27, 0
      %p146 = por %p144, %p145
      %p147 = scmp.ne.s32.totalorder %s139, %s141
      %p148 = scmp.eq.s32.totalorder %s32, 3
      %p149 = por %p147, %p148
      %p150 = scmp.ne.s32.totalorder %s141, %s142
      %p151 = scmp.eq.s32.totalorder %s32, 0
      %p152 = por %p150, %p151
      %p153 = scmp.ne.s32.totalorder %s141, %s142
      %p154 = scmp.eq.s32.totalorder %s33, 3
      %p155 = por %p153, %p154
      %p157 = scmp.ne.s32.totalorder %s142, %s156
      %p158 = scmp.eq.s32.totalorder %s33, 0
      %p159 = por %p157, %p158
      %s161 = sadd.s32 %s160, 1
      %p164 = scmp.eq.s32.totalorder %s27, 3
      %p165 = scmp.ne.s32.totalorder %s160, %s162
      %p166 = scmp.eq.s32.totalorder %s27, 0
      %p167 = por %p165, %p166
      %p168 = scmp.ne.s32.totalorder %s160, %s162
      %p169 = scmp.eq.s32.totalorder %s32, 3
      %p170 = por %p168, %p169
      %p171 = scmp.ne.s32.totalorder %s162, %s163
      %p172 = scmp.eq.s32.totalorder %s32, 0
      %p173 = por %p171, %p172
      %p174 = scmp.ne.s32.totalorder %s162, %s163
      %p175 = scmp.eq.s32.totalorder %s33, 3
      %p176 = por %p174, %p175
      %p178 = scmp.ne.s32.totalorder %s163, %s177
      %p179 = scmp.eq.s32.totalorder %s33, 0
      %p180 = por %p178, %p179
      %s182 = sadd.s32 %s181, 1
      %p185 = scmp.eq.s32.totalorder %s27, 3
      %p186 = scmp.ne.s32.totalorder %s181, %s183
      %p187 = scmp.eq.s32.totalorder %s27, 0
      %p188 = por %p186, %p187
      %p189 = scmp.ne.s32.totalorder %s181, %s183
      %p190 = scmp.eq.s32.totalorder %s32, 3
      %p191 = por %p189, %p190
      %p192 = scmp.ne.s32.totalorder %s183, %s184
      %p193 = scmp.eq.s32.totalorder %s32, 0
      %p194 = por %p192, %p193
      %p195 = scmp.ne.s32.totalorder %s183, %s184
      %p196 = scmp.eq.s32.totalorder %s33, 3
      %p197 = por %p195, %p196
      %p199 = scmp.ne.s32.totalorder %s184, %s198
      %p200 = scmp.eq.s32.totalorder %s33, 0
      %p201 = por %p199, %p200
      %s203 = sadd.s32 %s202, 1
      %p206 = scmp.eq.s32.totalorder %s27, 3
      %p207 = scmp.ne.s32.totalorder %s202, %s204
      %p208 = scmp.eq.s32.totalorder %s27, 0
      %p209 = por %p207, %p208
      %p210 = scmp.ne.s32.totalorder %s202, %s204
      %p211 = scmp.eq.s32.totalorder %s32, 3
      %p212 = por %p210, %p211
      %p213 = scmp.ne.s32.totalorder %s204, %s205
      %p214 = scmp.eq.s32.totalorder %s32, 0
      %p215 = por %p213, %p214
      %p216 = scmp.ne.s32.totalorder %s204, %s205
      %p217 = scmp.eq.s32.totalorder %s33, 3
      %p218 = por %p216, %p217
      %p220 = scmp.ne.s32.totalorder %s205, %s219
      %p221 = scmp.eq.s32.totalorder %s33, 0
      %p222 = por %p220, %p221
      %s224 = sadd.s32 %s223, 1
      %p227 = scmp.eq.s32.totalorder %s27, 3
      %p228 = scmp.ne.s32.totalorder %s223, %s225
      %p229 = scmp.eq.s32.totalorder %s27, 0
      %p230 = por %p228, %p229
      %p231 = scmp.ne.s32.totalorder %s223, %s225
      %p232 = scmp.eq.s32.totalorder %s32, 3
      %p233 = por %p231, %p232
      %p234 = scmp.ne.s32.totalorder %s225, %s226
      %p235 = scmp.eq.s32.totalorder %s32, 0
      %p236 = por %p234, %p235
      %p237 = scmp.ne.s32.totalorder %s225, %s226
      %p238 = scmp.eq.s32.totalorder %s33, 3
      %p239 = por %p237, %p238
      %p241 = scmp.ne.s32.totalorder %s226, %s240
      %p242 = scmp.eq.s32.totalorder %s33, 0
      %p243 = por %p241, %p242
      %s245 = sadd.s32 %s244, 1
      %p248 = scmp.eq.s32.totalorder %s27, 3
      %p249 = scmp.ne.s32.totalorder %s244, %s246
      %p250 = scmp.eq.s32.totalorder %s27, 0
      %p251 = por %p249, %p250
      %p252 = scmp.ne.s32.totalorder %s244, %s246
      %p253 = scmp.eq.s32.totalorder %s32, 3
      %p254 = por %p252, %p253
      %p255 = scmp.ne.s32.totalorder %s246, %s247
      %p256 = scmp.eq.s32.totalorder %s32, 0
      %p257 = por %p255, %p256
      %p258 = scmp.ne.s32.totalorder %s246, %s247
      %p259 = scmp.eq.s32.totalorder %s33, 3
      %p260 = por %p258, %p259
      %p262 = scmp.ne.s32.totalorder %s247, %s261
      %p263 = scmp.eq.s32.totalorder %s33, 0
      %p264 = por %p262, %p263
      %s266 = sadd.s32 %s265, 1
      %p269 = scmp.eq.s32.totalorder %s27, 3
      %p270 = scmp.ne.s32.totalorder %s265, %s267
      %p271 = scmp.eq.s32.totalorder %s27, 0
      %p272 = por %p270, %p271
      %p273 = scmp.ne.s32.totalorder %s265, %s267
      %p274 = scmp.eq.s32.totalorder %s32, 3
      %p275 = por %p273, %p274
      %p276 = scmp.ne.s32.totalorder %s267, %s268
      %p277 = scmp.eq.s32.totalorder %s32, 0
      %p278 = por %p276, %p277
      %p279 = scmp.ne.s32.totalorder %s267, %s268
      %p280 = scmp.eq.s32.totalorder %s33, 3
      %p281 = por %p279, %p280
      %p283 = scmp.ne.s32.totalorder %s268, %s282
      %p284 = scmp.eq.s32.totalorder %s33, 0
      %p285 = por %p283, %p284
      %s286 = ssub.s32 %s27, %s34
      %p287 = scmp.eq.s32.totalorder %s286, 0
      %s289 = sadd.s32 %s288, 1
      %s290 = scalar_select %p287, %s288, %s289
      %p293 = pneg %p287
      %p294 = scmp.eq.s32.totalorder %s27, 3
      %p295 = por %p293, %p294
      %p296 = scmp.ne.s32.totalorder %s288, %s291
      %p297 = scmp.eq.s32.totalorder %s27, 0
      %p298 = por %p296, %p297
      %p299 = scmp.ne.s32.totalorder %s288, %s291
      %p300 = scmp.eq.s32.totalorder %s32, 3
      %p301 = por %p299, %p300
      %p302 = scmp.ne.s32.totalorder %s291, %s292
      %p303 = scmp.eq.s32.totalorder %s32, 0
      %p304 = por %p302, %p303
      %p305 = scmp.ne.s32.totalorder %s291, %s292
      %p306 = scmp.eq.s32.totalorder %s33, 3
      %p307 = por %p305, %p306
      %p309 = scmp.ne.s32.totalorder %s292, %s308
      %p310 = scmp.eq.s32.totalorder %s33, 0
      %p311 = por %p309, %p310
      %p312 = scmp.le.s32.totalorder 1, %s27
      %p313 = scmp.lt.s32.totalorder %s27, 5
      %p314 = pnand %p312, %p313
      %p315 = pneg %p314
      // Predicated region
      $region9: #{hetero_gnn_forward.1} parent=5 // pred_check
        _
      $region10: #{hetero_gnn_forward.1} parent=5 // pred_check_branch
        %317 = sbr.rel (%p314) target = $region12
      $region11: #{hetero_gnn_forward.1} parent=5 // pred_region
        %s318 = ssub.s32 %s27, 1
        // Predicated region
        $region13: #{hetero_gnn_forward.1} parent=11 // pred_check
          %p319 = pneg %p152
        $region14: #{hetero_gnn_forward.1} parent=11 // pred_check_branch
          %321 = sbr.rel (%p319) target = $region16
        $region15: #{hetero_gnn_forward.1} parent=11 // pred_region
          %s323 = ssub.s32 32768, 32768
          %324 = vsyncadd [#allocation8], %s323
          %s325 = sshll.u32 [#allocation7], 4
          %s326 = int_to_ptr.vmem [resolvable:$true] %s325
          %331 = dma.hbm_to_vmem [thread:$0]  %s4, 32768, %s326, [#allocation8], 256, 256, 16
        $region16: #{hetero_gnn_forward.1} parent=11 // pred_fallthru
          _
        // Predicated region
        $region17: #{hetero_gnn_forward.1} parent=11 // pred_check
          %p332 = pneg %p173
        $region18: #{hetero_gnn_forward.1} parent=11 // pred_check_branch
          %334 = sbr.rel (%p332) target = $region20
        $region19: #{hetero_gnn_forward.1} parent=11 // pred_region
          %s336 = ssub.s32 40960, 40960
          %337 = vsyncadd [#allocation8], %s336
          %s338 = sshll.u32 [#allocation9], 4
          %s339 = int_to_ptr.vmem [resolvable:$true] %s338
          %344 = dma.hbm_to_vmem [thread:$0]  %s5, 40960, %s339, [#allocation8], 256, 256, 16
        $region20: #{hetero_gnn_forward.1} parent=11 // pred_fallthru
          _
        // Predicated region
        $region21: #{hetero_gnn_forward.1} parent=11 // pred_check
          %p345 = pneg %p194
        $region22: #{hetero_gnn_forward.1} parent=11 // pred_check_branch
          %347 = sbr.rel (%p345) target = $region24
        $region23: #{hetero_gnn_forward.1} parent=11 // pred_region
          %s349 = ssub.s32 8192, 8192
          %350 = vsyncadd [#allocation11], %s349
          %s351 = sshll.u32 [#allocation10], 4
          %s352 = int_to_ptr.vmem [resolvable:$true] %s351
          %357 = dma.hbm_to_vmem [thread:$0]  %s6, 8192, %s352, [#allocation11], 256, 256, 16
        $region24: #{hetero_gnn_forward.1} parent=11 // pred_fallthru
          _
        // Predicated region
        $region25: #{hetero_gnn_forward.1} parent=11 // pred_check
          %p358 = pneg %p215
        $region26: #{hetero_gnn_forward.1} parent=11 // pred_check_branch
          %360 = sbr.rel (%p358) target = $region28
        $region27: #{hetero_gnn_forward.1} parent=11 // pred_region
          %s362 = ssub.s32 8192, 8192
          %363 = vsyncadd [#allocation11], %s362
          %s364 = sshll.u32 [#allocation12], 4
          %s365 = int_to_ptr.vmem [resolvable:$true] %s364
          %370 = dma.hbm_to_vmem [thread:$0]  %s7, 8192, %s365, [#allocation11], 256, 256, 16
        $region28: #{hetero_gnn_forward.1} parent=11 // pred_fallthru
          _
        // Predicated region
        $region29: #{hetero_gnn_forward.1} parent=11 // pred_check
          %p371 = pneg %p236
        $region30: #{hetero_gnn_forward.1} parent=11 // pred_check_branch
          %373 = sbr.rel (%p371) target = $region32
        $region31: #{hetero_gnn_forward.1} parent=11 // pred_region
          %s375 = ssub.s32 4096, 4096
          %376 = vsyncadd [#allocation14], %s375
          %s377 = sshll.u32 [#allocation13], 4
          %s378 = int_to_ptr.vmem [resolvable:$true] %s377
          %383 = dma.hbm_to_vmem [thread:$0]  %s8, 4096, %s378, [#allocation14], 128, 128, 8
        $region32: #{hetero_gnn_forward.1} parent=11 // pred_fallthru
          _
        // Predicated region
        $region33: #{hetero_gnn_forward.1} parent=11 // pred_check
          %p384 = pneg %p257
        $region34: #{hetero_gnn_forward.1} parent=11 // pred_check_branch
          %386 = sbr.rel (%p384) target = $region36
        $region35: #{hetero_gnn_forward.1} parent=11 // pred_region
          %s388 = ssub.s32 4096, 4096
          %389 = vsyncadd [#allocation14], %s388
          %s390 = sshll.u32 [#allocation15], 4
          %s391 = int_to_ptr.vmem [resolvable:$true] %s390
          %396 = dma.hbm_to_vmem [thread:$0]  %s9, 4096, %s391, [#allocation14], 128, 128, 8
        $region36: #{hetero_gnn_forward.1} parent=11 // pred_fallthru
          _
        // Predicated region
        $region37: #{hetero_gnn_forward.1} parent=11 // pred_check
          %p397 = pneg %p278
        $region38: #{hetero_gnn_forward.1} parent=11 // pred_check_branch
          %399 = sbr.rel (%p397) target = $region40
        $region39: #{hetero_gnn_forward.1} parent=11 // pred_region
          %s401 = ssub.s32 512, 512
          %402 = vsyncadd [#allocation17], %s401
          %s403 = sshll.u32 [#allocation16], 4
          %s404 = int_to_ptr.vmem [resolvable:$true] %s403
          %409 = dma.hbm_to_vmem [thread:$0]  %s10, 512, %s404, [#allocation17], 256, 256, 16
        $region40: #{hetero_gnn_forward.1} parent=11 // pred_fallthru
          _
      $region12: #{hetero_gnn_forward.1} parent=5 // pred_fallthru
        _
      %p410 = scmp.lt.s32.totalorder %s27, 4
      // Predicated region
      $region41: #{hetero_gnn_forward.1} parent=5 // pred_check
        %p411 = pneg %p410
      $region42: #{hetero_gnn_forward.1} parent=5 // pred_check_branch
        %413 = sbr.rel (%p411) target = $region44
      $region43: #{hetero_gnn_forward.1} parent=5 // pred_region
        // Predicated region
        $region45: #{hetero_gnn_forward.1} parent=43 // pred_check
          %p414 = pneg %p47
        $region46: #{hetero_gnn_forward.1} parent=43 // pred_check_branch
          %416 = sbr.rel (%p414) target = $region48
        $region47: #{hetero_gnn_forward.1} parent=43 // pred_region
          %p417 = scmp.lt.s32.totalorder %s27, 3
          %s418 = scalar_select %p417, %s27, 3
          %s419 = smul.addr %s418, 4
          %s420 = smul.addr %s419, 8
          %s421 = scalar_lea.vmem %s0, %s420
        $region48: #{hetero_gnn_forward.1} parent=43 // pred_fallthru
          _
        // Predicated region
        $region49: #{hetero_gnn_forward.1} parent=43 // pred_check
          %p422 = pneg %p73
        $region50: #{hetero_gnn_forward.1} parent=43 // pred_check_branch
          %424 = sbr.rel (%p422) target = $region52
        $region51: #{hetero_gnn_forward.1} parent=43 // pred_region
          %s425 = sand.u32 %s63, 1
          %s426 = scalar_lea.sflag [#allocation3], %s425
          %s427 = sand.u32 %s63, 1
          %s428 = smul.addr %s427, 2
          %s429 = scalar_lea.vmem [#allocation2], %s428
          %s431 = ssub.s32 32, 32
          %432 = vsyncadd %s426, %s431
          %s433 = smul.addr %s27, 32
          %s434 = scalar_lea.hbm %s1, %s433
          %s436 = sshll.u32 %s429, 4
          %s437 = int_to_ptr.vmem [resolvable:$true] %s436
          %439 = dma.hbm_to_vmem [thread:$0]  %s434, 32, %s437, %s426
        $region52: #{hetero_gnn_forward.1} parent=43 // pred_fallthru
          _
        // Predicated region
        $region53: #{hetero_gnn_forward.1} parent=43 // pred_check
          %p440 = pneg %p99
        $region54: #{hetero_gnn_forward.1} parent=43 // pred_check_branch
          %442 = sbr.rel (%p440) target = $region56
        $region55: #{hetero_gnn_forward.1} parent=43 // pred_region
          %s443 = sand.u32 %s27, 1
          %s444 = scalar_lea.sflag [#allocation5], %s443
          %s445 = sand.u32 %s89, 1
          %s446 = smul.addr %s445, 64
          %s447 = scalar_lea.vmem [#allocation4], %s446
          %s449 = ssub.s32 1024, 1024
          %450 = vsyncadd %s444, %s449
          %s451 = smul.addr %s27, 16
          %s452 = smul.addr %s451, 64
          %s453 = scalar_lea.hbm %s2, %s452
          %s454 = sshll.u32 %s447, 4
          %s455 = int_to_ptr.vmem [resolvable:$true] %s454
          %460 = dma.hbm_to_vmem [thread:$0]  %s453, 1024, %s455, %s444, 512, 512, 32
        $region56: #{hetero_gnn_forward.1} parent=43 // pred_fallthru
          _
        // Predicated region
        $region57: #{hetero_gnn_forward.1} parent=43 // pred_check
          %p461 = pneg %p125
        $region58: #{hetero_gnn_forward.1} parent=43 // pred_check_branch
          %463 = sbr.rel (%p461) target = $region60
        $region59: #{hetero_gnn_forward.1} parent=43 // pred_region
          %s464 = sand.u32 %s27, 1
          %s465 = scalar_lea.sflag [#allocation5], %s464
          %s466 = sand.u32 %s115, 1
          %s467 = smul.addr %s466, 80
          %s468 = scalar_lea.vmem [#allocation6], %s467
          %s470 = ssub.s32 1280, 1280
          %471 = vsyncadd %s465, %s470
          %s472 = smul.addr %s27, 20
          %s473 = smul.addr %s472, 64
          %s474 = scalar_lea.hbm %s3, %s473
          %s475 = sshll.u32 %s468, 4
          %s476 = int_to_ptr.vmem [resolvable:$true] %s475
          %481 = dma.hbm_to_vmem [thread:$0]  %s474, 1280, %s476, %s465, 640, 640, 40
        $region60: #{hetero_gnn_forward.1} parent=43 // pred_fallthru
          _
      $region44: #{hetero_gnn_forward.1} parent=5 // pred_fallthru
        _
      %p482 = scmp.le.s32.totalorder 1, %s27
      %p483 = scmp.lt.s32.totalorder %s27, 5
      %p484 = pnand %p482, %p483
      %p485 = pneg %p484
      // Predicated region
      $region61: #{hetero_gnn_forward.1} parent=5 // pred_check
        _
      $region62: #{hetero_gnn_forward.1} parent=5 // pred_check_branch
        %487 = sbr.rel (%p484) target = $region64
      $region63: #{hetero_gnn_forward.1} parent=5 // pred_region
        %s488 = ssub.s32 %s27, 1
        %s489 = sand.u32 %s66, 1
        %s490 = scalar_lea.sflag [#allocation3], %s489
        %s491 = sand.u32 %s66, 1
        %s492 = smul.addr %s491, 2
        %s493 = scalar_lea.vmem [#allocation2], %s492
        // Predicated region
        $region65: #{hetero_gnn_forward.1} parent=63 // pred_check
          %p494 = pneg %p79
        $region66: #{hetero_gnn_forward.1} parent=63 // pred_check_branch
          %496 = sbr.rel (%p494) target = $region68
        $region67: #{hetero_gnn_forward.1} parent=63 // pred_region
          %497 = dma.done %s490, 32
        $region68: #{hetero_gnn_forward.1} parent=63 // pred_fallthru
          _
        %s498 = sand.u32 %s32, 1
        %s499 = scalar_lea.sflag [#allocation5], %s498
        %s500 = sand.u32 %s92, 1
        %s501 = smul.addr %s500, 64
        %s502 = scalar_lea.vmem [#allocation4], %s501
        // Predicated region
        $region69: #{hetero_gnn_forward.1} parent=63 // pred_check
          %p503 = pneg %p105
        $region70: #{hetero_gnn_forward.1} parent=63 // pred_check_branch
          %505 = sbr.rel (%p503) target = $region72
        $region71: #{hetero_gnn_forward.1} parent=63 // pred_region
          %506 = dma.done %s499, 1024
        $region72: #{hetero_gnn_forward.1} parent=63 // pred_fallthru
          _
        %s507 = sand.u32 %s32, 1
        %s508 = scalar_lea.sflag [#allocation5], %s507
        %s509 = sand.u32 %s118, 1
        %s510 = smul.addr %s509, 80
        %s511 = scalar_lea.vmem [#allocation6], %s510
        // Predicated region
        $region73: #{hetero_gnn_forward.1} parent=63 // pred_check
          %p512 = pneg %p131
        $region74: #{hetero_gnn_forward.1} parent=63 // pred_check_branch
          %514 = sbr.rel (%p512) target = $region76
        $region75: #{hetero_gnn_forward.1} parent=63 // pred_region
          %515 = dma.done %s508, 1280
        $region76: #{hetero_gnn_forward.1} parent=63 // pred_fallthru
          _
        // Predicated region
        $region77: #{hetero_gnn_forward.1} parent=63 // pred_check
          %p516 = pneg %p152
        $region78: #{hetero_gnn_forward.1} parent=63 // pred_check_branch
          %518 = sbr.rel (%p516) target = $region80
        $region79: #{hetero_gnn_forward.1} parent=63 // pred_region
          %519 = dma.done [#allocation8], 32768
        $region80: #{hetero_gnn_forward.1} parent=63 // pred_fallthru
          _
        // Predicated region
        $region81: #{hetero_gnn_forward.1} parent=63 // pred_check
          %p520 = pneg %p173
        $region82: #{hetero_gnn_forward.1} parent=63 // pred_check_branch
          %522 = sbr.rel (%p520) target = $region84
        $region83: #{hetero_gnn_forward.1} parent=63 // pred_region
          %523 = dma.done [#allocation8], 40960
        $region84: #{hetero_gnn_forward.1} parent=63 // pred_fallthru
          _
        // Predicated region
        $region85: #{hetero_gnn_forward.1} parent=63 // pred_check
          %p524 = pneg %p194
        $region86: #{hetero_gnn_forward.1} parent=63 // pred_check_branch
          %526 = sbr.rel (%p524) target = $region88
        $region87: #{hetero_gnn_forward.1} parent=63 // pred_region
          %527 = dma.done [#allocation11], 8192
        $region88: #{hetero_gnn_forward.1} parent=63 // pred_fallthru
          _
        // Predicated region
        $region89: #{hetero_gnn_forward.1} parent=63 // pred_check
          %p528 = pneg %p215
        $region90: #{hetero_gnn_forward.1} parent=63 // pred_check_branch
          %530 = sbr.rel (%p528) target = $region92
        $region91: #{hetero_gnn_forward.1} parent=63 // pred_region
          %531 = dma.done [#allocation11], 8192
        $region92: #{hetero_gnn_forward.1} parent=63 // pred_fallthru
          _
        // Predicated region
        $region93: #{hetero_gnn_forward.1} parent=63 // pred_check
          %p532 = pneg %p236
        $region94: #{hetero_gnn_forward.1} parent=63 // pred_check_branch
          %534 = sbr.rel (%p532) target = $region96
        $region95: #{hetero_gnn_forward.1} parent=63 // pred_region
          %535 = dma.done [#allocation14], 4096
        $region96: #{hetero_gnn_forward.1} parent=63 // pred_fallthru
          _
        // Predicated region
        $region97: #{hetero_gnn_forward.1} parent=63 // pred_check
          %p536 = pneg %p257
        $region98: #{hetero_gnn_forward.1} parent=63 // pred_check_branch
          %538 = sbr.rel (%p536) target = $region100
        $region99: #{hetero_gnn_forward.1} parent=63 // pred_region
          %539 = dma.done [#allocation14], 4096
        $region100: #{hetero_gnn_forward.1} parent=63 // pred_fallthru
          _
        // Predicated region
        $region101: #{hetero_gnn_forward.1} parent=63 // pred_check
          %p540 = pneg %p278
        $region102: #{hetero_gnn_forward.1} parent=63 // pred_check_branch
          %542 = sbr.rel (%p540) target = $region104
        $region103: #{hetero_gnn_forward.1} parent=63 // pred_region
          %543 = dma.done [#allocation17], 512
        $region104: #{hetero_gnn_forward.1} parent=63 // pred_fallthru
          _
        %p544 = scmp.lt.s32.totalorder %s32, 3
        %s545 = scalar_select %p544, %s32, 3
        %s546 = smul.addr %s545, 4
        %s547 = smul.addr %s546, 8
        %s548 = scalar_lea.vmem %s0, %s547
        %p549 = pneg %p53
        %p550 = pneg %p50
        %s551 = sand.u32 %s66, 1
        %s552 = scalar_lea.sflag [#allocation3], %s551
        %s553 = sand.u32 %s66, 1
        %s554 = smul.addr %s553, 2
        %s555 = scalar_lea.vmem [#allocation2], %s554
        %p556 = pneg %p79
        %p557 = pneg %p76
        %s558 = sand.u32 %s32, 1
        %s559 = scalar_lea.sflag [#allocation5], %s558
        %s560 = sand.u32 %s92, 1
        %s561 = smul.addr %s560, 64
        %s562 = scalar_lea.vmem [#allocation4], %s561
        %p563 = pneg %p105
        %p564 = pneg %p102
        %s565 = sand.u32 %s32, 1
        %s566 = scalar_lea.sflag [#allocation5], %s565
        %s567 = sand.u32 %s118, 1
        %s568 = smul.addr %s567, 80
        %s569 = scalar_lea.vmem [#allocation6], %s568
        %p570 = pneg %p131
        %p571 = pneg %p128
        %p572 = pneg %p152
        %p573 = pneg %p149
        %p574 = pneg %p173
        %p575 = pneg %p170
        %p576 = pneg %p194
        %p577 = pneg %p191
        %p578 = pneg %p215
        %p579 = pneg %p212
        %p580 = pneg %p236
        %p581 = pneg %p233
        %p582 = pneg %p257
        %p583 = pneg %p254
        %p584 = pneg %p278
        %p585 = pneg %p275
        %p586 = pneg %p304
        %p587 = pneg %p301
        %p588 = scmp.lt.s32.totalorder %s32, 3
        %s589 = scalar_select %p588, %s32, 3
        %s590 = smul.addr %s589, 4
        %s591 = smul.addr %s590, 8
        %s592 = scalar_lea.vmem %s11, %s591
        %p593 = scmp.lt.s32.totalorder %s32, 3
        %s594 = scalar_select %p593, %s32, 3
        %s595 = smul.addr %s594, 4
        %s596 = smul.addr %s595, 8
        %s597 = scalar_lea.vmem %s0, %s596
        %p598 = scmp.lt.s32.totalorder %s32, 3
        %s599 = scalar_select %p598, %s32, 3
        %s600 = smul.addr %s599, 4
        %s601 = smul.addr %s600, 8
        %s602 = scalar_lea.vmem %s11, %s601
        %v604 = vld [vmem:[#allocation16] ss:$8 sm:$0x3]
        %s605 = scalar_lea.vmem [#allocation16], 1
        %v606 = vld [vmem:[%s605] ss:$8 sm:$0x3]
        %s607 = scalar_lea.vmem [#allocation16], 2
        %v608 = vld [vmem:[%s607] ss:$8 sm:$0x3]
        %s609 = scalar_lea.vmem [#allocation16], 3
        %v610 = vld [vmem:[%s609] ss:$8 sm:$0x3]
        %s611 = scalar_lea.vmem [#allocation16], 4
        %v612 = vld [vmem:[%s611] ss:$8 sm:$0x3]
        %s613 = scalar_lea.vmem [#allocation16], 5
        %v614 = vld [vmem:[%s613] ss:$8 sm:$0x3]
        %s615 = scalar_lea.vmem [#allocation16], 6
        %v616 = vld [vmem:[%s615] ss:$8 sm:$0x3]
        %s617 = scalar_lea.vmem [#allocation16], 7
        %v618 = vld [vmem:[%s617] ss:$8 sm:$0x3]
        %s619 = scalar_lea.vmem [#allocation16], 16
        %v620 = vld [vmem:[%s619] ss:$8 sm:$0x3]
        %s621 = scalar_lea.vmem [#allocation16], 17
        %v622 = vld [vmem:[%s621] ss:$8 sm:$0x3]
        %v623 = vld [vmem:[#allocation16 + $0x12] ss:$0 sm:$0xff]
        %v624 = vld [vmem:[%s597] sm:$0xff]
        %v625 = vld [vmem:[%s597 + $0x8] sm:$0xff]
        %v626 = vld [vmem:[%s597 + $0x10] sm:$0xff]
        %v627 = vld [vmem:[%s597 + $0x18] sm:$0xff]
        %v628 = vld [vmem:[%s493] sm:$0x1]
        %v629 = vld [vmem:[%s493 + $0x1] sm:$0x1]
        %v630 = vlaneseq
        %v631 = vand.u32 %v630, 127
        %632 = vset.pattern.permute.xlu0 0
        %633 = vperm.xlu0 %632, %v624
        %v634 = vpop.permute.xlu0 %633
        %635 = vset.pattern.permute.xlu0 0
        %636 = vperm.xlu0 %635, %v625
        %v637 = vpop.permute.xlu0 %636
        %638 = vset.pattern.permute.xlu0 0
        %639 = vperm.xlu0 %638, %v626
        %v640 = vpop.permute.xlu0 %639
        %641 = vset.pattern.permute.xlu0 0
        %642 = vperm.xlu0 %641, %v627
        %v643 = vpop.permute.xlu0 %642
        %vm644 = vcmp.eq.s32.totalorder %v631, %v634
        %vm645 = vcmp.eq.s32.totalorder %v631, %v637
        %vm646 = vcmp.eq.s32.totalorder %v631, %v640
        %vm647 = vcmp.eq.s32.totalorder %v631, %v643
        %v648 = vsel %vm644, 1, 0
        %v649 = vsel %vm645, 1, 0
        %v650 = vsel %vm646, 1, 0
        %v651 = vsel %vm647, 1, 0
        %v652 = vcvt.s32.f32 %v648
        %v653 = vcvt.s32.f32 %v649
        %v654 = vcvt.s32.f32 %v650
        %v655 = vcvt.s32.f32 %v651
        %v656 = vpack.c.bf16 %v653, %v652
        %v657 = vpack.c.bf16 %v655, %v654
        %658 = vset.pattern.permute.xlu0 1
        %659 = vperm.xlu0 %658, %v624
        %v660 = vpop.permute.xlu0 %659
        %661 = vset.pattern.permute.xlu0 1
        %662 = vperm.xlu0 %661, %v625
        %v663 = vpop.permute.xlu0 %662
        %664 = vset.pattern.permute.xlu0 1
        %665 = vperm.xlu0 %664, %v626
        %v666 = vpop.permute.xlu0 %665
        %667 = vset.pattern.permute.xlu0 1
        %668 = vperm.xlu0 %667, %v627
        %v669 = vpop.permute.xlu0 %668
        %vm670 = vcmp.eq.s32.totalorder %v631, %v660
        %vm671 = vcmp.eq.s32.totalorder %v631, %v663
        %vm672 = vcmp.eq.s32.totalorder %v631, %v666
        %vm673 = vcmp.eq.s32.totalorder %v631, %v669
        %v674 = vsel %vm670, 1, 0
        %v675 = vsel %vm671, 1, 0
        %v676 = vsel %vm672, 1, 0
        %v677 = vsel %vm673, 1, 0
        %v678 = vcvt.s32.f32 %v674
        %v679 = vcvt.s32.f32 %v675
        %v680 = vcvt.s32.f32 %v676
        %v681 = vcvt.s32.f32 %v677
        %v682 = vpack.c.bf16 %v679, %v678
        %v683 = vpack.c.bf16 %v681, %v680
        %v684 = vlaneseq
        %v685 = vshrl.u32 %v684, 7
        %v686 = vadd.s32 %v685, 8
        %v687 = vlaneseq
        %v688 = vshrl.u32 %v687, 7
        %v689 = vsub.s32 0, %v688
        %v690 = vrot.slane %v628, %v689
        %vm691 = vcmp.eq.s32.totalorder %v685, %v690
        %vm692 = vcmp.eq.s32.totalorder %v686, %v690
        %v693 = vsel %vm691, 1, 0
        %v694 = vsel %vm692, 1, 0
        %v695 = vcvt.s32.f32 %v693
        %v696 = vcvt.s32.f32 %v694
        %v697 = vpack.c.bf16 %v696, %v695
        %v698 = vlaneseq
        %v699 = vshrl.u32 %v698, 7
        %v700 = vsub.s32 0, %v699
        %v701 = vrot.slane %v629, %v700
        %vm702 = vcmp.eq.s32.totalorder %v685, %v701
        %vm703 = vcmp.eq.s32.totalorder %v686, %v701
        %v704 = vsel %vm702, 1, 0
        %v705 = vsel %vm703, 1, 0
        %v706 = vcvt.s32.f32 %v704
        %v707 = vcvt.s32.f32 %v705
        %v708 = vpack.c.bf16 %v707, %v706
        %vm709 = vcmask 261120
        %v711 = vsel %vm709, %v708, 0
        %713 = vmatprep.subr.bf16.mxu0 0
        %714 = vmatpush1.bf16.msra.mxu0 %v656
        %715 = vmatprep.subr.bf16.mxu0 0
        %716 = vmatpush1.bf16.msra.mxu0 %v657
        %717 = vmatprep.subr.bf16.mxu0 0
        %718 = vmatpush1.bf16.msra.mxu0 0
        %719 = vmatprep.subr.bf16.mxu0 0
        %720 = vmatpush1.bf16.msra.mxu0 0
        %721 = vmatprep.subr.bf16.mxu0 0
        %722 = vmatpush1.bf16.msra.mxu0 0
        %723 = vmatprep.subr.bf16.mxu0 0
        %724 = vmatpush1.bf16.msra.mxu0 0
        %725 = vmatprep.subr.bf16.mxu0 0
        %726 = vmatpush1.bf16.msra.mxu0 0
        %727 = vmatprep.subr.bf16.mxu0 0
        %728 = vmatpush1.bf16.msra.mxu0 0
        %729 = vmatprep.subr.bf16.mxu0 0
        %730 = vmatpush1.bf16.msra.mxu0 0
        %731 = vmatprep.subr.bf16.mxu0 0
        %732 = vmatpush1.bf16.msra.mxu0 0
        %733 = vmatprep.subr.bf16.mxu0 0
        %734 = vmatpush1.bf16.msra.mxu0 0
        %735 = vmatprep.subr.bf16.mxu0 0
        %736 = vmatpush1.bf16.msra.mxu0 0
        %737 = vmatprep.subr.bf16.mxu0 0
        %738 = vmatpush1.bf16.msra.mxu0 0
        %739 = vmatprep.subr.bf16.mxu0 0
        %740 = vmatpush1.bf16.msra.mxu0 0
        %741 = vmatprep.subr.bf16.mxu0 0
        %742 = vmatpush1.bf16.msra.mxu0 0
        %743 = vmatprep.subr.bf16.mxu0 0
        %744 = vmatpush1.bf16.msra.mxu0 0
        %745 = vmatprep.mubr.bf16.mxu0 0
        %746 = vmatmul.mubr.bf16.gmra.mrb[0].mxu0 %v711
        %v747 = vpop.f32.mrb[0].mxu0
        %v748 = vadd.f32 0.0, %v747
        %v749 = vpop.f32.mrb[0].mxu0
        %v750 = vpop.f32.mrb[0].mxu0
        %v751 = vadd.f32 0.0, %v750
        %v752 = vpop.f32.mrb[0].mxu0
        %753 = vdwg.mxu0
        %v755 = vsel %vm709, %v697, 0
        %757 = vmatprep.subr.bf16.mxu0 0
        %758 = vmatpush1.bf16.msra.mxu0 %v682
        %759 = vmatprep.subr.bf16.mxu0 0
        %760 = vmatpush1.bf16.msra.mxu0 %v683
        %761 = vmatprep.subr.bf16.mxu0 0
        %762 = vmatpush1.bf16.msra.mxu0 0
        %763 = vmatprep.subr.bf16.mxu0 0
        %764 = vmatpush1.bf16.msra.mxu0 0
        %765 = vmatprep.subr.bf16.mxu0 0
        %766 = vmatpush1.bf16.msra.mxu0 0
        %767 = vmatprep.subr.bf16.mxu0 0
        %768 = vmatpush1.bf16.msra.mxu0 0
        %769 = vmatprep.subr.bf16.mxu0 0
        %770 = vmatpush1.bf16.msra.mxu0 0
        %771 = vmatprep.subr.bf16.mxu0 0
        %772 = vmatpush1.bf16.msra.mxu0 0
        %773 = vmatprep.subr.bf16.mxu0 0
        %774 = vmatpush1.bf16.msra.mxu0 0
        %775 = vmatprep.subr.bf16.mxu0 0
        %776 = vmatpush1.bf16.msra.mxu0 0
        %777 = vmatprep.subr.bf16.mxu0 0
        %778 = vmatpush1.bf16.msra.mxu0 0
        %779 = vmatprep.subr.bf16.mxu0 0
        %780 = vmatpush1.bf16.msra.mxu0 0
        %781 = vmatprep.subr.bf16.mxu0 0
        %782 = vmatpush1.bf16.msra.mxu0 0
        %783 = vmatprep.subr.bf16.mxu0 0
        %784 = vmatpush1.bf16.msra.mxu0 0
        %785 = vmatprep.subr.bf16.mxu0 0
        %786 = vmatpush1.bf16.msra.mxu0 0
        %787 = vmatprep.subr.bf16.mxu0 0
        %788 = vmatpush1.bf16.msra.mxu0 0
        %789 = vmatprep.mubr.bf16.mxu0 0
        %790 = vmatmul.mubr.bf16.gmra.mrb[0].mxu0 %v755
        %v791 = vpop.f32.mrb[0].mxu0
        %v792 = vadd.f32 0.0, %v791
        %v793 = vpop.f32.mrb[0].mxu0
        %v794 = vpop.f32.mrb[0].mxu0
        %v795 = vadd.f32 0.0, %v794
        %v796 = vpop.f32.mrb[0].mxu0
        %797 = vdwg.mxu0
        %vm798 = vcmask 130048
        %v799 = vsel %vm798, %v748, 0.0
        %800 = vadd.xlane.f32.xlu0 %v799
        %v801 = vpop.xlane.xlu0 %800
        %v802 = vsel %vm798, %v751, 0.0
        %803 = vadd.xlane.f32.xlu0 %v802
        %v804 = vpop.xlane.xlu0 %803
        %v805 = vmax.f32 %v801, 1.0
        %v806 = vmax.f32 %v804, 1.0
        %v807 = vrcp.pop %v805
        %v808 = vmul.f32 1.0, %v807
        %v809 = vrcp.pop %v806
        %v810 = vmul.f32 1.0, %v809
        %v811 = vsel %vm798, %v792, 0.0
        %812 = vadd.xlane.f32.xlu0 %v811
        %v813 = vpop.xlane.xlu0 %812
        %v814 = vsel %vm798, %v795, 0.0
        %815 = vadd.xlane.f32.xlu0 %v814
        %v816 = vpop.xlane.xlu0 %815
        %v817 = vmax.f32 %v813, 1.0
        %v818 = vmax.f32 %v816, 1.0
        %v819 = vrcp.pop %v817
        %v820 = vmul.f32 1.0, %v819
        %v821 = vrcp.pop %v818
        %v822 = vmul.f32 1.0, %v821
        %v823 = vpack.c.bf16 %v751, %v748
        %v824 = vpack.c.bf16 %v795, %v792
        %v825 = vld [vmem:[%s502] sm:$0xff]
        %v826 = vld [vmem:[%s502 + $0x8] sm:$0xff]
        %v827 = vld [vmem:[%s502 + $0x10] sm:$0xff]
        %v828 = vld [vmem:[%s502 + $0x18] sm:$0xff]
        %v829 = vld [vmem:[%s502 + $0x20] sm:$0xff]
        %v830 = vld [vmem:[%s502 + $0x28] sm:$0xff]
        %v831 = vld [vmem:[%s502 + $0x30] sm:$0xff]
        %v832 = vld [vmem:[%s502 + $0x38] sm:$0xff]
        %v833 = vld [vmem:[%s511] sm:$0xff]
        %v834 = vld [vmem:[%s511 + $0x8] sm:$0xff]
        %v835 = vld [vmem:[%s511 + $0x10] sm:$0xff]
        %v836 = vld [vmem:[%s511 + $0x18] sm:$0xff]
        %v837 = vld [vmem:[%s511 + $0x20] sm:$0xff]
        %v838 = vld [vmem:[%s511 + $0x28] sm:$0xff]
        %v839 = vld [vmem:[%s511 + $0x30] sm:$0xff]
        %v840 = vld [vmem:[%s511 + $0x38] sm:$0xff]
        %v841 = vld [vmem:[%s511 + $0x40] sm:$0xff]
        %v842 = vld [vmem:[%s511 + $0x48] sm:$0xff]
        %v843 = vld [vmem:[#allocation7] sm:$0xff]
        %v844 = vld [vmem:[#allocation7 + $0x8] sm:$0xff]
        %v845 = vld [vmem:[#allocation7 + $0x10] sm:$0xff]
        %v846 = vld [vmem:[#allocation7 + $0x18] sm:$0xff]
        %v847 = vld [vmem:[#allocation7 + $0x20] sm:$0xff]
        %v848 = vld [vmem:[#allocation7 + $0x28] sm:$0xff]
        %v849 = vld [vmem:[#allocation7 + $0x30] sm:$0xff]
        %v850 = vld [vmem:[#allocation7 + $0x38] sm:$0xff]
        %v851 = vld [vmem:[#allocation7 + $0x40] sm:$0xff]
        %v852 = vld [vmem:[#allocation7 + $0x48] sm:$0xff]
        %v853 = vld [vmem:[#allocation7 + $0x50] sm:$0xff]
        %v854 = vld [vmem:[#allocation7 + $0x58] sm:$0xff]
        %v855 = vld [vmem:[#allocation7 + $0x60] sm:$0xff]
        %v856 = vld [vmem:[#allocation7 + $0x68] sm:$0xff]
        %v857 = vld [vmem:[#allocation7 + $0x70] sm:$0xff]
        %v858 = vld [vmem:[#allocation7 + $0x78] sm:$0xff]
        %v859 = vld [vmem:[#allocation7 + $0x80] sm:$0xff]
        %v860 = vld [vmem:[#allocation7 + $0x88] sm:$0xff]
        %v861 = vld [vmem:[#allocation7 + $0x90] sm:$0xff]
        %v862 = vld [vmem:[#allocation7 + $0x98] sm:$0xff]
        %v863 = vld [vmem:[#allocation7 + $0xa0] sm:$0xff]
        %v864 = vld [vmem:[#allocation7 + $0xa8] sm:$0xff]
        %v865 = vld [vmem:[#allocation7 + $0xb0] sm:$0xff]
        %v866 = vld [vmem:[#allocation7 + $0xb8] sm:$0xff]
        %v867 = vld [vmem:[#allocation7 + $0xc0] sm:$0xff]
        %v868 = vld [vmem:[#allocation7 + $0xc8] sm:$0xff]
        %v869 = vld [vmem:[#allocation7 + $0xd0] sm:$0xff]
        %v870 = vld [vmem:[#allocation7 + $0xd8] sm:$0xff]
        %v871 = vld [vmem:[#allocation7 + $0xe0] sm:$0xff]
        %v872 = vld [vmem:[#allocation7 + $0xe8] sm:$0xff]
        %v873 = vld [vmem:[#allocation7 + $0xf0] sm:$0xff]
        %v874 = vld [vmem:[#allocation7 + $0xf8] sm:$0xff]
        %v875 = vld [vmem:[#allocation7 + $0x100] sm:$0xff]
        %v876 = vld [vmem:[#allocation7 + $0x108] sm:$0xff]
        %v877 = vld [vmem:[#allocation7 + $0x110] sm:$0xff]
        %v878 = vld [vmem:[#allocation7 + $0x118] sm:$0xff]
        %v879 = vld [vmem:[#allocation7 + $0x120] sm:$0xff]
        %v880 = vld [vmem:[#allocation7 + $0x128] sm:$0xff]
        %v881 = vld [vmem:[#allocation7 + $0x130] sm:$0xff]
        %v882 = vld [vmem:[#allocation7 + $0x138] sm:$0xff]
        %v883 = vld [vmem:[#allocation7 + $0x140] sm:$0xff]
        %v884 = vld [vmem:[#allocation7 + $0x148] sm:$0xff]
        %v885 = vld [vmem:[#allocation7 + $0x150] sm:$0xff]
        %v886 = vld [vmem:[#allocation7 + $0x158] sm:$0xff]
        %v887 = vld [vmem:[#allocation7 + $0x160] sm:$0xff]
        %v888 = vld [vmem:[#allocation7 + $0x168] sm:$0xff]
        %v889 = vld [vmem:[#allocation7 + $0x170] sm:$0xff]
        %v890 = vld [vmem:[#allocation7 + $0x178] sm:$0xff]
        %v891 = vld [vmem:[#allocation7 + $0x180] sm:$0xff]
        %v892 = vld [vmem:[#allocation7 + $0x188] sm:$0xff]
        %v893 = vld [vmem:[#allocation7 + $0x190] sm:$0xff]
        %v894 = vld [vmem:[#allocation7 + $0x198] sm:$0xff]
        %v895 = vld [vmem:[#allocation7 + $0x1a0] sm:$0xff]
        %v896 = vld [vmem:[#allocation7 + $0x1a8] sm:$0xff]
        %v897 = vld [vmem:[#allocation7 + $0x1b0] sm:$0xff]
        %v898 = vld [vmem:[#allocation7 + $0x1b8] sm:$0xff]
        %v899 = vld [vmem:[#allocation7 + $0x1c0] sm:$0xff]
        %v900 = vld [vmem:[#allocation7 + $0x1c8] sm:$0xff]
        %v901 = vld [vmem:[#allocation7 + $0x1d0] sm:$0xff]
        %v902 = vld [vmem:[#allocation7 + $0x1d8] sm:$0xff]
        %v903 = vld [vmem:[#allocation7 + $0x1e0] sm:$0xff]
        %v904 = vld [vmem:[#allocation7 + $0x1e8] sm:$0xff]
        %v905 = vld [vmem:[#allocation7 + $0x1f0] sm:$0xff]
        %v906 = vld [vmem:[#allocation7 + $0x1f8] sm:$0xff]
        %v907 = vld [vmem:[#allocation7 + $0x200] sm:$0xff]
        %v908 = vld [vmem:[#allocation7 + $0x208] sm:$0xff]
        %v909 = vld [vmem:[#allocation7 + $0x210] sm:$0xff]
        %v910 = vld [vmem:[#allocation7 + $0x218] sm:$0xff]
        %v911 = vld [vmem:[#allocation7 + $0x220] sm:$0xff]
        %v912 = vld [vmem:[#allocation7 + $0x228] sm:$0xff]
        %v913 = vld [vmem:[#allocation7 + $0x230] sm:$0xff]
        %v914 = vld [vmem:[#allocation7 + $0x238] sm:$0xff]
        %v915 = vld [vmem:[#allocation7 + $0x240] sm:$0xff]
        %v916 = vld [vmem:[#allocation7 + $0x248] sm:$0xff]
        %v917 = vld [vmem:[#allocation7 + $0x250] sm:$0xff]
        %v918 = vld [vmem:[#allocation7 + $0x258] sm:$0xff]
        %v919 = vld [vmem:[#allocation7 + $0x260] sm:$0xff]
        %v920 = vld [vmem:[#allocation7 + $0x268] sm:$0xff]
        %v921 = vld [vmem:[#allocation7 + $0x270] sm:$0xff]
        %v922 = vld [vmem:[#allocation7 + $0x278] sm:$0xff]
        %v923 = vld [vmem:[#allocation7 + $0x280] sm:$0xff]
        %v924 = vld [vmem:[#allocation7 + $0x288] sm:$0xff]
        %v925 = vld [vmem:[#allocation7 + $0x290] sm:$0xff]
        %v926 = vld [vmem:[#allocation7 + $0x298] sm:$0xff]
        %v927 = vld [vmem:[#allocation7 + $0x2a0] sm:$0xff]
        %v928 = vld [vmem:[#allocation7 + $0x2a8] sm:$0xff]
        %v929 = vld [vmem:[#allocation7 + $0x2b0] sm:$0xff]
        %v930 = vld [vmem:[#allocation7 + $0x2b8] sm:$0xff]
        %v931 = vld [vmem:[#allocation7 + $0x2c0] sm:$0xff]
        %v932 = vld [vmem:[#allocation7 + $0x2c8] sm:$0xff]
        %v933 = vld [vmem:[#allocation7 + $0x2d0] sm:$0xff]
        %v934 = vld [vmem:[#allocation7 + $0x2d8] sm:$0xff]
        %v935 = vld [vmem:[#allocation7 + $0x2e0] sm:$0xff]
        %v936 = vld [vmem:[#allocation7 + $0x2e8] sm:$0xff]
        %v937 = vld [vmem:[#allocation7 + $0x2f0] sm:$0xff]
        %v938 = vld [vmem:[#allocation7 + $0x2f8] sm:$0xff]
        %v939 = vld [vmem:[#allocation7 + $0x300] sm:$0xff]
        %v940 = vld [vmem:[#allocation7 + $0x308] sm:$0xff]
        %v941 = vld [vmem:[#allocation7 + $0x310] sm:$0xff]
        %v942 = vld [vmem:[#allocation7 + $0x318] sm:$0xff]
        %v943 = vld [vmem:[#allocation7 + $0x320] sm:$0xff]
        %v944 = vld [vmem:[#allocation7 + $0x328] sm:$0xff]
        %v945 = vld [vmem:[#allocation7 + $0x330] sm:$0xff]
        %v946 = vld [vmem:[#allocation7 + $0x338] sm:$0xff]
        %v947 = vld [vmem:[#allocation7 + $0x340] sm:$0xff]
        %v948 = vld [vmem:[#allocation7 + $0x348] sm:$0xff]
        %v949 = vld [vmem:[#allocation7 + $0x350] sm:$0xff]
        %v950 = vld [vmem:[#allocation7 + $0x358] sm:$0xff]
        %v951 = vld [vmem:[#allocation7 + $0x360] sm:$0xff]
        %v952 = vld [vmem:[#allocation7 + $0x368] sm:$0xff]
        %v953 = vld [vmem:[#allocation7 + $0x370] sm:$0xff]
        %v954 = vld [vmem:[#allocation7 + $0x378] sm:$0xff]
        %v955 = vld [vmem:[#allocation7 + $0x380] sm:$0xff]
        %v956 = vld [vmem:[#allocation7 + $0x388] sm:$0xff]
        %v957 = vld [vmem:[#allocation7 + $0x390] sm:$0xff]
        %v958 = vld [vmem:[#allocation7 + $0x398] sm:$0xff]
        %v959 = vld [vmem:[#allocation7 + $0x3a0] sm:$0xff]
        %v960 = vld [vmem:[#allocation7 + $0x3a8] sm:$0xff]
        %v961 = vld [vmem:[#allocation7 + $0x3b0] sm:$0xff]
        %v962 = vld [vmem:[#allocation7 + $0x3b8] sm:$0xff]
        %v963 = vld [vmem:[#allocation7 + $0x3c0] sm:$0xff]
        %v964 = vld [vmem:[#allocation7 + $0x3c8] sm:$0xff]
        %v965 = vld [vmem:[#allocation7 + $0x3d0] sm:$0xff]
        %v966 = vld [vmem:[#allocation7 + $0x3d8] sm:$0xff]
        %v967 = vld [vmem:[#allocation7 + $0x3e0] sm:$0xff]
        %v968 = vld [vmem:[#allocation7 + $0x3e8] sm:$0xff]
        %v969 = vld [vmem:[#allocation7 + $0x3f0] sm:$0xff]
        %v970 = vld [vmem:[#allocation7 + $0x3f8] sm:$0xff]
        %v971 = vld [vmem:[#allocation7 + $0x400] sm:$0xff]
        %v972 = vld [vmem:[#allocation7 + $0x408] sm:$0xff]
        %v973 = vld [vmem:[#allocation7 + $0x410] sm:$0xff]
        %v974 = vld [vmem:[#allocation7 + $0x418] sm:$0xff]
        %v975 = vld [vmem:[#allocation7 + $0x420] sm:$0xff]
        %v976 = vld [vmem:[#allocation7 + $0x428] sm:$0xff]
        %v977 = vld [vmem:[#allocation7 + $0x430] sm:$0xff]
        %v978 = vld [vmem:[#allocation7 + $0x438] sm:$0xff]
        %v979 = vld [vmem:[#allocation7 + $0x440] sm:$0xff]
        %v980 = vld [vmem:[#allocation7 + $0x448] sm:$0xff]
        %v981 = vld [vmem:[#allocation7 + $0x450] sm:$0xff]
        %v982 = vld [vmem:[#allocation7 + $0x458] sm:$0xff]
        %v983 = vld [vmem:[#allocation7 + $0x460] sm:$0xff]
        %v984 = vld [vmem:[#allocation7 + $0x468] sm:$0xff]
        %v985 = vld [vmem:[#allocation7 + $0x470] sm:$0xff]
        %v986 = vld [vmem:[#allocation7 + $0x478] sm:$0xff]
        %v987 = vld [vmem:[#allocation7 + $0x480] sm:$0xff]
        %v988 = vld [vmem:[#allocation7 + $0x488] sm:$0xff]
        %v989 = vld [vmem:[#allocation7 + $0x490] sm:$0xff]
        %v990 = vld [vmem:[#allocation7 + $0x498] sm:$0xff]
        %v991 = vld [vmem:[#allocation7 + $0x4a0] sm:$0xff]
        %v992 = vld [vmem:[#allocation7 + $0x4a8] sm:$0xff]
        %v993 = vld [vmem:[#allocation7 + $0x4b0] sm:$0xff]
        %v994 = vld [vmem:[#allocation7 + $0x4b8] sm:$0xff]
        %v995 = vld [vmem:[#allocation7 + $0x4c0] sm:$0xff]
        %v996 = vld [vmem:[#allocation7 + $0x4c8] sm:$0xff]
        %v997 = vld [vmem:[#allocation7 + $0x4d0] sm:$0xff]
        %v998 = vld [vmem:[#allocation7 + $0x4d8] sm:$0xff]
        %v999 = vld [vmem:[#allocation7 + $0x4e0] sm:$0xff]
        %v1000 = vld [vmem:[#allocation7 + $0x4e8] sm:$0xff]
        %v1001 = vld [vmem:[#allocation7 + $0x4f0] sm:$0xff]
        %v1002 = vld [vmem:[#allocation7 + $0x4f8] sm:$0xff]
        %v1003 = vld [vmem:[#allocation7 + $0x500] sm:$0xff]
        %v1004 = vld [vmem:[#allocation7 + $0x508] sm:$0xff]
        %v1005 = vld [vmem:[#allocation7 + $0x510] sm:$0xff]
        %v1006 = vld [vmem:[#allocation7 + $0x518] sm:$0xff]
        %v1007 = vld [vmem:[#allocation7 + $0x520] sm:$0xff]
        %v1008 = vld [vmem:[#allocation7 + $0x528] sm:$0xff]
        %v1009 = vld [vmem:[#allocation7 + $0x530] sm:$0xff]
        %v1010 = vld [vmem:[#allocation7 + $0x538] sm:$0xff]
        %v1011 = vld [vmem:[#allocation7 + $0x540] sm:$0xff]
        %v1012 = vld [vmem:[#allocation7 + $0x548] sm:$0xff]
        %v1013 = vld [vmem:[#allocation7 + $0x550] sm:$0xff]
        %v1014 = vld [vmem:[#allocation7 + $0x558] sm:$0xff]
        %v1015 = vld [vmem:[#allocation7 + $0x560] sm:$0xff]
        %v1016 = vld [vmem:[#allocation7 + $0x568] sm:$0xff]
        %v1017 = vld [vmem:[#allocation7 + $0x570] sm:$0xff]
        %v1018 = vld [vmem:[#allocation7 + $0x578] sm:$0xff]
        %v1019 = vld [vmem:[#allocation7 + $0x580] sm:$0xff]
        %v1020 = vld [vmem:[#allocation7 + $0x588] sm:$0xff]
        %v1021 = vld [vmem:[#allocation7 + $0x590] sm:$0xff]
        %v1022 = vld [vmem:[#allocation7 + $0x598] sm:$0xff]
        %v1023 = vld [vmem:[#allocation7 + $0x5a0] sm:$0xff]
        %v1024 = vld [vmem:[#allocation7 + $0x5a8] sm:$0xff]
        %v1025 = vld [vmem:[#allocation7 + $0x5b0] sm:$0xff]
        %v1026 = vld [vmem:[#allocation7 + $0x5b8] sm:$0xff]
        %v1027 = vld [vmem:[#allocation7 + $0x5c0] sm:$0xff]
        %v1028 = vld [vmem:[#allocation7 + $0x5c8] sm:$0xff]
        %v1029 = vld [vmem:[#allocation7 + $0x5d0] sm:$0xff]
        %v1030 = vld [vmem:[#allocation7 + $0x5d8] sm:$0xff]
        %v1031 = vld [vmem:[#allocation7 + $0x5e0] sm:$0xff]
        %v1032 = vld [vmem:[#allocation7 + $0x5e8] sm:$0xff]
        %v1033 = vld [vmem:[#allocation7 + $0x5f0] sm:$0xff]
        %v1034 = vld [vmem:[#allocation7 + $0x5f8] sm:$0xff]
        %v1035 = vld [vmem:[#allocation7 + $0x600] sm:$0xff]
        %v1036 = vld [vmem:[#allocation7 + $0x608] sm:$0xff]
        %v1037 = vld [vmem:[#allocation7 + $0x610] sm:$0xff]
        %v1038 = vld [vmem:[#allocation7 + $0x618] sm:$0xff]
        %v1039 = vld [vmem:[#allocation7 + $0x620] sm:$0xff]
        %v1040 = vld [vmem:[#allocation7 + $0x628] sm:$0xff]
        %v1041 = vld [vmem:[#allocation7 + $0x630] sm:$0xff]
        %v1042 = vld [vmem:[#allocation7 + $0x638] sm:$0xff]
        %v1043 = vld [vmem:[#allocation7 + $0x640] sm:$0xff]
        %v1044 = vld [vmem:[#allocation7 + $0x648] sm:$0xff]
        %v1045 = vld [vmem:[#allocation7 + $0x650] sm:$0xff]
        %v1046 = vld [vmem:[#allocation7 + $0x658] sm:$0xff]
        %v1047 = vld [vmem:[#allocation7 + $0x660] sm:$0xff]
        %v1048 = vld [vmem:[#allocation7 + $0x668] sm:$0xff]
        %v1049 = vld [vmem:[#allocation7 + $0x670] sm:$0xff]
        %v1050 = vld [vmem:[#allocation7 + $0x678] sm:$0xff]
        %v1051 = vld [vmem:[#allocation7 + $0x680] sm:$0xff]
        %v1052 = vld [vmem:[#allocation7 + $0x688] sm:$0xff]
        %v1053 = vld [vmem:[#allocation7 + $0x690] sm:$0xff]
        %v1054 = vld [vmem:[#allocation7 + $0x698] sm:$0xff]
        %v1055 = vld [vmem:[#allocation7 + $0x6a0] sm:$0xff]
        %v1056 = vld [vmem:[#allocation7 + $0x6a8] sm:$0xff]
        %v1057 = vld [vmem:[#allocation7 + $0x6b0] sm:$0xff]
        %v1058 = vld [vmem:[#allocation7 + $0x6b8] sm:$0xff]
        %v1059 = vld [vmem:[#allocation7 + $0x6c0] sm:$0xff]
        %v1060 = vld [vmem:[#allocation7 + $0x6c8] sm:$0xff]
        %v1061 = vld [vmem:[#allocation7 + $0x6d0] sm:$0xff]
        %v1062 = vld [vmem:[#allocation7 + $0x6d8] sm:$0xff]
        %v1063 = vld [vmem:[#allocation7 + $0x6e0] sm:$0xff]
        %v1064 = vld [vmem:[#allocation7 + $0x6e8] sm:$0xff]
        %v1065 = vld [vmem:[#allocation7 + $0x6f0] sm:$0xff]
        %v1066 = vld [vmem:[#allocation7 + $0x6f8] sm:$0xff]
        %v1067 = vld [vmem:[#allocation7 + $0x700] sm:$0xff]
        %v1068 = vld [vmem:[#allocation7 + $0x708] sm:$0xff]
        %v1069 = vld [vmem:[#allocation7 + $0x710] sm:$0xff]
        %v1070 = vld [vmem:[#allocation7 + $0x718] sm:$0xff]
        %v1071 = vld [vmem:[#allocation7 + $0x720] sm:$0xff]
        %v1072 = vld [vmem:[#allocation7 + $0x728] sm:$0xff]
        %v1073 = vld [vmem:[#allocation7 + $0x730] sm:$0xff]
        %v1074 = vld [vmem:[#allocation7 + $0x738] sm:$0xff]
        %v1075 = vld [vmem:[#allocation7 + $0x740] sm:$0xff]
        %v1076 = vld [vmem:[#allocation7 + $0x748] sm:$0xff]
        %v1077 = vld [vmem:[#allocation7 + $0x750] sm:$0xff]
        %v1078 = vld [vmem:[#allocation7 + $0x758] sm:$0xff]
        %v1079 = vld [vmem:[#allocation7 + $0x760] sm:$0xff]
        %v1080 = vld [vmem:[#allocation7 + $0x768] sm:$0xff]
        %v1081 = vld [vmem:[#allocation7 + $0x770] sm:$0xff]
        %v1082 = vld [vmem:[#allocation7 + $0x778] sm:$0xff]
        %v1083 = vld [vmem:[#allocation7 + $0x780] sm:$0xff]
        %v1084 = vld [vmem:[#allocation7 + $0x788] sm:$0xff]
        %v1085 = vld [vmem:[#allocation7 + $0x790] sm:$0xff]
        %v1086 = vld [vmem:[#allocation7 + $0x798] sm:$0xff]
        %v1087 = vld [vmem:[#allocation7 + $0x7a0] sm:$0xff]
        %v1088 = vld [vmem:[#allocation7 + $0x7a8] sm:$0xff]
        %v1089 = vld [vmem:[#allocation7 + $0x7b0] sm:$0xff]
        %v1090 = vld [vmem:[#allocation7 + $0x7b8] sm:$0xff]
        %v1091 = vld [vmem:[#allocation7 + $0x7c0] sm:$0xff]
        %v1092 = vld [vmem:[#allocation7 + $0x7c8] sm:$0xff]
        %v1093 = vld [vmem:[#allocation7 + $0x7d0] sm:$0xff]
        %v1094 = vld [vmem:[#allocation7 + $0x7d8] sm:$0xff]
        %v1095 = vld [vmem:[#allocation7 + $0x7e0] sm:$0xff]
        %v1096 = vld [vmem:[#allocation7 + $0x7e8] sm:$0xff]
        %v1097 = vld [vmem:[#allocation7 + $0x7f0] sm:$0xff]
        %v1098 = vld [vmem:[#allocation7 + $0x7f8] sm:$0xff]
        %v1107 = vunpack.c.l.b16 %v825
        %v1108 = vunpack.c.h.b16 %v825
        %v1109 = vunpack.c.l.b16 %v826
        %v1110 = vunpack.c.h.b16 %v826
        %v1111 = vunpack.c.l.b16 %v827
        %v1112 = vunpack.c.h.b16 %v827
        %v1113 = vunpack.c.l.b16 %v828
        %v1114 = vunpack.c.h.b16 %v828
        %v1115 = vunpack.c.l.b16 %v829
        %v1116 = vunpack.c.h.b16 %v829
        %v1117 = vunpack.c.l.b16 %v830
        %v1118 = vunpack.c.h.b16 %v830
        %v1119 = vunpack.c.l.b16 %v831
        %v1120 = vunpack.c.h.b16 %v831
        %v1121 = vunpack.c.l.b16 %v832
        %v1122 = vunpack.c.h.b16 %v832
        %v1123 = vpack.c.b16 %v1115, %v1107
        %v1124 = vpack.c.b16 %v1116, %v1108
        %v1125 = vpack.c.b16 %v1117, %v1109
        %v1126 = vpack.c.b16 %v1118, %v1110
        %v1127 = vpack.c.b16 %v1119, %v1111
        %v1128 = vpack.c.b16 %v1120, %v1112
        %v1129 = vpack.c.b16 %v1121, %v1113
        %v1130 = vpack.c.b16 %v1122, %v1114
        %v1395 = vunpack.c.l.b16 %v843
        %v1396 = vunpack.c.h.b16 %v843
        %v1397 = vunpack.c.l.b16 %v844
        %v1398 = vunpack.c.h.b16 %v844
        %v1399 = vunpack.c.l.b16 %v845
        %v1400 = vunpack.c.h.b16 %v845
        %v1401 = vunpack.c.l.b16 %v846
        %v1402 = vunpack.c.h.b16 %v846
        %v1403 = vunpack.c.l.b16 %v847
        %v1404 = vunpack.c.h.b16 %v847
        %v1405 = vunpack.c.l.b16 %v848
        %v1406 = vunpack.c.h.b16 %v848
        %v1407 = vunpack.c.l.b16 %v849
        %v1408 = vunpack.c.h.b16 %v849
        %v1409 = vunpack.c.l.b16 %v850
        %v1410 = vunpack.c.h.b16 %v850
        %v1411 = vunpack.c.l.b16 %v851
        %v1412 = vunpack.c.h.b16 %v851
        %v1413 = vunpack.c.l.b16 %v852
        %v1414 = vunpack.c.h.b16 %v852
        %v1415 = vunpack.c.l.b16 %v853
        %v1416 = vunpack.c.h.b16 %v853
        %v1417 = vunpack.c.l.b16 %v854
        %v1418 = vunpack.c.h.b16 %v854
        %v1419 = vunpack.c.l.b16 %v855
        %v1420 = vunpack.c.h.b16 %v855
        %v1421 = vunpack.c.l.b16 %v856
        %v1422 = vunpack.c.h.b16 %v856
        %v1423 = vunpack.c.l.b16 %v857
        %v1424 = vunpack.c.h.b16 %v857
        %v1425 = vunpack.c.l.b16 %v858
        %v1426 = vunpack.c.h.b16 %v858
        %v1427 = vunpack.c.l.b16 %v859
        %v1428 = vunpack.c.h.b16 %v859
        %v1429 = vunpack.c.l.b16 %v860
        %v1430 = vunpack.c.h.b16 %v860
        %v1431 = vunpack.c.l.b16 %v861
        %v1432 = vunpack.c.h.b16 %v861
        %v1433 = vunpack.c.l.b16 %v862
        %v1434 = vunpack.c.h.b16 %v862
        %v1435 = vunpack.c.l.b16 %v863
        %v1436 = vunpack.c.h.b16 %v863
        %v1437 = vunpack.c.l.b16 %v864
        %v1438 = vunpack.c.h.b16 %v864
        %v1439 = vunpack.c.l.b16 %v865
        %v1440 = vunpack.c.h.b16 %v865
        %v1441 = vunpack.c.l.b16 %v866
        %v1442 = vunpack.c.h.b16 %v866
        %v1443 = vunpack.c.l.b16 %v867
        %v1444 = vunpack.c.h.b16 %v867
        %v1445 = vunpack.c.l.b16 %v868
        %v1446 = vunpack.c.h.b16 %v868
        %v1447 = vunpack.c.l.b16 %v869
        %v1448 = vunpack.c.h.b16 %v869
        %v1449 = vunpack.c.l.b16 %v870
        %v1450 = vunpack.c.h.b16 %v870
        %v1451 = vunpack.c.l.b16 %v871
        %v1452 = vunpack.c.h.b16 %v871
        %v1453 = vunpack.c.l.b16 %v872
        %v1454 = vunpack.c.h.b16 %v872
        %v1455 = vunpack.c.l.b16 %v873
        %v1456 = vunpack.c.h.b16 %v873
        %v1457 = vunpack.c.l.b16 %v874
        %v1458 = vunpack.c.h.b16 %v874
        %v1459 = vunpack.c.l.b16 %v875
        %v1460 = vunpack.c.h.b16 %v875
        %v1461 = vunpack.c.l.b16 %v876
        %v1462 = vunpack.c.h.b16 %v876
        %v1463 = vunpack.c.l.b16 %v877
        %v1464 = vunpack.c.h.b16 %v877
        %v1465 = vunpack.c.l.b16 %v878
        %v1466 = vunpack.c.h.b16 %v878
        %v1467 = vunpack.c.l.b16 %v879
        %v1468 = vunpack.c.h.b16 %v879
        %v1469 = vunpack.c.l.b16 %v880
        %v1470 = vunpack.c.h.b16 %v880
        %v1471 = vunpack.c.l.b16 %v881
        %v1472 = vunpack.c.h.b16 %v881
        %v1473 = vunpack.c.l.b16 %v882
        %v1474 = vunpack.c.h.b16 %v882
        %v1475 = vunpack.c.l.b16 %v883
        %v1476 = vunpack.c.h.b16 %v883
        %v1477 = vunpack.c.l.b16 %v884
        %v1478 = vunpack.c.h.b16 %v884
        %v1479 = vunpack.c.l.b16 %v885
        %v1480 = vunpack.c.h.b16 %v885
        %v1481 = vunpack.c.l.b16 %v886
        %v1482 = vunpack.c.h.b16 %v886
        %v1483 = vunpack.c.l.b16 %v887
        %v1484 = vunpack.c.h.b16 %v887
        %v1485 = vunpack.c.l.b16 %v888
        %v1486 = vunpack.c.h.b16 %v888
        %v1487 = vunpack.c.l.b16 %v889
        %v1488 = vunpack.c.h.b16 %v889
        %v1489 = vunpack.c.l.b16 %v890
        %v1490 = vunpack.c.h.b16 %v890
        %v1491 = vunpack.c.l.b16 %v891
        %v1492 = vunpack.c.h.b16 %v891
        %v1493 = vunpack.c.l.b16 %v892
        %v1494 = vunpack.c.h.b16 %v892
        %v1495 = vunpack.c.l.b16 %v893
        %v1496 = vunpack.c.h.b16 %v893
        %v1497 = vunpack.c.l.b16 %v894
        %v1498 = vunpack.c.h.b16 %v894
        %v1499 = vunpack.c.l.b16 %v895
        %v1500 = vunpack.c.h.b16 %v895
        %v1501 = vunpack.c.l.b16 %v896
        %v1502 = vunpack.c.h.b16 %v896
        %v1503 = vunpack.c.l.b16 %v897
        %v1504 = vunpack.c.h.b16 %v897
        %v1505 = vunpack.c.l.b16 %v898
        %v1506 = vunpack.c.h.b16 %v898
        %v1507 = vunpack.c.l.b16 %v899
        %v1508 = vunpack.c.h.b16 %v899
        %v1509 = vunpack.c.l.b16 %v900
        %v1510 = vunpack.c.h.b16 %v900
        %v1511 = vunpack.c.l.b16 %v901
        %v1512 = vunpack.c.h.b16 %v901
        %v1513 = vunpack.c.l.b16 %v902
        %v1514 = vunpack.c.h.b16 %v902
        %v1515 = vunpack.c.l.b16 %v903
        %v1516 = vunpack.c.h.b16 %v903
        %v1517 = vunpack.c.l.b16 %v904
        %v1518 = vunpack.c.h.b16 %v904
        %v1519 = vunpack.c.l.b16 %v905
        %v1520 = vunpack.c.h.b16 %v905
        %v1521 = vunpack.c.l.b16 %v906
        %v1522 = vunpack.c.h.b16 %v906
        %v1523 = vunpack.c.l.b16 %v907
        %v1524 = vunpack.c.h.b16 %v907
        %v1525 = vunpack.c.l.b16 %v908
        %v1526 = vunpack.c.h.b16 %v908
        %v1527 = vunpack.c.l.b16 %v909
        %v1528 = vunpack.c.h.b16 %v909
        %v1529 = vunpack.c.l.b16 %v910
        %v1530 = vunpack.c.h.b16 %v910
        %v1531 = vunpack.c.l.b16 %v911
        %v1532 = vunpack.c.h.b16 %v911
        %v1533 = vunpack.c.l.b16 %v912
        %v1534 = vunpack.c.h.b16 %v912
        %v1535 = vunpack.c.l.b16 %v913
        %v1536 = vunpack.c.h.b16 %v913
        %v1537 = vunpack.c.l.b16 %v914
        %v1538 = vunpack.c.h.b16 %v914
        %v1539 = vunpack.c.l.b16 %v915
        %v1540 = vunpack.c.h.b16 %v915
        %v1541 = vunpack.c.l.b16 %v916
        %v1542 = vunpack.c.h.b16 %v916
        %v1543 = vunpack.c.l.b16 %v917
        %v1544 = vunpack.c.h.b16 %v917
        %v1545 = vunpack.c.l.b16 %v918
        %v1546 = vunpack.c.h.b16 %v918
        %v1547 = vunpack.c.l.b16 %v919
        %v1548 = vunpack.c.h.b16 %v919
        %v1549 = vunpack.c.l.b16 %v920
        %v1550 = vunpack.c.h.b16 %v920
        %v1551 = vunpack.c.l.b16 %v921
        %v1552 = vunpack.c.h.b16 %v921
        %v1553 = vunpack.c.l.b16 %v922
        %v1554 = vunpack.c.h.b16 %v922
        %v1555 = vunpack.c.l.b16 %v923
        %v1556 = vunpack.c.h.b16 %v923
        %v1557 = vunpack.c.l.b16 %v924
        %v1558 = vunpack.c.h.b16 %v924
        %v1559 = vunpack.c.l.b16 %v925
        %v1560 = vunpack.c.h.b16 %v925
        %v1561 = vunpack.c.l.b16 %v926
        %v1562 = vunpack.c.h.b16 %v926
        %v1563 = vunpack.c.l.b16 %v927
        %v1564 = vunpack.c.h.b16 %v927
        %v1565 = vunpack.c.l.b16 %v928
        %v1566 = vunpack.c.h.b16 %v928
        %v1567 = vunpack.c.l.b16 %v929
        %v1568 = vunpack.c.h.b16 %v929
        %v1569 = vunpack.c.l.b16 %v930
        %v1570 = vunpack.c.h.b16 %v930
        %v1571 = vunpack.c.l.b16 %v931
        %v1572 = vunpack.c.h.b16 %v931
        %v1573 = vunpack.c.l.b16 %v932
        %v1574 = vunpack.c.h.b16 %v932
        %v1575 = vunpack.c.l.b16 %v933
        %v1576 = vunpack.c.h.b16 %v933
        %v1577 = vunpack.c.l.b16 %v934
        %v1578 = vunpack.c.h.b16 %v934
        %v1579 = vunpack.c.l.b16 %v935
        %v1580 = vunpack.c.h.b16 %v935
        %v1581 = vunpack.c.l.b16 %v936
        %v1582 = vunpack.c.h.b16 %v936
        %v1583 = vunpack.c.l.b16 %v937
        %v1584 = vunpack.c.h.b16 %v937
        %v1585 = vunpack.c.l.b16 %v938
        %v1586 = vunpack.c.h.b16 %v938
        %v1587 = vunpack.c.l.b16 %v939
        %v1588 = vunpack.c.h.b16 %v939
        %v1589 = vunpack.c.l.b16 %v940
        %v1590 = vunpack.c.h.b16 %v940
        %v1591 = vunpack.c.l.b16 %v941
        %v1592 = vunpack.c.h.b16 %v941
        %v1593 = vunpack.c.l.b16 %v942
        %v1594 = vunpack.c.h.b16 %v942
        %v1595 = vunpack.c.l.b16 %v943
        %v1596 = vunpack.c.h.b16 %v943
        %v1597 = vunpack.c.l.b16 %v944
        %v1598 = vunpack.c.h.b16 %v944
        %v1599 = vunpack.c.l.b16 %v945
        %v1600 = vunpack.c.h.b16 %v945
        %v1601 = vunpack.c.l.b16 %v946
        %v1602 = vunpack.c.h.b16 %v946
        %v1603 = vunpack.c.l.b16 %v947
        %v1604 = vunpack.c.h.b16 %v947
        %v1605 = vunpack.c.l.b16 %v948
        %v1606 = vunpack.c.h.b16 %v948
        %v1607 = vunpack.c.l.b16 %v949
        %v1608 = vunpack.c.h.b16 %v949
        %v1609 = vunpack.c.l.b16 %v950
        %v1610 = vunpack.c.h.b16 %v950
        %v1611 = vunpack.c.l.b16 %v951
        %v1612 = vunpack.c.h.b16 %v951
        %v1613 = vunpack.c.l.b16 %v952
        %v1614 = vunpack.c.h.b16 %v952
        %v1615 = vunpack.c.l.b16 %v953
        %v1616 = vunpack.c.h.b16 %v953
        %v1617 = vunpack.c.l.b16 %v954
        %v1618 = vunpack.c.h.b16 %v954
        %v1619 = vunpack.c.l.b16 %v955
        %v1620 = vunpack.c.h.b16 %v955
        %v1621 = vunpack.c.l.b16 %v956
        %v1622 = vunpack.c.h.b16 %v956
        %v1623 = vunpack.c.l.b16 %v957
        %v1624 = vunpack.c.h.b16 %v957
        %v1625 = vunpack.c.l.b16 %v958
        %v1626 = vunpack.c.h.b16 %v958
        %v1627 = vunpack.c.l.b16 %v959
        %v1628 = vunpack.c.h.b16 %v959
        %v1629 = vunpack.c.l.b16 %v960
        %v1630 = vunpack.c.h.b16 %v960
        %v1631 = vunpack.c.l.b16 %v961
        %v1632 = vunpack.c.h.b16 %v961
        %v1633 = vunpack.c.l.b16 %v962
        %v1634 = vunpack.c.h.b16 %v962
        %v1635 = vunpack.c.l.b16 %v963
        %v1636 = vunpack.c.h.b16 %v963
        %v1637 = vunpack.c.l.b16 %v964
        %v1638 = vunpack.c.h.b16 %v964
        %v1639 = vunpack.c.l.b16 %v965
        %v1640 = vunpack.c.h.b16 %v965
        %v1641 = vunpack.c.l.b16 %v966
        %v1642 = vunpack.c.h.b16 %v966
        %v1643 = vunpack.c.l.b16 %v967
        %v1644 = vunpack.c.h.b16 %v967
        %v1645 = vunpack.c.l.b16 %v968
        %v1646 = vunpack.c.h.b16 %v968
        %v1647 = vunpack.c.l.b16 %v969
        %v1648 = vunpack.c.h.b16 %v969
        %v1649 = vunpack.c.l.b16 %v970
        %v1650 = vunpack.c.h.b16 %v970
        %v1651 = vunpack.c.l.b16 %v971
        %v1652 = vunpack.c.h.b16 %v971
        %v1653 = vunpack.c.l.b16 %v972
        %v1654 = vunpack.c.h.b16 %v972
        %v1655 = vunpack.c.l.b16 %v973
        %v1656 = vunpack.c.h.b16 %v973
        %v1657 = vunpack.c.l.b16 %v974
        %v1658 = vunpack.c.h.b16 %v974
        %v1659 = vunpack.c.l.b16 %v975
        %v1660 = vunpack.c.h.b16 %v975
        %v1661 = vunpack.c.l.b16 %v976
        %v1662 = vunpack.c.h.b16 %v976
        %v1663 = vunpack.c.l.b16 %v977
        %v1664 = vunpack.c.h.b16 %v977
        %v1665 = vunpack.c.l.b16 %v978
        %v1666 = vunpack.c.h.b16 %v978
        %v1667 = vunpack.c.l.b16 %v979
        %v1668 = vunpack.c.h.b16 %v979
        %v1669 = vunpack.c.l.b16 %v980
        %v1670 = vunpack.c.h.b16 %v980
        %v1671 = vunpack.c.l.b16 %v981
        %v1672 = vunpack.c.h.b16 %v981
        %v1673 = vunpack.c.l.b16 %v982
        %v1674 = vunpack.c.h.b16 %v982
        %v1675 = vunpack.c.l.b16 %v983
        %v1676 = vunpack.c.h.b16 %v983
        %v1677 = vunpack.c.l.b16 %v984
        %v1678 = vunpack.c.h.b16 %v984
        %v1679 = vunpack.c.l.b16 %v985
        %v1680 = vunpack.c.h.b16 %v985
        %v1681 = vunpack.c.l.b16 %v986
        %v1682 = vunpack.c.h.b16 %v986
        %v1683 = vunpack.c.l.b16 %v987
        %v1684 = vunpack.c.h.b16 %v987
        %v1685 = vunpack.c.l.b16 %v988
        %v1686 = vunpack.c.h.b16 %v988
        %v1687 = vunpack.c.l.b16 %v989
        %v1688 = vunpack.c.h.b16 %v989
        %v1689 = vunpack.c.l.b16 %v990
        %v1690 = vunpack.c.h.b16 %v990
        %v1691 = vunpack.c.l.b16 %v991
        %v1692 = vunpack.c.h.b16 %v991
        %v1693 = vunpack.c.l.b16 %v992
        %v1694 = vunpack.c.h.b16 %v992
        %v1695 = vunpack.c.l.b16 %v993
        %v1696 = vunpack.c.h.b16 %v993
        %v1697 = vunpack.c.l.b16 %v994
        %v1698 = vunpack.c.h.b16 %v994
        %v1699 = vunpack.c.l.b16 %v995
        %v1700 = vunpack.c.h.b16 %v995
        %v1701 = vunpack.c.l.b16 %v996
        %v1702 = vunpack.c.h.b16 %v996
        %v1703 = vunpack.c.l.b16 %v997
        %v1704 = vunpack.c.h.b16 %v997
        %v1705 = vunpack.c.l.b16 %v998
        %v1706 = vunpack.c.h.b16 %v998
        %v1707 = vunpack.c.l.b16 %v999
        %v1708 = vunpack.c.h.b16 %v999
        %v1709 = vunpack.c.l.b16 %v1000
        %v1710 = vunpack.c.h.b16 %v1000
        %v1711 = vunpack.c.l.b16 %v1001
        %v1712 = vunpack.c.h.b16 %v1001
        %v1713 = vunpack.c.l.b16 %v1002
        %v1714 = vunpack.c.h.b16 %v1002
        %v1715 = vunpack.c.l.b16 %v1003
        %v1716 = vunpack.c.h.b16 %v1003
        %v1717 = vunpack.c.l.b16 %v1004
        %v1718 = vunpack.c.h.b16 %v1004
        %v1719 = vunpack.c.l.b16 %v1005
        %v1720 = vunpack.c.h.b16 %v1005
        %v1721 = vunpack.c.l.b16 %v1006
        %v1722 = vunpack.c.h.b16 %v1006
        %v1723 = vunpack.c.l.b16 %v1007
        %v1724 = vunpack.c.h.b16 %v1007
        %v1725 = vunpack.c.l.b16 %v1008
        %v1726 = vunpack.c.h.b16 %v1008
        %v1727 = vunpack.c.l.b16 %v1009
        %v1728 = vunpack.c.h.b16 %v1009
        %v1729 = vunpack.c.l.b16 %v1010
        %v1730 = vunpack.c.h.b16 %v1010
        %v1731 = vunpack.c.l.b16 %v1011
        %v1732 = vunpack.c.h.b16 %v1011
        %v1733 = vunpack.c.l.b16 %v1012
        %v1734 = vunpack.c.h.b16 %v1012
        %v1735 = vunpack.c.l.b16 %v1013
        %v1736 = vunpack.c.h.b16 %v1013
        %v1737 = vunpack.c.l.b16 %v1014
        %v1738 = vunpack.c.h.b16 %v1014
        %v1739 = vunpack.c.l.b16 %v1015
        %v1740 = vunpack.c.h.b16 %v1015
        %v1741 = vunpack.c.l.b16 %v1016
        %v1742 = vunpack.c.h.b16 %v1016
        %v1743 = vunpack.c.l.b16 %v1017
        %v1744 = vunpack.c.h.b16 %v1017
        %v1745 = vunpack.c.l.b16 %v1018
        %v1746 = vunpack.c.h.b16 %v1018
        %v1747 = vunpack.c.l.b16 %v1019
        %v1748 = vunpack.c.h.b16 %v1019
        %v1749 = vunpack.c.l.b16 %v1020
        %v1750 = vunpack.c.h.b16 %v1020
        %v1751 = vunpack.c.l.b16 %v1021
        %v1752 = vunpack.c.h.b16 %v1021
        %v1753 = vunpack.c.l.b16 %v1022
        %v1754 = vunpack.c.h.b16 %v1022
        %v1755 = vunpack.c.l.b16 %v1023
        %v1756 = vunpack.c.h.b16 %v1023
        %v1757 = vunpack.c.l.b16 %v1024
        %v1758 = vunpack.c.h.b16 %v1024
        %v1759 = vunpack.c.l.b16 %v1025
        %v1760 = vunpack.c.h.b16 %v1025
        %v1761 = vunpack.c.l.b16 %v1026
        %v1762 = vunpack.c.h.b16 %v1026
        %v1763 = vunpack.c.l.b16 %v1027
        %v1764 = vunpack.c.h.b16 %v1027
        %v1765 = vunpack.c.l.b16 %v1028
        %v1766 = vunpack.c.h.b16 %v1028
        %v1767 = vunpack.c.l.b16 %v1029
        %v1768 = vunpack.c.h.b16 %v1029
        %v1769 = vunpack.c.l.b16 %v1030
        %v1770 = vunpack.c.h.b16 %v1030
        %v1771 = vunpack.c.l.b16 %v1031
        %v1772 = vunpack.c.h.b16 %v1031
        %v1773 = vunpack.c.l.b16 %v1032
        %v1774 = vunpack.c.h.b16 %v1032
        %v1775 = vunpack.c.l.b16 %v1033
        %v1776 = vunpack.c.h.b16 %v1033
        %v1777 = vunpack.c.l.b16 %v1034
        %v1778 = vunpack.c.h.b16 %v1034
        %v1779 = vunpack.c.l.b16 %v1035
        %v1780 = vunpack.c.h.b16 %v1035
        %v1781 = vunpack.c.l.b16 %v1036
        %v1782 = vunpack.c.h.b16 %v1036
        %v1783 = vunpack.c.l.b16 %v1037
        %v1784 = vunpack.c.h.b16 %v1037
        %v1785 = vunpack.c.l.b16 %v1038
        %v1786 = vunpack.c.h.b16 %v1038
        %v1787 = vunpack.c.l.b16 %v1039
        %v1788 = vunpack.c.h.b16 %v1039
        %v1789 = vunpack.c.l.b16 %v1040
        %v1790 = vunpack.c.h.b16 %v1040
        %v1791 = vunpack.c.l.b16 %v1041
        %v1792 = vunpack.c.h.b16 %v1041
        %v1793 = vunpack.c.l.b16 %v1042
        %v1794 = vunpack.c.h.b16 %v1042
        %v1795 = vunpack.c.l.b16 %v1043
        %v1796 = vunpack.c.h.b16 %v1043
        %v1797 = vunpack.c.l.b16 %v1044
        %v1798 = vunpack.c.h.b16 %v1044
        %v1799 = vunpack.c.l.b16 %v1045
        %v1800 = vunpack.c.h.b16 %v1045
        %v1801 = vunpack.c.l.b16 %v1046
        %v1802 = vunpack.c.h.b16 %v1046
        %v1803 = vunpack.c.l.b16 %v1047
        %v1804 = vunpack.c.h.b16 %v1047
        %v1805 = vunpack.c.l.b16 %v1048
        %v1806 = vunpack.c.h.b16 %v1048
        %v1807 = vunpack.c.l.b16 %v1049
        %v1808 = vunpack.c.h.b16 %v1049
        %v1809 = vunpack.c.l.b16 %v1050
        %v1810 = vunpack.c.h.b16 %v1050
        %v1811 = vunpack.c.l.b16 %v1051
        %v1812 = vunpack.c.h.b16 %v1051
        %v1813 = vunpack.c.l.b16 %v1052
        %v1814 = vunpack.c.h.b16 %v1052
        %v1815 = vunpack.c.l.b16 %v1053
        %v1816 = vunpack.c.h.b16 %v1053
        %v1817 = vunpack.c.l.b16 %v1054
        %v1818 = vunpack.c.h.b16 %v1054
        %v1819 = vunpack.c.l.b16 %v1055
        %v1820 = vunpack.c.h.b16 %v1055
        %v1821 = vunpack.c.l.b16 %v1056
        %v1822 = vunpack.c.h.b16 %v1056
        %v1823 = vunpack.c.l.b16 %v1057
        %v1824 = vunpack.c.h.b16 %v1057
        %v1825 = vunpack.c.l.b16 %v1058
        %v1826 = vunpack.c.h.b16 %v1058
        %v1827 = vunpack.c.l.b16 %v1059
        %v1828 = vunpack.c.h.b16 %v1059
        %v1829 = vunpack.c.l.b16 %v1060
        %v1830 = vunpack.c.h.b16 %v1060
        %v1831 = vunpack.c.l.b16 %v1061
        %v1832 = vunpack.c.h.b16 %v1061
        %v1833 = vunpack.c.l.b16 %v1062
        %v1834 = vunpack.c.h.b16 %v1062
        %v1835 = vunpack.c.l.b16 %v1063
        %v1836 = vunpack.c.h.b16 %v1063
        %v1837 = vunpack.c.l.b16 %v1064
        %v1838 = vunpack.c.h.b16 %v1064
        %v1839 = vunpack.c.l.b16 %v1065
        %v1840 = vunpack.c.h.b16 %v1065
        %v1841 = vunpack.c.l.b16 %v1066
        %v1842 = vunpack.c.h.b16 %v1066
        %v1843 = vunpack.c.l.b16 %v1067
        %v1844 = vunpack.c.h.b16 %v1067
        %v1845 = vunpack.c.l.b16 %v1068
        %v1846 = vunpack.c.h.b16 %v1068
        %v1847 = vunpack.c.l.b16 %v1069
        %v1848 = vunpack.c.h.b16 %v1069
        %v1849 = vunpack.c.l.b16 %v1070
        %v1850 = vunpack.c.h.b16 %v1070
        %v1851 = vunpack.c.l.b16 %v1071
        %v1852 = vunpack.c.h.b16 %v1071
        %v1853 = vunpack.c.l.b16 %v1072
        %v1854 = vunpack.c.h.b16 %v1072
        %v1855 = vunpack.c.l.b16 %v1073
        %v1856 = vunpack.c.h.b16 %v1073
        %v1857 = vunpack.c.l.b16 %v1074
        %v1858 = vunpack.c.h.b16 %v1074
        %v1859 = vunpack.c.l.b16 %v1075
        %v1860 = vunpack.c.h.b16 %v1075
        %v1861 = vunpack.c.l.b16 %v1076
        %v1862 = vunpack.c.h.b16 %v1076
        %v1863 = vunpack.c.l.b16 %v1077
        %v1864 = vunpack.c.h.b16 %v1077
        %v1865 = vunpack.c.l.b16 %v1078
        %v1866 = vunpack.c.h.b16 %v1078
        %v1867 = vunpack.c.l.b16 %v1079
        %v1868 = vunpack.c.h.b16 %v1079
        %v1869 = vunpack.c.l.b16 %v1080
        %v1870 = vunpack.c.h.b16 %v1080
        %v1871 = vunpack.c.l.b16 %v1081
        %v1872 = vunpack.c.h.b16 %v1081
        %v1873 = vunpack.c.l.b16 %v1082
        %v1874 = vunpack.c.h.b16 %v1082
        %v1875 = vunpack.c.l.b16 %v1083
        %v1876 = vunpack.c.h.b16 %v1083
        %v1877 = vunpack.c.l.b16 %v1084
        %v1878 = vunpack.c.h.b16 %v1084
        %v1879 = vunpack.c.l.b16 %v1085
        %v1880 = vunpack.c.h.b16 %v1085
        %v1881 = vunpack.c.l.b16 %v1086
        %v1882 = vunpack.c.h.b16 %v1086
        %v1883 = vunpack.c.l.b16 %v1087
        %v1884 = vunpack.c.h.b16 %v1087
        %v1885 = vunpack.c.l.b16 %v1088
        %v1886 = vunpack.c.h.b16 %v1088
        %v1887 = vunpack.c.l.b16 %v1089
        %v1888 = vunpack.c.h.b16 %v1089
        %v1889 = vunpack.c.l.b16 %v1090
        %v1890 = vunpack.c.h.b16 %v1090
        %v1891 = vunpack.c.l.b16 %v1091
        %v1892 = vunpack.c.h.b16 %v1091
        %v1893 = vunpack.c.l.b16 %v1092
        %v1894 = vunpack.c.h.b16 %v1092
        %v1895 = vunpack.c.l.b16 %v1093
        %v1896 = vunpack.c.h.b16 %v1093
        %v1897 = vunpack.c.l.b16 %v1094
        %v1898 = vunpack.c.h.b16 %v1094
        %v1899 = vunpack.c.l.b16 %v1095
        %v1900 = vunpack.c.h.b16 %v1095
        %v1901 = vunpack.c.l.b16 %v1096
        %v1902 = vunpack.c.h.b16 %v1096
        %v1903 = vunpack.c.l.b16 %v1097
        %v1904 = vunpack.c.h.b16 %v1097
        %v1905 = vunpack.c.l.b16 %v1098
        %v1906 = vunpack.c.h.b16 %v1098
        %v1907 = vpack.c.b16 %v1399, %v1395
        %v1908 = vpack.c.b16 %v1400, %v1396
        %v1909 = vpack.c.b16 %v1401, %v1397
        %v1910 = vpack.c.b16 %v1402, %v1398
        %v1911 = vpack.c.b16 %v1407, %v1403
        %v1912 = vpack.c.b16 %v1408, %v1404
        %v1913 = vpack.c.b16 %v1409, %v1405
        %v1914 = vpack.c.b16 %v1410, %v1406
        %v1915 = vpack.c.b16 %v1415, %v1411
        %v1916 = vpack.c.b16 %v1416, %v1412
        %v1917 = vpack.c.b16 %v1417, %v1413
        %v1918 = vpack.c.b16 %v1418, %v1414
        %v1919 = vpack.c.b16 %v1423, %v1419
        %v1920 = vpack.c.b16 %v1424, %v1420
        %v1921 = vpack.c.b16 %v1425, %v1421
        %v1922 = vpack.c.b16 %v1426, %v1422
        %v1923 = vpack.c.b16 %v1431, %v1427
        %v1924 = vpack.c.b16 %v1432, %v1428
        %v1925 = vpack.c.b16 %v1433, %v1429
        %v1926 = vpack.c.b16 %v1434, %v1430
        %v1927 = vpack.c.b16 %v1439, %v1435
        %v1928 = vpack.c.b16 %v1440, %v1436
        %v1929 = vpack.c.b16 %v1441, %v1437
        %v1930 = vpack.c.b16 %v1442, %v1438
        %v1931 = vpack.c.b16 %v1447, %v1443
        %v1932 = vpack.c.b16 %v1448, %v1444
        %v1933 = vpack.c.b16 %v1449, %v1445
        %v1934 = vpack.c.b16 %v1450, %v1446
        %v1935 = vpack.c.b16 %v1455, %v1451
        %v1936 = vpack.c.b16 %v1456, %v1452
        %v1937 = vpack.c.b16 %v1457, %v1453
        %v1938 = vpack.c.b16 %v1458, %v1454
        %v1939 = vpack.c.b16 %v1463, %v1459
        %v1940 = vpack.c.b16 %v1464, %v1460
        %v1941 = vpack.c.b16 %v1465, %v1461
        %v1942 = vpack.c.b16 %v1466, %v1462
        %v1943 = vpack.c.b16 %v1471, %v1467
        %v1944 = vpack.c.b16 %v1472, %v1468
        %v1945 = vpack.c.b16 %v1473, %v1469
        %v1946 = vpack.c.b16 %v1474, %v1470
        %v1947 = vpack.c.b16 %v1479, %v1475
        %v1948 = vpack.c.b16 %v1480, %v1476
        %v1949 = vpack.c.b16 %v1481, %v1477
        %v1950 = vpack.c.b16 %v1482, %v1478
        %v1951 = vpack.c.b16 %v1487, %v1483
        %v1952 = vpack.c.b16 %v1488, %v1484
        %v1953 = vpack.c.b16 %v1489, %v1485
        %v1954 = vpack.c.b16 %v1490, %v1486
        %v1955 = vpack.c.b16 %v1495, %v1491
        %v1956 = vpack.c.b16 %v1496, %v1492
        %v1957 = vpack.c.b16 %v1497, %v1493
        %v1958 = vpack.c.b16 %v1498, %v1494
        %v1959 = vpack.c.b16 %v1503, %v1499
        %v1960 = vpack.c.b16 %v1504, %v1500
        %v1961 = vpack.c.b16 %v1505, %v1501
        %v1962 = vpack.c.b16 %v1506, %v1502
        %v1963 = vpack.c.b16 %v1511, %v1507
        %v1964 = vpack.c.b16 %v1512, %v1508
        %v1965 = vpack.c.b16 %v1513, %v1509
        %v1966 = vpack.c.b16 %v1514, %v1510
        %v1967 = vpack.c.b16 %v1519, %v1515
        %v1968 = vpack.c.b16 %v1520, %v1516
        %v1969 = vpack.c.b16 %v1521, %v1517
        %v1970 = vpack.c.b16 %v1522, %v1518
        %v1971 = vpack.c.b16 %v1527, %v1523
        %v1972 = vpack.c.b16 %v1528, %v1524
        %v1973 = vpack.c.b16 %v1529, %v1525
        %v1974 = vpack.c.b16 %v1530, %v1526
        %v1975 = vpack.c.b16 %v1535, %v1531
        %v1976 = vpack.c.b16 %v1536, %v1532
        %v1977 = vpack.c.b16 %v1537, %v1533
        %v1978 = vpack.c.b16 %v1538, %v1534
        %v1979 = vpack.c.b16 %v1543, %v1539
        %v1980 = vpack.c.b16 %v1544, %v1540
        %v1981 = vpack.c.b16 %v1545, %v1541
        %v1982 = vpack.c.b16 %v1546, %v1542
        %v1983 = vpack.c.b16 %v1551, %v1547
        %v1984 = vpack.c.b16 %v1552, %v1548
        %v1985 = vpack.c.b16 %v1553, %v1549
        %v1986 = vpack.c.b16 %v1554, %v1550
        %v1987 = vpack.c.b16 %v1559, %v1555
        %v1988 = vpack.c.b16 %v1560, %v1556
        %v1989 = vpack.c.b16 %v1561, %v1557
        %v1990 = vpack.c.b16 %v1562, %v1558
        %v1991 = vpack.c.b16 %v1567, %v1563
        %v1992 = vpack.c.b16 %v1568, %v1564
        %v1993 = vpack.c.b16 %v1569, %v1565
        %v1994 = vpack.c.b16 %v1570, %v1566
        %v1995 = vpack.c.b16 %v1575, %v1571
        %v1996 = vpack.c.b16 %v1576, %v1572
        %v1997 = vpack.c.b16 %v1577, %v1573
        %v1998 = vpack.c.b16 %v1578, %v1574
        %v1999 = vpack.c.b16 %v1583, %v1579
        %v2000 = vpack.c.b16 %v1584, %v1580
        %v2001 = vpack.c.b16 %v1585, %v1581
        %v2002 = vpack.c.b16 %v1586, %v1582
        %v2003 = vpack.c.b16 %v1591, %v1587
        %v2004 = vpack.c.b16 %v1592, %v1588
        %v2005 = vpack.c.b16 %v1593, %v1589
        %v2006 = vpack.c.b16 %v1594, %v1590
        %v2007 = vpack.c.b16 %v1599, %v1595
        %v2008 = vpack.c.b16 %v1600, %v1596
        %v2009 = vpack.c.b16 %v1601, %v1597
        %v2010 = vpack.c.b16 %v1602, %v1598
        %v2011 = vpack.c.b16 %v1607, %v1603
        %v2012 = vpack.c.b16 %v1608, %v1604
        %v2013 = vpack.c.b16 %v1609, %v1605
        %v2014 = vpack.c.b16 %v1610, %v1606
        %v2015 = vpack.c.b16 %v1615, %v1611
        %v2016 = vpack.c.b16 %v1616, %v1612
        %v2017 = vpack.c.b16 %v1617, %v1613
        %v2018 = vpack.c.b16 %v1618, %v1614
        %v2019 = vpack.c.b16 %v1623, %v1619
        %v2020 = vpack.c.b16 %v1624, %v1620
        %v2021 = vpack.c.b16 %v1625, %v1621
        %v2022 = vpack.c.b16 %v1626, %v1622
        %v2023 = vpack.c.b16 %v1631, %v1627
        %v2024 = vpack.c.b16 %v1632, %v1628
        %v2025 = vpack.c.b16 %v1633, %v1629
        %v2026 = vpack.c.b16 %v1634, %v1630
        %v2027 = vpack.c.b16 %v1639, %v1635
        %v2028 = vpack.c.b16 %v1640, %v1636
        %v2029 = vpack.c.b16 %v1641, %v1637
        %v2030 = vpack.c.b16 %v1642, %v1638
        %v2031 = vpack.c.b16 %v1647, %v1643
        %v2032 = vpack.c.b16 %v1648, %v1644
        %v2033 = vpack.c.b16 %v1649, %v1645
        %v2034 = vpack.c.b16 %v1650, %v1646
        %v2035 = vpack.c.b16 %v1655, %v1651
        %v2036 = vpack.c.b16 %v1656, %v1652
        %v2037 = vpack.c.b16 %v1657, %v1653
        %v2038 = vpack.c.b16 %v1658, %v1654
        %v2039 = vpack.c.b16 %v1663, %v1659
        %v2040 = vpack.c.b16 %v1664, %v1660
        %v2041 = vpack.c.b16 %v1665, %v1661
        %v2042 = vpack.c.b16 %v1666, %v1662
        %v2043 = vpack.c.b16 %v1671, %v1667
        %v2044 = vpack.c.b16 %v1672, %v1668
        %v2045 = vpack.c.b16 %v1673, %v1669
        %v2046 = vpack.c.b16 %v1674, %v1670
        %v2047 = vpack.c.b16 %v1679, %v1675
        %v2048 = vpack.c.b16 %v1680, %v1676
        %v2049 = vpack.c.b16 %v1681, %v1677
        %v2050 = vpack.c.b16 %v1682, %v1678
        %v2051 = vpack.c.b16 %v1687, %v1683
        %v2052 = vpack.c.b16 %v1688, %v1684
        %v2053 = vpack.c.b16 %v1689, %v1685
        %v2054 = vpack.c.b16 %v1690, %v1686
        %v2055 = vpack.c.b16 %v1695, %v1691
        %v2056 = vpack.c.b16 %v1696, %v1692
        %v2057 = vpack.c.b16 %v1697, %v1693
        %v2058 = vpack.c.b16 %v1698, %v1694
        %v2059 = vpack.c.b16 %v1703, %v1699
        %v2060 = vpack.c.b16 %v1704, %v1700
        %v2061 = vpack.c.b16 %v1705, %v1701
        %v2062 = vpack.c.b16 %v1706, %v1702
        %v2063 = vpack.c.b16 %v1711, %v1707
        %v2064 = vpack.c.b16 %v1712, %v1708
        %v2065 = vpack.c.b16 %v1713, %v1709
        %v2066 = vpack.c.b16 %v1714, %v1710
        %v2067 = vpack.c.b16 %v1719, %v1715
        %v2068 = vpack.c.b16 %v1720, %v1716
        %v2069 = vpack.c.b16 %v1721, %v1717
        %v2070 = vpack.c.b16 %v1722, %v1718
        %v2071 = vpack.c.b16 %v1727, %v1723
        %v2072 = vpack.c.b16 %v1728, %v1724
        %v2073 = vpack.c.b16 %v1729, %v1725
        %v2074 = vpack.c.b16 %v1730, %v1726
        %v2075 = vpack.c.b16 %v1735, %v1731
        %v2076 = vpack.c.b16 %v1736, %v1732
        %v2077 = vpack.c.b16 %v1737, %v1733
        %v2078 = vpack.c.b16 %v1738, %v1734
        %v2079 = vpack.c.b16 %v1743, %v1739
        %v2080 = vpack.c.b16 %v1744, %v1740
        %v2081 = vpack.c.b16 %v1745, %v1741
        %v2082 = vpack.c.b16 %v1746, %v1742
        %v2083 = vpack.c.b16 %v1751, %v1747
        %v2084 = vpack.c.b16 %v1752, %v1748
        %v2085 = vpack.c.b16 %v1753, %v1749
        %v2086 = vpack.c.b16 %v1754, %v1750
        %v2087 = vpack.c.b16 %v1759, %v1755
        %v2088 = vpack.c.b16 %v1760, %v1756
        %v2089 = vpack.c.b16 %v1761, %v1757
        %v2090 = vpack.c.b16 %v1762, %v1758
        %v2091 = vpack.c.b16 %v1767, %v1763
        %v2092 = vpack.c.b16 %v1768, %v1764
        %v2093 = vpack.c.b16 %v1769, %v1765
        %v2094 = vpack.c.b16 %v1770, %v1766
        %v2095 = vpack.c.b16 %v1775, %v1771
        %v2096 = vpack.c.b16 %v1776, %v1772
        %v2097 = vpack.c.b16 %v1777, %v1773
        %v2098 = vpack.c.b16 %v1778, %v1774
        %v2099 = vpack.c.b16 %v1783, %v1779
        %v2100 = vpack.c.b16 %v1784, %v1780
        %v2101 = vpack.c.b16 %v1785, %v1781
        %v2102 = vpack.c.b16 %v1786, %v1782
        %v2103 = vpack.c.b16 %v1791, %v1787
        %v2104 = vpack.c.b16 %v1792, %v1788
        %v2105 = vpack.c.b16 %v1793, %v1789
        %v2106 = vpack.c.b16 %v1794, %v1790
        %v2107 = vpack.c.b16 %v1799, %v1795
        %v2108 = vpack.c.b16 %v1800, %v1796
        %v2109 = vpack.c.b16 %v1801, %v1797
        %v2110 = vpack.c.b16 %v1802, %v1798
        %v2111 = vpack.c.b16 %v1807, %v1803
        %v2112 = vpack.c.b16 %v1808, %v1804
        %v2113 = vpack.c.b16 %v1809, %v1805
        %v2114 = vpack.c.b16 %v1810, %v1806
        %v2115 = vpack.c.b16 %v1815, %v1811
        %v2116 = vpack.c.b16 %v1816, %v1812
        %v2117 = vpack.c.b16 %v1817, %v1813
        %v2118 = vpack.c.b16 %v1818, %v1814
        %v2119 = vpack.c.b16 %v1823, %v1819
        %v2120 = vpack.c.b16 %v1824, %v1820
        %v2121 = vpack.c.b16 %v1825, %v1821
        %v2122 = vpack.c.b16 %v1826, %v1822
        %v2123 = vpack.c.b16 %v1831, %v1827
        %v2124 = vpack.c.b16 %v1832, %v1828
        %v2125 = vpack.c.b16 %v1833, %v1829
        %v2126 = vpack.c.b16 %v1834, %v1830
        %v2127 = vpack.c.b16 %v1839, %v1835
        %v2128 = vpack.c.b16 %v1840, %v1836
        %v2129 = vpack.c.b16 %v1841, %v1837
        %v2130 = vpack.c.b16 %v1842, %v1838
        %v2131 = vpack.c.b16 %v1847, %v1843
        %v2132 = vpack.c.b16 %v1848, %v1844
        %v2133 = vpack.c.b16 %v1849, %v1845
        %v2134 = vpack.c.b16 %v1850, %v1846
        %v2135 = vpack.c.b16 %v1855, %v1851
        %v2136 = vpack.c.b16 %v1856, %v1852
        %v2137 = vpack.c.b16 %v1857, %v1853
        %v2138 = vpack.c.b16 %v1858, %v1854
        %v2139 = vpack.c.b16 %v1863, %v1859
        %v2140 = vpack.c.b16 %v1864, %v1860
        %v2141 = vpack.c.b16 %v1865, %v1861
        %v2142 = vpack.c.b16 %v1866, %v1862
        %v2143 = vpack.c.b16 %v1871, %v1867
        %v2144 = vpack.c.b16 %v1872, %v1868
        %v2145 = vpack.c.b16 %v1873, %v1869
        %v2146 = vpack.c.b16 %v1874, %v1870
        %v2147 = vpack.c.b16 %v1879, %v1875
        %v2148 = vpack.c.b16 %v1880, %v1876
        %v2149 = vpack.c.b16 %v1881, %v1877
        %v2150 = vpack.c.b16 %v1882, %v1878
        %v2151 = vpack.c.b16 %v1887, %v1883
        %v2152 = vpack.c.b16 %v1888, %v1884
        %v2153 = vpack.c.b16 %v1889, %v1885
        %v2154 = vpack.c.b16 %v1890, %v1886
        %v2155 = vpack.c.b16 %v1895, %v1891
        %v2156 = vpack.c.b16 %v1896, %v1892
        %v2157 = vpack.c.b16 %v1897, %v1893
        %v2158 = vpack.c.b16 %v1898, %v1894
        %v2159 = vpack.c.b16 %v1903, %v1899
        %v2160 = vpack.c.b16 %v1904, %v1900
        %v2161 = vpack.c.b16 %v1905, %v1901
        %v2162 = vpack.c.b16 %v1906, %v1902
        %2419 = vmatprep.subr.bf16.mxu0 %v1908
        %2420 = vmatpush1.bf16.msra.mxu0 %v1907
        %2421 = vmatprep.subr.bf16.mxu0 %v1912
        %2422 = vmatpush1.bf16.msra.mxu0 %v1911
        %2423 = vmatprep.subr.bf16.mxu0 %v1916
        %2424 = vmatpush1.bf16.msra.mxu0 %v1915
        %2425 = vmatprep.subr.bf16.mxu0 %v1920
        %2426 = vmatpush1.bf16.msra.mxu0 %v1919
        %2427 = vmatprep.subr.bf16.mxu0 %v1924
        %2428 = vmatpush1.bf16.msra.mxu0 %v1923
        %2429 = vmatprep.subr.bf16.mxu0 %v1928
        %2430 = vmatpush1.bf16.msra.mxu0 %v1927
        %2431 = vmatprep.subr.bf16.mxu0 %v1932
        %2432 = vmatpush1.bf16.msra.mxu0 %v1931
        %2433 = vmatprep.subr.bf16.mxu0 %v1936
        %2434 = vmatpush1.bf16.msra.mxu0 %v1935
        %2435 = vmatprep.subr.bf16.mxu0 %v1940
        %2436 = vmatpush1.bf16.msra.mxu0 %v1939
        %2437 = vmatprep.subr.bf16.mxu0 %v1944
        %2438 = vmatpush1.bf16.msra.mxu0 %v1943
        %2439 = vmatprep.subr.bf16.mxu0 %v1948
        %2440 = vmatpush1.bf16.msra.mxu0 %v1947
        %2441 = vmatprep.subr.bf16.mxu0 %v1952
        %2442 = vmatpush1.bf16.msra.mxu0 %v1951
        %2443 = vmatprep.subr.bf16.mxu0 %v1956
        %2444 = vmatpush1.bf16.msra.mxu0 %v1955
        %2445 = vmatprep.subr.bf16.mxu0 %v1960
        %2446 = vmatpush1.bf16.msra.mxu0 %v1959
        %2447 = vmatprep.subr.bf16.mxu0 %v1964
        %2448 = vmatpush1.bf16.msra.mxu0 %v1963
        %2449 = vmatprep.subr.bf16.mxu0 %v1968
        %2450 = vmatpush1.bf16.msra.mxu0 %v1967
        %2451 = vmatprep.mubr.bf16.mxu0 %v1124
        %2452 = vmatmul.mubr.bf16.gmra.mrb[0].mxu0 %v1123
        %v2453 = vpop.f32.mrb[0].mxu0
        %v2454 = vadd.f32 0.0, %v2453
        %v2455 = vpop.f32.mrb[0].mxu0
        %v2456 = vadd.f32 0.0, %v2455
        %v2457 = vpop.f32.mrb[0].mxu0
        %v2458 = vadd.f32 0.0, %v2457
        %v2459 = vpop.f32.mrb[0].mxu0
        %v2460 = vadd.f32 0.0, %v2459
        %2461 = vdwg.mxu0
        %2462 = vmatprep.subr.bf16.mxu0 %v1972
        %2463 = vmatpush1.bf16.msra.mxu0 %v1971
        %2464 = vmatprep.subr.bf16.mxu0 %v1976
        %2465 = vmatpush1.bf16.msra.mxu0 %v1975
        %2466 = vmatprep.subr.bf16.mxu0 %v1980
        %2467 = vmatpush1.bf16.msra.mxu0 %v1979
        %2468 = vmatprep.subr.bf16.mxu0 %v1984
        %2469 = vmatpush1.bf16.msra.mxu0 %v1983
        %2470 = vmatprep.subr.bf16.mxu0 %v1988
        %2471 = vmatpush1.bf16.msra.mxu0 %v1987
        %2472 = vmatprep.subr.bf16.mxu0 %v1992
        %2473 = vmatpush1.bf16.msra.mxu0 %v1991
        %2474 = vmatprep.subr.bf16.mxu0 %v1996
        %2475 = vmatpush1.bf16.msra.mxu0 %v1995
        %2476 = vmatprep.subr.bf16.mxu0 %v2000
        %2477 = vmatpush1.bf16.msra.mxu0 %v1999
        %2478 = vmatprep.subr.bf16.mxu0 %v2004
        %2479 = vmatpush1.bf16.msra.mxu0 %v2003
        %2480 = vmatprep.subr.bf16.mxu0 %v2008
        %2481 = vmatpush1.bf16.msra.mxu0 %v2007
        %2482 = vmatprep.subr.bf16.mxu0 %v2012
        %2483 = vmatpush1.bf16.msra.mxu0 %v2011
        %2484 = vmatprep.subr.bf16.mxu0 %v2016
        %2485 = vmatpush1.bf16.msra.mxu0 %v2015
        %2486 = vmatprep.subr.bf16.mxu0 %v2020
        %2487 = vmatpush1.bf16.msra.mxu0 %v2019
        %2488 = vmatprep.subr.bf16.mxu0 %v2024
        %2489 = vmatpush1.bf16.msra.mxu0 %v2023
        %2490 = vmatprep.subr.bf16.mxu0 %v2028
        %2491 = vmatpush1.bf16.msra.mxu0 %v2027
        %2492 = vmatprep.subr.bf16.mxu0 %v2032
        %2493 = vmatpush1.bf16.msra.mxu0 %v2031
        %2494 = vmatprep.mubr.bf16.mxu0 %v1126
        %2495 = vmatmul.mubr.bf16.gmra.mrb[0].mxu0 %v1125
        %v2496 = vpop.f32.mrb[0].mxu0
        %v2497 = vadd.f32 %v2454, %v2496
        %v2498 = vpop.f32.mrb[0].mxu0
        %v2499 = vadd.f32 %v2456, %v2498
        %v2500 = vpop.f32.mrb[0].mxu0
        %v2501 = vadd.f32 %v2458, %v2500
        %v2502 = vpop.f32.mrb[0].mxu0
        %v2503 = vadd.f32 %v2460, %v2502
        %2504 = vdwg.mxu0
        %2505 = vmatprep.subr.bf16.mxu0 %v2036
        %2506 = vmatpush1.bf16.msra.mxu0 %v2035
        %2507 = vmatprep.subr.bf16.mxu0 %v2040
        %2508 = vmatpush1.bf16.msra.mxu0 %v2039
        %2509 = vmatprep.subr.bf16.mxu0 %v2044
        %2510 = vmatpush1.bf16.msra.mxu0 %v2043
        %2511 = vmatprep.subr.bf16.mxu0 %v2048
        %2512 = vmatpush1.bf16.msra.mxu0 %v2047
        %2513 = vmatprep.subr.bf16.mxu0 %v2052
        %2514 = vmatpush1.bf16.msra.mxu0 %v2051
        %2515 = vmatprep.subr.bf16.mxu0 %v2056
        %2516 = vmatpush1.bf16.msra.mxu0 %v2055
        %2517 = vmatprep.subr.bf16.mxu0 %v2060
        %2518 = vmatpush1.bf16.msra.mxu0 %v2059
        %2519 = vmatprep.subr.bf16.mxu0 %v2064
        %2520 = vmatpush1.bf16.msra.mxu0 %v2063
        %2521 = vmatprep.subr.bf16.mxu0 %v2068
        %2522 = vmatpush1.bf16.msra.mxu0 %v2067
        %2523 = vmatprep.subr.bf16.mxu0 %v2072
        %2524 = vmatpush1.bf16.msra.mxu0 %v2071
        %2525 = vmatprep.subr.bf16.mxu0 %v2076
        %2526 = vmatpush1.bf16.msra.mxu0 %v2075
        %2527 = vmatprep.subr.bf16.mxu0 %v2080
        %2528 = vmatpush1.bf16.msra.mxu0 %v2079
        %2529 = vmatprep.subr.bf16.mxu0 %v2084
        %2530 = vmatpush1.bf16.msra.mxu0 %v2083
        %2531 = vmatprep.subr.bf16.mxu0 %v2088
        %2532 = vmatpush1.bf16.msra.mxu0 %v2087
        %2533 = vmatprep.subr.bf16.mxu0 %v2092
        %2534 = vmatpush1.bf16.msra.mxu0 %v2091
        %2535 = vmatprep.subr.bf16.mxu0 %v2096
        %2536 = vmatpush1.bf16.msra.mxu0 %v2095
        %2537 = vmatprep.mubr.bf16.mxu0 %v1128
        %2538 = vmatmul.mubr.bf16.gmra.mrb[0].mxu0 %v1127
        %v2539 = vpop.f32.mrb[0].mxu0
        %v2540 = vadd.f32 %v2497, %v2539
        %v2541 = vpop.f32.mrb[0].mxu0
        %v2542 = vadd.f32 %v2499, %v2541
        %v2543 = vpop.f32.mrb[0].mxu0
        %v2544 = vadd.f32 %v2501, %v2543
        %v2545 = vpop.f32.mrb[0].mxu0
        %v2546 = vadd.f32 %v2503, %v2545
        %2547 = vdwg.mxu0
        %2548 = vmatprep.subr.bf16.mxu0 %v2100
        %2549 = vmatpush1.bf16.msra.mxu0 %v2099
        %2550 = vmatprep.subr.bf16.mxu0 %v2104
        %2551 = vmatpush1.bf16.msra.mxu0 %v2103
        %2552 = vmatprep.subr.bf16.mxu0 %v2108
        %2553 = vmatpush1.bf16.msra.mxu0 %v2107
        %2554 = vmatprep.subr.bf16.mxu0 %v2112
        %2555 = vmatpush1.bf16.msra.mxu0 %v2111
        %2556 = vmatprep.subr.bf16.mxu0 %v2116
        %2557 = vmatpush1.bf16.msra.mxu0 %v2115
        %2558 = vmatprep.subr.bf16.mxu0 %v2120
        %2559 = vmatpush1.bf16.msra.mxu0 %v2119
        %2560 = vmatprep.subr.bf16.mxu0 %v2124
        %2561 = vmatpush1.bf16.msra.mxu0 %v2123
        %2562 = vmatprep.subr.bf16.mxu0 %v2128
        %2563 = vmatpush1.bf16.msra.mxu0 %v2127
        %2564 = vmatprep.subr.bf16.mxu0 %v2132
        %2565 = vmatpush1.bf16.msra.mxu0 %v2131
        %2566 = vmatprep.subr.bf16.mxu0 %v2136
        %2567 = vmatpush1.bf16.msra.mxu0 %v2135
        %2568 = vmatprep.subr.bf16.mxu0 %v2140
        %2569 = vmatpush1.bf16.msra.mxu0 %v2139
        %2570 = vmatprep.subr.bf16.mxu0 %v2144
        %2571 = vmatpush1.bf16.msra.mxu0 %v2143
        %2572 = vmatprep.subr.bf16.mxu0 %v2148
        %2573 = vmatpush1.bf16.msra.mxu0 %v2147
        %2574 = vmatprep.subr.bf16.mxu0 %v2152
        %2575 = vmatpush1.bf16.msra.mxu0 %v2151
        %2576 = vmatprep.subr.bf16.mxu0 %v2156
        %2577 = vmatpush1.bf16.msra.mxu0 %v2155
        %2578 = vmatprep.subr.bf16.mxu0 %v2160
        %2579 = vmatpush1.bf16.msra.mxu0 %v2159
        %2580 = vmatprep.mubr.bf16.mxu0 %v1130
        %2581 = vmatmul.mubr.bf16.gmra.mrb[0].mxu0 %v1129
        %v2582 = vpop.f32.mrb[0].mxu0
        %v2583 = vadd.f32 %v2540, %v2582
        %v2584 = vpop.f32.mrb[0].mxu0
        %v2585 = vadd.f32 %v2542, %v2584
        %v2586 = vpop.f32.mrb[0].mxu0
        %v2587 = vadd.f32 %v2544, %v2586
        %v2588 = vpop.f32.mrb[0].mxu0
        %v2589 = vadd.f32 %v2546, %v2588
        %2590 = vdwg.mxu0
        %2591 = vmatprep.subr.bf16.mxu0 %v1910
        %2592 = vmatpush1.bf16.msra.mxu0 %v1909
        %2593 = vmatprep.subr.bf16.mxu0 %v1914
        %2594 = vmatpush1.bf16.msra.mxu0 %v1913
        %2595 = vmatprep.subr.bf16.mxu0 %v1918
        %2596 = vmatpush1.bf16.msra.mxu0 %v1917
        %2597 = vmatprep.subr.bf16.mxu0 %v1922
        %2598 = vmatpush1.bf16.msra.mxu0 %v1921
        %2599 = vmatprep.subr.bf16.mxu0 %v1926
        %2600 = vmatpush1.bf16.msra.mxu0 %v1925
        %2601 = vmatprep.subr.bf16.mxu0 %v1930
        %2602 = vmatpush1.bf16.msra.mxu0 %v1929
        %2603 = vmatprep.subr.bf16.mxu0 %v1934
        %2604 = vmatpush1.bf16.msra.mxu0 %v1933
        %2605 = vmatprep.subr.bf16.mxu0 %v1938
        %2606 = vmatpush1.bf16.msra.mxu0 %v1937
        %2607 = vmatprep.subr.bf16.mxu0 %v1942
        %2608 = vmatpush1.bf16.msra.mxu0 %v1941
        %2609 = vmatprep.subr.bf16.mxu0 %v1946
        %2610 = vmatpush1.bf16.msra.mxu0 %v1945
        %2611 = vmatprep.subr.bf16.mxu0 %v1950
        %2612 = vmatpush1.bf16.msra.mxu0 %v1949
        %2613 = vmatprep.subr.bf16.mxu0 %v1954
        %2614 = vmatpush1.bf16.msra.mxu0 %v1953
        %2615 = vmatprep.subr.bf16.mxu0 %v1958
        %2616 = vmatpush1.bf16.msra.mxu0 %v1957
        %2617 = vmatprep.subr.bf16.mxu0 %v1962
        %2618 = vmatpush1.bf16.msra.mxu0 %v1961
        %2619 = vmatprep.subr.bf16.mxu0 %v1966
        %2620 = vmatpush1.bf16.msra.mxu0 %v1965
        %2621 = vmatprep.subr.bf16.mxu0 %v1970
        %2622 = vmatpush1.bf16.msra.mxu0 %v1969
        %2623 = vmatprep.mubr.bf16.mxu0 %v1124
        %2624 = vmatmul.mubr.bf16.gmra.mrb[0].mxu0 %v1123
        %v2625 = vpop.f32.mrb[0].mxu0
        %v2626 = vadd.f32 0.0, %v2625
        %v2627 = vpop.f32.mrb[0].mxu0
        %v2628 = vadd.f32 0.0, %v2627
        %v2629 = vpop.f32.mrb[0].mxu0
        %v2630 = vadd.f32 0.0, %v2629
        %v2631 = vpop.f32.mrb[0].mxu0
        %v2632 = vadd.f32 0.0, %v2631
        %2633 = vdwg.mxu0
        %2634 = vmatprep.subr.bf16.mxu0 %v1974
        %2635 = vmatpush1.bf16.msra.mxu0 %v1973
        %2636 = vmatprep.subr.bf16.mxu0 %v1978
        %2637 = vmatpush1.bf16.msra.mxu0 %v1977
        %2638 = vmatprep.subr.bf16.mxu0 %v1982
        %2639 = vmatpush1.bf16.msra.mxu0 %v1981
        %2640 = vmatprep.subr.bf16.mxu0 %v1986
        %2641 = vmatpush1.bf16.msra.mxu0 %v1985
        %2642 = vmatprep.subr.bf16.mxu0 %v1990
        %2643 = vmatpush1.bf16.msra.mxu0 %v1989
        %2644 = vmatprep.subr.bf16.mxu0 %v1994
        %2645 = vmatpush1.bf16.msra.mxu0 %v1993
        %2646 = vmatprep.subr.bf16.mxu0 %v1998
        %2647 = vmatpush1.bf16.msra.mxu0 %v1997
        %2648 = vmatprep.subr.bf16.mxu0 %v2002
        %2649 = vmatpush1.bf16.msra.mxu0 %v2001
        %2650 = vmatprep.subr.bf16.mxu0 %v2006
        %2651 = vmatpush1.bf16.msra.mxu0 %v2005
        %2652 = vmatprep.subr.bf16.mxu0 %v2010
        %2653 = vmatpush1.bf16.msra.mxu0 %v2009
        %2654 = vmatprep.subr.bf16.mxu0 %v2014
        %2655 = vmatpush1.bf16.msra.mxu0 %v2013
        %2656 = vmatprep.subr.bf16.mxu0 %v2018
        %2657 = vmatpush1.bf16.msra.mxu0 %v2017
        %2658 = vmatprep.subr.bf16.mxu0 %v2022
        %2659 = vmatpush1.bf16.msra.mxu0 %v2021
        %2660 = vmatprep.subr.bf16.mxu0 %v2026
        %2661 = vmatpush1.bf16.msra.mxu0 %v2025
        %2662 = vmatprep.subr.bf16.mxu0 %v2030
        %2663 = vmatpush1.bf16.msra.mxu0 %v2029
        %2664 = vmatprep.subr.bf16.mxu0 %v2034
        %2665 = vmatpush1.bf16.msra.mxu0 %v2033
        %2666 = vmatprep.mubr.bf16.mxu0 %v1126
        %2667 = vmatmul.mubr.bf16.gmra.mrb[0].mxu0 %v1125
        %v2668 = vpop.f32.mrb[0].mxu0
        %v2669 = vadd.f32 %v2626, %v2668
        %v2670 = vpop.f32.mrb[0].mxu0
        %v2671 = vadd.f32 %v2628, %v2670
        %v2672 = vpop.f32.mrb[0].mxu0
        %v2673 = vadd.f32 %v2630, %v2672
        %v2674 = vpop.f32.mrb[0].mxu0
        %v2675 = vadd.f32 %v2632, %v2674
        %2676 = vdwg.mxu0
        %2677 = vmatprep.subr.bf16.mxu0 %v2038
        %2678 = vmatpush1.bf16.msra.mxu0 %v2037
        %2679 = vmatprep.subr.bf16.mxu0 %v2042
        %2680 = vmatpush1.bf16.msra.mxu0 %v2041
        %2681 = vmatprep.subr.bf16.mxu0 %v2046
        %2682 = vmatpush1.bf16.msra.mxu0 %v2045
        %2683 = vmatprep.subr.bf16.mxu0 %v2050
        %2684 = vmatpush1.bf16.msra.mxu0 %v2049
        %2685 = vmatprep.subr.bf16.mxu0 %v2054
        %2686 = vmatpush1.bf16.msra.mxu0 %v2053
        %2687 = vmatprep.subr.bf16.mxu0 %v2058
        %2688 = vmatpush1.bf16.msra.mxu0 %v2057
        %2689 = vmatprep.subr.bf16.mxu0 %v2062
        %2690 = vmatpush1.bf16.msra.mxu0 %v2061
        %2691 = vmatprep.subr.bf16.mxu0 %v2066
        %2692 = vmatpush1.bf16.msra.mxu0 %v2065
        %2693 = vmatprep.subr.bf16.mxu0 %v2070
        %2694 = vmatpush1.bf16.msra.mxu0 %v2069
        %2695 = vmatprep.subr.bf16.mxu0 %v2074
        %2696 = vmatpush1.bf16.msra.mxu0 %v2073
        %2697 = vmatprep.subr.bf16.mxu0 %v2078
        %2698 = vmatpush1.bf16.msra.mxu0 %v2077
        %2699 = vmatprep.subr.bf16.mxu0 %v2082
        %2700 = vmatpush1.bf16.msra.mxu0 %v2081
        %2701 = vmatprep.subr.bf16.mxu0 %v2086
        %2702 = vmatpush1.bf16.msra.mxu0 %v2085
        %2703 = vmatprep.subr.bf16.mxu0 %v2090
        %2704 = vmatpush1.bf16.msra.mxu0 %v2089
        %2705 = vmatprep.subr.bf16.mxu0 %v2094
        %2706 = vmatpush1.bf16.msra.mxu0 %v2093
        %2707 = vmatprep.subr.bf16.mxu0 %v2098
        %2708 = vmatpush1.bf16.msra.mxu0 %v2097
        %2709 = vmatprep.mubr.bf16.mxu0 %v1128
        %2710 = vmatmul.mubr.bf16.gmra.mrb[0].mxu0 %v1127
        %v2711 = vpop.f32.mrb[0].mxu0
        %v2712 = vadd.f32 %v2669, %v2711
        %v2713 = vpop.f32.mrb[0].mxu0
        %v2714 = vadd.f32 %v2671, %v2713
        %v2715 = vpop.f32.mrb[0].mxu0
        %v2716 = vadd.f32 %v2673, %v2715
        %v2717 = vpop.f32.mrb[0].mxu0
        %v2718 = vadd.f32 %v2675, %v2717
        %2719 = vdwg.mxu0
        %2720 = vmatprep.subr.bf16.mxu0 %v2102
        %2721 = vmatpush1.bf16.msra.mxu0 %v2101
        %2722 = vmatprep.subr.bf16.mxu0 %v2106
        %2723 = vmatpush1.bf16.msra.mxu0 %v2105
        %2724 = vmatprep.subr.bf16.mxu0 %v2110
        %2725 = vmatpush1.bf16.msra.mxu0 %v2109
        %2726 = vmatprep.subr.bf16.mxu0 %v2114
        %2727 = vmatpush1.bf16.msra.mxu0 %v2113
        %2728 = vmatprep.subr.bf16.mxu0 %v2118
        %2729 = vmatpush1.bf16.msra.mxu0 %v2117
        %2730 = vmatprep.subr.bf16.mxu0 %v2122
        %2731 = vmatpush1.bf16.msra.mxu0 %v2121
        %2732 = vmatprep.subr.bf16.mxu0 %v2126
        %2733 = vmatpush1.bf16.msra.mxu0 %v2125
        %2734 = vmatprep.subr.bf16.mxu0 %v2130
        %2735 = vmatpush1.bf16.msra.mxu0 %v2129
        %2736 = vmatprep.subr.bf16.mxu0 %v2134
        %2737 = vmatpush1.bf16.msra.mxu0 %v2133
        %2738 = vmatprep.subr.bf16.mxu0 %v2138
        %2739 = vmatpush1.bf16.msra.mxu0 %v2137
        %2740 = vmatprep.subr.bf16.mxu0 %v2142
        %2741 = vmatpush1.bf16.msra.mxu0 %v2141
        %2742 = vmatprep.subr.bf16.mxu0 %v2146
        %2743 = vmatpush1.bf16.msra.mxu0 %v2145
        %2744 = vmatprep.subr.bf16.mxu0 %v2150
        %2745 = vmatpush1.bf16.msra.mxu0 %v2149
        %2746 = vmatprep.subr.bf16.mxu0 %v2154
        %2747 = vmatpush1.bf16.msra.mxu0 %v2153
        %2748 = vmatprep.subr.bf16.mxu0 %v2158
        %2749 = vmatpush1.bf16.msra.mxu0 %v2157
        %2750 = vmatprep.subr.bf16.mxu0 %v2162
        %2751 = vmatpush1.bf16.msra.mxu0 %v2161
        %2752 = vmatprep.mubr.bf16.mxu0 %v1130
        %2753 = vmatmul.mubr.bf16.gmra.mrb[0].mxu0 %v1129
        %v2754 = vpop.f32.mrb[0].mxu0
        %v2755 = vadd.f32 %v2712, %v2754
        %v2756 = vpop.f32.mrb[0].mxu0
        %v2757 = vadd.f32 %v2714, %v2756
        %v2758 = vpop.f32.mrb[0].mxu0
        %v2759 = vadd.f32 %v2716, %v2758
        %v2760 = vpop.f32.mrb[0].mxu0
        %v2761 = vadd.f32 %v2718, %v2760
        %2762 = vdwg.mxu0
        %v2763 = vld [vmem:[#allocation9] sm:$0xff]
        %v2764 = vld [vmem:[#allocation9 + $0x8] sm:$0xff]
        %v2765 = vld [vmem:[#allocation9 + $0x10] sm:$0xff]
        %v2766 = vld [vmem:[#allocation9 + $0x18] sm:$0xff]
        %v2767 = vld [vmem:[#allocation9 + $0x20] sm:$0xff]
        %v2768 = vld [vmem:[#allocation9 + $0x28] sm:$0xff]
        %v2769 = vld [vmem:[#allocation9 + $0x30] sm:$0xff]
        %v2770 = vld [vmem:[#allocation9 + $0x38] sm:$0xff]
        %v2771 = vld [vmem:[#allocation9 + $0x40] sm:$0xff]
        %v2772 = vld [vmem:[#allocation9 + $0x48] sm:$0xff]
        %v2773 = vld [vmem:[#allocation9 + $0x50] sm:$0xff]
        %v2774 = vld [vmem:[#allocation9 + $0x58] sm:$0xff]
        %v2775 = vld [vmem:[#allocation9 + $0x60] sm:$0xff]
        %v2776 = vld [vmem:[#allocation9 + $0x68] sm:$0xff]
        %v2777 = vld [vmem:[#allocation9 + $0x70] sm:$0xff]
        %v2778 = vld [vmem:[#allocation9 + $0x78] sm:$0xff]
        %v2779 = vld [vmem:[#allocation9 + $0x80] sm:$0xff]
        %v2780 = vld [vmem:[#allocation9 + $0x88] sm:$0xff]
        %v2781 = vld [vmem:[#allocation9 + $0x90] sm:$0xff]
        %v2782 = vld [vmem:[#allocation9 + $0x98] sm:$0xff]
        %v2783 = vld [vmem:[#allocation9 + $0xa0] sm:$0xff]
        %v2784 = vld [vmem:[#allocation9 + $0xa8] sm:$0xff]
        %v2785 = vld [vmem:[#allocation9 + $0xb0] sm:$0xff]
        %v2786 = vld [vmem:[#allocation9 + $0xb8] sm:$0xff]
        %v2787 = vld [vmem:[#allocation9 + $0xc0] sm:$0xff]
        %v2788 = vld [vmem:[#allocation9 + $0xc8] sm:$0xff]
        %v2789 = vld [vmem:[#allocation9 + $0xd0] sm:$0xff]
        %v2790 = vld [vmem:[#allocation9 + $0xd8] sm:$0xff]
        %v2791 = vld [vmem:[#allocation9 + $0xe0] sm:$0xff]
        %v2792 = vld [vmem:[#allocation9 + $0xe8] sm:$0xff]
        %v2793 = vld [vmem:[#allocation9 + $0xf0] sm:$0xff]
        %v2794 = vld [vmem:[#allocation9 + $0xf8] sm:$0xff]
        %v2795 = vld [vmem:[#allocation9 + $0x100] sm:$0xff]
        %v2796 = vld [vmem:[#allocation9 + $0x108] sm:$0xff]
        %v2797 = vld [vmem:[#allocation9 + $0x110] sm:$0xff]
        %v2798 = vld [vmem:[#allocation9 + $0x118] sm:$0xff]
        %v2799 = vld [vmem:[#allocation9 + $0x120] sm:$0xff]
        %v2800 = vld [vmem:[#allocation9 + $0x128] sm:$0xff]
        %v2801 = vld [vmem:[#allocation9 + $0x130] sm:$0xff]
        %v2802 = vld [vmem:[#allocation9 + $0x138] sm:$0xff]
        %v2803 = vld [vmem:[#allocation9 + $0x140] sm:$0xff]
        %v2804 = vld [vmem:[#allocation9 + $0x148] sm:$0xff]
        %v2805 = vld [vmem:[#allocation9 + $0x150] sm:$0xff]
        %v2806 = vld [vmem:[#allocation9 + $0x158] sm:$0xff]
        %v2807 = vld [vmem:[#allocation9 + $0x160] sm:$0xff]
        %v2808 = vld [vmem:[#allocation9 + $0x168] sm:$0xff]
        %v2809 = vld [vmem:[#allocation9 + $0x170] sm:$0xff]
        %v2810 = vld [vmem:[#allocation9 + $0x178] sm:$0xff]
        %v2811 = vld [vmem:[#allocation9 + $0x180] sm:$0xff]
        %v2812 = vld [vmem:[#allocation9 + $0x188] sm:$0xff]
        %v2813 = vld [vmem:[#allocation9 + $0x190] sm:$0xff]
        %v2814 = vld [vmem:[#allocation9 + $0x198] sm:$0xff]
        %v2815 = vld [vmem:[#allocation9 + $0x1a0] sm:$0xff]
        %v2816 = vld [vmem:[#allocation9 + $0x1a8] sm:$0xff]
        %v2817 = vld [vmem:[#allocation9 + $0x1b0] sm:$0xff]
        %v2818 = vld [vmem:[#allocation9 + $0x1b8] sm:$0xff]
        %v2819 = vld [vmem:[#allocation9 + $0x1c0] sm:$0xff]
        %v2820 = vld [vmem:[#allocation9 + $0x1c8] sm:$0xff]
        %v2821 = vld [vmem:[#allocation9 + $0x1d0] sm:$0xff]
        %v2822 = vld [vmem:[#allocation9 + $0x1d8] sm:$0xff]
        %v2823 = vld [vmem:[#allocation9 + $0x1e0] sm:$0xff]
        %v2824 = vld [vmem:[#allocation9 + $0x1e8] sm:$0xff]
        %v2825 = vld [vmem:[#allocation9 + $0x1f0] sm:$0xff]
        %v2826 = vld [vmem:[#allocation9 + $0x1f8] sm:$0xff]
        %v2827 = vld [vmem:[#allocation9 + $0x200] sm:$0xff]
        %v2828 = vld [vmem:[#allocation9 + $0x208] sm:$0xff]
        %v2829 = vld [vmem:[#allocation9 + $0x210] sm:$0xff]
        %v2830 = vld [vmem:[#allocation9 + $0x218] sm:$0xff]
        %v2831 = vld [vmem:[#allocation9 + $0x220] sm:$0xff]
        %v2832 = vld [vmem:[#allocation9 + $0x228] sm:$0xff]
        %v2833 = vld [vmem:[#allocation9 + $0x230] sm:$0xff]
        %v2834 = vld [vmem:[#allocation9 + $0x238] sm:$0xff]
        %v2835 = vld [vmem:[#allocation9 + $0x240] sm:$0xff]
        %v2836 = vld [vmem:[#allocation9 + $0x248] sm:$0xff]
        %v2837 = vld [vmem:[#allocation9 + $0x250] sm:$0xff]
        %v2838 = vld [vmem:[#allocation9 + $0x258] sm:$0xff]
        %v2839 = vld [vmem:[#allocation9 + $0x260] sm:$0xff]
        %v2840 = vld [vmem:[#allocation9 + $0x268] sm:$0xff]
        %v2841 = vld [vmem:[#allocation9 + $0x270] sm:$0xff]
        %v2842 = vld [vmem:[#allocation9 + $0x278] sm:$0xff]
        %v2843 = vld [vmem:[#allocation9 + $0x280] sm:$0xff]
        %v2844 = vld [vmem:[#allocation9 + $0x288] sm:$0xff]
        %v2845 = vld [vmem:[#allocation9 + $0x290] sm:$0xff]
        %v2846 = vld [vmem:[#allocation9 + $0x298] sm:$0xff]
        %v2847 = vld [vmem:[#allocation9 + $0x2a0] sm:$0xff]
        %v2848 = vld [vmem:[#allocation9 + $0x2a8] sm:$0xff]
        %v2849 = vld [vmem:[#allocation9 + $0x2b0] sm:$0xff]
        %v2850 = vld [vmem:[#allocation9 + $0x2b8] sm:$0xff]
        %v2851 = vld [vmem:[#allocation9 + $0x2c0] sm:$0xff]
        %v2852 = vld [vmem:[#allocation9 + $0x2c8] sm:$0xff]
        %v2853 = vld [vmem:[#allocation9 + $0x2d0] sm:$0xff]
        %v2854 = vld [vmem:[#allocation9 + $0x2d8] sm:$0xff]
        %v2855 = vld [vmem:[#allocation9 + $0x2e0] sm:$0xff]
        %v2856 = vld [vmem:[#allocation9 + $0x2e8] sm:$0xff]
        %v2857 = vld [vmem:[#allocation9 + $0x2f0] sm:$0xff]
        %v2858 = vld [vmem:[#allocation9 + $0x2f8] sm:$0xff]
        %v2859 = vld [vmem:[#allocation9 + $0x300] sm:$0xff]
        %v2860 = vld [vmem:[#allocation9 + $0x308] sm:$0xff]
        %v2861 = vld [vmem:[#allocation9 + $0x310] sm:$0xff]
        %v2862 = vld [vmem:[#allocation9 + $0x318] sm:$0xff]
        %v2863 = vld [vmem:[#allocation9 + $0x320] sm:$0xff]
        %v2864 = vld [vmem:[#allocation9 + $0x328] sm:$0xff]
        %v2865 = vld [vmem:[#allocation9 + $0x330] sm:$0xff]
        %v2866 = vld [vmem:[#allocation9 + $0x338] sm:$0xff]
        %v2867 = vld [vmem:[#allocation9 + $0x340] sm:$0xff]
        %v2868 = vld [vmem:[#allocation9 + $0x348] sm:$0xff]
        %v2869 = vld [vmem:[#allocation9 + $0x350] sm:$0xff]
        %v2870 = vld [vmem:[#allocation9 + $0x358] sm:$0xff]
        %v2871 = vld [vmem:[#allocation9 + $0x360] sm:$0xff]
        %v2872 = vld [vmem:[#allocation9 + $0x368] sm:$0xff]
        %v2873 = vld [vmem:[#allocation9 + $0x370] sm:$0xff]
        %v2874 = vld [vmem:[#allocation9 + $0x378] sm:$0xff]
        %v2875 = vld [vmem:[#allocation9 + $0x380] sm:$0xff]
        %v2876 = vld [vmem:[#allocation9 + $0x388] sm:$0xff]
        %v2877 = vld [vmem:[#allocation9 + $0x390] sm:$0xff]
        %v2878 = vld [vmem:[#allocation9 + $0x398] sm:$0xff]
        %v2879 = vld [vmem:[#allocation9 + $0x3a0] sm:$0xff]
        %v2880 = vld [vmem:[#allocation9 + $0x3a8] sm:$0xff]
        %v2881 = vld [vmem:[#allocation9 + $0x3b0] sm:$0xff]
        %v2882 = vld [vmem:[#allocation9 + $0x3b8] sm:$0xff]
        %v2883 = vld [vmem:[#allocation9 + $0x3c0] sm:$0xff]
        %v2884 = vld [vmem:[#allocation9 + $0x3c8] sm:$0xff]
        %v2885 = vld [vmem:[#allocation9 + $0x3d0] sm:$0xff]
        %v2886 = vld [vmem:[#allocation9 + $0x3d8] sm:$0xff]
        %v2887 = vld [vmem:[#allocation9 + $0x3e0] sm:$0xff]
        %v2888 = vld [vmem:[#allocation9 + $0x3e8] sm:$0xff]
        %v2889 = vld [vmem:[#allocation9 + $0x3f0] sm:$0xff]
        %v2890 = vld [vmem:[#allocation9 + $0x3f8] sm:$0xff]
        %v2891 = vld [vmem:[#allocation9 + $0x400] sm:$0xff]
        %v2892 = vld [vmem:[#allocation9 + $0x408] sm:$0xff]
        %v2893 = vld [vmem:[#allocation9 + $0x410] sm:$0xff]
        %v2894 = vld [vmem:[#allocation9 + $0x418] sm:$0xff]
        %v2895 = vld [vmem:[#allocation9 + $0x420] sm:$0xff]
        %v2896 = vld [vmem:[#allocation9 + $0x428] sm:$0xff]
        %v2897 = vld [vmem:[#allocation9 + $0x430] sm:$0xff]
        %v2898 = vld [vmem:[#allocation9 + $0x438] sm:$0xff]
        %v2899 = vld [vmem:[#allocation9 + $0x440] sm:$0xff]
        %v2900 = vld [vmem:[#allocation9 + $0x448] sm:$0xff]
        %v2901 = vld [vmem:[#allocation9 + $0x450] sm:$0xff]
        %v2902 = vld [vmem:[#allocation9 + $0x458] sm:$0xff]
        %v2903 = vld [vmem:[#allocation9 + $0x460] sm:$0xff]
        %v2904 = vld [vmem:[#allocation9 + $0x468] sm:$0xff]
        %v2905 = vld [vmem:[#allocation9 + $0x470] sm:$0xff]
        %v2906 = vld [vmem:[#allocation9 + $0x478] sm:$0xff]
        %v2907 = vld [vmem:[#allocation9 + $0x480] sm:$0xff]
        %v2908 = vld [vmem:[#allocation9 + $0x488] sm:$0xff]
        %v2909 = vld [vmem:[#allocation9 + $0x490] sm:$0xff]
        %v2910 = vld [vmem:[#allocation9 + $0x498] sm:$0xff]
        %v2911 = vld [vmem:[#allocation9 + $0x4a0] sm:$0xff]
        %v2912 = vld [vmem:[#allocation9 + $0x4a8] sm:$0xff]
        %v2913 = vld [vmem:[#allocation9 + $0x4b0] sm:$0xff]
        %v2914 = vld [vmem:[#allocation9 + $0x4b8] sm:$0xff]
        %v2915 = vld [vmem:[#allocation9 + $0x4c0] sm:$0xff]
        %v2916 = vld [vmem:[#allocation9 + $0x4c8] sm:$0xff]
        %v2917 = vld [vmem:[#allocation9 + $0x4d0] sm:$0xff]
        %v2918 = vld [vmem:[#allocation9 + $0x4d8] sm:$0xff]
        %v2919 = vld [vmem:[#allocation9 + $0x4e0] sm:$0xff]
        %v2920 = vld [vmem:[#allocation9 + $0x4e8] sm:$0xff]
        %v2921 = vld [vmem:[#allocation9 + $0x4f0] sm:$0xff]
        %v2922 = vld [vmem:[#allocation9 + $0x4f8] sm:$0xff]
        %v2923 = vld [vmem:[#allocation9 + $0x500] sm:$0xff]
        %v2924 = vld [vmem:[#allocation9 + $0x508] sm:$0xff]
        %v2925 = vld [vmem:[#allocation9 + $0x510] sm:$0xff]
        %v2926 = vld [vmem:[#allocation9 + $0x518] sm:$0xff]
        %v2927 = vld [vmem:[#allocation9 + $0x520] sm:$0xff]
        %v2928 = vld [vmem:[#allocation9 + $0x528] sm:$0xff]
        %v2929 = vld [vmem:[#allocation9 + $0x530] sm:$0xff]
        %v2930 = vld [vmem:[#allocation9 + $0x538] sm:$0xff]
        %v2931 = vld [vmem:[#allocation9 + $0x540] sm:$0xff]
        %v2932 = vld [vmem:[#allocation9 + $0x548] sm:$0xff]
        %v2933 = vld [vmem:[#allocation9 + $0x550] sm:$0xff]
        %v2934 = vld [vmem:[#allocation9 + $0x558] sm:$0xff]
        %v2935 = vld [vmem:[#allocation9 + $0x560] sm:$0xff]
        %v2936 = vld [vmem:[#allocation9 + $0x568] sm:$0xff]
        %v2937 = vld [vmem:[#allocation9 + $0x570] sm:$0xff]
        %v2938 = vld [vmem:[#allocation9 + $0x578] sm:$0xff]
        %v2939 = vld [vmem:[#allocation9 + $0x580] sm:$0xff]
        %v2940 = vld [vmem:[#allocation9 + $0x588] sm:$0xff]
        %v2941 = vld [vmem:[#allocation9 + $0x590] sm:$0xff]
        %v2942 = vld [vmem:[#allocation9 + $0x598] sm:$0xff]
        %v2943 = vld [vmem:[#allocation9 + $0x5a0] sm:$0xff]
        %v2944 = vld [vmem:[#allocation9 + $0x5a8] sm:$0xff]
        %v2945 = vld [vmem:[#allocation9 + $0x5b0] sm:$0xff]
        %v2946 = vld [vmem:[#allocation9 + $0x5b8] sm:$0xff]
        %v2947 = vld [vmem:[#allocation9 + $0x5c0] sm:$0xff]
        %v2948 = vld [vmem:[#allocation9 + $0x5c8] sm:$0xff]
        %v2949 = vld [vmem:[#allocation9 + $0x5d0] sm:$0xff]
        %v2950 = vld [vmem:[#allocation9 + $0x5d8] sm:$0xff]
        %v2951 = vld [vmem:[#allocation9 + $0x5e0] sm:$0xff]
        %v2952 = vld [vmem:[#allocation9 + $0x5e8] sm:$0xff]
        %v2953 = vld [vmem:[#allocation9 + $0x5f0] sm:$0xff]
        %v2954 = vld [vmem:[#allocation9 + $0x5f8] sm:$0xff]
        %v2955 = vld [vmem:[#allocation9 + $0x600] sm:$0xff]
        %v2956 = vld [vmem:[#allocation9 + $0x608] sm:$0xff]
        %v2957 = vld [vmem:[#allocation9 + $0x610] sm:$0xff]
        %v2958 = vld [vmem:[#allocation9 + $0x618] sm:$0xff]
        %v2959 = vld [vmem:[#allocation9 + $0x620] sm:$0xff]
        %v2960 = vld [vmem:[#allocation9 + $0x628] sm:$0xff]
        %v2961 = vld [vmem:[#allocation9 + $0x630] sm:$0xff]
        %v2962 = vld [vmem:[#allocation9 + $0x638] sm:$0xff]
        %v2963 = vld [vmem:[#allocation9 + $0x640] sm:$0xff]
        %v2964 = vld [vmem:[#allocation9 + $0x648] sm:$0xff]
        %v2965 = vld [vmem:[#allocation9 + $0x650] sm:$0xff]
        %v2966 = vld [vmem:[#allocation9 + $0x658] sm:$0xff]
        %v2967 = vld [vmem:[#allocation9 + $0x660] sm:$0xff]
        %v2968 = vld [vmem:[#allocation9 + $0x668] sm:$0xff]
        %v2969 = vld [vmem:[#allocation9 + $0x670] sm:$0xff]
        %v2970 = vld [vmem:[#allocation9 + $0x678] sm:$0xff]
        %v2971 = vld [vmem:[#allocation9 + $0x680] sm:$0xff]
        %v2972 = vld [vmem:[#allocation9 + $0x688] sm:$0xff]
        %v2973 = vld [vmem:[#allocation9 + $0x690] sm:$0xff]
        %v2974 = vld [vmem:[#allocation9 + $0x698] sm:$0xff]
        %v2975 = vld [vmem:[#allocation9 + $0x6a0] sm:$0xff]
        %v2976 = vld [vmem:[#allocation9 + $0x6a8] sm:$0xff]
        %v2977 = vld [vmem:[#allocation9 + $0x6b0] sm:$0xff]
        %v2978 = vld [vmem:[#allocation9 + $0x6b8] sm:$0xff]
        %v2979 = vld [vmem:[#allocation9 + $0x6c0] sm:$0xff]
        %v2980 = vld [vmem:[#allocation9 + $0x6c8] sm:$0xff]
        %v2981 = vld [vmem:[#allocation9 + $0x6d0] sm:$0xff]
        %v2982 = vld [vmem:[#allocation9 + $0x6d8] sm:$0xff]
        %v2983 = vld [vmem:[#allocation9 + $0x6e0] sm:$0xff]
        %v2984 = vld [vmem:[#allocation9 + $0x6e8] sm:$0xff]
        %v2985 = vld [vmem:[#allocation9 + $0x6f0] sm:$0xff]
        %v2986 = vld [vmem:[#allocation9 + $0x6f8] sm:$0xff]
        %v2987 = vld [vmem:[#allocation9 + $0x700] sm:$0xff]
        %v2988 = vld [vmem:[#allocation9 + $0x708] sm:$0xff]
        %v2989 = vld [vmem:[#allocation9 + $0x710] sm:$0xff]
        %v2990 = vld [vmem:[#allocation9 + $0x718] sm:$0xff]
        %v2991 = vld [vmem:[#allocation9 + $0x720] sm:$0xff]
        %v2992 = vld [vmem:[#allocation9 + $0x728] sm:$0xff]
        %v2993 = vld [vmem:[#allocation9 + $0x730] sm:$0xff]
        %v2994 = vld [vmem:[#allocation9 + $0x738] sm:$0xff]
        %v2995 = vld [vmem:[#allocation9 + $0x740] sm:$0xff]
        %v2996 = vld [vmem:[#allocation9 + $0x748] sm:$0xff]
        %v2997 = vld [vmem:[#allocation9 + $0x750] sm:$0xff]
        %v2998 = vld [vmem:[#allocation9 + $0x758] sm:$0xff]
        %v2999 = vld [vmem:[#allocation9 + $0x760] sm:$0xff]
        %v3000 = vld [vmem:[#allocation9 + $0x768] sm:$0xff]
        %v3001 = vld [vmem:[#allocation9 + $0x770] sm:$0xff]
        %v3002 = vld [vmem:[#allocation9 + $0x778] sm:$0xff]
        %v3003 = vld [vmem:[#allocation9 + $0x780] sm:$0xff]
        %v3004 = vld [vmem:[#allocation9 + $0x788] sm:$0xff]
        %v3005 = vld [vmem:[#allocation9 + $0x790] sm:$0xff]
        %v3006 = vld [vmem:[#allocation9 + $0x798] sm:$0xff]
        %v3007 = vld [vmem:[#allocation9 + $0x7a0] sm:$0xff]
        %v3008 = vld [vmem:[#allocation9 + $0x7a8] sm:$0xff]
        %v3009 = vld [vmem:[#allocation9 + $0x7b0] sm:$0xff]
        %v3010 = vld [vmem:[#allocation9 + $0x7b8] sm:$0xff]
        %v3011 = vld [vmem:[#allocation9 + $0x7c0] sm:$0xff]
        %v3012 = vld [vmem:[#allocation9 + $0x7c8] sm:$0xff]
        %v3013 = vld [vmem:[#allocation9 + $0x7d0] sm:$0xff]
        %v3014 = vld [vmem:[#allocation9 + $0x7d8] sm:$0xff]
        %v3015 = vld [vmem:[#allocation9 + $0x7e0] sm:$0xff]
        %v3016 = vld [vmem:[#allocation9 + $0x7e8] sm:$0xff]
        %v3017 = vld [vmem:[#allocation9 + $0x7f0] sm:$0xff]
        %v3018 = vld [vmem:[#allocation9 + $0x7f8] sm:$0xff]
        %v3019 = vld [vmem:[#allocation9 + $0x800] sm:$0xff]
        %v3020 = vld [vmem:[#allocation9 + $0x808] sm:$0xff]
        %v3021 = vld [vmem:[#allocation9 + $0x810] sm:$0xff]
        %v3022 = vld [vmem:[#allocation9 + $0x818] sm:$0xff]
        %v3023 = vld [vmem:[#allocation9 + $0x820] sm:$0xff]
        %v3024 = vld [vmem:[#allocation9 + $0x828] sm:$0xff]
        %v3025 = vld [vmem:[#allocation9 + $0x830] sm:$0xff]
        %v3026 = vld [vmem:[#allocation9 + $0x838] sm:$0xff]
        %v3027 = vld [vmem:[#allocation9 + $0x840] sm:$0xff]
        %v3028 = vld [vmem:[#allocation9 + $0x848] sm:$0xff]
        %v3029 = vld [vmem:[#allocation9 + $0x850] sm:$0xff]
        %v3030 = vld [vmem:[#allocation9 + $0x858] sm:$0xff]
        %v3031 = vld [vmem:[#allocation9 + $0x860] sm:$0xff]
        %v3032 = vld [vmem:[#allocation9 + $0x868] sm:$0xff]
        %v3033 = vld [vmem:[#allocation9 + $0x870] sm:$0xff]
        %v3034 = vld [vmem:[#allocation9 + $0x878] sm:$0xff]
        %v3035 = vld [vmem:[#allocation9 + $0x880] sm:$0xff]
        %v3036 = vld [vmem:[#allocation9 + $0x888] sm:$0xff]
        %v3037 = vld [vmem:[#allocation9 + $0x890] sm:$0xff]
        %v3038 = vld [vmem:[#allocation9 + $0x898] sm:$0xff]
        %v3039 = vld [vmem:[#allocation9 + $0x8a0] sm:$0xff]
        %v3040 = vld [vmem:[#allocation9 + $0x8a8] sm:$0xff]
        %v3041 = vld [vmem:[#allocation9 + $0x8b0] sm:$0xff]
        %v3042 = vld [vmem:[#allocation9 + $0x8b8] sm:$0xff]
        %v3043 = vld [vmem:[#allocation9 + $0x8c0] sm:$0xff]
        %v3044 = vld [vmem:[#allocation9 + $0x8c8] sm:$0xff]
        %v3045 = vld [vmem:[#allocation9 + $0x8d0] sm:$0xff]
        %v3046 = vld [vmem:[#allocation9 + $0x8d8] sm:$0xff]
        %v3047 = vld [vmem:[#allocation9 + $0x8e0] sm:$0xff]
        %v3048 = vld [vmem:[#allocation9 + $0x8e8] sm:$0xff]
        %v3049 = vld [vmem:[#allocation9 + $0x8f0] sm:$0xff]
        %v3050 = vld [vmem:[#allocation9 + $0x8f8] sm:$0xff]
        %v3051 = vld [vmem:[#allocation9 + $0x900] sm:$0xff]
        %v3052 = vld [vmem:[#allocation9 + $0x908] sm:$0xff]
        %v3053 = vld [vmem:[#allocation9 + $0x910] sm:$0xff]
        %v3054 = vld [vmem:[#allocation9 + $0x918] sm:$0xff]
        %v3055 = vld [vmem:[#allocation9 + $0x920] sm:$0xff]
        %v3056 = vld [vmem:[#allocation9 + $0x928] sm:$0xff]
        %v3057 = vld [vmem:[#allocation9 + $0x930] sm:$0xff]
        %v3058 = vld [vmem:[#allocation9 + $0x938] sm:$0xff]
        %v3059 = vld [vmem:[#allocation9 + $0x940] sm:$0xff]
        %v3060 = vld [vmem:[#allocation9 + $0x948] sm:$0xff]
        %v3061 = vld [vmem:[#allocation9 + $0x950] sm:$0xff]
        %v3062 = vld [vmem:[#allocation9 + $0x958] sm:$0xff]
        %v3063 = vld [vmem:[#allocation9 + $0x960] sm:$0xff]
        %v3064 = vld [vmem:[#allocation9 + $0x968] sm:$0xff]
        %v3065 = vld [vmem:[#allocation9 + $0x970] sm:$0xff]
        %v3066 = vld [vmem:[#allocation9 + $0x978] sm:$0xff]
        %v3067 = vld [vmem:[#allocation9 + $0x980] sm:$0xff]
        %v3068 = vld [vmem:[#allocation9 + $0x988] sm:$0xff]
        %v3069 = vld [vmem:[#allocation9 + $0x990] sm:$0xff]
        %v3070 = vld [vmem:[#allocation9 + $0x998] sm:$0xff]
        %v3071 = vld [vmem:[#allocation9 + $0x9a0] sm:$0xff]
        %v3072 = vld [vmem:[#allocation9 + $0x9a8] sm:$0xff]
        %v3073 = vld [vmem:[#allocation9 + $0x9b0] sm:$0xff]
        %v3074 = vld [vmem:[#allocation9 + $0x9b8] sm:$0xff]
        %v3075 = vld [vmem:[#allocation9 + $0x9c0] sm:$0xff]
        %v3076 = vld [vmem:[#allocation9 + $0x9c8] sm:$0xff]
        %v3077 = vld [vmem:[#allocation9 + $0x9d0] sm:$0xff]
        %v3078 = vld [vmem:[#allocation9 + $0x9d8] sm:$0xff]
        %v3079 = vld [vmem:[#allocation9 + $0x9e0] sm:$0xff]
        %v3080 = vld [vmem:[#allocation9 + $0x9e8] sm:$0xff]
        %v3081 = vld [vmem:[#allocation9 + $0x9f0] sm:$0xff]
        %v3082 = vld [vmem:[#allocation9 + $0x9f8] sm:$0xff]
        %v3093 = vunpack.c.l.b16 %v833
        %v3094 = vunpack.c.h.b16 %v833
        %v3095 = vunpack.c.l.b16 %v834
        %v3096 = vunpack.c.h.b16 %v834
        %v3097 = vunpack.c.l.b16 %v835
        %v3098 = vunpack.c.h.b16 %v835
        %v3099 = vunpack.c.l.b16 %v836
        %v3100 = vunpack.c.h.b16 %v836
        %v3101 = vunpack.c.l.b16 %v837
        %v3102 = vunpack.c.h.b16 %v837
        %v3103 = vunpack.c.l.b16 %v838
        %v3104 = vunpack.c.h.b16 %v838
        %v3105 = vunpack.c.l.b16 %v839
        %v3106 = vunpack.c.h.b16 %v839
        %v3107 = vunpack.c.l.b16 %v840
        %v3108 = vunpack.c.h.b16 %v840
        %v3109 = vunpack.c.l.b16 %v841
        %v3110 = vunpack.c.h.b16 %v841
        %v3111 = vunpack.c.l.b16 %v842
        %v3112 = vunpack.c.h.b16 %v842
        %v3113 = vpack.c.b16 %v3103, %v3093
        %v3114 = vpack.c.b16 %v3104, %v3094
        %v3115 = vpack.c.b16 %v3105, %v3095
        %v3116 = vpack.c.b16 %v3106, %v3096
        %v3117 = vpack.c.b16 %v3107, %v3097
        %v3118 = vpack.c.b16 %v3108, %v3098
        %v3119 = vpack.c.b16 %v3109, %v3099
        %v3120 = vpack.c.b16 %v3110, %v3100
        %v3121 = vpack.c.b16 %v3111, %v3101
        %v3122 = vpack.c.b16 %v3112, %v3102
        %v3453 = vunpack.c.l.b16 %v2763
        %v3454 = vunpack.c.h.b16 %v2763
        %v3455 = vunpack.c.l.b16 %v2764
        %v3456 = vunpack.c.h.b16 %v2764
        %v3457 = vunpack.c.l.b16 %v2765
        %v3458 = vunpack.c.h.b16 %v2765
        %v3459 = vunpack.c.l.b16 %v2766
        %v3460 = vunpack.c.h.b16 %v2766
        %v3461 = vunpack.c.l.b16 %v2767
        %v3462 = vunpack.c.h.b16 %v2767
        %v3463 = vunpack.c.l.b16 %v2768
        %v3464 = vunpack.c.h.b16 %v2768
        %v3465 = vunpack.c.l.b16 %v2769
        %v3466 = vunpack.c.h.b16 %v2769
        %v3467 = vunpack.c.l.b16 %v2770
        %v3468 = vunpack.c.h.b16 %v2770
        %v3469 = vunpack.c.l.b16 %v2771
        %v3470 = vunpack.c.h.b16 %v2771
        %v3471 = vunpack.c.l.b16 %v2772
        %v3472 = vunpack.c.h.b16 %v2772
        %v3473 = vunpack.c.l.b16 %v2773
        %v3474 = vunpack.c.h.b16 %v2773
        %v3475 = vunpack.c.l.b16 %v2774
        %v3476 = vunpack.c.h.b16 %v2774
        %v3477 = vunpack.c.l.b16 %v2775
        %v3478 = vunpack.c.h.b16 %v2775
        %v3479 = vunpack.c.l.b16 %v2776
        %v3480 = vunpack.c.h.b16 %v2776
        %v3481 = vunpack.c.l.b16 %v2777
        %v3482 = vunpack.c.h.b16 %v2777
        %v3483 = vunpack.c.l.b16 %v2778
        %v3484 = vunpack.c.h.b16 %v2778
        %v3485 = vunpack.c.l.b16 %v2779
        %v3486 = vunpack.c.h.b16 %v2779
        %v3487 = vunpack.c.l.b16 %v2780
        %v3488 = vunpack.c.h.b16 %v2780
        %v3489 = vunpack.c.l.b16 %v2781
        %v3490 = vunpack.c.h.b16 %v2781
        %v3491 = vunpack.c.l.b16 %v2782
        %v3492 = vunpack.c.h.b16 %v2782
        %v3493 = vunpack.c.l.b16 %v2783
        %v3494 = vunpack.c.h.b16 %v2783
        %v3495 = vunpack.c.l.b16 %v2784
        %v3496 = vunpack.c.h.b16 %v2784
        %v3497 = vunpack.c.l.b16 %v2785
        %v3498 = vunpack.c.h.b16 %v2785
        %v3499 = vunpack.c.l.b16 %v2786
        %v3500 = vunpack.c.h.b16 %v2786
        %v3501 = vunpack.c.l.b16 %v2787
        %v3502 = vunpack.c.h.b16 %v2787
        %v3503 = vunpack.c.l.b16 %v2788
        %v3504 = vunpack.c.h.b16 %v2788
        %v3505 = vunpack.c.l.b16 %v2789
        %v3506 = vunpack.c.h.b16 %v2789
        %v3507 = vunpack.c.l.b16 %v2790
        %v3508 = vunpack.c.h.b16 %v2790
        %v3509 = vunpack.c.l.b16 %v2791
        %v3510 = vunpack.c.h.b16 %v2791
        %v3511 = vunpack.c.l.b16 %v2792
        %v3512 = vunpack.c.h.b16 %v2792
        %v3513 = vunpack.c.l.b16 %v2793
        %v3514 = vunpack.c.h.b16 %v2793
        %v3515 = vunpack.c.l.b16 %v2794
        %v3516 = vunpack.c.h.b16 %v2794
        %v3517 = vunpack.c.l.b16 %v2795
        %v3518 = vunpack.c.h.b16 %v2795
        %v3519 = vunpack.c.l.b16 %v2796
        %v3520 = vunpack.c.h.b16 %v2796
        %v3521 = vunpack.c.l.b16 %v2797
        %v3522 = vunpack.c.h.b16 %v2797
        %v3523 = vunpack.c.l.b16 %v2798
        %v3524 = vunpack.c.h.b16 %v2798
        %v3525 = vunpack.c.l.b16 %v2799
        %v3526 = vunpack.c.h.b16 %v2799
        %v3527 = vunpack.c.l.b16 %v2800
        %v3528 = vunpack.c.h.b16 %v2800
        %v3529 = vunpack.c.l.b16 %v2801
        %v3530 = vunpack.c.h.b16 %v2801
        %v3531 = vunpack.c.l.b16 %v2802
        %v3532 = vunpack.c.h.b16 %v2802
        %v3533 = vunpack.c.l.b16 %v2803
        %v3534 = vunpack.c.h.b16 %v2803
        %v3535 = vunpack.c.l.b16 %v2804
        %v3536 = vunpack.c.h.b16 %v2804
        %v3537 = vunpack.c.l.b16 %v2805
        %v3538 = vunpack.c.h.b16 %v2805
        %v3539 = vunpack.c.l.b16 %v2806
        %v3540 = vunpack.c.h.b16 %v2806
        %v3541 = vunpack.c.l.b16 %v2807
        %v3542 = vunpack.c.h.b16 %v2807
        %v3543 = vunpack.c.l.b16 %v2808
        %v3544 = vunpack.c.h.b16 %v2808
        %v3545 = vunpack.c.l.b16 %v2809
        %v3546 = vunpack.c.h.b16 %v2809
        %v3547 = vunpack.c.l.b16 %v2810
        %v3548 = vunpack.c.h.b16 %v2810
        %v3549 = vunpack.c.l.b16 %v2811
        %v3550 = vunpack.c.h.b16 %v2811
        %v3551 = vunpack.c.l.b16 %v2812
        %v3552 = vunpack.c.h.b16 %v2812
        %v3553 = vunpack.c.l.b16 %v2813
        %v3554 = vunpack.c.h.b16 %v2813
        %v3555 = vunpack.c.l.b16 %v2814
        %v3556 = vunpack.c.h.b16 %v2814
        %v3557 = vunpack.c.l.b16 %v2815
        %v3558 = vunpack.c.h.b16 %v2815
        %v3559 = vunpack.c.l.b16 %v2816
        %v3560 = vunpack.c.h.b16 %v2816
        %v3561 = vunpack.c.l.b16 %v2817
        %v3562 = vunpack.c.h.b16 %v2817
        %v3563 = vunpack.c.l.b16 %v2818
        %v3564 = vunpack.c.h.b16 %v2818
        %v3565 = vunpack.c.l.b16 %v2819
        %v3566 = vunpack.c.h.b16 %v2819
        %v3567 = vunpack.c.l.b16 %v2820
        %v3568 = vunpack.c.h.b16 %v2820
        %v3569 = vunpack.c.l.b16 %v2821
        %v3570 = vunpack.c.h.b16 %v2821
        %v3571 = vunpack.c.l.b16 %v2822
        %v3572 = vunpack.c.h.b16 %v2822
        %v3573 = vunpack.c.l.b16 %v2823
        %v3574 = vunpack.c.h.b16 %v2823
        %v3575 = vunpack.c.l.b16 %v2824
        %v3576 = vunpack.c.h.b16 %v2824
        %v3577 = vunpack.c.l.b16 %v2825
        %v3578 = vunpack.c.h.b16 %v2825
        %v3579 = vunpack.c.l.b16 %v2826
        %v3580 = vunpack.c.h.b16 %v2826
        %v3581 = vunpack.c.l.b16 %v2827
        %v3582 = vunpack.c.h.b16 %v2827
        %v3583 = vunpack.c.l.b16 %v2828
        %v3584 = vunpack.c.h.b16 %v2828
        %v3585 = vunpack.c.l.b16 %v2829
        %v3586 = vunpack.c.h.b16 %v2829
        %v3587 = vunpack.c.l.b16 %v2830
        %v3588 = vunpack.c.h.b16 %v2830
        %v3589 = vunpack.c.l.b16 %v2831
        %v3590 = vunpack.c.h.b16 %v2831
        %v3591 = vunpack.c.l.b16 %v2832
        %v3592 = vunpack.c.h.b16 %v2832
        %v3593 = vunpack.c.l.b16 %v2833
        %v3594 = vunpack.c.h.b16 %v2833
        %v3595 = vunpack.c.l.b16 %v2834
        %v3596 = vunpack.c.h.b16 %v2834
        %v3597 = vunpack.c.l.b16 %v2835
        %v3598 = vunpack.c.h.b16 %v2835
        %v3599 = vunpack.c.l.b16 %v2836
        %v3600 = vunpack.c.h.b16 %v2836
        %v3601 = vunpack.c.l.b16 %v2837
        %v3602 = vunpack.c.h.b16 %v2837
        %v3603 = vunpack.c.l.b16 %v2838
        %v3604 = vunpack.c.h.b16 %v2838
        %v3605 = vunpack.c.l.b16 %v2839
        %v3606 = vunpack.c.h.b16 %v2839
        %v3607 = vunpack.c.l.b16 %v2840
        %v3608 = vunpack.c.h.b16 %v2840
        %v3609 = vunpack.c.l.b16 %v2841
        %v3610 = vunpack.c.h.b16 %v2841
        %v3611 = vunpack.c.l.b16 %v2842
        %v3612 = vunpack.c.h.b16 %v2842
        %v3613 = vunpack.c.l.b16 %v2843
        %v3614 = vunpack.c.h.b16 %v2843
        %v3615 = vunpack.c.l.b16 %v2844
        %v3616 = vunpack.c.h.b16 %v2844
        %v3617 = vunpack.c.l.b16 %v2845
        %v3618 = vunpack.c.h.b16 %v2845
        %v3619 = vunpack.c.l.b16 %v2846
        %v3620 = vunpack.c.h.b16 %v2846
        %v3621 = vunpack.c.l.b16 %v2847
        %v3622 = vunpack.c.h.b16 %v2847
        %v3623 = vunpack.c.l.b16 %v2848
        %v3624 = vunpack.c.h.b16 %v2848
        %v3625 = vunpack.c.l.b16 %v2849
        %v3626 = vunpack.c.h.b16 %v2849
        %v3627 = vunpack.c.l.b16 %v2850
        %v3628 = vunpack.c.h.b16 %v2850
        %v3629 = vunpack.c.l.b16 %v2851
        %v3630 = vunpack.c.h.b16 %v2851
        %v3631 = vunpack.c.l.b16 %v2852
        %v3632 = vunpack.c.h.b16 %v2852
        %v3633 = vunpack.c.l.b16 %v2853
        %v3634 = vunpack.c.h.b16 %v2853
        %v3635 = vunpack.c.l.b16 %v2854
        %v3636 = vunpack.c.h.b16 %v2854
        %v3637 = vunpack.c.l.b16 %v2855
        %v3638 = vunpack.c.h.b16 %v2855
        %v3639 = vunpack.c.l.b16 %v2856
        %v3640 = vunpack.c.h.b16 %v2856
        %v3641 = vunpack.c.l.b16 %v2857
        %v3642 = vunpack.c.h.b16 %v2857
        %v3643 = vunpack.c.l.b16 %v2858
        %v3644 = vunpack.c.h.b16 %v2858
        %v3645 = vunpack.c.l.b16 %v2859
        %v3646 = vunpack.c.h.b16 %v2859
        %v3647 = vunpack.c.l.b16 %v2860
        %v3648 = vunpack.c.h.b16 %v2860
        %v3649 = vunpack.c.l.b16 %v2861
        %v3650 = vunpack.c.h.b16 %v2861
        %v3651 = vunpack.c.l.b16 %v2862
        %v3652 = vunpack.c.h.b16 %v2862
        %v3653 = vunpack.c.l.b16 %v2863
        %v3654 = vunpack.c.h.b16 %v2863
        %v3655 = vunpack.c.l.b16 %v2864
        %v3656 = vunpack.c.h.b16 %v2864
        %v3657 = vunpack.c.l.b16 %v2865
        %v3658 = vunpack.c.h.b16 %v2865
        %v3659 = vunpack.c.l.b16 %v2866
        %v3660 = vunpack.c.h.b16 %v2866
        %v3661 = vunpack.c.l.b16 %v2867
        %v3662 = vunpack.c.h.b16 %v2867
        %v3663 = vunpack.c.l.b16 %v2868
        %v3664 = vunpack.c.h.b16 %v2868
        %v3665 = vunpack.c.l.b16 %v2869
        %v3666 = vunpack.c.h.b16 %v2869
        %v3667 = vunpack.c.l.b16 %v2870
        %v3668 = vunpack.c.h.b16 %v2870
        %v3669 = vunpack.c.l.b16 %v2871
        %v3670 = vunpack.c.h.b16 %v2871
        %v3671 = vunpack.c.l.b16 %v2872
        %v3672 = vunpack.c.h.b16 %v2872
        %v3673 = vunpack.c.l.b16 %v2873
        %v3674 = vunpack.c.h.b16 %v2873
        %v3675 = vunpack.c.l.b16 %v2874
        %v3676 = vunpack.c.h.b16 %v2874
        %v3677 = vunpack.c.l.b16 %v2875
        %v3678 = vunpack.c.h.b16 %v2875
        %v3679 = vunpack.c.l.b16 %v2876
        %v3680 = vunpack.c.h.b16 %v2876
        %v3681 = vunpack.c.l.b16 %v2877
        %v3682 = vunpack.c.h.b16 %v2877
        %v3683 = vunpack.c.l.b16 %v2878
        %v3684 = vunpack.c.h.b16 %v2878
        %v3685 = vunpack.c.l.b16 %v2879
        %v3686 = vunpack.c.h.b16 %v2879
        %v3687 = vunpack.c.l.b16 %v2880
        %v3688 = vunpack.c.h.b16 %v2880
        %v3689 = vunpack.c.l.b16 %v2881
        %v3690 = vunpack.c.h.b16 %v2881
        %v3691 = vunpack.c.l.b16 %v2882
        %v3692 = vunpack.c.h.b16 %v2882
        %v3693 = vunpack.c.l.b16 %v2883
        %v3694 = vunpack.c.h.b16 %v2883
        %v3695 = vunpack.c.l.b16 %v2884
        %v3696 = vunpack.c.h.b16 %v2884
        %v3697 = vunpack.c.l.b16 %v2885
        %v3698 = vunpack.c.h.b16 %v2885
        %v3699 = vunpack.c.l.b16 %v2886
        %v3700 = vunpack.c.h.b16 %v2886
        %v3701 = vunpack.c.l.b16 %v2887
        %v3702 = vunpack.c.h.b16 %v2887
        %v3703 = vunpack.c.l.b16 %v2888
        %v3704 = vunpack.c.h.b16 %v2888
        %v3705 = vunpack.c.l.b16 %v2889
        %v3706 = vunpack.c.h.b16 %v2889
        %v3707 = vunpack.c.l.b16 %v2890
        %v3708 = vunpack.c.h.b16 %v2890
        %v3709 = vunpack.c.l.b16 %v2891
        %v3710 = vunpack.c.h.b16 %v2891
        %v3711 = vunpack.c.l.b16 %v2892
        %v3712 = vunpack.c.h.b16 %v2892
        %v3713 = vunpack.c.l.b16 %v2893
        %v3714 = vunpack.c.h.b16 %v2893
        %v3715 = vunpack.c.l.b16 %v2894
        %v3716 = vunpack.c.h.b16 %v2894
        %v3717 = vunpack.c.l.b16 %v2895
        %v3718 = vunpack.c.h.b16 %v2895
        %v3719 = vunpack.c.l.b16 %v2896
        %v3720 = vunpack.c.h.b16 %v2896
        %v3721 = vunpack.c.l.b16 %v2897
        %v3722 = vunpack.c.h.b16 %v2897
        %v3723 = vunpack.c.l.b16 %v2898
        %v3724 = vunpack.c.h.b16 %v2898
        %v3725 = vunpack.c.l.b16 %v2899
        %v3726 = vunpack.c.h.b16 %v2899
        %v3727 = vunpack.c.l.b16 %v2900
        %v3728 = vunpack.c.h.b16 %v2900
        %v3729 = vunpack.c.l.b16 %v2901
        %v3730 = vunpack.c.h.b16 %v2901
        %v3731 = vunpack.c.l.b16 %v2902
        %v3732 = vunpack.c.h.b16 %v2902
        %v3733 = vunpack.c.l.b16 %v2903
        %v3734 = vunpack.c.h.b16 %v2903
        %v3735 = vunpack.c.l.b16 %v2904
        %v3736 = vunpack.c.h.b16 %v2904
        %v3737 = vunpack.c.l.b16 %v2905
        %v3738 = vunpack.c.h.b16 %v2905
        %v3739 = vunpack.c.l.b16 %v2906
        %v3740 = vunpack.c.h.b16 %v2906
        %v3741 = vunpack.c.l.b16 %v2907
        %v3742 = vunpack.c.h.b16 %v2907
        %v3743 = vunpack.c.l.b16 %v2908
        %v3744 = vunpack.c.h.b16 %v2908
        %v3745 = vunpack.c.l.b16 %v2909
        %v3746 = vunpack.c.h.b16 %v2909
        %v3747 = vunpack.c.l.b16 %v2910
        %v3748 = vunpack.c.h.b16 %v2910
        %v3749 = vunpack.c.l.b16 %v2911
        %v3750 = vunpack.c.h.b16 %v2911
        %v3751 = vunpack.c.l.b16 %v2912
        %v3752 = vunpack.c.h.b16 %v2912
        %v3753 = vunpack.c.l.b16 %v2913
        %v3754 = vunpack.c.h.b16 %v2913
        %v3755 = vunpack.c.l.b16 %v2914
        %v3756 = vunpack.c.h.b16 %v2914
        %v3757 = vunpack.c.l.b16 %v2915
        %v3758 = vunpack.c.h.b16 %v2915
        %v3759 = vunpack.c.l.b16 %v2916
        %v3760 = vunpack.c.h.b16 %v2916
        %v3761 = vunpack.c.l.b16 %v2917
        %v3762 = vunpack.c.h.b16 %v2917
        %v3763 = vunpack.c.l.b16 %v2918
        %v3764 = vunpack.c.h.b16 %v2918
        %v3765 = vunpack.c.l.b16 %v2919
        %v3766 = vunpack.c.h.b16 %v2919
        %v3767 = vunpack.c.l.b16 %v2920
        %v3768 = vunpack.c.h.b16 %v2920
        %v3769 = vunpack.c.l.b16 %v2921
        %v3770 = vunpack.c.h.b16 %v2921
        %v3771 = vunpack.c.l.b16 %v2922
        %v3772 = vunpack.c.h.b16 %v2922
        %v3773 = vunpack.c.l.b16 %v2923
        %v3774 = vunpack.c.h.b16 %v2923
        %v3775 = vunpack.c.l.b16 %v2924
        %v3776 = vunpack.c.h.b16 %v2924
        %v3777 = vunpack.c.l.b16 %v2925
        %v3778 = vunpack.c.h.b16 %v2925
        %v3779 = vunpack.c.l.b16 %v2926
        %v3780 = vunpack.c.h.b16 %v2926
        %v3781 = vunpack.c.l.b16 %v2927
        %v3782 = vunpack.c.h.b16 %v2927
        %v3783 = vunpack.c.l.b16 %v2928
        %v3784 = vunpack.c.h.b16 %v2928
        %v3785 = vunpack.c.l.b16 %v2929
        %v3786 = vunpack.c.h.b16 %v2929
        %v3787 = vunpack.c.l.b16 %v2930
        %v3788 = vunpack.c.h.b16 %v2930
        %v3789 = vunpack.c.l.b16 %v2931
        %v3790 = vunpack.c.h.b16 %v2931
        %v3791 = vunpack.c.l.b16 %v2932
        %v3792 = vunpack.c.h.b16 %v2932
        %v3793 = vunpack.c.l.b16 %v2933
        %v3794 = vunpack.c.h.b16 %v2933
        %v3795 = vunpack.c.l.b16 %v2934
        %v3796 = vunpack.c.h.b16 %v2934
        %v3797 = vunpack.c.l.b16 %v2935
        %v3798 = vunpack.c.h.b16 %v2935
        %v3799 = vunpack.c.l.b16 %v2936
        %v3800 = vunpack.c.h.b16 %v2936
        %v3801 = vunpack.c.l.b16 %v2937
        %v3802 = vunpack.c.h.b16 %v2937
        %v3803 = vunpack.c.l.b16 %v2938
        %v3804 = vunpack.c.h.b16 %v2938
        %v3805 = vunpack.c.l.b16 %v2939
        %v3806 = vunpack.c.h.b16 %v2939
        %v3807 = vunpack.c.l.b16 %v2940
        %v3808 = vunpack.c.h.b16 %v2940
        %v3809 = vunpack.c.l.b16 %v2941
        %v3810 = vunpack.c.h.b16 %v2941
        %v3811 = vunpack.c.l.b16 %v2942
        %v3812 = vunpack.c.h.b16 %v2942
        %v3813 = vunpack.c.l.b16 %v2943
        %v3814 = vunpack.c.h.b16 %v2943
        %v3815 = vunpack.c.l.b16 %v2944
        %v3816 = vunpack.c.h.b16 %v2944
        %v3817 = vunpack.c.l.b16 %v2945
        %v3818 = vunpack.c.h.b16 %v2945
        %v3819 = vunpack.c.l.b16 %v2946
        %v3820 = vunpack.c.h.b16 %v2946
        %v3821 = vunpack.c.l.b16 %v2947
        %v3822 = vunpack.c.h.b16 %v2947
        %v3823 = vunpack.c.l.b16 %v2948
        %v3824 = vunpack.c.h.b16 %v2948
        %v3825 = vunpack.c.l.b16 %v2949
        %v3826 = vunpack.c.h.b16 %v2949
        %v3827 = vunpack.c.l.b16 %v2950
        %v3828 = vunpack.c.h.b16 %v2950
        %v3829 = vunpack.c.l.b16 %v2951
        %v3830 = vunpack.c.h.b16 %v2951
        %v3831 = vunpack.c.l.b16 %v2952
        %v3832 = vunpack.c.h.b16 %v2952
        %v3833 = vunpack.c.l.b16 %v2953
        %v3834 = vunpack.c.h.b16 %v2953
        %v3835 = vunpack.c.l.b16 %v2954
        %v3836 = vunpack.c.h.b16 %v2954
        %v3837 = vunpack.c.l.b16 %v2955
        %v3838 = vunpack.c.h.b16 %v2955
        %v3839 = vunpack.c.l.b16 %v2956
        %v3840 = vunpack.c.h.b16 %v2956
        %v3841 = vunpack.c.l.b16 %v2957
        %v3842 = vunpack.c.h.b16 %v2957
        %v3843 = vunpack.c.l.b16 %v2958
        %v3844 = vunpack.c.h.b16 %v2958
        %v3845 = vunpack.c.l.b16 %v2959
        %v3846 = vunpack.c.h.b16 %v2959
        %v3847 = vunpack.c.l.b16 %v2960
        %v3848 = vunpack.c.h.b16 %v2960
        %v3849 = vunpack.c.l.b16 %v2961
        %v3850 = vunpack.c.h.b16 %v2961
        %v3851 = vunpack.c.l.b16 %v2962
        %v3852 = vunpack.c.h.b16 %v2962
        %v3853 = vunpack.c.l.b16 %v2963
        %v3854 = vunpack.c.h.b16 %v2963
        %v3855 = vunpack.c.l.b16 %v2964
        %v3856 = vunpack.c.h.b16 %v2964
        %v3857 = vunpack.c.l.b16 %v2965
        %v3858 = vunpack.c.h.b16 %v2965
        %v3859 = vunpack.c.l.b16 %v2966
        %v3860 = vunpack.c.h.b16 %v2966
        %v3861 = vunpack.c.l.b16 %v2967
        %v3862 = vunpack.c.h.b16 %v2967
        %v3863 = vunpack.c.l.b16 %v2968
        %v3864 = vunpack.c.h.b16 %v2968
        %v3865 = vunpack.c.l.b16 %v2969
        %v3866 = vunpack.c.h.b16 %v2969
        %v3867 = vunpack.c.l.b16 %v2970
        %v3868 = vunpack.c.h.b16 %v2970
        %v3869 = vunpack.c.l.b16 %v2971
        %v3870 = vunpack.c.h.b16 %v2971
        %v3871 = vunpack.c.l.b16 %v2972
        %v3872 = vunpack.c.h.b16 %v2972
        %v3873 = vunpack.c.l.b16 %v2973
        %v3874 = vunpack.c.h.b16 %v2973
        %v3875 = vunpack.c.l.b16 %v2974
        %v3876 = vunpack.c.h.b16 %v2974
        %v3877 = vunpack.c.l.b16 %v2975
        %v3878 = vunpack.c.h.b16 %v2975
        %v3879 = vunpack.c.l.b16 %v2976
        %v3880 = vunpack.c.h.b16 %v2976
        %v3881 = vunpack.c.l.b16 %v2977
        %v3882 = vunpack.c.h.b16 %v2977
        %v3883 = vunpack.c.l.b16 %v2978
        %v3884 = vunpack.c.h.b16 %v2978
        %v3885 = vunpack.c.l.b16 %v2979
        %v3886 = vunpack.c.h.b16 %v2979
        %v3887 = vunpack.c.l.b16 %v2980
        %v3888 = vunpack.c.h.b16 %v2980
        %v3889 = vunpack.c.l.b16 %v2981
        %v3890 = vunpack.c.h.b16 %v2981
        %v3891 = vunpack.c.l.b16 %v2982
        %v3892 = vunpack.c.h.b16 %v2982
        %v3893 = vunpack.c.l.b16 %v2983
        %v3894 = vunpack.c.h.b16 %v2983
        %v3895 = vunpack.c.l.b16 %v2984
        %v3896 = vunpack.c.h.b16 %v2984
        %v3897 = vunpack.c.l.b16 %v2985
        %v3898 = vunpack.c.h.b16 %v2985
        %v3899 = vunpack.c.l.b16 %v2986
        %v3900 = vunpack.c.h.b16 %v2986
        %v3901 = vunpack.c.l.b16 %v2987
        %v3902 = vunpack.c.h.b16 %v2987
        %v3903 = vunpack.c.l.b16 %v2988
        %v3904 = vunpack.c.h.b16 %v2988
        %v3905 = vunpack.c.l.b16 %v2989
        %v3906 = vunpack.c.h.b16 %v2989
        %v3907 = vunpack.c.l.b16 %v2990
        %v3908 = vunpack.c.h.b16 %v2990
        %v3909 = vunpack.c.l.b16 %v2991
        %v3910 = vunpack.c.h.b16 %v2991
        %v3911 = vunpack.c.l.b16 %v2992
        %v3912 = vunpack.c.h.b16 %v2992
        %v3913 = vunpack.c.l.b16 %v2993
        %v3914 = vunpack.c.h.b16 %v2993
        %v3915 = vunpack.c.l.b16 %v2994
        %v3916 = vunpack.c.h.b16 %v2994
        %v3917 = vunpack.c.l.b16 %v2995
        %v3918 = vunpack.c.h.b16 %v2995
        %v3919 = vunpack.c.l.b16 %v2996
        %v3920 = vunpack.c.h.b16 %v2996
        %v3921 = vunpack.c.l.b16 %v2997
        %v3922 = vunpack.c.h.b16 %v2997
        %v3923 = vunpack.c.l.b16 %v2998
        %v3924 = vunpack.c.h.b16 %v2998
        %v3925 = vunpack.c.l.b16 %v2999
        %v3926 = vunpack.c.h.b16 %v2999
        %v3927 = vunpack.c.l.b16 %v3000
        %v3928 = vunpack.c.h.b16 %v3000
        %v3929 = vunpack.c.l.b16 %v3001
        %v3930 = vunpack.c.h.b16 %v3001
        %v3931 = vunpack.c.l.b16 %v3002
        %v3932 = vunpack.c.h.b16 %v3002
        %v3933 = vunpack.c.l.b16 %v3003
        %v3934 = vunpack.c.h.b16 %v3003
        %v3935 = vunpack.c.l.b16 %v3004
        %v3936 = vunpack.c.h.b16 %v3004
        %v3937 = vunpack.c.l.b16 %v3005
        %v3938 = vunpack.c.h.b16 %v3005
        %v3939 = vunpack.c.l.b16 %v3006
        %v3940 = vunpack.c.h.b16 %v3006
        %v3941 = vunpack.c.l.b16 %v3007
        %v3942 = vunpack.c.h.b16 %v3007
        %v3943 = vunpack.c.l.b16 %v3008
        %v3944 = vunpack.c.h.b16 %v3008
        %v3945 = vunpack.c.l.b16 %v3009
        %v3946 = vunpack.c.h.b16 %v3009
        %v3947 = vunpack.c.l.b16 %v3010
        %v3948 = vunpack.c.h.b16 %v3010
        %v3949 = vunpack.c.l.b16 %v3011
        %v3950 = vunpack.c.h.b16 %v3011
        %v3951 = vunpack.c.l.b16 %v3012
        %v3952 = vunpack.c.h.b16 %v3012
        %v3953 = vunpack.c.l.b16 %v3013
        %v3954 = vunpack.c.h.b16 %v3013
        %v3955 = vunpack.c.l.b16 %v3014
        %v3956 = vunpack.c.h.b16 %v3014
        %v3957 = vunpack.c.l.b16 %v3015
        %v3958 = vunpack.c.h.b16 %v3015
        %v3959 = vunpack.c.l.b16 %v3016
        %v3960 = vunpack.c.h.b16 %v3016
        %v3961 = vunpack.c.l.b16 %v3017
        %v3962 = vunpack.c.h.b16 %v3017
        %v3963 = vunpack.c.l.b16 %v3018
        %v3964 = vunpack.c.h.b16 %v3018
        %v3965 = vunpack.c.l.b16 %v3019
        %v3966 = vunpack.c.h.b16 %v3019
        %v3967 = vunpack.c.l.b16 %v3020
        %v3968 = vunpack.c.h.b16 %v3020
        %v3969 = vunpack.c.l.b16 %v3021
        %v3970 = vunpack.c.h.b16 %v3021
        %v3971 = vunpack.c.l.b16 %v3022
        %v3972 = vunpack.c.h.b16 %v3022
        %v3973 = vunpack.c.l.b16 %v3023
        %v3974 = vunpack.c.h.b16 %v3023
        %v3975 = vunpack.c.l.b16 %v3024
        %v3976 = vunpack.c.h.b16 %v3024
        %v3977 = vunpack.c.l.b16 %v3025
        %v3978 = vunpack.c.h.b16 %v3025
        %v3979 = vunpack.c.l.b16 %v3026
        %v3980 = vunpack.c.h.b16 %v3026
        %v3981 = vunpack.c.l.b16 %v3027
        %v3982 = vunpack.c.h.b16 %v3027
        %v3983 = vunpack.c.l.b16 %v3028
        %v3984 = vunpack.c.h.b16 %v3028
        %v3985 = vunpack.c.l.b16 %v3029
        %v3986 = vunpack.c.h.b16 %v3029
        %v3987 = vunpack.c.l.b16 %v3030
        %v3988 = vunpack.c.h.b16 %v3030
        %v3989 = vunpack.c.l.b16 %v3031
        %v3990 = vunpack.c.h.b16 %v3031
        %v3991 = vunpack.c.l.b16 %v3032
        %v3992 = vunpack.c.h.b16 %v3032
        %v3993 = vunpack.c.l.b16 %v3033
        %v3994 = vunpack.c.h.b16 %v3033
        %v3995 = vunpack.c.l.b16 %v3034
        %v3996 = vunpack.c.h.b16 %v3034
        %v3997 = vunpack.c.l.b16 %v3035
        %v3998 = vunpack.c.h.b16 %v3035
        %v3999 = vunpack.c.l.b16 %v3036
        %v4000 = vunpack.c.h.b16 %v3036
        %v4001 = vunpack.c.l.b16 %v3037
        %v4002 = vunpack.c.h.b16 %v3037
        %v4003 = vunpack.c.l.b16 %v3038
        %v4004 = vunpack.c.h.b16 %v3038
        %v4005 = vunpack.c.l.b16 %v3039
        %v4006 = vunpack.c.h.b16 %v3039
        %v4007 = vunpack.c.l.b16 %v3040
        %v4008 = vunpack.c.h.b16 %v3040
        %v4009 = vunpack.c.l.b16 %v3041
        %v4010 = vunpack.c.h.b16 %v3041
        %v4011 = vunpack.c.l.b16 %v3042
        %v4012 = vunpack.c.h.b16 %v3042
        %v4013 = vunpack.c.l.b16 %v3043
        %v4014 = vunpack.c.h.b16 %v3043
        %v4015 = vunpack.c.l.b16 %v3044
        %v4016 = vunpack.c.h.b16 %v3044
        %v4017 = vunpack.c.l.b16 %v3045
        %v4018 = vunpack.c.h.b16 %v3045
        %v4019 = vunpack.c.l.b16 %v3046
        %v4020 = vunpack.c.h.b16 %v3046
        %v4021 = vunpack.c.l.b16 %v3047
        %v4022 = vunpack.c.h.b16 %v3047
        %v4023 = vunpack.c.l.b16 %v3048
        %v4024 = vunpack.c.h.b16 %v3048
        %v4025 = vunpack.c.l.b16 %v3049
        %v4026 = vunpack.c.h.b16 %v3049
        %v4027 = vunpack.c.l.b16 %v3050
        %v4028 = vunpack.c.h.b16 %v3050
        %v4029 = vunpack.c.l.b16 %v3051
        %v4030 = vunpack.c.h.b16 %v3051
        %v4031 = vunpack.c.l.b16 %v3052
        %v4032 = vunpack.c.h.b16 %v3052
        %v4033 = vunpack.c.l.b16 %v3053
        %v4034 = vunpack.c.h.b16 %v3053
        %v4035 = vunpack.c.l.b16 %v3054
        %v4036 = vunpack.c.h.b16 %v3054
        %v4037 = vunpack.c.l.b16 %v3055
        %v4038 = vunpack.c.h.b16 %v3055
        %v4039 = vunpack.c.l.b16 %v3056
        %v4040 = vunpack.c.h.b16 %v3056
        %v4041 = vunpack.c.l.b16 %v3057
        %v4042 = vunpack.c.h.b16 %v3057
        %v4043 = vunpack.c.l.b16 %v3058
        %v4044 = vunpack.c.h.b16 %v3058
        %v4045 = vunpack.c.l.b16 %v3059
        %v4046 = vunpack.c.h.b16 %v3059
        %v4047 = vunpack.c.l.b16 %v3060
        %v4048 = vunpack.c.h.b16 %v3060
        %v4049 = vunpack.c.l.b16 %v3061
        %v4050 = vunpack.c.h.b16 %v3061
        %v4051 = vunpack.c.l.b16 %v3062
        %v4052 = vunpack.c.h.b16 %v3062
        %v4053 = vunpack.c.l.b16 %v3063
        %v4054 = vunpack.c.h.b16 %v3063
        %v4055 = vunpack.c.l.b16 %v3064
        %v4056 = vunpack.c.h.b16 %v3064
        %v4057 = vunpack.c.l.b16 %v3065
        %v4058 = vunpack.c.h.b16 %v3065
        %v4059 = vunpack.c.l.b16 %v3066
        %v4060 = vunpack.c.h.b16 %v3066
        %v4061 = vunpack.c.l.b16 %v3067
        %v4062 = vunpack.c.h.b16 %v3067
        %v4063 = vunpack.c.l.b16 %v3068
        %v4064 = vunpack.c.h.b16 %v3068
        %v4065 = vunpack.c.l.b16 %v3069
        %v4066 = vunpack.c.h.b16 %v3069
        %v4067 = vunpack.c.l.b16 %v3070
        %v4068 = vunpack.c.h.b16 %v3070
        %v4069 = vunpack.c.l.b16 %v3071
        %v4070 = vunpack.c.h.b16 %v3071
        %v4071 = vunpack.c.l.b16 %v3072
        %v4072 = vunpack.c.h.b16 %v3072
        %v4073 = vunpack.c.l.b16 %v3073
        %v4074 = vunpack.c.h.b16 %v3073
        %v4075 = vunpack.c.l.b16 %v3074
        %v4076 = vunpack.c.h.b16 %v3074
        %v4077 = vunpack.c.l.b16 %v3075
        %v4078 = vunpack.c.h.b16 %v3075
        %v4079 = vunpack.c.l.b16 %v3076
        %v4080 = vunpack.c.h.b16 %v3076
        %v4081 = vunpack.c.l.b16 %v3077
        %v4082 = vunpack.c.h.b16 %v3077
        %v4083 = vunpack.c.l.b16 %v3078
        %v4084 = vunpack.c.h.b16 %v3078
        %v4085 = vunpack.c.l.b16 %v3079
        %v4086 = vunpack.c.h.b16 %v3079
        %v4087 = vunpack.c.l.b16 %v3080
        %v4088 = vunpack.c.h.b16 %v3080
        %v4089 = vunpack.c.l.b16 %v3081
        %v4090 = vunpack.c.h.b16 %v3081
        %v4091 = vunpack.c.l.b16 %v3082
        %v4092 = vunpack.c.h.b16 %v3082
        %v4093 = vpack.c.b16 %v3457, %v3453
        %v4094 = vpack.c.b16 %v3458, %v3454
        %v4095 = vpack.c.b16 %v3459, %v3455
        %v4096 = vpack.c.b16 %v3460, %v3456
        %v4097 = vpack.c.b16 %v3465, %v3461
        %v4098 = vpack.c.b16 %v3466, %v3462
        %v4099 = vpack.c.b16 %v3467, %v3463
        %v4100 = vpack.c.b16 %v3468, %v3464
        %v4101 = vpack.c.b16 %v3473, %v3469
        %v4102 = vpack.c.b16 %v3474, %v3470
        %v4103 = vpack.c.b16 %v3475, %v3471
        %v4104 = vpack.c.b16 %v3476, %v3472
        %v4105 = vpack.c.b16 %v3481, %v3477
        %v4106 = vpack.c.b16 %v3482, %v3478
        %v4107 = vpack.c.b16 %v3483, %v3479
        %v4108 = vpack.c.b16 %v3484, %v3480
        %v4109 = vpack.c.b16 %v3489, %v3485
        %v4110 = vpack.c.b16 %v3490, %v3486
        %v4111 = vpack.c.b16 %v3491, %v3487
        %v4112 = vpack.c.b16 %v3492, %v3488
        %v4113 = vpack.c.b16 %v3497, %v3493
        %v4114 = vpack.c.b16 %v3498, %v3494
        %v4115 = vpack.c.b16 %v3499, %v3495
        %v4116 = vpack.c.b16 %v3500, %v3496
        %v4117 = vpack.c.b16 %v3505, %v3501
        %v4118 = vpack.c.b16 %v3506, %v3502
        %v4119 = vpack.c.b16 %v3507, %v3503
        %v4120 = vpack.c.b16 %v3508, %v3504
        %v4121 = vpack.c.b16 %v3513, %v3509
        %v4122 = vpack.c.b16 %v3514, %v3510
        %v4123 = vpack.c.b16 %v3515, %v3511
        %v4124 = vpack.c.b16 %v3516, %v3512
        %v4125 = vpack.c.b16 %v3521, %v3517
        %v4126 = vpack.c.b16 %v3522, %v3518
        %v4127 = vpack.c.b16 %v3523, %v3519
        %v4128 = vpack.c.b16 %v3524, %v3520
        %v4129 = vpack.c.b16 %v3529, %v3525
        %v4130 = vpack.c.b16 %v3530, %v3526
        %v4131 = vpack.c.b16 %v3531, %v3527
        %v4132 = vpack.c.b16 %v3532, %v3528
        %v4133 = vpack.c.b16 %v3537, %v3533
        %v4134 = vpack.c.b16 %v3538, %v3534
        %v4135 = vpack.c.b16 %v3539, %v3535
        %v4136 = vpack.c.b16 %v3540, %v3536
        %v4137 = vpack.c.b16 %v3545, %v3541
        %v4138 = vpack.c.b16 %v3546, %v3542
        %v4139 = vpack.c.b16 %v3547, %v3543
        %v4140 = vpack.c.b16 %v3548, %v3544
        %v4141 = vpack.c.b16 %v3553, %v3549
        %v4142 = vpack.c.b16 %v3554, %v3550
        %v4143 = vpack.c.b16 %v3555, %v3551
        %v4144 = vpack.c.b16 %v3556, %v3552
        %v4145 = vpack.c.b16 %v3561, %v3557
        %v4146 = vpack.c.b16 %v3562, %v3558
        %v4147 = vpack.c.b16 %v3563, %v3559
        %v4148 = vpack.c.b16 %v3564, %v3560
        %v4149 = vpack.c.b16 %v3569, %v3565
        %v4150 = vpack.c.b16 %v3570, %v3566
        %v4151 = vpack.c.b16 %v3571, %v3567
        %v4152 = vpack.c.b16 %v3572, %v3568
        %v4153 = vpack.c.b16 %v3577, %v3573
        %v4154 = vpack.c.b16 %v3578, %v3574
        %v4155 = vpack.c.b16 %v3579, %v3575
        %v4156 = vpack.c.b16 %v3580, %v3576
        %v4157 = vpack.c.b16 %v3585, %v3581
        %v4158 = vpack.c.b16 %v3586, %v3582
        %v4159 = vpack.c.b16 %v3587, %v3583
        %v4160 = vpack.c.b16 %v3588, %v3584
        %v4161 = vpack.c.b16 %v3593, %v3589
        %v4162 = vpack.c.b16 %v3594, %v3590
        %v4163 = vpack.c.b16 %v3595, %v3591
        %v4164 = vpack.c.b16 %v3596, %v3592
        %v4165 = vpack.c.b16 %v3601, %v3597
        %v4166 = vpack.c.b16 %v3602, %v3598
        %v4167 = vpack.c.b16 %v3603, %v3599
        %v4168 = vpack.c.b16 %v3604, %v3600
        %v4169 = vpack.c.b16 %v3609, %v3605
        %v4170 = vpack.c.b16 %v3610, %v3606
        %v4171 = vpack.c.b16 %v3611, %v3607
        %v4172 = vpack.c.b16 %v3612, %v3608
        %v4173 = vpack.c.b16 %v3617, %v3613
        %v4174 = vpack.c.b16 %v3618, %v3614
        %v4175 = vpack.c.b16 %v3619, %v3615
        %v4176 = vpack.c.b16 %v3620, %v3616
        %v4177 = vpack.c.b16 %v3625, %v3621
        %v4178 = vpack.c.b16 %v3626, %v3622
        %v4179 = vpack.c.b16 %v3627, %v3623
        %v4180 = vpack.c.b16 %v3628, %v3624
        %v4181 = vpack.c.b16 %v3633, %v3629
        %v4182 = vpack.c.b16 %v3634, %v3630
        %v4183 = vpack.c.b16 %v3635, %v3631
        %v4184 = vpack.c.b16 %v3636, %v3632
        %v4185 = vpack.c.b16 %v3641, %v3637
        %v4186 = vpack.c.b16 %v3642, %v3638
        %v4187 = vpack.c.b16 %v3643, %v3639
        %v4188 = vpack.c.b16 %v3644, %v3640
        %v4189 = vpack.c.b16 %v3649, %v3645
        %v4190 = vpack.c.b16 %v3650, %v3646
        %v4191 = vpack.c.b16 %v3651, %v3647
        %v4192 = vpack.c.b16 %v3652, %v3648
        %v4193 = vpack.c.b16 %v3657, %v3653
        %v4194 = vpack.c.b16 %v3658, %v3654
        %v4195 = vpack.c.b16 %v3659, %v3655
        %v4196 = vpack.c.b16 %v3660, %v3656
        %v4197 = vpack.c.b16 %v3665, %v3661
        %v4198 = vpack.c.b16 %v3666, %v3662
        %v4199 = vpack.c.b16 %v3667, %v3663
        %v4200 = vpack.c.b16 %v3668, %v3664
        %v4201 = vpack.c.b16 %v3673, %v3669
        %v4202 = vpack.c.b16 %v3674, %v3670
        %v4203 = vpack.c.b16 %v3675, %v3671
        %v4204 = vpack.c.b16 %v3676, %v3672
        %v4205 = vpack.c.b16 %v3681, %v3677
        %v4206 = vpack.c.b16 %v3682, %v3678
        %v4207 = vpack.c.b16 %v3683, %v3679
        %v4208 = vpack.c.b16 %v3684, %v3680
        %v4209 = vpack.c.b16 %v3689, %v3685
        %v4210 = vpack.c.b16 %v3690, %v3686
        %v4211 = vpack.c.b16 %v3691, %v3687
        %v4212 = vpack.c.b16 %v3692, %v3688
        %v4213 = vpack.c.b16 %v3697, %v3693
        %v4214 = vpack.c.b16 %v3698, %v3694
        %v4215 = vpack.c.b16 %v3699, %v3695
        %v4216 = vpack.c.b16 %v3700, %v3696
        %v4217 = vpack.c.b16 %v3705, %v3701
        %v4218 = vpack.c.b16 %v3706, %v3702
        %v4219 = vpack.c.b16 %v3707, %v3703
        %v4220 = vpack.c.b16 %v3708, %v3704
        %v4221 = vpack.c.b16 %v3713, %v3709
        %v4222 = vpack.c.b16 %v3714, %v3710
        %v4223 = vpack.c.b16 %v3715, %v3711
        %v4224 = vpack.c.b16 %v3716, %v3712
        %v4225 = vpack.c.b16 %v3721, %v3717
        %v4226 = vpack.c.b16 %v3722, %v3718
        %v4227 = vpack.c.b16 %v3723, %v3719
        %v4228 = vpack.c.b16 %v3724, %v3720
        %v4229 = vpack.c.b16 %v3729, %v3725
        %v4230 = vpack.c.b16 %v3730, %v3726
        %v4231 = vpack.c.b16 %v3731, %v3727
        %v4232 = vpack.c.b16 %v3732, %v3728
        %v4233 = vpack.c.b16 %v3737, %v3733
        %v4234 = vpack.c.b16 %v3738, %v3734
        %v4235 = vpack.c.b16 %v3739, %v3735
        %v4236 = vpack.c.b16 %v3740, %v3736
        %v4237 = vpack.c.b16 %v3745, %v3741
        %v4238 = vpack.c.b16 %v3746, %v3742
        %v4239 = vpack.c.b16 %v3747, %v3743
        %v4240 = vpack.c.b16 %v3748, %v3744
        %v4241 = vpack.c.b16 %v3753, %v3749
        %v4242 = vpack.c.b16 %v3754, %v3750
        %v4243 = vpack.c.b16 %v3755, %v3751
        %v4244 = vpack.c.b16 %v3756, %v3752
        %v4245 = vpack.c.b16 %v3761, %v3757
        %v4246 = vpack.c.b16 %v3762, %v3758
        %v4247 = vpack.c.b16 %v3763, %v3759
        %v4248 = vpack.c.b16 %v3764, %v3760
        %v4249 = vpack.c.b16 %v3769, %v3765
        %v4250 = vpack.c.b16 %v3770, %v3766
        %v4251 = vpack.c.b16 %v3771, %v3767
        %v4252 = vpack.c.b16 %v3772, %v3768
        %v4253 = vpack.c.b16 %v3777, %v3773
        %v4254 = vpack.c.b16 %v3778, %v3774
        %v4255 = vpack.c.b16 %v3779, %v3775
        %v4256 = vpack.c.b16 %v3780, %v3776
        %v4257 = vpack.c.b16 %v3785, %v3781
        %v4258 = vpack.c.b16 %v3786, %v3782
        %v4259 = vpack.c.b16 %v3787, %v3783
        %v4260 = vpack.c.b16 %v3788, %v3784
        %v4261 = vpack.c.b16 %v3793, %v3789
        %v4262 = vpack.c.b16 %v3794, %v3790
        %v4263 = vpack.c.b16 %v3795, %v3791
        %v4264 = vpack.c.b16 %v3796, %v3792
        %v4265 = vpack.c.b16 %v3801, %v3797
        %v4266 = vpack.c.b16 %v3802, %v3798
        %v4267 = vpack.c.b16 %v3803, %v3799
        %v4268 = vpack.c.b16 %v3804, %v3800
        %v4269 = vpack.c.b16 %v3809, %v3805
        %v4270 = vpack.c.b16 %v3810, %v3806
        %v4271 = vpack.c.b16 %v3811, %v3807
        %v4272 = vpack.c.b16 %v3812, %v3808
        %v4273 = vpack.c.b16 %v3817, %v3813
        %v4274 = vpack.c.b16 %v3818, %v3814
        %v4275 = vpack.c.b16 %v3819, %v3815
        %v4276 = vpack.c.b16 %v3820, %v3816
        %v4277 = vpack.c.b16 %v3825, %v3821
        %v4278 = vpack.c.b16 %v3826, %v3822
        %v4279 = vpack.c.b16 %v3827, %v3823
        %v4280 = vpack.c.b16 %v3828, %v3824
        %v4281 = vpack.c.b16 %v3833, %v3829
        %v4282 = vpack.c.b16 %v3834, %v3830
        %v4283 = vpack.c.b16 %v3835, %v3831
        %v4284 = vpack.c.b16 %v3836, %v3832
        %v4285 = vpack.c.b16 %v3841, %v3837
        %v4286 = vpack.c.b16 %v3842, %v3838
        %v4287 = vpack.c.b16 %v3843, %v3839
        %v4288 = vpack.c.b16 %v3844, %v3840
        %v4289 = vpack.c.b16 %v3849, %v3845
        %v4290 = vpack.c.b16 %v3850, %v3846
        %v4291 = vpack.c.b16 %v3851, %v3847
        %v4292 = vpack.c.b16 %v3852, %v3848
        %v4293 = vpack.c.b16 %v3857, %v3853
        %v4294 = vpack.c.b16 %v3858, %v3854
        %v4295 = vpack.c.b16 %v3859, %v3855
        %v4296 = vpack.c.b16 %v3860, %v3856
        %v4297 = vpack.c.b16 %v3865, %v3861
        %v4298 = vpack.c.b16 %v3866, %v3862
        %v4299 = vpack.c.b16 %v3867, %v3863
        %v4300 = vpack.c.b16 %v3868, %v3864
        %v4301 = vpack.c.b16 %v3873, %v3869
        %v4302 = vpack.c.b16 %v3874, %v3870
        %v4303 = vpack.c.b16 %v3875, %v3871
        %v4304 = vpack.c.b16 %v3876, %v3872
        %v4305 = vpack.c.b16 %v3881, %v3877
        %v4306 = vpack.c.b16 %v3882, %v3878
        %v4307 = vpack.c.b16 %v3883, %v3879
        %v4308 = vpack.c.b16 %v3884, %v3880
        %v4309 = vpack.c.b16 %v3889, %v3885
        %v4310 = vpack.c.b16 %v3890, %v3886
        %v4311 = vpack.c.b16 %v3891, %v3887
        %v4312 = vpack.c.b16 %v3892, %v3888
        %v4313 = vpack.c.b16 %v3897, %v3893
        %v4314 = vpack.c.b16 %v3898, %v3894
        %v4315 = vpack.c.b16 %v3899, %v3895
        %v4316 = vpack.c.b16 %v3900, %v3896
        %v4317 = vpack.c.b16 %v3905, %v3901
        %v4318 = vpack.c.b16 %v3906, %v3902
        %v4319 = vpack.c.b16 %v3907, %v3903
        %v4320 = vpack.c.b16 %v3908, %v3904
        %v4321 = vpack.c.b16 %v3913, %v3909
        %v4322 = vpack.c.b16 %v3914, %v3910
        %v4323 = vpack.c.b16 %v3915, %v3911
        %v4324 = vpack.c.b16 %v3916, %v3912
        %v4325 = vpack.c.b16 %v3921, %v3917
        %v4326 = vpack.c.b16 %v3922, %v3918
        %v4327 = vpack.c.b16 %v3923, %v3919
        %v4328 = vpack.c.b16 %v3924, %v3920
        %v4329 = vpack.c.b16 %v3929, %v3925
        %v4330 = vpack.c.b16 %v3930, %v3926
        %v4331 = vpack.c.b16 %v3931, %v3927
        %v4332 = vpack.c.b16 %v3932, %v3928
        %v4333 = vpack.c.b16 %v3937, %v3933
        %v4334 = vpack.c.b16 %v3938, %v3934
        %v4335 = vpack.c.b16 %v3939, %v3935
        %v4336 = vpack.c.b16 %v3940, %v3936
        %v4337 = vpack.c.b16 %v3945, %v3941
        %v4338 = vpack.c.b16 %v3946, %v3942
        %v4339 = vpack.c.b16 %v3947, %v3943
        %v4340 = vpack.c.b16 %v3948, %v3944
        %v4341 = vpack.c.b16 %v3953, %v3949
        %v4342 = vpack.c.b16 %v3954, %v3950
        %v4343 = vpack.c.b16 %v3955, %v3951
        %v4344 = vpack.c.b16 %v3956, %v3952
        %v4345 = vpack.c.b16 %v3961, %v3957
        %v4346 = vpack.c.b16 %v3962, %v3958
        %v4347 = vpack.c.b16 %v3963, %v3959
        %v4348 = vpack.c.b16 %v3964, %v3960
        %v4349 = vpack.c.b16 %v3969, %v3965
        %v4350 = vpack.c.b16 %v3970, %v3966
        %v4351 = vpack.c.b16 %v3971, %v3967
        %v4352 = vpack.c.b16 %v3972, %v3968
        %v4353 = vpack.c.b16 %v3977, %v3973
        %v4354 = vpack.c.b16 %v3978, %v3974
        %v4355 = vpack.c.b16 %v3979, %v3975
        %v4356 = vpack.c.b16 %v3980, %v3976
        %v4357 = vpack.c.b16 %v3985, %v3981
        %v4358 = vpack.c.b16 %v3986, %v3982
        %v4359 = vpack.c.b16 %v3987, %v3983
        %v4360 = vpack.c.b16 %v3988, %v3984
        %v4361 = vpack.c.b16 %v3993, %v3989
        %v4362 = vpack.c.b16 %v3994, %v3990
        %v4363 = vpack.c.b16 %v3995, %v3991
        %v4364 = vpack.c.b16 %v3996, %v3992
        %v4365 = vpack.c.b16 %v4001, %v3997
        %v4366 = vpack.c.b16 %v4002, %v3998
        %v4367 = vpack.c.b16 %v4003, %v3999
        %v4368 = vpack.c.b16 %v4004, %v4000
        %v4369 = vpack.c.b16 %v4009, %v4005
        %v4370 = vpack.c.b16 %v4010, %v4006
        %v4371 = vpack.c.b16 %v4011, %v4007
        %v4372 = vpack.c.b16 %v4012, %v4008
        %v4373 = vpack.c.b16 %v4017, %v4013
        %v4374 = vpack.c.b16 %v4018, %v4014
        %v4375 = vpack.c.b16 %v4019, %v4015
        %v4376 = vpack.c.b16 %v4020, %v4016
        %v4377 = vpack.c.b16 %v4025, %v4021
        %v4378 = vpack.c.b16 %v4026, %v4022
        %v4379 = vpack.c.b16 %v4027, %v4023
        %v4380 = vpack.c.b16 %v4028, %v4024
        %v4381 = vpack.c.b16 %v4033, %v4029
        %v4382 = vpack.c.b16 %v4034, %v4030
        %v4383 = vpack.c.b16 %v4035, %v4031
        %v4384 = vpack.c.b16 %v4036, %v4032
        %v4385 = vpack.c.b16 %v4041, %v4037
        %v4386 = vpack.c.b16 %v4042, %v4038
        %v4387 = vpack.c.b16 %v4043, %v4039
        %v4388 = vpack.c.b16 %v4044, %v4040
        %v4389 = vpack.c.b16 %v4049, %v4045
        %v4390 = vpack.c.b16 %v4050, %v4046
        %v4391 = vpack.c.b16 %v4051, %v4047
        %v4392 = vpack.c.b16 %v4052, %v4048
        %v4393 = vpack.c.b16 %v4057, %v4053
        %v4394 = vpack.c.b16 %v4058, %v4054
        %v4395 = vpack.c.b16 %v4059, %v4055
        %v4396 = vpack.c.b16 %v4060, %v4056
        %v4397 = vpack.c.b16 %v4065, %v4061
        %v4398 = vpack.c.b16 %v4066, %v4062
        %v4399 = vpack.c.b16 %v4067, %v4063
        %v4400 = vpack.c.b16 %v4068, %v4064
        %v4401 = vpack.c.b16 %v4073, %v4069
        %v4402 = vpack.c.b16 %v4074, %v4070
        %v4403 = vpack.c.b16 %v4075, %v4071
        %v4404 = vpack.c.b16 %v4076, %v4072
        %v4405 = vpack.c.b16 %v4081, %v4077
        %v4406 = vpack.c.b16 %v4082, %v4078
        %v4407 = vpack.c.b16 %v4083, %v4079
        %v4408 = vpack.c.b16 %v4084, %v4080
        %v4409 = vpack.c.b16 %v4089, %v4085
        %v4410 = vpack.c.b16 %v4090, %v4086
        %v4411 = vpack.c.b16 %v4091, %v4087
        %v4412 = vpack.c.b16 %v4092, %v4088
        %4733 = vmatprep.subr.bf16.mxu0 %v4094
        %4734 = vmatpush1.bf16.msra.mxu0 %v4093
        %4735 = vmatprep.subr.bf16.mxu0 %v4098
        %4736 = vmatpush1.bf16.msra.mxu0 %v4097
        %4737 = vmatprep.subr.bf16.mxu0 %v4102
        %4738 = vmatpush1.bf16.msra.mxu0 %v4101
        %4739 = vmatprep.subr.bf16.mxu0 %v4106
        %4740 = vmatpush1.bf16.msra.mxu0 %v4105
        %4741 = vmatprep.subr.bf16.mxu0 %v4110
        %4742 = vmatpush1.bf16.msra.mxu0 %v4109
        %4743 = vmatprep.subr.bf16.mxu0 %v4114
        %4744 = vmatpush1.bf16.msra.mxu0 %v4113
        %4745 = vmatprep.subr.bf16.mxu0 %v4118
        %4746 = vmatpush1.bf16.msra.mxu0 %v4117
        %4747 = vmatprep.subr.bf16.mxu0 %v4122
        %4748 = vmatpush1.bf16.msra.mxu0 %v4121
        %4749 = vmatprep.subr.bf16.mxu0 %v4126
        %4750 = vmatpush1.bf16.msra.mxu0 %v4125
        %4751 = vmatprep.subr.bf16.mxu0 %v4130
        %4752 = vmatpush1.bf16.msra.mxu0 %v4129
        %4753 = vmatprep.subr.bf16.mxu0 %v4134
        %4754 = vmatpush1.bf16.msra.mxu0 %v4133
        %4755 = vmatprep.subr.bf16.mxu0 %v4138
        %4756 = vmatpush1.bf16.msra.mxu0 %v4137
        %4757 = vmatprep.subr.bf16.mxu0 %v4142
        %4758 = vmatpush1.bf16.msra.mxu0 %v4141
        %4759 = vmatprep.subr.bf16.mxu0 %v4146
        %4760 = vmatpush1.bf16.msra.mxu0 %v4145
        %4761 = vmatprep.subr.bf16.mxu0 %v4150
        %4762 = vmatpush1.bf16.msra.mxu0 %v4149
        %4763 = vmatprep.subr.bf16.mxu0 %v4154
        %4764 = vmatpush1.bf16.msra.mxu0 %v4153
        %4765 = vmatprep.mubr.bf16.mxu0 %v3114
        %4766 = vmatmul.mubr.bf16.gmra.mrb[0].mxu0 %v3113
        %v4767 = vpop.f32.mrb[0].mxu0
        %v4768 = vadd.f32 0.0, %v4767
        %v4769 = vpop.f32.mrb[0].mxu0
        %v4770 = vadd.f32 0.0, %v4769
        %v4771 = vpop.f32.mrb[0].mxu0
        %v4772 = vadd.f32 0.0, %v4771
        %v4773 = vpop.f32.mrb[0].mxu0
        %v4774 = vadd.f32 0.0, %v4773
        %4775 = vdwg.mxu0
        %4776 = vmatprep.subr.bf16.mxu0 %v4158
        %4777 = vmatpush1.bf16.msra.mxu0 %v4157
        %4778 = vmatprep.subr.bf16.mxu0 %v4162
        %4779 = vmatpush1.bf16.msra.mxu0 %v4161
        %4780 = vmatprep.subr.bf16.mxu0 %v4166
        %4781 = vmatpush1.bf16.msra.mxu0 %v4165
        %4782 = vmatprep.subr.bf16.mxu0 %v4170
        %4783 = vmatpush1.bf16.msra.mxu0 %v4169
        %4784 = vmatprep.subr.bf16.mxu0 %v4174
        %4785 = vmatpush1.bf16.msra.mxu0 %v4173
        %4786 = vmatprep.subr.bf16.mxu0 %v4178
        %4787 = vmatpush1.bf16.msra.mxu0 %v4177
        %4788 = vmatprep.subr.bf16.mxu0 %v4182
        %4789 = vmatpush1.bf16.msra.mxu0 %v4181
        %4790 = vmatprep.subr.bf16.mxu0 %v4186
        %4791 = vmatpush1.bf16.msra.mxu0 %v4185
        %4792 = vmatprep.subr.bf16.mxu0 %v4190
        %4793 = vmatpush1.bf16.msra.mxu0 %v4189
        %4794 = vmatprep.subr.bf16.mxu0 %v4194
        %4795 = vmatpush1.bf16.msra.mxu0 %v4193
        %4796 = vmatprep.subr.bf16.mxu0 %v4198
        %4797 = vmatpush1.bf16.msra.mxu0 %v4197
        %4798 = vmatprep.subr.bf16.mxu0 %v4202
        %4799 = vmatpush1.bf16.msra.mxu0 %v4201
        %4800 = vmatprep.subr.bf16.mxu0 %v4206
        %4801 = vmatpush1.bf16.msra.mxu0 %v4205
        %4802 = vmatprep.subr.bf16.mxu0 %v4210
        %4803 = vmatpush1.bf16.msra.mxu0 %v4209
        %4804 = vmatprep.subr.bf16.mxu0 %v4214
        %4805 = vmatpush1.bf16.msra.mxu0 %v4213
        %4806 = vmatprep.subr.bf16.mxu0 %v4218
        %4807 = vmatpush1.bf16.msra.mxu0 %v4217
        %4808 = vmatprep.mubr.bf16.mxu0 %v3116
        %4809 = vmatmul.mubr.bf16.gmra.mrb[0].mxu0 %v3115
        %v4810 = vpop.f32.mrb[0].mxu0
        %v4811 = vadd.f32 %v4768, %v4810
        %v4812 = vpop.f32.mrb[0].mxu0
        %v4813 = vadd.f32 %v4770, %v4812
        %v4814 = vpop.f32.mrb[0].mxu0
        %v4815 = vadd.f32 %v4772, %v4814
        %v4816 = vpop.f32.mrb[0].mxu0
        %v4817 = vadd.f32 %v4774, %v4816
        %4818 = vdwg.mxu0
        %4819 = vmatprep.subr.bf16.mxu0 %v4222
        %4820 = vmatpush1.bf16.msra.mxu0 %v4221
        %4821 = vmatprep.subr.bf16.mxu0 %v4226
        %4822 = vmatpush1.bf16.msra.mxu0 %v4225
        %4823 = vmatprep.subr.bf16.mxu0 %v4230
        %4824 = vmatpush1.bf16.msra.mxu0 %v4229
        %4825 = vmatprep.subr.bf16.mxu0 %v4234
        %4826 = vmatpush1.bf16.msra.mxu0 %v4233
        %4827 = vmatprep.subr.bf16.mxu0 %v4238
        %4828 = vmatpush1.bf16.msra.mxu0 %v4237
        %4829 = vmatprep.subr.bf16.mxu0 %v4242
        %4830 = vmatpush1.bf16.msra.mxu0 %v4241
        %4831 = vmatprep.subr.bf16.mxu0 %v4246
        %4832 = vmatpush1.bf16.msra.mxu0 %v4245
        %4833 = vmatprep.subr.bf16.mxu0 %v4250
        %4834 = vmatpush1.bf16.msra.mxu0 %v4249
        %4835 = vmatprep.subr.bf16.mxu0 %v4254
        %4836 = vmatpush1.bf16.msra.mxu0 %v4253
        %4837 = vmatprep.subr.bf16.mxu0 %v4258
        %4838 = vmatpush1.bf16.msra.mxu0 %v4257
        %4839 = vmatprep.subr.bf16.mxu0 %v4262
        %4840 = vmatpush1.bf16.msra.mxu0 %v4261
        %4841 = vmatprep.subr.bf16.mxu0 %v4266
        %4842 = vmatpush1.bf16.msra.mxu0 %v4265
        %4843 = vmatprep.subr.bf16.mxu0 %v4270
        %4844 = vmatpush1.bf16.msra.mxu0 %v4269
        %4845 = vmatprep.subr.bf16.mxu0 %v4274
        %4846 = vmatpush1.bf16.msra.mxu0 %v4273
        %4847 = vmatprep.subr.bf16.mxu0 %v4278
        %4848 = vmatpush1.bf16.msra.mxu0 %v4277
        %4849 = vmatprep.subr.bf16.mxu0 %v4282
        %4850 = vmatpush1.bf16.msra.mxu0 %v4281
        %4851 = vmatprep.mubr.bf16.mxu0 %v3118
        %4852 = vmatmul.mubr.bf16.gmra.mrb[0].mxu0 %v3117
        %v4853 = vpop.f32.mrb[0].mxu0
        %v4854 = vadd.f32 %v4811, %v4853
        %v4855 = vpop.f32.mrb[0].mxu0
        %v4856 = vadd.f32 %v4813, %v4855
        %v4857 = vpop.f32.mrb[0].mxu0
        %v4858 = vadd.f32 %v4815, %v4857
        %v4859 = vpop.f32.mrb[0].mxu0
        %v4860 = vadd.f32 %v4817, %v4859
        %4861 = vdwg.mxu0
        %4862 = vmatprep.subr.bf16.mxu0 %v4286
        %4863 = vmatpush1.bf16.msra.mxu0 %v4285
        %4864 = vmatprep.subr.bf16.mxu0 %v4290
        %4865 = vmatpush1.bf16.msra.mxu0 %v4289
        %4866 = vmatprep.subr.bf16.mxu0 %v4294
        %4867 = vmatpush1.bf16.msra.mxu0 %v4293
        %4868 = vmatprep.subr.bf16.mxu0 %v4298
        %4869 = vmatpush1.bf16.msra.mxu0 %v4297
        %4870 = vmatprep.subr.bf16.mxu0 %v4302
        %4871 = vmatpush1.bf16.msra.mxu0 %v4301
        %4872 = vmatprep.subr.bf16.mxu0 %v4306
        %4873 = vmatpush1.bf16.msra.mxu0 %v4305
        %4874 = vmatprep.subr.bf16.mxu0 %v4310
        %4875 = vmatpush1.bf16.msra.mxu0 %v4309
        %4876 = vmatprep.subr.bf16.mxu0 %v4314
        %4877 = vmatpush1.bf16.msra.mxu0 %v4313
        %4878 = vmatprep.subr.bf16.mxu0 %v4318
        %4879 = vmatpush1.bf16.msra.mxu0 %v4317
        %4880 = vmatprep.subr.bf16.mxu0 %v4322
        %4881 = vmatpush1.bf16.msra.mxu0 %v4321
        %4882 = vmatprep.subr.bf16.mxu0 %v4326
        %4883 = vmatpush1.bf16.msra.mxu0 %v4325
        %4884 = vmatprep.subr.bf16.mxu0 %v4330
        %4885 = vmatpush1.bf16.msra.mxu0 %v4329
        %4886 = vmatprep.subr.bf16.mxu0 %v4334
        %4887 = vmatpush1.bf16.msra.mxu0 %v4333
        %4888 = vmatprep.subr.bf16.mxu0 %v4338
        %4889 = vmatpush1.bf16.msra.mxu0 %v4337
        %4890 = vmatprep.subr.bf16.mxu0 %v4342
        %4891 = vmatpush1.bf16.msra.mxu0 %v4341
        %4892 = vmatprep.subr.bf16.mxu0 %v4346
        %4893 = vmatpush1.bf16.msra.mxu0 %v4345
        %4894 = vmatprep.mubr.bf16.mxu0 %v3120
        %4895 = vmatmul.mubr.bf16.gmra.mrb[0].mxu0 %v3119
        %v4896 = vpop.f32.mrb[0].mxu0
        %v4897 = vadd.f32 %v4854, %v4896
        %v4898 = vpop.f32.mrb[0].mxu0
        %v4899 = vadd.f32 %v4856, %v4898
        %v4900 = vpop.f32.mrb[0].mxu0
        %v4901 = vadd.f32 %v4858, %v4900
        %v4902 = vpop.f32.mrb[0].mxu0
        %v4903 = vadd.f32 %v4860, %v4902
        %4904 = vdwg.mxu0
        %4905 = vmatprep.subr.bf16.mxu0 %v4350
        %4906 = vmatpush1.bf16.msra.mxu0 %v4349
        %4907 = vmatprep.subr.bf16.mxu0 %v4354
        %4908 = vmatpush1.bf16.msra.mxu0 %v4353
        %4909 = vmatprep.subr.bf16.mxu0 %v4358
        %4910 = vmatpush1.bf16.msra.mxu0 %v4357
        %4911 = vmatprep.subr.bf16.mxu0 %v4362
        %4912 = vmatpush1.bf16.msra.mxu0 %v4361
        %4913 = vmatprep.subr.bf16.mxu0 %v4366
        %4914 = vmatpush1.bf16.msra.mxu0 %v4365
        %4915 = vmatprep.subr.bf16.mxu0 %v4370
        %4916 = vmatpush1.bf16.msra.mxu0 %v4369
        %4917 = vmatprep.subr.bf16.mxu0 %v4374
        %4918 = vmatpush1.bf16.msra.mxu0 %v4373
        %4919 = vmatprep.subr.bf16.mxu0 %v4378
        %4920 = vmatpush1.bf16.msra.mxu0 %v4377
        %4921 = vmatprep.subr.bf16.mxu0 %v4382
        %4922 = vmatpush1.bf16.msra.mxu0 %v4381
        %4923 = vmatprep.subr.bf16.mxu0 %v4386
        %4924 = vmatpush1.bf16.msra.mxu0 %v4385
        %4925 = vmatprep.subr.bf16.mxu0 %v4390
        %4926 = vmatpush1.bf16.msra.mxu0 %v4389
        %4927 = vmatprep.subr.bf16.mxu0 %v4394
        %4928 = vmatpush1.bf16.msra.mxu0 %v4393
        %4929 = vmatprep.subr.bf16.mxu0 %v4398
        %4930 = vmatpush1.bf16.msra.mxu0 %v4397
        %4931 = vmatprep.subr.bf16.mxu0 %v4402
        %4932 = vmatpush1.bf16.msra.mxu0 %v4401
        %4933 = vmatprep.subr.bf16.mxu0 %v4406
        %4934 = vmatpush1.bf16.msra.mxu0 %v4405
        %4935 = vmatprep.subr.bf16.mxu0 %v4410
        %4936 = vmatpush1.bf16.msra.mxu0 %v4409
        %4937 = vmatprep.mubr.bf16.mxu0 %v3122
        %4938 = vmatmul.mubr.bf16.gmra.mrb[0].mxu0 %v3121
        %v4939 = vpop.f32.mrb[0].mxu0
        %v4940 = vadd.f32 %v4897, %v4939
        %v4941 = vpop.f32.mrb[0].mxu0
        %v4942 = vadd.f32 %v4899, %v4941
        %v4943 = vpop.f32.mrb[0].mxu0
        %v4944 = vadd.f32 %v4901, %v4943
        %v4945 = vpop.f32.mrb[0].mxu0
        %v4946 = vadd.f32 %v4903, %v4945
        %4947 = vdwg.mxu0
        %4948 = vmatprep.subr.bf16.mxu0 %v4096
        %4949 = vmatpush1.bf16.msra.mxu0 %v4095
        %4950 = vmatprep.subr.bf16.mxu0 %v4100
        %4951 = vmatpush1.bf16.msra.mxu0 %v4099
        %4952 = vmatprep.subr.bf16.mxu0 %v4104
        %4953 = vmatpush1.bf16.msra.mxu0 %v4103
        %4954 = vmatprep.subr.bf16.mxu0 %v4108
        %4955 = vmatpush1.bf16.msra.mxu0 %v4107
        %4956 = vmatprep.subr.bf16.mxu0 %v4112
        %4957 = vmatpush1.bf16.msra.mxu0 %v4111
        %4958 = vmatprep.subr.bf16.mxu0 %v4116
        %4959 = vmatpush1.bf16.msra.mxu0 %v4115
        %4960 = vmatprep.subr.bf16.mxu0 %v4120
        %4961 = vmatpush1.bf16.msra.mxu0 %v4119
        %4962 = vmatprep.subr.bf16.mxu0 %v4124
        %4963 = vmatpush1.bf16.msra.mxu0 %v4123
        %4964 = vmatprep.subr.bf16.mxu0 %v4128
        %4965 = vmatpush1.bf16.msra.mxu0 %v4127
        %4966 = vmatprep.subr.bf16.mxu0 %v4132
        %4967 = vmatpush1.bf16.msra.mxu0 %v4131
        %4968 = vmatprep.subr.bf16.mxu0 %v4136
        %4969 = vmatpush1.bf16.msra.mxu0 %v4135
        %4970 = vmatprep.subr.bf16.mxu0 %v4140
        %4971 = vmatpush1.bf16.msra.mxu0 %v4139
        %4972 = vmatprep.subr.bf16.mxu0 %v4144
        %4973 = vmatpush1.bf16.msra.mxu0 %v4143
        %4974 = vmatprep.subr.bf16.mxu0 %v4148
        %4975 = vmatpush1.bf16.msra.mxu0 %v4147
        %4976 = vmatprep.subr.bf16.mxu0 %v4152
        %4977 = vmatpush1.bf16.msra.mxu0 %v4151
        %4978 = vmatprep.subr.bf16.mxu0 %v4156
        %4979 = vmatpush1.bf16.msra.mxu0 %v4155
        %4980 = vmatprep.mubr.bf16.mxu0 %v3114
        %4981 = vmatmul.mubr.bf16.gmra.mrb[0].mxu0 %v3113
        %v4982 = vpop.f32.mrb[0].mxu0
        %v4983 = vadd.f32 0.0, %v4982
        %v4984 = vpop.f32.mrb[0].mxu0
        %v4985 = vadd.f32 0.0, %v4984
        %v4986 = vpop.f32.mrb[0].mxu0
        %v4987 = vadd.f32 0.0, %v4986
        %v4988 = vpop.f32.mrb[0].mxu0
        %v4989 = vadd.f32 0.0, %v4988
        %4990 = vdwg.mxu0
        %4991 = vmatprep.subr.bf16.mxu0 %v4160
        %4992 = vmatpush1.bf16.msra.mxu0 %v4159
        %4993 = vmatprep.subr.bf16.mxu0 %v4164
        %4994 = vmatpush1.bf16.msra.mxu0 %v4163
        %4995 = vmatprep.subr.bf16.mxu0 %v4168
        %4996 = vmatpush1.bf16.msra.mxu0 %v4167
        %4997 = vmatprep.subr.bf16.mxu0 %v4172
        %4998 = vmatpush1.bf16.msra.mxu0 %v4171
        %4999 = vmatprep.subr.bf16.mxu0 %v4176
        %5000 = vmatpush1.bf16.msra.mxu0 %v4175
        %5001 = vmatprep.subr.bf16.mxu0 %v4180
        %5002 = vmatpush1.bf16.msra.mxu0 %v4179
        %5003 = vmatprep.subr.bf16.mxu0 %v4184
        %5004 = vmatpush1.bf16.msra.mxu0 %v4183
        %5005 = vmatprep.subr.bf16.mxu0 %v4188
        %5006 = vmatpush1.bf16.msra.mxu0 %v4187
        %5007 = vmatprep.subr.bf16.mxu0 %v4192
        %5008 = vmatpush1.bf16.msra.mxu0 %v4191
        %5009 = vmatprep.subr.bf16.mxu0 %v4196
        %5010 = vmatpush1.bf16.msra.mxu0 %v4195
        %5011 = vmatprep.subr.bf16.mxu0 %v4200
        %5012 = vmatpush1.bf16.msra.mxu0 %v4199
        %5013 = vmatprep.subr.bf16.mxu0 %v4204
        %5014 = vmatpush1.bf16.msra.mxu0 %v4203
        %5015 = vmatprep.subr.bf16.mxu0 %v4208
        %5016 = vmatpush1.bf16.msra.mxu0 %v4207
        %5017 = vmatprep.subr.bf16.mxu0 %v4212
        %5018 = vmatpush1.bf16.msra.mxu0 %v4211
        %5019 = vmatprep.subr.bf16.mxu0 %v4216
        %5020 = vmatpush1.bf16.msra.mxu0 %v4215
        %5021 = vmatprep.subr.bf16.mxu0 %v4220
        %5022 = vmatpush1.bf16.msra.mxu0 %v4219
        %5023 = vmatprep.mubr.bf16.mxu0 %v3116
        %5024 = vmatmul.mubr.bf16.gmra.mrb[0].mxu0 %v3115
        %v5025 = vpop.f32.mrb[0].mxu0
        %v5026 = vadd.f32 %v4983, %v5025
        %v5027 = vpop.f32.mrb[0].mxu0
        %v5028 = vadd.f32 %v4985, %v5027
        %v5029 = vpop.f32.mrb[0].mxu0
        %v5030 = vadd.f32 %v4987, %v5029
        %v5031 = vpop.f32.mrb[0].mxu0
        %v5032 = vadd.f32 %v4989, %v5031
        %5033 = vdwg.mxu0
        %5034 = vmatprep.subr.bf16.mxu0 %v4224
        %5035 = vmatpush1.bf16.msra.mxu0 %v4223
        %5036 = vmatprep.subr.bf16.mxu0 %v4228
        %5037 = vmatpush1.bf16.msra.mxu0 %v4227
        %5038 = vmatprep.subr.bf16.mxu0 %v4232
        %5039 = vmatpush1.bf16.msra.mxu0 %v4231
        %5040 = vmatprep.subr.bf16.mxu0 %v4236
        %5041 = vmatpush1.bf16.msra.mxu0 %v4235
        %5042 = vmatprep.subr.bf16.mxu0 %v4240
        %5043 = vmatpush1.bf16.msra.mxu0 %v4239
        %5044 = vmatprep.subr.bf16.mxu0 %v4244
        %5045 = vmatpush1.bf16.msra.mxu0 %v4243
        %5046 = vmatprep.subr.bf16.mxu0 %v4248
        %5047 = vmatpush1.bf16.msra.mxu0 %v4247
        %5048 = vmatprep.subr.bf16.mxu0 %v4252
        %5049 = vmatpush1.bf16.msra.mxu0 %v4251
        %5050 = vmatprep.subr.bf16.mxu0 %v4256
        %5051 = vmatpush1.bf16.msra.mxu0 %v4255
        %5052 = vmatprep.subr.bf16.mxu0 %v4260
        %5053 = vmatpush1.bf16.msra.mxu0 %v4259
        %5054 = vmatprep.subr.bf16.mxu0 %v4264
        %5055 = vmatpush1.bf16.msra.mxu0 %v4263
        %5056 = vmatprep.subr.bf16.mxu0 %v4268
        %5057 = vmatpush1.bf16.msra.mxu0 %v4267
        %5058 = vmatprep.subr.bf16.mxu0 %v4272
        %5059 = vmatpush1.bf16.msra.mxu0 %v4271
        %5060 = vmatprep.subr.bf16.mxu0 %v4276
        %5061 = vmatpush1.bf16.msra.mxu0 %v4275
        %5062 = vmatprep.subr.bf16.mxu0 %v4280
        %5063 = vmatpush1.bf16.msra.mxu0 %v4279
        %5064 = vmatprep.subr.bf16.mxu0 %v4284
        %5065 = vmatpush1.bf16.msra.mxu0 %v4283
        %5066 = vmatprep.mubr.bf16.mxu0 %v3118
        %5067 = vmatmul.mubr.bf16.gmra.mrb[0].mxu0 %v3117
        %v5068 = vpop.f32.mrb[0].mxu0
        %v5069 = vadd.f32 %v5026, %v5068
        %v5070 = vpop.f32.mrb[0].mxu0
        %v5071 = vadd.f32 %v5028, %v5070
        %v5072 = vpop.f32.mrb[0].mxu0
        %v5073 = vadd.f32 %v5030, %v5072
        %v5074 = vpop.f32.mrb[0].mxu0
        %v5075 = vadd.f32 %v5032, %v5074
        %5076 = vdwg.mxu0
        %5077 = vmatprep.subr.bf16.mxu0 %v4288
        %5078 = vmatpush1.bf16.msra.mxu0 %v4287
        %5079 = vmatprep.subr.bf16.mxu0 %v4292
        %5080 = vmatpush1.bf16.msra.mxu0 %v4291
        %5081 = vmatprep.subr.bf16.mxu0 %v4296
        %5082 = vmatpush1.bf16.msra.mxu0 %v4295
        %5083 = vmatprep.subr.bf16.mxu0 %v4300
        %5084 = vmatpush1.bf16.msra.mxu0 %v4299
        %5085 = vmatprep.subr.bf16.mxu0 %v4304
        %5086 = vmatpush1.bf16.msra.mxu0 %v4303
        %5087 = vmatprep.subr.bf16.mxu0 %v4308
        %5088 = vmatpush1.bf16.msra.mxu0 %v4307
        %5089 = vmatprep.subr.bf16.mxu0 %v4312
        %5090 = vmatpush1.bf16.msra.mxu0 %v4311
        %5091 = vmatprep.subr.bf16.mxu0 %v4316
        %5092 = vmatpush1.bf16.msra.mxu0 %v4315
        %5093 = vmatprep.subr.bf16.mxu0 %v4320
        %5094 = vmatpush1.bf16.msra.mxu0 %v4319
        %5095 = vmatprep.subr.bf16.mxu0 %v4324
        %5096 = vmatpush1.bf16.msra.mxu0 %v4323
        %5097 = vmatprep.subr.bf16.mxu0 %v4328
        %5098 = vmatpush1.bf16.msra.mxu0 %v4327
        %5099 = vmatprep.subr.bf16.mxu0 %v4332
        %5100 = vmatpush1.bf16.msra.mxu0 %v4331
        %5101 = vmatprep.subr.bf16.mxu0 %v4336
        %5102 = vmatpush1.bf16.msra.mxu0 %v4335
        %5103 = vmatprep.subr.bf16.mxu0 %v4340
        %5104 = vmatpush1.bf16.msra.mxu0 %v4339
        %5105 = vmatprep.subr.bf16.mxu0 %v4344
        %5106 = vmatpush1.bf16.msra.mxu0 %v4343
        %5107 = vmatprep.subr.bf16.mxu0 %v4348
        %5108 = vmatpush1.bf16.msra.mxu0 %v4347
        %5109 = vmatprep.mubr.bf16.mxu0 %v3120
        %5110 = vmatmul.mubr.bf16.gmra.mrb[0].mxu0 %v3119
        %v5111 = vpop.f32.mrb[0].mxu0
        %v5112 = vadd.f32 %v5069, %v5111
        %v5113 = vpop.f32.mrb[0].mxu0
        %v5114 = vadd.f32 %v5071, %v5113
        %v5115 = vpop.f32.mrb[0].mxu0
        %v5116 = vadd.f32 %v5073, %v5115
        %v5117 = vpop.f32.mrb[0].mxu0
        %v5118 = vadd.f32 %v5075, %v5117
        %5119 = vdwg.mxu0
        %5120 = vmatprep.subr.bf16.mxu0 %v4352
        %5121 = vmatpush1.bf16.msra.mxu0 %v4351
        %5122 = vmatprep.subr.bf16.mxu0 %v4356
        %5123 = vmatpush1.bf16.msra.mxu0 %v4355
        %5124 = vmatprep.subr.bf16.mxu0 %v4360
        %5125 = vmatpush1.bf16.msra.mxu0 %v4359
        %5126 = vmatprep.subr.bf16.mxu0 %v4364
        %5127 = vmatpush1.bf16.msra.mxu0 %v4363
        %5128 = vmatprep.subr.bf16.mxu0 %v4368
        %5129 = vmatpush1.bf16.msra.mxu0 %v4367
        %5130 = vmatprep.subr.bf16.mxu0 %v4372
        %5131 = vmatpush1.bf16.msra.mxu0 %v4371
        %5132 = vmatprep.subr.bf16.mxu0 %v4376
        %5133 = vmatpush1.bf16.msra.mxu0 %v4375
        %5134 = vmatprep.subr.bf16.mxu0 %v4380
        %5135 = vmatpush1.bf16.msra.mxu0 %v4379
        %5136 = vmatprep.subr.bf16.mxu0 %v4384
        %5137 = vmatpush1.bf16.msra.mxu0 %v4383
        %5138 = vmatprep.subr.bf16.mxu0 %v4388
        %5139 = vmatpush1.bf16.msra.mxu0 %v4387
        %5140 = vmatprep.subr.bf16.mxu0 %v4392
        %5141 = vmatpush1.bf16.msra.mxu0 %v4391
        %5142 = vmatprep.subr.bf16.mxu0 %v4396
        %5143 = vmatpush1.bf16.msra.mxu0 %v4395
        %5144 = vmatprep.subr.bf16.mxu0 %v4400
        %5145 = vmatpush1.bf16.msra.mxu0 %v4399
        %5146 = vmatprep.subr.bf16.mxu0 %v4404
        %5147 = vmatpush1.bf16.msra.mxu0 %v4403
        %5148 = vmatprep.subr.bf16.mxu0 %v4408
        %5149 = vmatpush1.bf16.msra.mxu0 %v4407
        %5150 = vmatprep.subr.bf16.mxu0 %v4412
        %5151 = vmatpush1.bf16.msra.mxu0 %v4411
        %5152 = vmatprep.mubr.bf16.mxu0 %v3122
        %5153 = vmatmul.mubr.bf16.gmra.mrb[0].mxu0 %v3121
        %v5154 = vpop.f32.mrb[0].mxu0
        %v5155 = vadd.f32 %v5112, %v5154
        %v5156 = vpop.f32.mrb[0].mxu0
        %v5157 = vadd.f32 %v5114, %v5156
        %v5158 = vpop.f32.mrb[0].mxu0
        %v5159 = vadd.f32 %v5116, %v5158
        %v5160 = vpop.f32.mrb[0].mxu0
        %v5161 = vadd.f32 %v5118, %v5160
        %5162 = vdwg.mxu0
        %v5163 = vpack.c.bf16 %v2587, %v2583
        %v5164 = vpack.c.bf16 %v2589, %v2585
        %v5166 = vsel %vm798, %v823, 0
        %5168 = vmatprep.subr.bf16.mxu0 %v5164
        %5169 = vmatpush1.bf16.msra.mxu0 %v5163
        %5170 = vmatprep.subr.bf16.mxu0 0
        %5171 = vmatpush1.bf16.msra.mxu0 0
        %5172 = vmatprep.subr.bf16.mxu0 0
        %5173 = vmatpush1.bf16.msra.mxu0 0
        %5174 = vmatprep.subr.bf16.mxu0 0
        %5175 = vmatpush1.bf16.msra.mxu0 0
        %5176 = vmatprep.subr.bf16.mxu0 0
        %5177 = vmatpush1.bf16.msra.mxu0 0
        %5178 = vmatprep.subr.bf16.mxu0 0
        %5179 = vmatpush1.bf16.msra.mxu0 0
        %5180 = vmatprep.subr.bf16.mxu0 0
        %5181 = vmatpush1.bf16.msra.mxu0 0
        %5182 = vmatprep.subr.bf16.mxu0 0
        %5183 = vmatpush1.bf16.msra.mxu0 0
        %5184 = vmatprep.subr.bf16.mxu0 0
        %5185 = vmatpush1.bf16.msra.mxu0 0
        %5186 = vmatprep.subr.bf16.mxu0 0
        %5187 = vmatpush1.bf16.msra.mxu0 0
        %5188 = vmatprep.subr.bf16.mxu0 0
        %5189 = vmatpush1.bf16.msra.mxu0 0
        %5190 = vmatprep.subr.bf16.mxu0 0
        %5191 = vmatpush1.bf16.msra.mxu0 0
        %5192 = vmatprep.subr.bf16.mxu0 0
        %5193 = vmatpush1.bf16.msra.mxu0 0
        %5194 = vmatprep.subr.bf16.mxu0 0
        %5195 = vmatpush1.bf16.msra.mxu0 0
        %5196 = vmatprep.subr.bf16.mxu0 0
        %5197 = vmatpush1.bf16.msra.mxu0 0
        %5198 = vmatprep.subr.bf16.mxu0 0
        %5199 = vmatpush1.bf16.msra.mxu0 0
        %5200 = vmatprep.mubr.bf16.mxu0 0
        %5201 = vmatmul.mubr.bf16.gmra.mrb[0].mxu0 %v5166
        %v5202 = vpop.f32.mrb[0].mxu0
        %v5203 = vadd.f32 0.0, %v5202
        %v5204 = vpop.f32.mrb[0].mxu0
        %v5205 = vadd.f32 0.0, %v5204
        %v5206 = vpop.f32.mrb[0].mxu0
        %v5207 = vadd.f32 0.0, %v5206
        %v5208 = vpop.f32.mrb[0].mxu0
        %v5209 = vadd.f32 0.0, %v5208
        %5210 = vdwg.mxu0
        %v5211 = vmul.f32 %v5203, %v808
        %v5212 = vmul.f32 %v5205, %v808
        %v5213 = vmul.f32 %v5207, %v810
        %v5214 = vmul.f32 %v5209, %v810
        %v5215 = vpack.c.bf16 %v4944, %v4940
        %v5216 = vpack.c.bf16 %v4946, %v4942
        %v5218 = vsel %vm798, %v824, 0
        %5220 = vmatprep.subr.bf16.mxu0 %v5216
        %5221 = vmatpush1.bf16.msra.mxu0 %v5215
        %5222 = vmatprep.subr.bf16.mxu0 0
        %5223 = vmatpush1.bf16.msra.mxu0 0
        %5224 = vmatprep.subr.bf16.mxu0 0
        %5225 = vmatpush1.bf16.msra.mxu0 0
        %5226 = vmatprep.subr.bf16.mxu0 0
        %5227 = vmatpush1.bf16.msra.mxu0 0
        %5228 = vmatprep.subr.bf16.mxu0 0
        %5229 = vmatpush1.bf16.msra.mxu0 0
        %5230 = vmatprep.subr.bf16.mxu0 0
        %5231 = vmatpush1.bf16.msra.mxu0 0
        %5232 = vmatprep.subr.bf16.mxu0 0
        %5233 = vmatpush1.bf16.msra.mxu0 0
        %5234 = vmatprep.subr.bf16.mxu0 0
        %5235 = vmatpush1.bf16.msra.mxu0 0
        %5236 = vmatprep.subr.bf16.mxu0 0
        %5237 = vmatpush1.bf16.msra.mxu0 0
        %5238 = vmatprep.subr.bf16.mxu0 0
        %5239 = vmatpush1.bf16.msra.mxu0 0
        %5240 = vmatprep.subr.bf16.mxu0 0
        %5241 = vmatpush1.bf16.msra.mxu0 0
        %5242 = vmatprep.subr.bf16.mxu0 0
        %5243 = vmatpush1.bf16.msra.mxu0 0
        %5244 = vmatprep.subr.bf16.mxu0 0
        %5245 = vmatpush1.bf16.msra.mxu0 0
        %5246 = vmatprep.subr.bf16.mxu0 0
        %5247 = vmatpush1.bf16.msra.mxu0 0
        %5248 = vmatprep.subr.bf16.mxu0 0
        %5249 = vmatpush1.bf16.msra.mxu0 0
        %5250 = vmatprep.subr.bf16.mxu0 0
        %5251 = vmatpush1.bf16.msra.mxu0 0
        %5252 = vmatprep.mubr.bf16.mxu0 0
        %5253 = vmatmul.mubr.bf16.gmra.mrb[0].mxu0 %v5218
        %v5254 = vpop.f32.mrb[0].mxu0
        %v5255 = vadd.f32 0.0, %v5254
        %v5256 = vpop.f32.mrb[0].mxu0
        %v5257 = vadd.f32 0.0, %v5256
        %v5258 = vpop.f32.mrb[0].mxu0
        %v5259 = vadd.f32 0.0, %v5258
        %v5260 = vpop.f32.mrb[0].mxu0
        %v5261 = vadd.f32 0.0, %v5260
        %5262 = vdwg.mxu0
        %v5263 = vmul.f32 %v5255, %v820
        %v5264 = vmul.f32 %v5257, %v820
        %v5265 = vmul.f32 %v5259, %v822
        %v5266 = vmul.f32 %v5261, %v822
        %v5268 = vlaneseq
        %v5269 = vshrl.u32 %v5268, 7
        %v5270 = vsub.s32 0, %v5269
        %v5271 = vrot.slane %v604, %v5270
        %v5272 = vlaneseq
        %v5273 = vshrl.u32 %v5272, 7
        %v5274 = vsub.s32 1, %v5273
        %v5275 = vrot.slane %v604, %v5274
        %v5278 = vadd.f32 %v5211, %v5271
        %v5279 = vadd.f32 %v5212, %v5275
        %v5280 = vadd.f32 %v5213, %v5271
        %v5281 = vadd.f32 %v5214, %v5275
        %v5282 = vadd.f32 %v5278, %v5155
        %v5283 = vadd.f32 %v5279, %v5157
        %v5284 = vadd.f32 %v5280, %v5159
        %v5285 = vadd.f32 %v5281, %v5161
        %v5287 = vlaneseq
        %v5288 = vshrl.u32 %v5287, 7
        %v5289 = vsub.s32 0, %v5288
        %v5290 = vrot.slane %v606, %v5289
        %v5291 = vlaneseq
        %v5292 = vshrl.u32 %v5291, 7
        %v5293 = vsub.s32 1, %v5292
        %v5294 = vrot.slane %v606, %v5293
        %v5297 = vadd.f32 %v5263, %v5290
        %v5298 = vadd.f32 %v5264, %v5294
        %v5299 = vadd.f32 %v5265, %v5290
        %v5300 = vadd.f32 %v5266, %v5294
        %v5301 = vadd.f32 %v5297, %v2755
        %v5302 = vadd.f32 %v5298, %v2757
        %v5303 = vadd.f32 %v5299, %v2759
        %v5304 = vadd.f32 %v5300, %v2761
        %v5305 = vmax.f32 %v5301, 0.0
        %v5306 = vmax.f32 %v5302, 0.0
        %v5307 = vmax.f32 %v5303, 0.0
        %v5308 = vmax.f32 %v5304, 0.0
        %v5309 = vadd.f32 %v5305, %v5307
        %v5310 = vrot.slane %v5309, 4
        %v5311 = vadd.f32 %v5309, %v5310
        %v5312 = vrot.slane %v5311, 2
        %v5313 = vadd.f32 %v5311, %v5312
        %v5314 = vrot.slane %v5313, 1
        %v5315 = vadd.f32 %v5313, %v5314
        %v5316 = vadd.f32 %v5306, %v5308
        %v5317 = vrot.slane %v5316, 4
        %v5318 = vadd.f32 %v5316, %v5317
        %v5319 = vrot.slane %v5318, 2
        %v5320 = vadd.f32 %v5318, %v5319
        %v5321 = vrot.slane %v5320, 1
        %v5322 = vadd.f32 %v5320, %v5321
        %v5323 = vrcp.pop 16.0
        %v5324 = vmul.f32 %v5315, %v5323
        %v5325 = vmul.f32 %v5322, %v5323
        %v5326 = vsub.f32 %v5305, %v5324
        %v5327 = vsub.f32 %v5306, %v5325
        %v5328 = vsub.f32 %v5307, %v5324
        %v5329 = vsub.f32 %v5308, %v5325
        %v5330 = vmul.f32 %v5326, %v5326
        %v5331 = vmul.f32 %v5327, %v5327
        %v5332 = vmul.f32 %v5328, %v5328
        %v5333 = vmul.f32 %v5329, %v5329
        %v5334 = vadd.f32 %v5330, %v5332
        %v5335 = vrot.slane %v5334, 4
        %v5336 = vadd.f32 %v5334, %v5335
        %v5337 = vrot.slane %v5336, 2
        %v5338 = vadd.f32 %v5336, %v5337
        %v5339 = vrot.slane %v5338, 1
        %v5340 = vadd.f32 %v5338, %v5339
        %v5341 = vadd.f32 %v5331, %v5333
        %v5342 = vrot.slane %v5341, 4
        %v5343 = vadd.f32 %v5341, %v5342
        %v5344 = vrot.slane %v5343, 2
        %v5345 = vadd.f32 %v5343, %v5344
        %v5346 = vrot.slane %v5345, 1
        %v5347 = vadd.f32 %v5345, %v5346
        %v5348 = vmul.f32 %v5340, %v5323
        %v5349 = vmul.f32 %v5347, %v5323
        %v5350 = vadd.f32 %v5348, 1e-05
        %v5351 = vadd.f32 %v5349, 1e-05
        %v5352 = vrsqrt.pop %v5350
        %v5353 = vrsqrt.pop %v5351
        %v5354 = vmul.f32 %v5326, %v5352
        %v5355 = vmul.f32 %v5327, %v5353
        %v5356 = vmul.f32 %v5328, %v5352
        %v5357 = vmul.f32 %v5329, %v5353
        %v5359 = vlaneseq
        %v5360 = vshrl.u32 %v5359, 7
        %v5361 = vsub.s32 0, %v5360
        %v5362 = vrot.slane %v608, %v5361
        %v5363 = vlaneseq
        %v5364 = vshrl.u32 %v5363, 7
        %v5365 = vsub.s32 1, %v5364
        %v5366 = vrot.slane %v608, %v5365
        %v5369 = vmul.f32 %v5354, %v5362
        %v5370 = vmul.f32 %v5355, %v5366
        %v5371 = vmul.f32 %v5356, %v5362
        %v5372 = vmul.f32 %v5357, %v5366
        %v5374 = vlaneseq
        %v5375 = vshrl.u32 %v5374, 7
        %v5376 = vsub.s32 0, %v5375
        %v5377 = vrot.slane %v610, %v5376
        %v5378 = vlaneseq
        %v5379 = vshrl.u32 %v5378, 7
        %v5380 = vsub.s32 1, %v5379
        %v5381 = vrot.slane %v610, %v5380
        %v5384 = vadd.f32 %v5369, %v5377
        %v5385 = vadd.f32 %v5370, %v5381
        %v5386 = vadd.f32 %v5371, %v5377
        %v5387 = vadd.f32 %v5372, %v5381
        %v5388 = vmax.f32 %v5282, 0.0
        %v5389 = vmax.f32 %v5283, 0.0
        %v5390 = vmax.f32 %v5284, 0.0
        %v5391 = vmax.f32 %v5285, 0.0
        %v5392 = vadd.f32 %v5388, %v5390
        %v5393 = vrot.slane %v5392, 4
        %v5394 = vadd.f32 %v5392, %v5393
        %v5395 = vrot.slane %v5394, 2
        %v5396 = vadd.f32 %v5394, %v5395
        %v5397 = vrot.slane %v5396, 1
        %v5398 = vadd.f32 %v5396, %v5397
        %v5399 = vadd.f32 %v5389, %v5391
        %v5400 = vrot.slane %v5399, 4
        %v5401 = vadd.f32 %v5399, %v5400
        %v5402 = vrot.slane %v5401, 2
        %v5403 = vadd.f32 %v5401, %v5402
        %v5404 = vrot.slane %v5403, 1
        %v5405 = vadd.f32 %v5403, %v5404
        %v5406 = vmul.f32 %v5398, %v5323
        %v5407 = vmul.f32 %v5405, %v5323
        %v5408 = vsub.f32 %v5388, %v5406
        %v5409 = vsub.f32 %v5389, %v5407
        %v5410 = vsub.f32 %v5390, %v5406
        %v5411 = vsub.f32 %v5391, %v5407
        %v5412 = vmul.f32 %v5408, %v5408
        %v5413 = vmul.f32 %v5409, %v5409
        %v5414 = vmul.f32 %v5410, %v5410
        %v5415 = vmul.f32 %v5411, %v5411
        %v5416 = vadd.f32 %v5412, %v5414
        %v5417 = vrot.slane %v5416, 4
        %v5418 = vadd.f32 %v5416, %v5417
        %v5419 = vrot.slane %v5418, 2
        %v5420 = vadd.f32 %v5418, %v5419
        %v5421 = vrot.slane %v5420, 1
        %v5422 = vadd.f32 %v5420, %v5421
        %v5423 = vadd.f32 %v5413, %v5415
        %v5424 = vrot.slane %v5423, 4
        %v5425 = vadd.f32 %v5423, %v5424
        %v5426 = vrot.slane %v5425, 2
        %v5427 = vadd.f32 %v5425, %v5426
        %v5428 = vrot.slane %v5427, 1
        %v5429 = vadd.f32 %v5427, %v5428
        %v5430 = vmul.f32 %v5422, %v5323
        %v5431 = vmul.f32 %v5429, %v5323
        %v5432 = vadd.f32 %v5430, 1e-05
        %v5433 = vadd.f32 %v5431, 1e-05
        %v5434 = vrsqrt.pop %v5432
        %v5435 = vrsqrt.pop %v5433
        %v5436 = vmul.f32 %v5408, %v5434
        %v5437 = vmul.f32 %v5409, %v5435
        %v5438 = vmul.f32 %v5410, %v5434
        %v5439 = vmul.f32 %v5411, %v5435
        %v5440 = vmul.f32 %v5436, %v5362
        %v5441 = vmul.f32 %v5437, %v5366
        %v5442 = vmul.f32 %v5438, %v5362
        %v5443 = vmul.f32 %v5439, %v5366
        %v5444 = vadd.f32 %v5440, %v5377
        %v5445 = vadd.f32 %v5441, %v5381
        %v5446 = vadd.f32 %v5442, %v5377
        %v5447 = vadd.f32 %v5443, %v5381
        %v5448 = vpack.c.bf16 %v5386, %v5384
        %v5449 = vpack.c.bf16 %v5387, %v5385
        %v5450 = vpack.c.bf16 %v5446, %v5444
        %v5451 = vpack.c.bf16 %v5447, %v5445
        %v5452 = vld [vmem:[#allocation10] sm:$0xff]
        %v5453 = vld [vmem:[#allocation10 + $0x8] sm:$0xff]
        %v5454 = vld [vmem:[#allocation10 + $0x10] sm:$0xff]
        %v5455 = vld [vmem:[#allocation10 + $0x18] sm:$0xff]
        %v5456 = vld [vmem:[#allocation10 + $0x20] sm:$0xff]
        %v5457 = vld [vmem:[#allocation10 + $0x28] sm:$0xff]
        %v5458 = vld [vmem:[#allocation10 + $0x30] sm:$0xff]
        %v5459 = vld [vmem:[#allocation10 + $0x38] sm:$0xff]
        %v5460 = vld [vmem:[#allocation10 + $0x40] sm:$0xff]
        %v5461 = vld [vmem:[#allocation10 + $0x48] sm:$0xff]
        %v5462 = vld [vmem:[#allocation10 + $0x50] sm:$0xff]
        %v5463 = vld [vmem:[#allocation10 + $0x58] sm:$0xff]
        %v5464 = vld [vmem:[#allocation10 + $0x60] sm:$0xff]
        %v5465 = vld [vmem:[#allocation10 + $0x68] sm:$0xff]
        %v5466 = vld [vmem:[#allocation10 + $0x70] sm:$0xff]
        %v5467 = vld [vmem:[#allocation10 + $0x78] sm:$0xff]
        %v5468 = vld [vmem:[#allocation10 + $0x80] sm:$0xff]
        %v5469 = vld [vmem:[#allocation10 + $0x88] sm:$0xff]
        %v5470 = vld [vmem:[#allocation10 + $0x90] sm:$0xff]
        %v5471 = vld [vmem:[#allocation10 + $0x98] sm:$0xff]
        %v5472 = vld [vmem:[#allocation10 + $0xa0] sm:$0xff]
        %v5473 = vld [vmem:[#allocation10 + $0xa8] sm:$0xff]
        %v5474 = vld [vmem:[#allocation10 + $0xb0] sm:$0xff]
        %v5475 = vld [vmem:[#allocation10 + $0xb8] sm:$0xff]
        %v5476 = vld [vmem:[#allocation10 + $0xc0] sm:$0xff]
        %v5477 = vld [vmem:[#allocation10 + $0xc8] sm:$0xff]
        %v5478 = vld [vmem:[#allocation10 + $0xd0] sm:$0xff]
        %v5479 = vld [vmem:[#allocation10 + $0xd8] sm:$0xff]
        %v5480 = vld [vmem:[#allocation10 + $0xe0] sm:$0xff]
        %v5481 = vld [vmem:[#allocation10 + $0xe8] sm:$0xff]
        %v5482 = vld [vmem:[#allocation10 + $0xf0] sm:$0xff]
        %v5483 = vld [vmem:[#allocation10 + $0xf8] sm:$0xff]
        %v5484 = vld [vmem:[#allocation10 + $0x100] sm:$0xff]
        %v5485 = vld [vmem:[#allocation10 + $0x108] sm:$0xff]
        %v5486 = vld [vmem:[#allocation10 + $0x110] sm:$0xff]
        %v5487 = vld [vmem:[#allocation10 + $0x118] sm:$0xff]
        %v5488 = vld [vmem:[#allocation10 + $0x120] sm:$0xff]
        %v5489 = vld [vmem:[#allocation10 + $0x128] sm:$0xff]
        %v5490 = vld [vmem:[#allocation10 + $0x130] sm:$0xff]
        %v5491 = vld [vmem:[#allocation10 + $0x138] sm:$0xff]
        %v5492 = vld [vmem:[#allocation10 + $0x140] sm:$0xff]
        %v5493 = vld [vmem:[#allocation10 + $0x148] sm:$0xff]
        %v5494 = vld [vmem:[#allocation10 + $0x150] sm:$0xff]
        %v5495 = vld [vmem:[#allocation10 + $0x158] sm:$0xff]
        %v5496 = vld [vmem:[#allocation10 + $0x160] sm:$0xff]
        %v5497 = vld [vmem:[#allocation10 + $0x168] sm:$0xff]
        %v5498 = vld [vmem:[#allocation10 + $0x170] sm:$0xff]
        %v5499 = vld [vmem:[#allocation10 + $0x178] sm:$0xff]
        %v5500 = vld [vmem:[#allocation10 + $0x180] sm:$0xff]
        %v5501 = vld [vmem:[#allocation10 + $0x188] sm:$0xff]
        %v5502 = vld [vmem:[#allocation10 + $0x190] sm:$0xff]
        %v5503 = vld [vmem:[#allocation10 + $0x198] sm:$0xff]
        %v5504 = vld [vmem:[#allocation10 + $0x1a0] sm:$0xff]
        %v5505 = vld [vmem:[#allocation10 + $0x1a8] sm:$0xff]
        %v5506 = vld [vmem:[#allocation10 + $0x1b0] sm:$0xff]
        %v5507 = vld [vmem:[#allocation10 + $0x1b8] sm:$0xff]
        %v5508 = vld [vmem:[#allocation10 + $0x1c0] sm:$0xff]
        %v5509 = vld [vmem:[#allocation10 + $0x1c8] sm:$0xff]
        %v5510 = vld [vmem:[#allocation10 + $0x1d0] sm:$0xff]
        %v5511 = vld [vmem:[#allocation10 + $0x1d8] sm:$0xff]
        %v5512 = vld [vmem:[#allocation10 + $0x1e0] sm:$0xff]
        %v5513 = vld [vmem:[#allocation10 + $0x1e8] sm:$0xff]
        %v5514 = vld [vmem:[#allocation10 + $0x1f0] sm:$0xff]
        %v5515 = vld [vmem:[#allocation10 + $0x1f8] sm:$0xff]
        %v5580 = vunpack.c.l.b16 %v5452
        %v5581 = vunpack.c.h.b16 %v5452
        %v5582 = vunpack.c.l.b16 %v5453
        %v5583 = vunpack.c.h.b16 %v5453
        %v5584 = vunpack.c.l.b16 %v5454
        %v5585 = vunpack.c.h.b16 %v5454
        %v5586 = vunpack.c.l.b16 %v5455
        %v5587 = vunpack.c.h.b16 %v5455
        %v5588 = vunpack.c.l.b16 %v5456
        %v5589 = vunpack.c.h.b16 %v5456
        %v5590 = vunpack.c.l.b16 %v5457
        %v5591 = vunpack.c.h.b16 %v5457
        %v5592 = vunpack.c.l.b16 %v5458
        %v5593 = vunpack.c.h.b16 %v5458
        %v5594 = vunpack.c.l.b16 %v5459
        %v5595 = vunpack.c.h.b16 %v5459
        %v5596 = vunpack.c.l.b16 %v5460
        %v5597 = vunpack.c.h.b16 %v5460
        %v5598 = vunpack.c.l.b16 %v5461
        %v5599 = vunpack.c.h.b16 %v5461
        %v5600 = vunpack.c.l.b16 %v5462
        %v5601 = vunpack.c.h.b16 %v5462
        %v5602 = vunpack.c.l.b16 %v5463
        %v5603 = vunpack.c.h.b16 %v5463
        %v5604 = vunpack.c.l.b16 %v5464
        %v5605 = vunpack.c.h.b16 %v5464
        %v5606 = vunpack.c.l.b16 %v5465
        %v5607 = vunpack.c.h.b16 %v5465
        %v5608 = vunpack.c.l.b16 %v5466
        %v5609 = vunpack.c.h.b16 %v5466
        %v5610 = vunpack.c.l.b16 %v5467
        %v5611 = vunpack.c.h.b16 %v5467
        %v5612 = vunpack.c.l.b16 %v5468
        %v5613 = vunpack.c.h.b16 %v5468
        %v5614 = vunpack.c.l.b16 %v5469
        %v5615 = vunpack.c.h.b16 %v5469
        %v5616 = vunpack.c.l.b16 %v5470
        %v5617 = vunpack.c.h.b16 %v5470
        %v5618 = vunpack.c.l.b16 %v5471
        %v5619 = vunpack.c.h.b16 %v5471
        %v5620 = vunpack.c.l.b16 %v5472
        %v5621 = vunpack.c.h.b16 %v5472
        %v5622 = vunpack.c.l.b16 %v5473
        %v5623 = vunpack.c.h.b16 %v5473
        %v5624 = vunpack.c.l.b16 %v5474
        %v5625 = vunpack.c.h.b16 %v5474
        %v5626 = vunpack.c.l.b16 %v5475
        %v5627 = vunpack.c.h.b16 %v5475
        %v5628 = vunpack.c.l.b16 %v5476
        %v5629 = vunpack.c.h.b16 %v5476
        %v5630 = vunpack.c.l.b16 %v5477
        %v5631 = vunpack.c.h.b16 %v5477
        %v5632 = vunpack.c.l.b16 %v5478
        %v5633 = vunpack.c.h.b16 %v5478
        %v5634 = vunpack.c.l.b16 %v5479
        %v5635 = vunpack.c.h.b16 %v5479
        %v5636 = vunpack.c.l.b16 %v5480
        %v5637 = vunpack.c.h.b16 %v5480
        %v5638 = vunpack.c.l.b16 %v5481
        %v5639 = vunpack.c.h.b16 %v5481
        %v5640 = vunpack.c.l.b16 %v5482
        %v5641 = vunpack.c.h.b16 %v5482
        %v5642 = vunpack.c.l.b16 %v5483
        %v5643 = vunpack.c.h.b16 %v5483
        %v5644 = vunpack.c.l.b16 %v5484
        %v5645 = vunpack.c.h.b16 %v5484
        %v5646 = vunpack.c.l.b16 %v5485
        %v5647 = vunpack.c.h.b16 %v5485
        %v5648 = vunpack.c.l.b16 %v5486
        %v5649 = vunpack.c.h.b16 %v5486
        %v5650 = vunpack.c.l.b16 %v5487
        %v5651 = vunpack.c.h.b16 %v5487
        %v5652 = vunpack.c.l.b16 %v5488
        %v5653 = vunpack.c.h.b16 %v5488
        %v5654 = vunpack.c.l.b16 %v5489
        %v5655 = vunpack.c.h.b16 %v5489
        %v5656 = vunpack.c.l.b16 %v5490
        %v5657 = vunpack.c.h.b16 %v5490
        %v5658 = vunpack.c.l.b16 %v5491
        %v5659 = vunpack.c.h.b16 %v5491
        %v5660 = vunpack.c.l.b16 %v5492
        %v5661 = vunpack.c.h.b16 %v5492
        %v5662 = vunpack.c.l.b16 %v5493
        %v5663 = vunpack.c.h.b16 %v5493
        %v5664 = vunpack.c.l.b16 %v5494
        %v5665 = vunpack.c.h.b16 %v5494
        %v5666 = vunpack.c.l.b16 %v5495
        %v5667 = vunpack.c.h.b16 %v5495
        %v5668 = vunpack.c.l.b16 %v5496
        %v5669 = vunpack.c.h.b16 %v5496
        %v5670 = vunpack.c.l.b16 %v5497
        %v5671 = vunpack.c.h.b16 %v5497
        %v5672 = vunpack.c.l.b16 %v5498
        %v5673 = vunpack.c.h.b16 %v5498
        %v5674 = vunpack.c.l.b16 %v5499
        %v5675 = vunpack.c.h.b16 %v5499
        %v5676 = vunpack.c.l.b16 %v5500
        %v5677 = vunpack.c.h.b16 %v5500
        %v5678 = vunpack.c.l.b16 %v5501
        %v5679 = vunpack.c.h.b16 %v5501
        %v5680 = vunpack.c.l.b16 %v5502
        %v5681 = vunpack.c.h.b16 %v5502
        %v5682 = vunpack.c.l.b16 %v5503
        %v5683 = vunpack.c.h.b16 %v5503
        %v5684 = vunpack.c.l.b16 %v5504
        %v5685 = vunpack.c.h.b16 %v5504
        %v5686 = vunpack.c.l.b16 %v5505
        %v5687 = vunpack.c.h.b16 %v5505
        %v5688 = vunpack.c.l.b16 %v5506
        %v5689 = vunpack.c.h.b16 %v5506
        %v5690 = vunpack.c.l.b16 %v5507
        %v5691 = vunpack.c.h.b16 %v5507
        %v5692 = vunpack.c.l.b16 %v5508
        %v5693 = vunpack.c.h.b16 %v5508
        %v5694 = vunpack.c.l.b16 %v5509
        %v5695 = vunpack.c.h.b16 %v5509
        %v5696 = vunpack.c.l.b16 %v5510
        %v5697 = vunpack.c.h.b16 %v5510
        %v5698 = vunpack.c.l.b16 %v5511
        %v5699 = vunpack.c.h.b16 %v5511
        %v5700 = vunpack.c.l.b16 %v5512
        %v5701 = vunpack.c.h.b16 %v5512
        %v5702 = vunpack.c.l.b16 %v5513
        %v5703 = vunpack.c.h.b16 %v5513
        %v5704 = vunpack.c.l.b16 %v5514
        %v5705 = vunpack.c.h.b16 %v5514
        %v5706 = vunpack.c.l.b16 %v5515
        %v5707 = vunpack.c.h.b16 %v5515
        %v5708 = vpack.c.b16 %v5584, %v5580
        %v5709 = vpack.c.b16 %v5585, %v5581
        %v5710 = vpack.c.b16 %v5586, %v5582
        %v5711 = vpack.c.b16 %v5587, %v5583
        %v5712 = vpack.c.b16 %v5592, %v5588
        %v5713 = vpack.c.b16 %v5593, %v5589
        %v5714 = vpack.c.b16 %v5594, %v5590
        %v5715 = vpack.c.b16 %v5595, %v5591
        %v5716 = vpack.c.b16 %v5600, %v5596
        %v5717 = vpack.c.b16 %v5601, %v5597
        %v5718 = vpack.c.b16 %v5602, %v5598
        %v5719 = vpack.c.b16 %v5603, %v5599
        %v5720 = vpack.c.b16 %v5608, %v5604
        %v5721 = vpack.c.b16 %v5609, %v5605
        %v5722 = vpack.c.b16 %v5610, %v5606
        %v5723 = vpack.c.b16 %v5611, %v5607
        %v5724 = vpack.c.b16 %v5616, %v5612
        %v5725 = vpack.c.b16 %v5617, %v5613
        %v5726 = vpack.c.b16 %v5618, %v5614
        %v5727 = vpack.c.b16 %v5619, %v5615
        %v5728 = vpack.c.b16 %v5624, %v5620
        %v5729 = vpack.c.b16 %v5625, %v5621
        %v5730 = vpack.c.b16 %v5626, %v5622
        %v5731 = vpack.c.b16 %v5627, %v5623
        %v5732 = vpack.c.b16 %v5632, %v5628
        %v5733 = vpack.c.b16 %v5633, %v5629
        %v5734 = vpack.c.b16 %v5634, %v5630
        %v5735 = vpack.c.b16 %v5635, %v5631
        %v5736 = vpack.c.b16 %v5640, %v5636
        %v5737 = vpack.c.b16 %v5641, %v5637
        %v5738 = vpack.c.b16 %v5642, %v5638
        %v5739 = vpack.c.b16 %v5643, %v5639
        %v5740 = vpack.c.b16 %v5648, %v5644
        %v5741 = vpack.c.b16 %v5649, %v5645
        %v5742 = vpack.c.b16 %v5650, %v5646
        %v5743 = vpack.c.b16 %v5651, %v5647
        %v5744 = vpack.c.b16 %v5656, %v5652
        %v5745 = vpack.c.b16 %v5657, %v5653
        %v5746 = vpack.c.b16 %v5658, %v5654
        %v5747 = vpack.c.b16 %v5659, %v5655
        %v5748 = vpack.c.b16 %v5664, %v5660
        %v5749 = vpack.c.b16 %v5665, %v5661
        %v5750 = vpack.c.b16 %v5666, %v5662
        %v5751 = vpack.c.b16 %v5667, %v5663
        %v5752 = vpack.c.b16 %v5672, %v5668
        %v5753 = vpack.c.b16 %v5673, %v5669
        %v5754 = vpack.c.b16 %v5674, %v5670
        %v5755 = vpack.c.b16 %v5675, %v5671
        %v5756 = vpack.c.b16 %v5680, %v5676
        %v5757 = vpack.c.b16 %v5681, %v5677
        %v5758 = vpack.c.b16 %v5682, %v5678
        %v5759 = vpack.c.b16 %v5683, %v5679
        %v5760 = vpack.c.b16 %v5688, %v5684
        %v5761 = vpack.c.b16 %v5689, %v5685
        %v5762 = vpack.c.b16 %v5690, %v5686
        %v5763 = vpack.c.b16 %v5691, %v5687
        %v5764 = vpack.c.b16 %v5696, %v5692
        %v5765 = vpack.c.b16 %v5697, %v5693
        %v5766 = vpack.c.b16 %v5698, %v5694
        %v5767 = vpack.c.b16 %v5699, %v5695
        %v5768 = vpack.c.b16 %v5704, %v5700
        %v5769 = vpack.c.b16 %v5705, %v5701
        %v5770 = vpack.c.b16 %v5706, %v5702
        %v5771 = vpack.c.b16 %v5707, %v5703
        %5836 = vmatprep.subr.bf16.mxu0 %v5709
        %5837 = vmatpush1.bf16.msra.mxu0 %v5708
        %5838 = vmatprep.subr.bf16.mxu0 %v5713
        %5839 = vmatpush1.bf16.msra.mxu0 %v5712
        %5840 = vmatprep.subr.bf16.mxu0 %v5717
        %5841 = vmatpush1.bf16.msra.mxu0 %v5716
        %5842 = vmatprep.subr.bf16.mxu0 %v5721
        %5843 = vmatpush1.bf16.msra.mxu0 %v5720
        %5844 = vmatprep.subr.bf16.mxu0 %v5725
        %5845 = vmatpush1.bf16.msra.mxu0 %v5724
        %5846 = vmatprep.subr.bf16.mxu0 %v5729
        %5847 = vmatpush1.bf16.msra.mxu0 %v5728
        %5848 = vmatprep.subr.bf16.mxu0 %v5733
        %5849 = vmatpush1.bf16.msra.mxu0 %v5732
        %5850 = vmatprep.subr.bf16.mxu0 %v5737
        %5851 = vmatpush1.bf16.msra.mxu0 %v5736
        %5852 = vmatprep.subr.bf16.mxu0 %v5741
        %5853 = vmatpush1.bf16.msra.mxu0 %v5740
        %5854 = vmatprep.subr.bf16.mxu0 %v5745
        %5855 = vmatpush1.bf16.msra.mxu0 %v5744
        %5856 = vmatprep.subr.bf16.mxu0 %v5749
        %5857 = vmatpush1.bf16.msra.mxu0 %v5748
        %5858 = vmatprep.subr.bf16.mxu0 %v5753
        %5859 = vmatpush1.bf16.msra.mxu0 %v5752
        %5860 = vmatprep.subr.bf16.mxu0 %v5757
        %5861 = vmatpush1.bf16.msra.mxu0 %v5756
        %5862 = vmatprep.subr.bf16.mxu0 %v5761
        %5863 = vmatpush1.bf16.msra.mxu0 %v5760
        %5864 = vmatprep.subr.bf16.mxu0 %v5765
        %5865 = vmatpush1.bf16.msra.mxu0 %v5764
        %5866 = vmatprep.subr.bf16.mxu0 %v5769
        %5867 = vmatpush1.bf16.msra.mxu0 %v5768
        %5868 = vmatprep.mubr.bf16.mxu0 %v5449
        %5869 = vmatmul.mubr.bf16.gmra.mrb[0].mxu0 %v5448
        %v5870 = vpop.f32.mrb[0].mxu0
        %v5871 = vadd.f32 0.0, %v5870
        %v5872 = vpop.f32.mrb[0].mxu0
        %v5873 = vadd.f32 0.0, %v5872
        %v5874 = vpop.f32.mrb[0].mxu0
        %v5875 = vadd.f32 0.0, %v5874
        %v5876 = vpop.f32.mrb[0].mxu0
        %v5877 = vadd.f32 0.0, %v5876
        %5878 = vdwg.mxu0
        %5879 = vmatprep.subr.bf16.mxu0 %v5711
        %5880 = vmatpush1.bf16.msra.mxu0 %v5710
        %5881 = vmatprep.subr.bf16.mxu0 %v5715
        %5882 = vmatpush1.bf16.msra.mxu0 %v5714
        %5883 = vmatprep.subr.bf16.mxu0 %v5719
        %5884 = vmatpush1.bf16.msra.mxu0 %v5718
        %5885 = vmatprep.subr.bf16.mxu0 %v5723
        %5886 = vmatpush1.bf16.msra.mxu0 %v5722
        %5887 = vmatprep.subr.bf16.mxu0 %v5727
        %5888 = vmatpush1.bf16.msra.mxu0 %v5726
        %5889 = vmatprep.subr.bf16.mxu0 %v5731
        %5890 = vmatpush1.bf16.msra.mxu0 %v5730
        %5891 = vmatprep.subr.bf16.mxu0 %v5735
        %5892 = vmatpush1.bf16.msra.mxu0 %v5734
        %5893 = vmatprep.subr.bf16.mxu0 %v5739
        %5894 = vmatpush1.bf16.msra.mxu0 %v5738
        %5895 = vmatprep.subr.bf16.mxu0 %v5743
        %5896 = vmatpush1.bf16.msra.mxu0 %v5742
        %5897 = vmatprep.subr.bf16.mxu0 %v5747
        %5898 = vmatpush1.bf16.msra.mxu0 %v5746
        %5899 = vmatprep.subr.bf16.mxu0 %v5751
        %5900 = vmatpush1.bf16.msra.mxu0 %v5750
        %5901 = vmatprep.subr.bf16.mxu0 %v5755
        %5902 = vmatpush1.bf16.msra.mxu0 %v5754
        %5903 = vmatprep.subr.bf16.mxu0 %v5759
        %5904 = vmatpush1.bf16.msra.mxu0 %v5758
        %5905 = vmatprep.subr.bf16.mxu0 %v5763
        %5906 = vmatpush1.bf16.msra.mxu0 %v5762
        %5907 = vmatprep.subr.bf16.mxu0 %v5767
        %5908 = vmatpush1.bf16.msra.mxu0 %v5766
        %5909 = vmatprep.subr.bf16.mxu0 %v5771
        %5910 = vmatpush1.bf16.msra.mxu0 %v5770
        %5911 = vmatprep.mubr.bf16.mxu0 %v5449
        %5912 = vmatmul.mubr.bf16.gmra.mrb[0].mxu0 %v5448
        %v5913 = vpop.f32.mrb[0].mxu0
        %v5914 = vadd.f32 0.0, %v5913
        %v5915 = vpop.f32.mrb[0].mxu0
        %v5916 = vadd.f32 0.0, %v5915
        %v5917 = vpop.f32.mrb[0].mxu0
        %v5918 = vadd.f32 0.0, %v5917
        %v5919 = vpop.f32.mrb[0].mxu0
        %v5920 = vadd.f32 0.0, %v5919
        %5921 = vdwg.mxu0
        %v5922 = vld [vmem:[#allocation12] sm:$0xff]
        %v5923 = vld [vmem:[#allocation12 + $0x8] sm:$0xff]
        %v5924 = vld [vmem:[#allocation12 + $0x10] sm:$0xff]
        %v5925 = vld [vmem:[#allocation12 + $0x18] sm:$0xff]
        %v5926 = vld [vmem:[#allocation12 + $0x20] sm:$0xff]
        %v5927 = vld [vmem:[#allocation12 + $0x28] sm:$0xff]
        %v5928 = vld [vmem:[#allocation12 + $0x30] sm:$0xff]
        %v5929 = vld [vmem:[#allocation12 + $0x38] sm:$0xff]
        %v5930 = vld [vmem:[#allocation12 + $0x40] sm:$0xff]
        %v5931 = vld [vmem:[#allocation12 + $0x48] sm:$0xff]
        %v5932 = vld [vmem:[#allocation12 + $0x50] sm:$0xff]
        %v5933 = vld [vmem:[#allocation12 + $0x58] sm:$0xff]
        %v5934 = vld [vmem:[#allocation12 + $0x60] sm:$0xff]
        %v5935 = vld [vmem:[#allocation12 + $0x68] sm:$0xff]
        %v5936 = vld [vmem:[#allocation12 + $0x70] sm:$0xff]
        %v5937 = vld [vmem:[#allocation12 + $0x78] sm:$0xff]
        %v5938 = vld [vmem:[#allocation12 + $0x80] sm:$0xff]
        %v5939 = vld [vmem:[#allocation12 + $0x88] sm:$0xff]
        %v5940 = vld [vmem:[#allocation12 + $0x90] sm:$0xff]
        %v5941 = vld [vmem:[#allocation12 + $0x98] sm:$0xff]
        %v5942 = vld [vmem:[#allocation12 + $0xa0] sm:$0xff]
        %v5943 = vld [vmem:[#allocation12 + $0xa8] sm:$0xff]
        %v5944 = vld [vmem:[#allocation12 + $0xb0] sm:$0xff]
        %v5945 = vld [vmem:[#allocation12 + $0xb8] sm:$0xff]
        %v5946 = vld [vmem:[#allocation12 + $0xc0] sm:$0xff]
        %v5947 = vld [vmem:[#allocation12 + $0xc8] sm:$0xff]
        %v5948 = vld [vmem:[#allocation12 + $0xd0] sm:$0xff]
        %v5949 = vld [vmem:[#allocation12 + $0xd8] sm:$0xff]
        %v5950 = vld [vmem:[#allocation12 + $0xe0] sm:$0xff]
        %v5951 = vld [vmem:[#allocation12 + $0xe8] sm:$0xff]
        %v5952 = vld [vmem:[#allocation12 + $0xf0] sm:$0xff]
        %v5953 = vld [vmem:[#allocation12 + $0xf8] sm:$0xff]
        %v5954 = vld [vmem:[#allocation12 + $0x100] sm:$0xff]
        %v5955 = vld [vmem:[#allocation12 + $0x108] sm:$0xff]
        %v5956 = vld [vmem:[#allocation12 + $0x110] sm:$0xff]
        %v5957 = vld [vmem:[#allocation12 + $0x118] sm:$0xff]
        %v5958 = vld [vmem:[#allocation12 + $0x120] sm:$0xff]
        %v5959 = vld [vmem:[#allocation12 + $0x128] sm:$0xff]
        %v5960 = vld [vmem:[#allocation12 + $0x130] sm:$0xff]
        %v5961 = vld [vmem:[#allocation12 + $0x138] sm:$0xff]
        %v5962 = vld [vmem:[#allocation12 + $0x140] sm:$0xff]
        %v5963 = vld [vmem:[#allocation12 + $0x148] sm:$0xff]
        %v5964 = vld [vmem:[#allocation12 + $0x150] sm:$0xff]
        %v5965 = vld [vmem:[#allocation12 + $0x158] sm:$0xff]
        %v5966 = vld [vmem:[#allocation12 + $0x160] sm:$0xff]
        %v5967 = vld [vmem:[#allocation12 + $0x168] sm:$0xff]
        %v5968 = vld [vmem:[#allocation12 + $0x170] sm:$0xff]
        %v5969 = vld [vmem:[#allocation12 + $0x178] sm:$0xff]
        %v5970 = vld [vmem:[#allocation12 + $0x180] sm:$0xff]
        %v5971 = vld [vmem:[#allocation12 + $0x188] sm:$0xff]
        %v5972 = vld [vmem:[#allocation12 + $0x190] sm:$0xff]
        %v5973 = vld [vmem:[#allocation12 + $0x198] sm:$0xff]
        %v5974 = vld [vmem:[#allocation12 + $0x1a0] sm:$0xff]
        %v5975 = vld [vmem:[#allocation12 + $0x1a8] sm:$0xff]
        %v5976 = vld [vmem:[#allocation12 + $0x1b0] sm:$0xff]
        %v5977 = vld [vmem:[#allocation12 + $0x1b8] sm:$0xff]
        %v5978 = vld [vmem:[#allocation12 + $0x1c0] sm:$0xff]
        %v5979 = vld [vmem:[#allocation12 + $0x1c8] sm:$0xff]
        %v5980 = vld [vmem:[#allocation12 + $0x1d0] sm:$0xff]
        %v5981 = vld [vmem:[#allocation12 + $0x1d8] sm:$0xff]
        %v5982 = vld [vmem:[#allocation12 + $0x1e0] sm:$0xff]
        %v5983 = vld [vmem:[#allocation12 + $0x1e8] sm:$0xff]
        %v5984 = vld [vmem:[#allocation12 + $0x1f0] sm:$0xff]
        %v5985 = vld [vmem:[#allocation12 + $0x1f8] sm:$0xff]
        %v6050 = vunpack.c.l.b16 %v5922
        %v6051 = vunpack.c.h.b16 %v5922
        %v6052 = vunpack.c.l.b16 %v5923
        %v6053 = vunpack.c.h.b16 %v5923
        %v6054 = vunpack.c.l.b16 %v5924
        %v6055 = vunpack.c.h.b16 %v5924
        %v6056 = vunpack.c.l.b16 %v5925
        %v6057 = vunpack.c.h.b16 %v5925
        %v6058 = vunpack.c.l.b16 %v5926
        %v6059 = vunpack.c.h.b16 %v5926
        %v6060 = vunpack.c.l.b16 %v5927
        %v6061 = vunpack.c.h.b16 %v5927
        %v6062 = vunpack.c.l.b16 %v5928
        %v6063 = vunpack.c.h.b16 %v5928
        %v6064 = vunpack.c.l.b16 %v5929
        %v6065 = vunpack.c.h.b16 %v5929
        %v6066 = vunpack.c.l.b16 %v5930
        %v6067 = vunpack.c.h.b16 %v5930
        %v6068 = vunpack.c.l.b16 %v5931
        %v6069 = vunpack.c.h.b16 %v5931
        %v6070 = vunpack.c.l.b16 %v5932
        %v6071 = vunpack.c.h.b16 %v5932
        %v6072 = vunpack.c.l.b16 %v5933
        %v6073 = vunpack.c.h.b16 %v5933
        %v6074 = vunpack.c.l.b16 %v5934
        %v6075 = vunpack.c.h.b16 %v5934
        %v6076 = vunpack.c.l.b16 %v5935
        %v6077 = vunpack.c.h.b16 %v5935
        %v6078 = vunpack.c.l.b16 %v5936
        %v6079 = vunpack.c.h.b16 %v5936
        %v6080 = vunpack.c.l.b16 %v5937
        %v6081 = vunpack.c.h.b16 %v5937
        %v6082 = vunpack.c.l.b16 %v5938
        %v6083 = vunpack.c.h.b16 %v5938
        %v6084 = vunpack.c.l.b16 %v5939
        %v6085 = vunpack.c.h.b16 %v5939
        %v6086 = vunpack.c.l.b16 %v5940
        %v6087 = vunpack.c.h.b16 %v5940
        %v6088 = vunpack.c.l.b16 %v5941
        %v6089 = vunpack.c.h.b16 %v5941
        %v6090 = vunpack.c.l.b16 %v5942
        %v6091 = vunpack.c.h.b16 %v5942
        %v6092 = vunpack.c.l.b16 %v5943
        %v6093 = vunpack.c.h.b16 %v5943
        %v6094 = vunpack.c.l.b16 %v5944
        %v6095 = vunpack.c.h.b16 %v5944
        %v6096 = vunpack.c.l.b16 %v5945
        %v6097 = vunpack.c.h.b16 %v5945
        %v6098 = vunpack.c.l.b16 %v5946
        %v6099 = vunpack.c.h.b16 %v5946
        %v6100 = vunpack.c.l.b16 %v5947
        %v6101 = vunpack.c.h.b16 %v5947
        %v6102 = vunpack.c.l.b16 %v5948
        %v6103 = vunpack.c.h.b16 %v5948
        %v6104 = vunpack.c.l.b16 %v5949
        %v6105 = vunpack.c.h.b16 %v5949
        %v6106 = vunpack.c.l.b16 %v5950
        %v6107 = vunpack.c.h.b16 %v5950
        %v6108 = vunpack.c.l.b16 %v5951
        %v6109 = vunpack.c.h.b16 %v5951
        %v6110 = vunpack.c.l.b16 %v5952
        %v6111 = vunpack.c.h.b16 %v5952
        %v6112 = vunpack.c.l.b16 %v5953
        %v6113 = vunpack.c.h.b16 %v5953
        %v6114 = vunpack.c.l.b16 %v5954
        %v6115 = vunpack.c.h.b16 %v5954
        %v6116 = vunpack.c.l.b16 %v5955
        %v6117 = vunpack.c.h.b16 %v5955
        %v6118 = vunpack.c.l.b16 %v5956
        %v6119 = vunpack.c.h.b16 %v5956
        %v6120 = vunpack.c.l.b16 %v5957
        %v6121 = vunpack.c.h.b16 %v5957
        %v6122 = vunpack.c.l.b16 %v5958
        %v6123 = vunpack.c.h.b16 %v5958
        %v6124 = vunpack.c.l.b16 %v5959
        %v6125 = vunpack.c.h.b16 %v5959
        %v6126 = vunpack.c.l.b16 %v5960
        %v6127 = vunpack.c.h.b16 %v5960
        %v6128 = vunpack.c.l.b16 %v5961
        %v6129 = vunpack.c.h.b16 %v5961
        %v6130 = vunpack.c.l.b16 %v5962
        %v6131 = vunpack.c.h.b16 %v5962
        %v6132 = vunpack.c.l.b16 %v5963
        %v6133 = vunpack.c.h.b16 %v5963
        %v6134 = vunpack.c.l.b16 %v5964
        %v6135 = vunpack.c.h.b16 %v5964
        %v6136 = vunpack.c.l.b16 %v5965
        %v6137 = vunpack.c.h.b16 %v5965
        %v6138 = vunpack.c.l.b16 %v5966
        %v6139 = vunpack.c.h.b16 %v5966
        %v6140 = vunpack.c.l.b16 %v5967
        %v6141 = vunpack.c.h.b16 %v5967
        %v6142 = vunpack.c.l.b16 %v5968
        %v6143 = vunpack.c.h.b16 %v5968
        %v6144 = vunpack.c.l.b16 %v5969
        %v6145 = vunpack.c.h.b16 %v5969
        %v6146 = vunpack.c.l.b16 %v5970
        %v6147 = vunpack.c.h.b16 %v5970
        %v6148 = vunpack.c.l.b16 %v5971
        %v6149 = vunpack.c.h.b16 %v5971
        %v6150 = vunpack.c.l.b16 %v5972
        %v6151 = vunpack.c.h.b16 %v5972
        %v6152 = vunpack.c.l.b16 %v5973
        %v6153 = vunpack.c.h.b16 %v5973
        %v6154 = vunpack.c.l.b16 %v5974
        %v6155 = vunpack.c.h.b16 %v5974
        %v6156 = vunpack.c.l.b16 %v5975
        %v6157 = vunpack.c.h.b16 %v5975
        %v6158 = vunpack.c.l.b16 %v5976
        %v6159 = vunpack.c.h.b16 %v5976
        %v6160 = vunpack.c.l.b16 %v5977
        %v6161 = vunpack.c.h.b16 %v5977
        %v6162 = vunpack.c.l.b16 %v5978
        %v6163 = vunpack.c.h.b16 %v5978
        %v6164 = vunpack.c.l.b16 %v5979
        %v6165 = vunpack.c.h.b16 %v5979
        %v6166 = vunpack.c.l.b16 %v5980
        %v6167 = vunpack.c.h.b16 %v5980
        %v6168 = vunpack.c.l.b16 %v5981
        %v6169 = vunpack.c.h.b16 %v5981
        %v6170 = vunpack.c.l.b16 %v5982
        %v6171 = vunpack.c.h.b16 %v5982
        %v6172 = vunpack.c.l.b16 %v5983
        %v6173 = vunpack.c.h.b16 %v5983
        %v6174 = vunpack.c.l.b16 %v5984
        %v6175 = vunpack.c.h.b16 %v5984
        %v6176 = vunpack.c.l.b16 %v5985
        %v6177 = vunpack.c.h.b16 %v5985
        %v6178 = vpack.c.b16 %v6054, %v6050
        %v6179 = vpack.c.b16 %v6055, %v6051
        %v6180 = vpack.c.b16 %v6056, %v6052
        %v6181 = vpack.c.b16 %v6057, %v6053
        %v6182 = vpack.c.b16 %v6062, %v6058
        %v6183 = vpack.c.b16 %v6063, %v6059
        %v6184 = vpack.c.b16 %v6064, %v6060
        %v6185 = vpack.c.b16 %v6065, %v6061
        %v6186 = vpack.c.b16 %v6070, %v6066
        %v6187 = vpack.c.b16 %v6071, %v6067
        %v6188 = vpack.c.b16 %v6072, %v6068
        %v6189 = vpack.c.b16 %v6073, %v6069
        %v6190 = vpack.c.b16 %v6078, %v6074
        %v6191 = vpack.c.b16 %v6079, %v6075
        %v6192 = vpack.c.b16 %v6080, %v6076
        %v6193 = vpack.c.b16 %v6081, %v6077
        %v6194 = vpack.c.b16 %v6086, %v6082
        %v6195 = vpack.c.b16 %v6087, %v6083
        %v6196 = vpack.c.b16 %v6088, %v6084
        %v6197 = vpack.c.b16 %v6089, %v6085
        %v6198 = vpack.c.b16 %v6094, %v6090
        %v6199 = vpack.c.b16 %v6095, %v6091
        %v6200 = vpack.c.b16 %v6096, %v6092
        %v6201 = vpack.c.b16 %v6097, %v6093
        %v6202 = vpack.c.b16 %v6102, %v6098
        %v6203 = vpack.c.b16 %v6103, %v6099
        %v6204 = vpack.c.b16 %v6104, %v6100
        %v6205 = vpack.c.b16 %v6105, %v6101
        %v6206 = vpack.c.b16 %v6110, %v6106
        %v6207 = vpack.c.b16 %v6111, %v6107
        %v6208 = vpack.c.b16 %v6112, %v6108
        %v6209 = vpack.c.b16 %v6113, %v6109
        %v6210 = vpack.c.b16 %v6118, %v6114
        %v6211 = vpack.c.b16 %v6119, %v6115
        %v6212 = vpack.c.b16 %v6120, %v6116
        %v6213 = vpack.c.b16 %v6121, %v6117
        %v6214 = vpack.c.b16 %v6126, %v6122
        %v6215 = vpack.c.b16 %v6127, %v6123
        %v6216 = vpack.c.b16 %v6128, %v6124
        %v6217 = vpack.c.b16 %v6129, %v6125
        %v6218 = vpack.c.b16 %v6134, %v6130
        %v6219 = vpack.c.b16 %v6135, %v6131
        %v6220 = vpack.c.b16 %v6136, %v6132
        %v6221 = vpack.c.b16 %v6137, %v6133
        %v6222 = vpack.c.b16 %v6142, %v6138
        %v6223 = vpack.c.b16 %v6143, %v6139
        %v6224 = vpack.c.b16 %v6144, %v6140
        %v6225 = vpack.c.b16 %v6145, %v6141
        %v6226 = vpack.c.b16 %v6150, %v6146
        %v6227 = vpack.c.b16 %v6151, %v6147
        %v6228 = vpack.c.b16 %v6152, %v6148
        %v6229 = vpack.c.b16 %v6153, %v6149
        %v6230 = vpack.c.b16 %v6158, %v6154
        %v6231 = vpack.c.b16 %v6159, %v6155
        %v6232 = vpack.c.b16 %v6160, %v6156
        %v6233 = vpack.c.b16 %v6161, %v6157
        %v6234 = vpack.c.b16 %v6166, %v6162
        %v6235 = vpack.c.b16 %v6167, %v6163
        %v6236 = vpack.c.b16 %v6168, %v6164
        %v6237 = vpack.c.b16 %v6169, %v6165
        %v6238 = vpack.c.b16 %v6174, %v6170
        %v6239 = vpack.c.b16 %v6175, %v6171
        %v6240 = vpack.c.b16 %v6176, %v6172
        %v6241 = vpack.c.b16 %v6177, %v6173
        %6306 = vmatprep.subr.bf16.mxu0 %v6179
        %6307 = vmatpush1.bf16.msra.mxu0 %v6178
        %6308 = vmatprep.subr.bf16.mxu0 %v6183
        %6309 = vmatpush1.bf16.msra.mxu0 %v6182
        %6310 = vmatprep.subr.bf16.mxu0 %v6187
        %6311 = vmatpush1.bf16.msra.mxu0 %v6186
        %6312 = vmatprep.subr.bf16.mxu0 %v6191
        %6313 = vmatpush1.bf16.msra.mxu0 %v6190
        %6314 = vmatprep.subr.bf16.mxu0 %v6195
        %6315 = vmatpush1.bf16.msra.mxu0 %v6194
        %6316 = vmatprep.subr.bf16.mxu0 %v6199
        %6317 = vmatpush1.bf16.msra.mxu0 %v6198
        %6318 = vmatprep.subr.bf16.mxu0 %v6203
        %6319 = vmatpush1.bf16.msra.mxu0 %v6202
        %6320 = vmatprep.subr.bf16.mxu0 %v6207
        %6321 = vmatpush1.bf16.msra.mxu0 %v6206
        %6322 = vmatprep.subr.bf16.mxu0 %v6211
        %6323 = vmatpush1.bf16.msra.mxu0 %v6210
        %6324 = vmatprep.subr.bf16.mxu0 %v6215
        %6325 = vmatpush1.bf16.msra.mxu0 %v6214
        %6326 = vmatprep.subr.bf16.mxu0 %v6219
        %6327 = vmatpush1.bf16.msra.mxu0 %v6218
        %6328 = vmatprep.subr.bf16.mxu0 %v6223
        %6329 = vmatpush1.bf16.msra.mxu0 %v6222
        %6330 = vmatprep.subr.bf16.mxu0 %v6227
        %6331 = vmatpush1.bf16.msra.mxu0 %v6226
        %6332 = vmatprep.subr.bf16.mxu0 %v6231
        %6333 = vmatpush1.bf16.msra.mxu0 %v6230
        %6334 = vmatprep.subr.bf16.mxu0 %v6235
        %6335 = vmatpush1.bf16.msra.mxu0 %v6234
        %6336 = vmatprep.subr.bf16.mxu0 %v6239
        %6337 = vmatpush1.bf16.msra.mxu0 %v6238
        %6338 = vmatprep.mubr.bf16.mxu0 %v5451
        %6339 = vmatmul.mubr.bf16.gmra.mrb[0].mxu0 %v5450
        %v6340 = vpop.f32.mrb[0].mxu0
        %v6341 = vadd.f32 0.0, %v6340
        %v6342 = vpop.f32.mrb[0].mxu0
        %v6343 = vadd.f32 0.0, %v6342
        %v6344 = vpop.f32.mrb[0].mxu0
        %v6345 = vadd.f32 0.0, %v6344
        %v6346 = vpop.f32.mrb[0].mxu0
        %v6347 = vadd.f32 0.0, %v6346
        %6348 = vdwg.mxu0
        %6349 = vmatprep.subr.bf16.mxu0 %v6181
        %6350 = vmatpush1.bf16.msra.mxu0 %v6180
        %6351 = vmatprep.subr.bf16.mxu0 %v6185
        %6352 = vmatpush1.bf16.msra.mxu0 %v6184
        %6353 = vmatprep.subr.bf16.mxu0 %v6189
        %6354 = vmatpush1.bf16.msra.mxu0 %v6188
        %6355 = vmatprep.subr.bf16.mxu0 %v6193
        %6356 = vmatpush1.bf16.msra.mxu0 %v6192
        %6357 = vmatprep.subr.bf16.mxu0 %v6197
        %6358 = vmatpush1.bf16.msra.mxu0 %v6196
        %6359 = vmatprep.subr.bf16.mxu0 %v6201
        %6360 = vmatpush1.bf16.msra.mxu0 %v6200
        %6361 = vmatprep.subr.bf16.mxu0 %v6205
        %6362 = vmatpush1.bf16.msra.mxu0 %v6204
        %6363 = vmatprep.subr.bf16.mxu0 %v6209
        %6364 = vmatpush1.bf16.msra.mxu0 %v6208
        %6365 = vmatprep.subr.bf16.mxu0 %v6213
        %6366 = vmatpush1.bf16.msra.mxu0 %v6212
        %6367 = vmatprep.subr.bf16.mxu0 %v6217
        %6368 = vmatpush1.bf16.msra.mxu0 %v6216
        %6369 = vmatprep.subr.bf16.mxu0 %v6221
        %6370 = vmatpush1.bf16.msra.mxu0 %v6220
        %6371 = vmatprep.subr.bf16.mxu0 %v6225
        %6372 = vmatpush1.bf16.msra.mxu0 %v6224
        %6373 = vmatprep.subr.bf16.mxu0 %v6229
        %6374 = vmatpush1.bf16.msra.mxu0 %v6228
        %6375 = vmatprep.subr.bf16.mxu0 %v6233
        %6376 = vmatpush1.bf16.msra.mxu0 %v6232
        %6377 = vmatprep.subr.bf16.mxu0 %v6237
        %6378 = vmatpush1.bf16.msra.mxu0 %v6236
        %6379 = vmatprep.subr.bf16.mxu0 %v6241
        %6380 = vmatpush1.bf16.msra.mxu0 %v6240
        %6381 = vmatprep.mubr.bf16.mxu0 %v5451
        %6382 = vmatmul.mubr.bf16.gmra.mrb[0].mxu0 %v5450
        %v6383 = vpop.f32.mrb[0].mxu0
        %v6384 = vadd.f32 0.0, %v6383
        %v6385 = vpop.f32.mrb[0].mxu0
        %v6386 = vadd.f32 0.0, %v6385
        %v6387 = vpop.f32.mrb[0].mxu0
        %v6388 = vadd.f32 0.0, %v6387
        %v6389 = vpop.f32.mrb[0].mxu0
        %v6390 = vadd.f32 0.0, %v6389
        %6391 = vdwg.mxu0
        %v6392 = vpack.c.bf16 %v5875, %v5871
        %v6393 = vpack.c.bf16 %v5877, %v5873
        %6394 = vmatprep.subr.bf16.mxu0 %v6393
        %6395 = vmatpush1.bf16.msra.mxu0 %v6392
        %6396 = vmatprep.subr.bf16.mxu0 0
        %6397 = vmatpush1.bf16.msra.mxu0 0
        %6398 = vmatprep.subr.bf16.mxu0 0
        %6399 = vmatpush1.bf16.msra.mxu0 0
        %6400 = vmatprep.subr.bf16.mxu0 0
        %6401 = vmatpush1.bf16.msra.mxu0 0
        %6402 = vmatprep.subr.bf16.mxu0 0
        %6403 = vmatpush1.bf16.msra.mxu0 0
        %6404 = vmatprep.subr.bf16.mxu0 0
        %6405 = vmatpush1.bf16.msra.mxu0 0
        %6406 = vmatprep.subr.bf16.mxu0 0
        %6407 = vmatpush1.bf16.msra.mxu0 0
        %6408 = vmatprep.subr.bf16.mxu0 0
        %6409 = vmatpush1.bf16.msra.mxu0 0
        %6410 = vmatprep.subr.bf16.mxu0 0
        %6411 = vmatpush1.bf16.msra.mxu0 0
        %6412 = vmatprep.subr.bf16.mxu0 0
        %6413 = vmatpush1.bf16.msra.mxu0 0
        %6414 = vmatprep.subr.bf16.mxu0 0
        %6415 = vmatpush1.bf16.msra.mxu0 0
        %6416 = vmatprep.subr.bf16.mxu0 0
        %6417 = vmatpush1.bf16.msra.mxu0 0
        %6418 = vmatprep.subr.bf16.mxu0 0
        %6419 = vmatpush1.bf16.msra.mxu0 0
        %6420 = vmatprep.subr.bf16.mxu0 0
        %6421 = vmatpush1.bf16.msra.mxu0 0
        %6422 = vmatprep.subr.bf16.mxu0 0
        %6423 = vmatpush1.bf16.msra.mxu0 0
        %6424 = vmatprep.subr.bf16.mxu0 0
        %6425 = vmatpush1.bf16.msra.mxu0 0
        %6426 = vmatprep.mubr.bf16.mxu0 0
        %6427 = vmatmul.mubr.bf16.gmra.mrb[0].mxu0 %v5166
        %v6428 = vpop.f32.mrb[0].mxu0
        %v6429 = vadd.f32 0.0, %v6428
        %v6430 = vpop.f32.mrb[0].mxu0
        %v6431 = vadd.f32 0.0, %v6430
        %v6432 = vpop.f32.mrb[0].mxu0
        %v6433 = vadd.f32 0.0, %v6432
        %v6434 = vpop.f32.mrb[0].mxu0
        %v6435 = vadd.f32 0.0, %v6434
        %6436 = vdwg.mxu0
        %v6437 = vmul.f32 %v6429, %v808
        %v6438 = vmul.f32 %v6431, %v808
        %v6439 = vmul.f32 %v6433, %v810
        %v6440 = vmul.f32 %v6435, %v810
        %v6441 = vpack.c.bf16 %v6345, %v6341
        %v6442 = vpack.c.bf16 %v6347, %v6343
        %6443 = vmatprep.subr.bf16.mxu0 %v6442
        %6444 = vmatpush1.bf16.msra.mxu0 %v6441
        %6445 = vmatprep.subr.bf16.mxu0 0
        %6446 = vmatpush1.bf16.msra.mxu0 0
        %6447 = vmatprep.subr.bf16.mxu0 0
        %6448 = vmatpush1.bf16.msra.mxu0 0
        %6449 = vmatprep.subr.bf16.mxu0 0
        %6450 = vmatpush1.bf16.msra.mxu0 0
        %6451 = vmatprep.subr.bf16.mxu0 0
        %6452 = vmatpush1.bf16.msra.mxu0 0
        %6453 = vmatprep.subr.bf16.mxu0 0
        %6454 = vmatpush1.bf16.msra.mxu0 0
        %6455 = vmatprep.subr.bf16.mxu0 0
        %6456 = vmatpush1.bf16.msra.mxu0 0
        %6457 = vmatprep.subr.bf16.mxu0 0
        %6458 = vmatpush1.bf16.msra.mxu0 0
        %6459 = vmatprep.subr.bf16.mxu0 0
        %6460 = vmatpush1.bf16.msra.mxu0 0
        %6461 = vmatprep.subr.bf16.mxu0 0
        %6462 = vmatpush1.bf16.msra.mxu0 0
        %6463 = vmatprep.subr.bf16.mxu0 0
        %6464 = vmatpush1.bf16.msra.mxu0 0
        %6465 = vmatprep.subr.bf16.mxu0 0
        %6466 = vmatpush1.bf16.msra.mxu0 0
        %6467 = vmatprep.subr.bf16.mxu0 0
        %6468 = vmatpush1.bf16.msra.mxu0 0
        %6469 = vmatprep.subr.bf16.mxu0 0
        %6470 = vmatpush1.bf16.msra.mxu0 0
        %6471 = vmatprep.subr.bf16.mxu0 0
        %6472 = vmatpush1.bf16.msra.mxu0 0
        %6473 = vmatprep.subr.bf16.mxu0 0
        %6474 = vmatpush1.bf16.msra.mxu0 0
        %6475 = vmatprep.mubr.bf16.mxu0 0
        %6476 = vmatmul.mubr.bf16.gmra.mrb[0].mxu0 %v5218
        %v6477 = vpop.f32.mrb[0].mxu0
        %v6478 = vadd.f32 0.0, %v6477
        %v6479 = vpop.f32.mrb[0].mxu0
        %v6480 = vadd.f32 0.0, %v6479
        %v6481 = vpop.f32.mrb[0].mxu0
        %v6482 = vadd.f32 0.0, %v6481
        %v6483 = vpop.f32.mrb[0].mxu0
        %v6484 = vadd.f32 0.0, %v6483
        %6485 = vdwg.mxu0
        %v6486 = vmul.f32 %v6478, %v820
        %v6487 = vmul.f32 %v6480, %v820
        %v6488 = vmul.f32 %v6482, %v822
        %v6489 = vmul.f32 %v6484, %v822
        %v6491 = vlaneseq
        %v6492 = vshrl.u32 %v6491, 7
        %v6493 = vsub.s32 0, %v6492
        %v6494 = vrot.slane %v612, %v6493
        %v6495 = vlaneseq
        %v6496 = vshrl.u32 %v6495, 7
        %v6497 = vsub.s32 1, %v6496
        %v6498 = vrot.slane %v612, %v6497
        %v6501 = vadd.f32 %v6437, %v6494
        %v6502 = vadd.f32 %v6438, %v6498
        %v6503 = vadd.f32 %v6439, %v6494
        %v6504 = vadd.f32 %v6440, %v6498
        %v6505 = vadd.f32 %v6501, %v6384
        %v6506 = vadd.f32 %v6502, %v6386
        %v6507 = vadd.f32 %v6503, %v6388
        %v6508 = vadd.f32 %v6504, %v6390
        %v6510 = vlaneseq
        %v6511 = vshrl.u32 %v6510, 7
        %v6512 = vsub.s32 0, %v6511
        %v6513 = vrot.slane %v614, %v6512
        %v6514 = vlaneseq
        %v6515 = vshrl.u32 %v6514, 7
        %v6516 = vsub.s32 1, %v6515
        %v6517 = vrot.slane %v614, %v6516
        %v6520 = vadd.f32 %v6486, %v6513
        %v6521 = vadd.f32 %v6487, %v6517
        %v6522 = vadd.f32 %v6488, %v6513
        %v6523 = vadd.f32 %v6489, %v6517
        %v6524 = vadd.f32 %v6520, %v5914
        %v6525 = vadd.f32 %v6521, %v5916
        %v6526 = vadd.f32 %v6522, %v5918
        %v6527 = vadd.f32 %v6523, %v5920
        %v6528 = vmax.f32 %v6524, 0.0
        %v6529 = vmax.f32 %v6525, 0.0
        %v6530 = vmax.f32 %v6526, 0.0
        %v6531 = vmax.f32 %v6527, 0.0
        %v6532 = vadd.f32 %v6528, %v6530
        %v6533 = vrot.slane %v6532, 4
        %v6534 = vadd.f32 %v6532, %v6533
        %v6535 = vrot.slane %v6534, 2
        %v6536 = vadd.f32 %v6534, %v6535
        %v6537 = vrot.slane %v6536, 1
        %v6538 = vadd.f32 %v6536, %v6537
        %v6539 = vadd.f32 %v6529, %v6531
        %v6540 = vrot.slane %v6539, 4
        %v6541 = vadd.f32 %v6539, %v6540
        %v6542 = vrot.slane %v6541, 2
        %v6543 = vadd.f32 %v6541, %v6542
        %v6544 = vrot.slane %v6543, 1
        %v6545 = vadd.f32 %v6543, %v6544
        %v6546 = vmul.f32 %v6538, %v5323
        %v6547 = vmul.f32 %v6545, %v5323
        %v6548 = vsub.f32 %v6528, %v6546
        %v6549 = vsub.f32 %v6529, %v6547
        %v6550 = vsub.f32 %v6530, %v6546
        %v6551 = vsub.f32 %v6531, %v6547
        %v6552 = vmul.f32 %v6548, %v6548
        %v6553 = vmul.f32 %v6549, %v6549
        %v6554 = vmul.f32 %v6550, %v6550
        %v6555 = vmul.f32 %v6551, %v6551
        %v6556 = vadd.f32 %v6552, %v6554
        %v6557 = vrot.slane %v6556, 4
        %v6558 = vadd.f32 %v6556, %v6557
        %v6559 = vrot.slane %v6558, 2
        %v6560 = vadd.f32 %v6558, %v6559
        %v6561 = vrot.slane %v6560, 1
        %v6562 = vadd.f32 %v6560, %v6561
        %v6563 = vadd.f32 %v6553, %v6555
        %v6564 = vrot.slane %v6563, 4
        %v6565 = vadd.f32 %v6563, %v6564
        %v6566 = vrot.slane %v6565, 2
        %v6567 = vadd.f32 %v6565, %v6566
        %v6568 = vrot.slane %v6567, 1
        %v6569 = vadd.f32 %v6567, %v6568
        %v6570 = vmul.f32 %v6562, %v5323
        %v6571 = vmul.f32 %v6569, %v5323
        %v6572 = vadd.f32 %v6570, 1e-05
        %v6573 = vadd.f32 %v6571, 1e-05
        %v6574 = vrsqrt.pop %v6572
        %v6575 = vrsqrt.pop %v6573
        %v6576 = vmul.f32 %v6548, %v6574
        %v6577 = vmul.f32 %v6549, %v6575
        %v6578 = vmul.f32 %v6550, %v6574
        %v6579 = vmul.f32 %v6551, %v6575
        %v6581 = vlaneseq
        %v6582 = vshrl.u32 %v6581, 7
        %v6583 = vsub.s32 0, %v6582
        %v6584 = vrot.slane %v616, %v6583
        %v6585 = vlaneseq
        %v6586 = vshrl.u32 %v6585, 7
        %v6587 = vsub.s32 1, %v6586
        %v6588 = vrot.slane %v616, %v6587
        %v6591 = vmul.f32 %v6576, %v6584
        %v6592 = vmul.f32 %v6577, %v6588
        %v6593 = vmul.f32 %v6578, %v6584
        %v6594 = vmul.f32 %v6579, %v6588
        %v6596 = vlaneseq
        %v6597 = vshrl.u32 %v6596, 7
        %v6598 = vsub.s32 0, %v6597
        %v6599 = vrot.slane %v618, %v6598
        %v6600 = vlaneseq
        %v6601 = vshrl.u32 %v6600, 7
        %v6602 = vsub.s32 1, %v6601
        %v6603 = vrot.slane %v618, %v6602
        %v6606 = vadd.f32 %v6591, %v6599
        %v6607 = vadd.f32 %v6592, %v6603
        %v6608 = vadd.f32 %v6593, %v6599
        %v6609 = vadd.f32 %v6594, %v6603
        %v6610 = vmax.f32 %v6505, 0.0
        %v6611 = vmax.f32 %v6506, 0.0
        %v6612 = vmax.f32 %v6507, 0.0
        %v6613 = vmax.f32 %v6508, 0.0
        %v6614 = vadd.f32 %v6610, %v6612
        %v6615 = vrot.slane %v6614, 4
        %v6616 = vadd.f32 %v6614, %v6615
        %v6617 = vrot.slane %v6616, 2
        %v6618 = vadd.f32 %v6616, %v6617
        %v6619 = vrot.slane %v6618, 1
        %v6620 = vadd.f32 %v6618, %v6619
        %v6621 = vadd.f32 %v6611, %v6613
        %v6622 = vrot.slane %v6621, 4
        %v6623 = vadd.f32 %v6621, %v6622
        %v6624 = vrot.slane %v6623, 2
        %v6625 = vadd.f32 %v6623, %v6624
        %v6626 = vrot.slane %v6625, 1
        %v6627 = vadd.f32 %v6625, %v6626
        %v6628 = vmul.f32 %v6620, %v5323
        %v6629 = vmul.f32 %v6627, %v5323
        %v6630 = vsub.f32 %v6610, %v6628
        %v6631 = vsub.f32 %v6611, %v6629
        %v6632 = vsub.f32 %v6612, %v6628
        %v6633 = vsub.f32 %v6613, %v6629
        %v6634 = vmul.f32 %v6630, %v6630
        %v6635 = vmul.f32 %v6631, %v6631
        %v6636 = vmul.f32 %v6632, %v6632
        %v6637 = vmul.f32 %v6633, %v6633
        %v6638 = vadd.f32 %v6634, %v6636
        %v6639 = vrot.slane %v6638, 4
        %v6640 = vadd.f32 %v6638, %v6639
        %v6641 = vrot.slane %v6640, 2
        %v6642 = vadd.f32 %v6640, %v6641
        %v6643 = vrot.slane %v6642, 1
        %v6644 = vadd.f32 %v6642, %v6643
        %v6645 = vadd.f32 %v6635, %v6637
        %v6646 = vrot.slane %v6645, 4
        %v6647 = vadd.f32 %v6645, %v6646
        %v6648 = vrot.slane %v6647, 2
        %v6649 = vadd.f32 %v6647, %v6648
        %v6650 = vrot.slane %v6649, 1
        %v6651 = vadd.f32 %v6649, %v6650
        %v6652 = vmul.f32 %v6644, %v5323
        %v6653 = vmul.f32 %v6651, %v5323
        %v6654 = vadd.f32 %v6652, 1e-05
        %v6655 = vadd.f32 %v6653, 1e-05
        %v6656 = vrsqrt.pop %v6654
        %v6657 = vrsqrt.pop %v6655
        %v6658 = vmul.f32 %v6630, %v6656
        %v6659 = vmul.f32 %v6631, %v6657
        %v6660 = vmul.f32 %v6632, %v6656
        %v6661 = vmul.f32 %v6633, %v6657
        %v6662 = vmul.f32 %v6658, %v6584
        %v6663 = vmul.f32 %v6659, %v6588
        %v6664 = vmul.f32 %v6660, %v6584
        %v6665 = vmul.f32 %v6661, %v6588
        %v6666 = vadd.f32 %v6662, %v6599
        %v6667 = vadd.f32 %v6663, %v6603
        %v6668 = vadd.f32 %v6664, %v6599
        %v6669 = vadd.f32 %v6665, %v6603
        %v6670 = vpack.c.bf16 %v6608, %v6606
        %v6671 = vpack.c.bf16 %v6609, %v6607
        %v6672 = vld [vmem:[#allocation13] sm:$0xff]
        %v6673 = vld [vmem:[#allocation13 + $0x8] sm:$0xff]
        %v6674 = vld [vmem:[#allocation13 + $0x10] sm:$0xff]
        %v6675 = vld [vmem:[#allocation13 + $0x18] sm:$0xff]
        %v6676 = vld [vmem:[#allocation13 + $0x20] sm:$0xff]
        %v6677 = vld [vmem:[#allocation13 + $0x28] sm:$0xff]
        %v6678 = vld [vmem:[#allocation13 + $0x30] sm:$0xff]
        %v6679 = vld [vmem:[#allocation13 + $0x38] sm:$0xff]
        %v6680 = vld [vmem:[#allocation13 + $0x40] sm:$0xff]
        %v6681 = vld [vmem:[#allocation13 + $0x48] sm:$0xff]
        %v6682 = vld [vmem:[#allocation13 + $0x50] sm:$0xff]
        %v6683 = vld [vmem:[#allocation13 + $0x58] sm:$0xff]
        %v6684 = vld [vmem:[#allocation13 + $0x60] sm:$0xff]
        %v6685 = vld [vmem:[#allocation13 + $0x68] sm:$0xff]
        %v6686 = vld [vmem:[#allocation13 + $0x70] sm:$0xff]
        %v6687 = vld [vmem:[#allocation13 + $0x78] sm:$0xff]
        %v6688 = vld [vmem:[#allocation13 + $0x80] sm:$0xff]
        %v6689 = vld [vmem:[#allocation13 + $0x88] sm:$0xff]
        %v6690 = vld [vmem:[#allocation13 + $0x90] sm:$0xff]
        %v6691 = vld [vmem:[#allocation13 + $0x98] sm:$0xff]
        %v6692 = vld [vmem:[#allocation13 + $0xa0] sm:$0xff]
        %v6693 = vld [vmem:[#allocation13 + $0xa8] sm:$0xff]
        %v6694 = vld [vmem:[#allocation13 + $0xb0] sm:$0xff]
        %v6695 = vld [vmem:[#allocation13 + $0xb8] sm:$0xff]
        %v6696 = vld [vmem:[#allocation13 + $0xc0] sm:$0xff]
        %v6697 = vld [vmem:[#allocation13 + $0xc8] sm:$0xff]
        %v6698 = vld [vmem:[#allocation13 + $0xd0] sm:$0xff]
        %v6699 = vld [vmem:[#allocation13 + $0xd8] sm:$0xff]
        %v6700 = vld [vmem:[#allocation13 + $0xe0] sm:$0xff]
        %v6701 = vld [vmem:[#allocation13 + $0xe8] sm:$0xff]
        %v6702 = vld [vmem:[#allocation13 + $0xf0] sm:$0xff]
        %v6703 = vld [vmem:[#allocation13 + $0xf8] sm:$0xff]
        %v6736 = vunpack.c.l.b16 %v6672
        %v6737 = vunpack.c.h.b16 %v6672
        %v6738 = vunpack.c.l.b16 %v6673
        %v6739 = vunpack.c.h.b16 %v6673
        %v6740 = vunpack.c.l.b16 %v6674
        %v6741 = vunpack.c.h.b16 %v6674
        %v6742 = vunpack.c.l.b16 %v6675
        %v6743 = vunpack.c.h.b16 %v6675
        %v6744 = vunpack.c.l.b16 %v6676
        %v6745 = vunpack.c.h.b16 %v6676
        %v6746 = vunpack.c.l.b16 %v6677
        %v6747 = vunpack.c.h.b16 %v6677
        %v6748 = vunpack.c.l.b16 %v6678
        %v6749 = vunpack.c.h.b16 %v6678
        %v6750 = vunpack.c.l.b16 %v6679
        %v6751 = vunpack.c.h.b16 %v6679
        %v6752 = vunpack.c.l.b16 %v6680
        %v6753 = vunpack.c.h.b16 %v6680
        %v6754 = vunpack.c.l.b16 %v6681
        %v6755 = vunpack.c.h.b16 %v6681
        %v6756 = vunpack.c.l.b16 %v6682
        %v6757 = vunpack.c.h.b16 %v6682
        %v6758 = vunpack.c.l.b16 %v6683
        %v6759 = vunpack.c.h.b16 %v6683
        %v6760 = vunpack.c.l.b16 %v6684
        %v6761 = vunpack.c.h.b16 %v6684
        %v6762 = vunpack.c.l.b16 %v6685
        %v6763 = vunpack.c.h.b16 %v6685
        %v6764 = vunpack.c.l.b16 %v6686
        %v6765 = vunpack.c.h.b16 %v6686
        %v6766 = vunpack.c.l.b16 %v6687
        %v6767 = vunpack.c.h.b16 %v6687
        %v6768 = vunpack.c.l.b16 %v6688
        %v6769 = vunpack.c.h.b16 %v6688
        %v6770 = vunpack.c.l.b16 %v6689
        %v6771 = vunpack.c.h.b16 %v6689
        %v6772 = vunpack.c.l.b16 %v6690
        %v6773 = vunpack.c.h.b16 %v6690
        %v6774 = vunpack.c.l.b16 %v6691
        %v6775 = vunpack.c.h.b16 %v6691
        %v6776 = vunpack.c.l.b16 %v6692
        %v6777 = vunpack.c.h.b16 %v6692
        %v6778 = vunpack.c.l.b16 %v6693
        %v6779 = vunpack.c.h.b16 %v6693
        %v6780 = vunpack.c.l.b16 %v6694
        %v6781 = vunpack.c.h.b16 %v6694
        %v6782 = vunpack.c.l.b16 %v6695
        %v6783 = vunpack.c.h.b16 %v6695
        %v6784 = vunpack.c.l.b16 %v6696
        %v6785 = vunpack.c.h.b16 %v6696
        %v6786 = vunpack.c.l.b16 %v6697
        %v6787 = vunpack.c.h.b16 %v6697
        %v6788 = vunpack.c.l.b16 %v6698
        %v6789 = vunpack.c.h.b16 %v6698
        %v6790 = vunpack.c.l.b16 %v6699
        %v6791 = vunpack.c.h.b16 %v6699
        %v6792 = vunpack.c.l.b16 %v6700
        %v6793 = vunpack.c.h.b16 %v6700
        %v6794 = vunpack.c.l.b16 %v6701
        %v6795 = vunpack.c.h.b16 %v6701
        %v6796 = vunpack.c.l.b16 %v6702
        %v6797 = vunpack.c.h.b16 %v6702
        %v6798 = vunpack.c.l.b16 %v6703
        %v6799 = vunpack.c.h.b16 %v6703
        %v6800 = vpack.c.b16 %v6738, %v6736
        %v6801 = vpack.c.b16 %v6739, %v6737
        %v6802 = vpack.c.b16 %v6742, %v6740
        %v6803 = vpack.c.b16 %v6743, %v6741
        %v6804 = vpack.c.b16 %v6746, %v6744
        %v6805 = vpack.c.b16 %v6747, %v6745
        %v6806 = vpack.c.b16 %v6750, %v6748
        %v6807 = vpack.c.b16 %v6751, %v6749
        %v6808 = vpack.c.b16 %v6754, %v6752
        %v6809 = vpack.c.b16 %v6755, %v6753
        %v6810 = vpack.c.b16 %v6758, %v6756
        %v6811 = vpack.c.b16 %v6759, %v6757
        %v6812 = vpack.c.b16 %v6762, %v6760
        %v6813 = vpack.c.b16 %v6763, %v6761
        %v6814 = vpack.c.b16 %v6766, %v6764
        %v6815 = vpack.c.b16 %v6767, %v6765
        %v6816 = vpack.c.b16 %v6770, %v6768
        %v6817 = vpack.c.b16 %v6771, %v6769
        %v6818 = vpack.c.b16 %v6774, %v6772
        %v6819 = vpack.c.b16 %v6775, %v6773
        %v6820 = vpack.c.b16 %v6778, %v6776
        %v6821 = vpack.c.b16 %v6779, %v6777
        %v6822 = vpack.c.b16 %v6782, %v6780
        %v6823 = vpack.c.b16 %v6783, %v6781
        %v6824 = vpack.c.b16 %v6786, %v6784
        %v6825 = vpack.c.b16 %v6787, %v6785
        %v6826 = vpack.c.b16 %v6790, %v6788
        %v6827 = vpack.c.b16 %v6791, %v6789
        %v6828 = vpack.c.b16 %v6794, %v6792
        %v6829 = vpack.c.b16 %v6795, %v6793
        %v6830 = vpack.c.b16 %v6798, %v6796
        %v6831 = vpack.c.b16 %v6799, %v6797
        %6864 = vmatprep.subr.bf16.mxu0 %v6801
        %6865 = vmatpush1.bf16.msra.mxu0 %v6800
        %6866 = vmatprep.subr.bf16.mxu0 %v6803
        %6867 = vmatpush1.bf16.msra.mxu0 %v6802
        %6868 = vmatprep.subr.bf16.mxu0 %v6805
        %6869 = vmatpush1.bf16.msra.mxu0 %v6804
        %6870 = vmatprep.subr.bf16.mxu0 %v6807
        %6871 = vmatpush1.bf16.msra.mxu0 %v6806
        %6872 = vmatprep.subr.bf16.mxu0 %v6809
        %6873 = vmatpush1.bf16.msra.mxu0 %v6808
        %6874 = vmatprep.subr.bf16.mxu0 %v6811
        %6875 = vmatpush1.bf16.msra.mxu0 %v6810
        %6876 = vmatprep.subr.bf16.mxu0 %v6813
        %6877 = vmatpush1.bf16.msra.mxu0 %v6812
        %6878 = vmatprep.subr.bf16.mxu0 %v6815
        %6879 = vmatpush1.bf16.msra.mxu0 %v6814
        %6880 = vmatprep.subr.bf16.mxu0 %v6817
        %6881 = vmatpush1.bf16.msra.mxu0 %v6816
        %6882 = vmatprep.subr.bf16.mxu0 %v6819
        %6883 = vmatpush1.bf16.msra.mxu0 %v6818
        %6884 = vmatprep.subr.bf16.mxu0 %v6821
        %6885 = vmatpush1.bf16.msra.mxu0 %v6820
        %6886 = vmatprep.subr.bf16.mxu0 %v6823
        %6887 = vmatpush1.bf16.msra.mxu0 %v6822
        %6888 = vmatprep.subr.bf16.mxu0 %v6825
        %6889 = vmatpush1.bf16.msra.mxu0 %v6824
        %6890 = vmatprep.subr.bf16.mxu0 %v6827
        %6891 = vmatpush1.bf16.msra.mxu0 %v6826
        %6892 = vmatprep.subr.bf16.mxu0 %v6829
        %6893 = vmatpush1.bf16.msra.mxu0 %v6828
        %6894 = vmatprep.subr.bf16.mxu0 %v6831
        %6895 = vmatpush1.bf16.msra.mxu0 %v6830
        %6896 = vmatprep.mubr.bf16.mxu0 %v6671
        %6897 = vmatmul.mubr.bf16.gmra.mrb[0].mxu0 %v6670
        %v6898 = vpop.f32.mrb[0].mxu0
        %v6899 = vadd.f32 0.0, %v6898
        %v6900 = vpop.f32.mrb[0].mxu0
        %v6901 = vadd.f32 0.0, %v6900
        %v6902 = vpop.f32.mrb[0].mxu0
        %v6903 = vadd.f32 0.0, %v6902
        %v6904 = vpop.f32.mrb[0].mxu0
        %v6905 = vadd.f32 0.0, %v6904
        %6906 = vdwg.mxu0
        %v6907 = vpack.c.bf16 %v6668, %v6666
        %v6908 = vpack.c.bf16 %v6669, %v6667
        %v6909 = vld [vmem:[#allocation15] sm:$0xff]
        %v6910 = vld [vmem:[#allocation15 + $0x8] sm:$0xff]
        %v6911 = vld [vmem:[#allocation15 + $0x10] sm:$0xff]
        %v6912 = vld [vmem:[#allocation15 + $0x18] sm:$0xff]
        %v6913 = vld [vmem:[#allocation15 + $0x20] sm:$0xff]
        %v6914 = vld [vmem:[#allocation15 + $0x28] sm:$0xff]
        %v6915 = vld [vmem:[#allocation15 + $0x30] sm:$0xff]
        %v6916 = vld [vmem:[#allocation15 + $0x38] sm:$0xff]
        %v6917 = vld [vmem:[#allocation15 + $0x40] sm:$0xff]
        %v6918 = vld [vmem:[#allocation15 + $0x48] sm:$0xff]
        %v6919 = vld [vmem:[#allocation15 + $0x50] sm:$0xff]
        %v6920 = vld [vmem:[#allocation15 + $0x58] sm:$0xff]
        %v6921 = vld [vmem:[#allocation15 + $0x60] sm:$0xff]
        %v6922 = vld [vmem:[#allocation15 + $0x68] sm:$0xff]
        %v6923 = vld [vmem:[#allocation15 + $0x70] sm:$0xff]
        %v6924 = vld [vmem:[#allocation15 + $0x78] sm:$0xff]
        %v6925 = vld [vmem:[#allocation15 + $0x80] sm:$0xff]
        %v6926 = vld [vmem:[#allocation15 + $0x88] sm:$0xff]
        %v6927 = vld [vmem:[#allocation15 + $0x90] sm:$0xff]
        %v6928 = vld [vmem:[#allocation15 + $0x98] sm:$0xff]
        %v6929 = vld [vmem:[#allocation15 + $0xa0] sm:$0xff]
        %v6930 = vld [vmem:[#allocation15 + $0xa8] sm:$0xff]
        %v6931 = vld [vmem:[#allocation15 + $0xb0] sm:$0xff]
        %v6932 = vld [vmem:[#allocation15 + $0xb8] sm:$0xff]
        %v6933 = vld [vmem:[#allocation15 + $0xc0] sm:$0xff]
        %v6934 = vld [vmem:[#allocation15 + $0xc8] sm:$0xff]
        %v6935 = vld [vmem:[#allocation15 + $0xd0] sm:$0xff]
        %v6936 = vld [vmem:[#allocation15 + $0xd8] sm:$0xff]
        %v6937 = vld [vmem:[#allocation15 + $0xe0] sm:$0xff]
        %v6938 = vld [vmem:[#allocation15 + $0xe8] sm:$0xff]
        %v6939 = vld [vmem:[#allocation15 + $0xf0] sm:$0xff]
        %v6940 = vld [vmem:[#allocation15 + $0xf8] sm:$0xff]
        %v6973 = vunpack.c.l.b16 %v6909
        %v6974 = vunpack.c.h.b16 %v6909
        %v6975 = vunpack.c.l.b16 %v6910
        %v6976 = vunpack.c.h.b16 %v6910
        %v6977 = vunpack.c.l.b16 %v6911
        %v6978 = vunpack.c.h.b16 %v6911
        %v6979 = vunpack.c.l.b16 %v6912
        %v6980 = vunpack.c.h.b16 %v6912
        %v6981 = vunpack.c.l.b16 %v6913
        %v6982 = vunpack.c.h.b16 %v6913
        %v6983 = vunpack.c.l.b16 %v6914
        %v6984 = vunpack.c.h.b16 %v6914
        %v6985 = vunpack.c.l.b16 %v6915
        %v6986 = vunpack.c.h.b16 %v6915
        %v6987 = vunpack.c.l.b16 %v6916
        %v6988 = vunpack.c.h.b16 %v6916
        %v6989 = vunpack.c.l.b16 %v6917
        %v6990 = vunpack.c.h.b16 %v6917
        %v6991 = vunpack.c.l.b16 %v6918
        %v6992 = vunpack.c.h.b16 %v6918
        %v6993 = vunpack.c.l.b16 %v6919
        %v6994 = vunpack.c.h.b16 %v6919
        %v6995 = vunpack.c.l.b16 %v6920
        %v6996 = vunpack.c.h.b16 %v6920
        %v6997 = vunpack.c.l.b16 %v6921
        %v6998 = vunpack.c.h.b16 %v6921
        %v6999 = vunpack.c.l.b16 %v6922
        %v7000 = vunpack.c.h.b16 %v6922
        %v7001 = vunpack.c.l.b16 %v6923
        %v7002 = vunpack.c.h.b16 %v6923
        %v7003 = vunpack.c.l.b16 %v6924
        %v7004 = vunpack.c.h.b16 %v6924
        %v7005 = vunpack.c.l.b16 %v6925
        %v7006 = vunpack.c.h.b16 %v6925
        %v7007 = vunpack.c.l.b16 %v6926
        %v7008 = vunpack.c.h.b16 %v6926
        %v7009 = vunpack.c.l.b16 %v6927
        %v7010 = vunpack.c.h.b16 %v6927
        %v7011 = vunpack.c.l.b16 %v6928
        %v7012 = vunpack.c.h.b16 %v6928
        %v7013 = vunpack.c.l.b16 %v6929
        %v7014 = vunpack.c.h.b16 %v6929
        %v7015 = vunpack.c.l.b16 %v6930
        %v7016 = vunpack.c.h.b16 %v6930
        %v7017 = vunpack.c.l.b16 %v6931
        %v7018 = vunpack.c.h.b16 %v6931
        %v7019 = vunpack.c.l.b16 %v6932
        %v7020 = vunpack.c.h.b16 %v6932
        %v7021 = vunpack.c.l.b16 %v6933
        %v7022 = vunpack.c.h.b16 %v6933
        %v7023 = vunpack.c.l.b16 %v6934
        %v7024 = vunpack.c.h.b16 %v6934
        %v7025 = vunpack.c.l.b16 %v6935
        %v7026 = vunpack.c.h.b16 %v6935
        %v7027 = vunpack.c.l.b16 %v6936
        %v7028 = vunpack.c.h.b16 %v6936
        %v7029 = vunpack.c.l.b16 %v6937
        %v7030 = vunpack.c.h.b16 %v6937
        %v7031 = vunpack.c.l.b16 %v6938
        %v7032 = vunpack.c.h.b16 %v6938
        %v7033 = vunpack.c.l.b16 %v6939
        %v7034 = vunpack.c.h.b16 %v6939
        %v7035 = vunpack.c.l.b16 %v6940
        %v7036 = vunpack.c.h.b16 %v6940
        %v7037 = vpack.c.b16 %v6975, %v6973
        %v7038 = vpack.c.b16 %v6976, %v6974
        %v7039 = vpack.c.b16 %v6979, %v6977
        %v7040 = vpack.c.b16 %v6980, %v6978
        %v7041 = vpack.c.b16 %v6983, %v6981
        %v7042 = vpack.c.b16 %v6984, %v6982
        %v7043 = vpack.c.b16 %v6987, %v6985
        %v7044 = vpack.c.b16 %v6988, %v6986
        %v7045 = vpack.c.b16 %v6991, %v6989
        %v7046 = vpack.c.b16 %v6992, %v6990
        %v7047 = vpack.c.b16 %v6995, %v6993
        %v7048 = vpack.c.b16 %v6996, %v6994
        %v7049 = vpack.c.b16 %v6999, %v6997
        %v7050 = vpack.c.b16 %v7000, %v6998
        %v7051 = vpack.c.b16 %v7003, %v7001
        %v7052 = vpack.c.b16 %v7004, %v7002
        %v7053 = vpack.c.b16 %v7007, %v7005
        %v7054 = vpack.c.b16 %v7008, %v7006
        %v7055 = vpack.c.b16 %v7011, %v7009
        %v7056 = vpack.c.b16 %v7012, %v7010
        %v7057 = vpack.c.b16 %v7015, %v7013
        %v7058 = vpack.c.b16 %v7016, %v7014
        %v7059 = vpack.c.b16 %v7019, %v7017
        %v7060 = vpack.c.b16 %v7020, %v7018
        %v7061 = vpack.c.b16 %v7023, %v7021
        %v7062 = vpack.c.b16 %v7024, %v7022
        %v7063 = vpack.c.b16 %v7027, %v7025
        %v7064 = vpack.c.b16 %v7028, %v7026
        %v7065 = vpack.c.b16 %v7031, %v7029
        %v7066 = vpack.c.b16 %v7032, %v7030
        %v7067 = vpack.c.b16 %v7035, %v7033
        %v7068 = vpack.c.b16 %v7036, %v7034
        %7101 = vmatprep.subr.bf16.mxu0 %v7038
        %7102 = vmatpush1.bf16.msra.mxu0 %v7037
        %7103 = vmatprep.subr.bf16.mxu0 %v7040
        %7104 = vmatpush1.bf16.msra.mxu0 %v7039
        %7105 = vmatprep.subr.bf16.mxu0 %v7042
        %7106 = vmatpush1.bf16.msra.mxu0 %v7041
        %7107 = vmatprep.subr.bf16.mxu0 %v7044
        %7108 = vmatpush1.bf16.msra.mxu0 %v7043
        %7109 = vmatprep.subr.bf16.mxu0 %v7046
        %7110 = vmatpush1.bf16.msra.mxu0 %v7045
        %7111 = vmatprep.subr.bf16.mxu0 %v7048
        %7112 = vmatpush1.bf16.msra.mxu0 %v7047
        %7113 = vmatprep.subr.bf16.mxu0 %v7050
        %7114 = vmatpush1.bf16.msra.mxu0 %v7049
        %7115 = vmatprep.subr.bf16.mxu0 %v7052
        %7116 = vmatpush1.bf16.msra.mxu0 %v7051
        %7117 = vmatprep.subr.bf16.mxu0 %v7054
        %7118 = vmatpush1.bf16.msra.mxu0 %v7053
        %7119 = vmatprep.subr.bf16.mxu0 %v7056
        %7120 = vmatpush1.bf16.msra.mxu0 %v7055
        %7121 = vmatprep.subr.bf16.mxu0 %v7058
        %7122 = vmatpush1.bf16.msra.mxu0 %v7057
        %7123 = vmatprep.subr.bf16.mxu0 %v7060
        %7124 = vmatpush1.bf16.msra.mxu0 %v7059
        %7125 = vmatprep.subr.bf16.mxu0 %v7062
        %7126 = vmatpush1.bf16.msra.mxu0 %v7061
        %7127 = vmatprep.subr.bf16.mxu0 %v7064
        %7128 = vmatpush1.bf16.msra.mxu0 %v7063
        %7129 = vmatprep.subr.bf16.mxu0 %v7066
        %7130 = vmatpush1.bf16.msra.mxu0 %v7065
        %7131 = vmatprep.subr.bf16.mxu0 %v7068
        %7132 = vmatpush1.bf16.msra.mxu0 %v7067
        %7133 = vmatprep.mubr.bf16.mxu0 %v6908
        %7134 = vmatmul.mubr.bf16.gmra.mrb[0].mxu0 %v6907
        %v7135 = vpop.f32.mrb[0].mxu0
        %v7136 = vadd.f32 0.0, %v7135
        %v7137 = vpop.f32.mrb[0].mxu0
        %v7138 = vadd.f32 0.0, %v7137
        %v7139 = vpop.f32.mrb[0].mxu0
        %v7140 = vadd.f32 0.0, %v7139
        %v7141 = vpop.f32.mrb[0].mxu0
        %v7142 = vadd.f32 0.0, %v7141
        %7143 = vdwg.mxu0
        %v7144 = vpack.c.bf16 %v6903, %v6899
        %v7145 = vpack.c.bf16 %v6905, %v6901
        %v7146 = vpack.c.bf16 %v7140, %v7136
        %v7147 = vpack.c.bf16 %v7142, %v7138
        %v7149 = vsel %vm798, %v682, 0
        %v7152 = vsel %vm798, %v683, 0
        %7154 = vmatprep.subr.bf16.mxu0 %v7147
        %7155 = vmatpush1.bf16.msra.mxu0 %v7146
        %7156 = vmatprep.subr.bf16.mxu0 0
        %7157 = vmatpush1.bf16.msra.mxu0 0
        %7158 = vmatprep.subr.bf16.mxu0 0
        %7159 = vmatpush1.bf16.msra.mxu0 0
        %7160 = vmatprep.subr.bf16.mxu0 0
        %7161 = vmatpush1.bf16.msra.mxu0 0
        %7162 = vmatprep.subr.bf16.mxu0 0
        %7163 = vmatpush1.bf16.msra.mxu0 0
        %7164 = vmatprep.subr.bf16.mxu0 0
        %7165 = vmatpush1.bf16.msra.mxu0 0
        %7166 = vmatprep.subr.bf16.mxu0 0
        %7167 = vmatpush1.bf16.msra.mxu0 0
        %7168 = vmatprep.subr.bf16.mxu0 0
        %7169 = vmatpush1.bf16.msra.mxu0 0
        %7170 = vmatprep.subr.bf16.mxu0 0
        %7171 = vmatpush1.bf16.msra.mxu0 0
        %7172 = vmatprep.subr.bf16.mxu0 0
        %7173 = vmatpush1.bf16.msra.mxu0 0
        %7174 = vmatprep.subr.bf16.mxu0 0
        %7175 = vmatpush1.bf16.msra.mxu0 0
        %7176 = vmatprep.subr.bf16.mxu0 0
        %7177 = vmatpush1.bf16.msra.mxu0 0
        %7178 = vmatprep.subr.bf16.mxu0 0
        %7179 = vmatpush1.bf16.msra.mxu0 0
        %7180 = vmatprep.subr.bf16.mxu0 0
        %7181 = vmatpush1.bf16.msra.mxu0 0
        %7182 = vmatprep.subr.bf16.mxu0 0
        %7183 = vmatpush1.bf16.msra.mxu0 0
        %7184 = vmatprep.subr.bf16.mxu0 0
        %7185 = vmatpush1.bf16.msra.mxu0 0
        %7186 = vmatprep.mubr.bf16.mxu0 0
        %7187 = vmatmul.mubr.bf16.gmra.mrb[0].mxu0 %v7149
        %v7188 = vpop.f32.mrb[0].mxu0
        %v7189 = vadd.f32 0.0, %v7188
        %v7190 = vpop.f32.mrb[0].mxu0
        %v7191 = vadd.f32 0.0, %v7190
        %v7192 = vpop.f32.mrb[0].mxu0
        %v7193 = vadd.f32 0.0, %v7192
        %v7194 = vpop.f32.mrb[0].mxu0
        %v7195 = vadd.f32 0.0, %v7194
        %7196 = vmatprep.mubr.bf16.mxu0 0
        %7197 = vmatmul.mubr.bf16.gmra.mrb[0].mxu0 %v7152
        %v7198 = vpop.f32.mrb[0].mxu0
        %v7199 = vadd.f32 0.0, %v7198
        %v7200 = vpop.f32.mrb[0].mxu0
        %v7201 = vadd.f32 0.0, %v7200
        %v7202 = vpop.f32.mrb[0].mxu0
        %v7203 = vadd.f32 0.0, %v7202
        %v7204 = vpop.f32.mrb[0].mxu0
        %v7205 = vadd.f32 0.0, %v7204
        %7206 = vdwg.mxu0
        %v7208 = vsel %vm798, %v656, 0
        %v7211 = vsel %vm798, %v657, 0
        %7213 = vmatprep.subr.bf16.mxu0 %v7145
        %7214 = vmatpush1.bf16.msra.mxu0 %v7144
        %7215 = vmatprep.subr.bf16.mxu0 0
        %7216 = vmatpush1.bf16.msra.mxu0 0
        %7217 = vmatprep.subr.bf16.mxu0 0
        %7218 = vmatpush1.bf16.msra.mxu0 0
        %7219 = vmatprep.subr.bf16.mxu0 0
        %7220 = vmatpush1.bf16.msra.mxu0 0
        %7221 = vmatprep.subr.bf16.mxu0 0
        %7222 = vmatpush1.bf16.msra.mxu0 0
        %7223 = vmatprep.subr.bf16.mxu0 0
        %7224 = vmatpush1.bf16.msra.mxu0 0
        %7225 = vmatprep.subr.bf16.mxu0 0
        %7226 = vmatpush1.bf16.msra.mxu0 0
        %7227 = vmatprep.subr.bf16.mxu0 0
        %7228 = vmatpush1.bf16.msra.mxu0 0
        %7229 = vmatprep.subr.bf16.mxu0 0
        %7230 = vmatpush1.bf16.msra.mxu0 0
        %7231 = vmatprep.subr.bf16.mxu0 0
        %7232 = vmatpush1.bf16.msra.mxu0 0
        %7233 = vmatprep.subr.bf16.mxu0 0
        %7234 = vmatpush1.bf16.msra.mxu0 0
        %7235 = vmatprep.subr.bf16.mxu0 0
        %7236 = vmatpush1.bf16.msra.mxu0 0
        %7237 = vmatprep.subr.bf16.mxu0 0
        %7238 = vmatpush1.bf16.msra.mxu0 0
        %7239 = vmatprep.subr.bf16.mxu0 0
        %7240 = vmatpush1.bf16.msra.mxu0 0
        %7241 = vmatprep.subr.bf16.mxu0 0
        %7242 = vmatpush1.bf16.msra.mxu0 0
        %7243 = vmatprep.subr.bf16.mxu0 0
        %7244 = vmatpush1.bf16.msra.mxu0 0
        %7245 = vmatprep.mubr.bf16.mxu0 0
        %7246 = vmatmul.mubr.bf16.gmra.mrb[0].mxu0 %v7208
        %v7247 = vpop.f32.mrb[0].mxu0
        %v7248 = vadd.f32 %v7189, %v7247
        %v7249 = vpop.f32.mrb[0].mxu0
        %v7250 = vadd.f32 %v7191, %v7249
        %v7251 = vpop.f32.mrb[0].mxu0
        %v7252 = vadd.f32 %v7193, %v7251
        %v7253 = vpop.f32.mrb[0].mxu0
        %v7254 = vadd.f32 %v7195, %v7253
        %7255 = vmatprep.mubr.bf16.mxu0 0
        %7256 = vmatmul.mubr.bf16.gmra.mrb[0].mxu0 %v7211
        %v7257 = vpop.f32.mrb[0].mxu0
        %v7258 = vadd.f32 %v7199, %v7257
        %v7259 = vpop.f32.mrb[0].mxu0
        %v7260 = vadd.f32 %v7201, %v7259
        %v7261 = vpop.f32.mrb[0].mxu0
        %v7262 = vadd.f32 %v7203, %v7261
        %v7263 = vpop.f32.mrb[0].mxu0
        %v7264 = vadd.f32 %v7205, %v7263
        %7265 = vdwg.mxu0
        %v7267 = vlaneseq
        %v7268 = vshrl.u32 %v7267, 7
        %v7269 = vsub.s32 0, %v7268
        %v7270 = vrot.slane %v620, %v7269
        %v7271 = vlaneseq
        %v7272 = vshrl.u32 %v7271, 7
        %v7273 = vsub.s32 1, %v7272
        %v7274 = vrot.slane %v620, %v7273
        %v7277 = vadd.f32 %v7248, %v7270
        %v7278 = vadd.f32 %v7250, %v7274
        %v7279 = vadd.f32 %v7252, %v7270
        %v7280 = vadd.f32 %v7254, %v7274
        %v7281 = vadd.f32 %v7258, %v7270
        %v7282 = vadd.f32 %v7260, %v7274
        %v7283 = vadd.f32 %v7262, %v7270
        %v7284 = vadd.f32 %v7264, %v7274
        %v7285 = vmax.f32 %v7277, 0.0
        %v7286 = vmax.f32 %v7278, 0.0
        %v7287 = vmax.f32 %v7279, 0.0
        %v7288 = vmax.f32 %v7280, 0.0
        %v7289 = vmax.f32 %v7281, 0.0
        %v7290 = vmax.f32 %v7282, 0.0
        %v7291 = vmax.f32 %v7283, 0.0
        %v7292 = vmax.f32 %v7284, 0.0
        %v7294 = vlaneseq
        %v7295 = vshrl.u32 %v7294, 7
        %v7296 = vsub.s32 0, %v7295
        %v7297 = vrot.slane %v622, %v7296
        %v7298 = vlaneseq
        %v7299 = vshrl.u32 %v7298, 7
        %v7300 = vsub.s32 1, %v7299
        %v7301 = vrot.slane %v622, %v7300
        %v7304 = vmul.f32 %v7285, %v7297
        %v7305 = vmul.f32 %v7286, %v7301
        %v7306 = vmul.f32 %v7287, %v7297
        %v7307 = vmul.f32 %v7288, %v7301
        %v7308 = vmul.f32 %v7289, %v7297
        %v7309 = vmul.f32 %v7290, %v7301
        %v7310 = vmul.f32 %v7291, %v7297
        %v7311 = vmul.f32 %v7292, %v7301
        %v7312 = vadd.f32 %v7304, %v7305
        %7313 = vadd.xlane.f32.xlu0 %v7312
        %v7314 = vpop.xlane.xlu0 %7313
        %v7315 = vadd.f32 %v7306, %v7307
        %7316 = vadd.xlane.f32.xlu0 %v7315
        %v7317 = vpop.xlane.xlu0 %7316
        %v7318 = vadd.f32 %v7308, %v7309
        %7319 = vadd.xlane.f32.xlu0 %v7318
        %v7320 = vpop.xlane.xlu0 %7319
        %v7321 = vadd.f32 %v7310, %v7311
        %7322 = vadd.xlane.f32.xlu0 %v7321
        %v7323 = vpop.xlane.xlu0 %7322
        %v7324 = vadd.f32 %v7314, %v623
        %v7325 = vadd.f32 %v7317, %v623
        %v7326 = vadd.f32 %v7320, %v623
        %v7327 = vadd.f32 %v7323, %v623
        %vm7328 = vcmask 7168
        %7329 = vst.msk [vmem:[%s602] sm:$0xff] %vm7328, %v7324
        %7330 = vst.msk [vmem:[%s602 + $0x8] sm:$0xff] %vm7328, %v7325
        %7331 = vst.msk [vmem:[%s602 + $0x10] sm:$0xff] %vm7328, %v7326
        %7332 = vst.msk [vmem:[%s602 + $0x18] sm:$0xff] %vm7328, %v7327
        %p7333 = scmp.lt.s32.totalorder %s32, 3
        %s7334 = scalar_select %p7333, %s32, 3
        %s7335 = smul.addr %s7334, 4
        %s7336 = smul.addr %s7335, 8
        %s7337 = scalar_lea.vmem %s11, %s7336
        // Predicated region
        $region105: #{hetero_gnn_forward.1} parent=63 // pred_check
          %p7338 = pneg %p301
        $region106: #{hetero_gnn_forward.1} parent=63 // pred_check_branch
          %7340 = sbr.rel (%p7338) target = $region108
        $region107: #{hetero_gnn_forward.1} parent=63 // pred_region
          _
        $region108: #{hetero_gnn_forward.1} parent=63 // pred_fallthru
          _
      $region64: #{hetero_gnn_forward.1} parent=5 // pred_fallthru
        _
      %p7341 = scmp.le.s32.totalorder 2, %s27
      // Predicated region
      $region109: #{hetero_gnn_forward.1} parent=5 // pred_check
        %p7342 = pneg %p7341
      $region110: #{hetero_gnn_forward.1} parent=5 // pred_check_branch
        %7344 = sbr.rel (%p7342) target = $region112
      $region111: #{hetero_gnn_forward.1} parent=5 // pred_region
        %s7345 = ssub.s32 %s27, 2
        // Predicated region
        $region113: #{hetero_gnn_forward.1} parent=111 // pred_check
          %p7346 = pneg %p307
        $region114: #{hetero_gnn_forward.1} parent=111 // pred_check_branch
          %7348 = sbr.rel (%p7346) target = $region116
        $region115: #{hetero_gnn_forward.1} parent=111 // pred_region
          %p7349 = scmp.lt.s32.totalorder %s33, 3
          %s7350 = scalar_select %p7349, %s33, 3
          %s7351 = smul.addr %s7350, 4
          %s7352 = smul.addr %s7351, 8
          %s7353 = scalar_lea.vmem %s11, %s7352
        $region116: #{hetero_gnn_forward.1} parent=111 // pred_fallthru
          _
      $region112: #{hetero_gnn_forward.1} parent=5 // pred_fallthru
        _
    $region6: #{hetero_gnn_forward.1} parent=1 // loop_footer
      %s31 = sadd.s32 1, %s27
    $region7: #{hetero_gnn_forward.1} parent=1 // loop_footer_branch
      %26 = sbr.rel target = $region3
    $region8: #{hetero_gnn_forward.1} parent=1 // loop_exit
      _
    %7354 = vsyncpa [#allocation3], 1
    %s7355 = scalar_lea.sflag [#allocation3], 1
    %7356 = vsyncpa %s7355, 1
    %7357 = vsyncpa [#allocation5], 1
    %s7358 = scalar_lea.sflag [#allocation5], 1
    %7359 = vsyncpa %s7358, 1
    %7360 = vsyncpa [#allocation8], 1
    %7361 = vsyncpa [#allocation11], 1
    %7362 = vsyncpa [#allocation14], 1
    %7363 = vsyncpa [#allocation17], 1

</llo_original>
